<compile_context>
chip_gen: v7x
topology: tpu7x:2x2x1
jax: 0.10.0
libtpu: 0.0.40
codegen_flags: <defaults>
</compile_context>

<pallas_src>
import functools

import jax
import jax.numpy as jnp
from jax.experimental import pallas as pl
from jax.experimental.pallas import tpu as pltpu

# Explicit scoped-VMEM budget: large enough for every tile choice below,
# and <= physical VMEM on all generations (v5e/v6e 128 MiB, v7x 64 MiB).
_VMEM_LIMIT_BYTES = 32 * 1024 * 1024


def _round_up(x, m):
    return (x + m - 1) // m * m


# --------------------- Pallas matmul + bias (+ReLU) ---------------------
# Inputs are bf16 (native MXU path, half the HBM traffic); accumulation f32.

def _mm_bias_kernel(x_ref, w_ref, b_ref, o_ref, *, relu):
    # Single K-step: no accumulator scratch needed.
    out = jnp.dot(x_ref[...], w_ref[...], preferred_element_type=jnp.float32)
    out = out + b_ref[...]
    if relu:
        out = jnp.maximum(out, 0.0)
    o_ref[...] = out.astype(o_ref.dtype)


def _mm_bias_acc_kernel(x_ref, w_ref, b_ref, o_ref, acc_ref, *, relu):
    @pl.when(pl.program_id(2) == 0)
    def _():
        acc_ref[...] = jnp.zeros_like(acc_ref)

    acc_ref[...] += jnp.dot(
        x_ref[...], w_ref[...], preferred_element_type=jnp.float32
    )

    @pl.when(pl.program_id(2) == pl.num_programs(2) - 1)
    def _():
        out = acc_ref[...] + b_ref[...]
        if relu:
            out = jnp.maximum(out, 0.0)
        o_ref[...] = out.astype(o_ref.dtype)


def matmul_bias(x, w, b, *, relu, tm, tn=None, tk=None):
    """out = x @ w + b, optional ReLU.  x:(M,K), w:(K,N), b:(N,).

    tn=None / tk=None -> one full-extent block along that axis (no padding and
    no extra grid steps; block dim == full array dim is always legal).
    x and w are streamed as bf16; accumulation / output stay f32.
    """
    M, K = x.shape
    Kw, N = w.shape
    assert K == Kw

    if tk is None:
        tk = K
    if tn is None:
        tn = N

    Mp = _round_up(M, tm)
    Kp = _round_up(K, tk)
    Np = _round_up(N, tn)

    xp = x.astype(jnp.bfloat16)
    wp = w.astype(jnp.bfloat16)
    bp = b.astype(jnp.float32).reshape(1, N)
    if (Mp, Kp) != (M, K):
        xp = jnp.pad(xp, ((0, Mp - M), (0, Kp - K)))
    if (Kp, Np) != (K, N):
        wp = jnp.pad(wp, ((0, Kp - K), (0, Np - N)))
    if Np != N:
        bp = jnp.pad(bp, ((0, 0), (0, Np - N)))

    nk = Kp // tk
    if nk == 1:
        kernel = functools.partial(_mm_bias_kernel, relu=relu)
        scratch = []
    else:
        kernel = functools.partial(_mm_bias_acc_kernel, relu=relu)
        scratch = [pltpu.VMEM((tm, tn), jnp.float32)]

    out = pl.pallas_call(
        kernel,
        out_shape=jax.ShapeDtypeStruct((Mp, Np), jnp.float32),
        grid_spec=pltpu.PrefetchScalarGridSpec(
            num_scalar_prefetch=0,
            grid=(Mp // tm, Np // tn, nk),
            in_specs=[
                pl.BlockSpec((tm, tk), lambda i, j, k: (i, k)),
                pl.BlockSpec((tk, tn), lambda i, j, k: (k, j)),
                pl.BlockSpec((1, tn), lambda i, j, k: (0, j)),
            ],
            out_specs=pl.BlockSpec((tm, tn), lambda i, j, k: (i, j)),
            scratch_shapes=scratch,
        ),
        compiler_params=pltpu.CompilerParams(
            dimension_semantics=("parallel", "parallel", "arbitrary"),
            vmem_limit_bytes=_VMEM_LIMIT_BYTES,
        ),
    )(xp, wp, bp)

    if (Mp, Np) != (M, N):
        out = out[:M, :N]
    return out


# ------------- Pallas fused MaxPool(2, stride=1) + BatchNorm -------------
# Single-input, lane-dense layout: one image per grid step as (H, W*C).
# The 2x2/stride-1 window max is built from an in-kernel sublane shift (+1 row)
# and an in-kernel lane shift (+C), then BN (eval, running stats) is applied as
# a per-(w,c)-lane scale/shift tile.

def _pool_bn_kernel(x_ref, s_ref, t_ref, o_ref, *, H, C):
    x = x_ref[0]                                    # (H, W*C)
    vmax = jnp.maximum(x[: H - 1, :], x[1:, :])     # max over dy  -> (Ho, W*C)
    woc = vmax.shape[1] - C                         # Wo*C
    m = jnp.maximum(vmax[:, :woc], vmax[:, C:])     # max over dx  -> (Ho, Wo*C)
    o_ref[0] = m * s_ref[...] + t_ref[...]


def maxpool2x2s1_batchnorm(x, gamma, beta, mean, var, eps=1e-5):
    """x: (N,H,W,C) f32 -> (N,H-1,W-1,C); BN uses running stats (eval mode)."""
    N, H, W, C = x.shape
    Ho, Wo = H - 1, W - 1

    x3 = x.reshape(N, H, W * C)                     # contiguous, free reshape

    scale = (gamma / jnp.sqrt(var + eps)).astype(jnp.float32)
    shift = (beta - mean * scale).astype(jnp.float32)
    s = jnp.tile(scale, Wo).reshape(1, Wo * C)      # lane index = w*C + c
    t = jnp.tile(shift, Wo).reshape(1, Wo * C)

    out = pl.pallas_call(
        functools.partial(_pool_bn_kernel, H=H, C=C),
        out_shape=jax.ShapeDtypeStruct((N, Ho, Wo * C), jnp.float32),
        grid_spec=pltpu.PrefetchScalarGridSpec(
            num_scalar_prefetch=0,
            grid=(N,),
            in_specs=[
                pl.BlockSpec((1, H, W * C), lambda n: (n, 0, 0)),
                pl.BlockSpec((1, Wo * C), lambda n: (0, 0)),
                pl.BlockSpec((1, Wo * C), lambda n: (0, 0)),
            ],
            out_specs=pl.BlockSpec((1, Ho, Wo * C), lambda n: (n, 0, 0)),
        ),
        compiler_params=pltpu.CompilerParams(
            dimension_semantics=("parallel",),
            vmem_limit_bytes=_VMEM_LIMIT_BYTES,
        ),
    )(x3, s, t)
    return out.reshape(N, Ho, Wo, C)


# ----------------------- Conv 3x3 (pad=1) + ReLU -------------------------

def conv3x3_relu(x, wm, b):
    """x: (N,H,W,Cin) NHWC; wm: (9*Cin, Cout) pre-reshaped im2col weight (bf16).

    'same' padding, fused bias + ReLU via the Pallas matmul.  The im2col rows
    are built as cheap bf16 XLA glue (activations here are <1 MB); K and Cout
    stay un-padded (full-extent blocks), M is split into 2 parallel row blocks.
    """
    N, H, W, Cin = x.shape
    Cout = wm.shape[1]
    x = x.astype(jnp.bfloat16)
    xp = jnp.pad(x, ((0, 0), (1, 1), (1, 1), (0, 0)))
    patches = jnp.stack(
        [xp[:, dy: dy + H, dx: dx + W, :] for dy in range(3) for dx in range(3)],
        axis=3,
    )                                               # (N,H,W,9,Cin)
    patches = patches.reshape(N * H * W, 9 * Cin)   # im2col rows, bf16
    M = N * H * W
    tm = _round_up((M + 1) // 2, 8)                 # 2 row-blocks -> both v7x TCs
    out = matmul_bias(patches, wm, b, relu=True, tm=tm)
    return out.reshape(N, H, W, Cout)


# ------------------------------ Model ------------------------------------

def init_params(key, num_classes):
    ks = jax.random.split(key, 16)

    def conv_wm(k, cout, cin):
        # PyTorch Conv2d layout (Cout,Cin,3,3) -> im2col matmul layout
        # (9*Cin, Cout), stored bf16 once at init (no per-forward transposes).
        w = jax.random.normal(k, (cout, cin, 3, 3), jnp.float32) / jnp.sqrt(9.0 * cin)
        return jnp.transpose(w, (2, 3, 1, 0)).reshape(9 * cin, cout).astype(jnp.bfloat16)

    def bn(k, c):
        k1, k2, k3, k4 = jax.random.split(k, 4)
        return {
            "gamma": 1.0 + 0.1 * jax.random.normal(k1, (c,), jnp.float32),
            "beta": 0.1 * jax.random.normal(k2, (c,), jnp.float32),
            "mean": 0.1 * jax.random.normal(k3, (c,), jnp.float32),
            "var": 1.0 + 0.1 * jax.random.uniform(k4, (c,), jnp.float32),
        }

    # fc1: PyTorch layout (512, 32*26*26) with input features ordered (c,h,w).
    # Pre-permute rows to the NHWC flatten order (h,w,c) and pre-transpose to
    # (K,N) bf16 ONCE here, so forward never transposes/copies the big weight
    # and never transposes the activation back to NCHW.
    fc1_w = jax.random.normal(ks[10], (512, 32 * 26 * 26), jnp.float32) / jnp.sqrt(
        32.0 * 26.0 * 26.0
    )
    fc1_w = (
        fc1_w.reshape(512, 32, 26, 26)
        .transpose(0, 2, 3, 1)
        .reshape(512, 26 * 26 * 32)
    )
    fc1_wT = fc1_w.T.astype(jnp.bfloat16)            # (21632, 512)

    fc2_w = jax.random.normal(ks[12], (num_classes, 512), jnp.float32) / jnp.sqrt(512.0)
    fc2_wT = fc2_w.T.astype(jnp.bfloat16)            # (512, num_classes)

    return {
        "conv1_wm": conv_wm(ks[0], 16, 1),
        "conv1_b": 0.01 * jax.random.normal(ks[1], (16,), jnp.float32),
        "conv2_wm": conv_wm(ks[2], 16, 16),
        "conv2_b": 0.01 * jax.random.normal(ks[3], (16,), jnp.float32),
        "bn1": bn(ks[4], 16),
        "conv3_wm": conv_wm(ks[5], 32, 16),
        "conv3_b": 0.01 * jax.random.normal(ks[6], (32,), jnp.float32),
        "conv4_wm": conv_wm(ks[7], 32, 32),
        "conv4_b": 0.01 * jax.random.normal(ks[8], (32,), jnp.float32),
        "bn2": bn(ks[9], 32),
        "fc1_wT": fc1_wT,
        "fc1_b": 0.01 * jax.random.normal(ks[11], (512,), jnp.float32),
        "fc2_wT": fc2_wT,
        "fc2_b": 0.01 * jax.random.normal(ks[13], (num_classes,), jnp.float32),
    }


def forward(params, x_nchw):
    # NCHW -> NHWC (tiny input; one cheap transpose)
    x = jnp.transpose(x_nchw, (0, 2, 3, 1))

    # block1: Conv(1->16) ReLU Conv(16->16) ReLU MaxPool(2,s1) BN(16)
    x = conv3x3_relu(x, params["conv1_wm"], params["conv1_b"])
    x = conv3x3_relu(x, params["conv2_wm"], params["conv2_b"])
    b1 = params["bn1"]
    x = maxpool2x2s1_batchnorm(x, b1["gamma"], b1["beta"], b1["mean"], b1["var"])

    # block2: Conv(16->32) ReLU Conv(32->32) ReLU MaxPool(2,s1) BN(32)
    x = conv3x3_relu(x, params["conv3_wm"], params["conv3_b"])
    x = conv3x3_relu(x, params["conv4_wm"], params["conv4_b"])
    b2 = params["bn2"]
    x = maxpool2x2s1_batchnorm(x, b2["gamma"], b2["beta"], b2["mean"], b2["var"])

    # Flatten.  fc1 weight rows were pre-permuted to NHWC order at init, so this
    # contiguous NHWC flatten is equivalent to PyTorch's x.view(N, 32*26*26).
    N = x.shape[0]
    x = x.reshape(N, 26 * 26 * 32)

    # full_conn: Linear(21632->512) ReLU -> Dropout(eval identity) -> Linear.
    # fc1 is weight-streaming bound: tiny-M tile (tm=8), tn=256 (2 parallel
    # N-blocks for v7x's 2 TCs), tk=1664 (=13*128, divides K exactly).
    x = matmul_bias(x, params["fc1_wT"], params["fc1_b"], relu=True,
                    tm=8, tn=256, tk=1664)
    # TODO(synk): Dropout is eval-mode identity; training-mode stochastic dropout omitted.
    out = matmul_bias(x, params["fc2_wT"], params["fc2_b"], relu=False, tm=8)
    return out


if __name__ == "__main__":
    num_classes = 10
    key = jax.random.PRNGKey(0)
    pkey, xkey = jax.random.split(key)
    params = init_params(pkey, num_classes)
    # Input spatial size must be 28x28 so the FC layer's 32*26*26 matches.
    x = jax.random.normal(xkey, (2, 1, 28, 28), jnp.float32)

    fwd = jax.jit(forward)
    logits = fwd(params, x)
    jax.block_until_ready(logits)
    assert logits.shape == (2, num_classes)
    print("KERNEL_OK")
</pallas_src>

<mosaic_0001>
module attributes {stable_mosaic.version = 11 : i64} {
  func.func @_mm_bias_kernel(%arg0: i32, %arg1: i32, %arg2: i32, %arg3: memref<784x9xbf16, #tpu.memory_space<vmem>>, %arg4: memref<9x16xbf16, #tpu.memory_space<vmem>>, %arg5: memref<1x16xf32, #tpu.memory_space<vmem>>, %arg6: memref<784x16xf32, #tpu.memory_space<vmem>>) attributes {dimension_semantics = [#tpu.dimension_semantics<parallel>, #tpu.dimension_semantics<parallel>, #tpu.dimension_semantics<arbitrary>], iteration_bounds = array<i64: 2, 1, 1>, scalar_prefetch = 0 : i64, scratch_operands = 0 : i64, tpu.core_type = #tpu.core_type<tc>, window_params = [{transform_indices = @transform_0, window_bounds = array<i64: 784, 9>}, {transform_indices = @transform_1, window_bounds = array<i64: 9, 16>}, {transform_indices = @transform_2, window_bounds = array<i64: 1, 16>}, {transform_indices = @transform_3, window_bounds = array<i64: 784, 16>}]} {
    %c0 = arith.constant 0 : index
    %c0_0 = arith.constant 0 : index
    %0 = vector.load %arg3[%c0, %c0_0] : memref<784x9xbf16, #tpu.memory_space<vmem>>, vector<784x9xbf16>
    %c0_1 = arith.constant 0 : index
    %c0_2 = arith.constant 0 : index
    %1 = vector.load %arg4[%c0_1, %c0_2] : memref<9x16xbf16, #tpu.memory_space<vmem>>, vector<9x16xbf16>
    %cst = arith.constant dense<0.000000e+00> : vector<784x16xf32>
    %2 = tpu.matmul %0, %1, %cst {dimension_numbers = #tpu.dot_dimension_numbers<[1], [0], [0], [1], [0, 0, 1, 1], [], []>} : vector<784x9xbf16>, vector<9x16xbf16>, vector<784x16xf32> -> vector<784x16xf32>
    %c0_3 = arith.constant 0 : index
    %c0_4 = arith.constant 0 : index
    %3 = vector.load %arg5[%c0_3, %c0_4] : memref<1x16xf32, #tpu.memory_space<vmem>>, vector<1x16xf32>
    %4 = vector.broadcast %3 : vector<1x16xf32> to vector<784x16xf32>
    %5 = arith.addf %2, %4 : vector<784x16xf32>
    %cst_5 = arith.constant 0.000000e+00 : f32
    %6 = vector.broadcast %cst_5 : f32 to vector<784x16xf32>
    %7 = arith.maximumf %5, %6 : vector<784x16xf32>
    %c0_6 = arith.constant 0 : index
    %c0_7 = arith.constant 0 : index
    %8 = vector.load %arg6[%c0_6, %c0_7] : memref<784x16xf32, #tpu.memory_space<vmem>>, vector<784x16xf32>
    tpu.vector_store %arg6[%c0_6, %c0_7], %7 {strides = array<i32>} : memref<784x16xf32, #tpu.memory_space<vmem>>, vector<784x16xf32>,
    return
  }
  func.func @transform_0(%arg0: i32, %arg1: i32, %arg2: i32) -> (i32, i32) {
    %c0_i32 = arith.constant 0 : i32
    return %arg0, %arg2 : i32, i32
  }
  func.func @transform_1(%arg0: i32, %arg1: i32, %arg2: i32) -> (i32, i32) {
    %c0_i32 = arith.constant 0 : i32
    return %arg2, %arg1 : i32, i32
  }
  func.func @transform_2(%arg0: i32, %arg1: i32, %arg2: i32) -> (i32, i32) {
    %c0_i32 = arith.constant 0 : i32
    %c0_i32_0 = arith.constant 0 : i32
    return %c0_i32, %arg1 : i32, i32
  }
  func.func @transform_3(%arg0: i32, %arg1: i32, %arg2: i32) -> (i32, i32) {
    %c0_i32 = arith.constant 0 : i32
    return %arg0, %arg1 : i32, i32
  }
}

module attributes {stable_mosaic.version = 11 : i64} {
  func.func @_mm_bias_kernel(%arg0: i32, %arg1: i32, %arg2: i32, %arg3: memref<784x144xbf16, #tpu.memory_space<vmem>>, %arg4: memref<144x16xbf16, #tpu.memory_space<vmem>>, %arg5: memref<1x16xf32, #tpu.memory_space<vmem>>, %arg6: memref<784x16xf32, #tpu.memory_space<vmem>>) attributes {dimension_semantics = [#tpu.dimension_semantics<parallel>, #tpu.dimension_semantics<parallel>, #tpu.dimension_semantics<arbitrary>], iteration_bounds = array<i64: 2, 1, 1>, scalar_prefetch = 0 : i64, scratch_operands = 0 : i64, tpu.core_type = #tpu.core_type<tc>, window_params = [{transform_indices = @transform_0, window_bounds = array<i64: 784, 144>}, {transform_indices = @transform_1, window_bounds = array<i64: 144, 16>}, {transform_indices = @transform_2, window_bounds = array<i64: 1, 16>}, {transform_indices = @transform_3, window_bounds = array<i64: 784, 16>}]} {
    %c0 = arith.constant 0 : index
    %c0_0 = arith.constant 0 : index
    %0 = vector.load %arg3[%c0, %c0_0] : memref<784x144xbf16, #tpu.memory_space<vmem>>, vector<784x144xbf16>
    %c0_1 = arith.constant 0 : index
    %c0_2 = arith.constant 0 : index
    %1 = vector.load %arg4[%c0_1, %c0_2] : memref<144x16xbf16, #tpu.memory_space<vmem>>, vector<144x16xbf16>
    %cst = arith.constant dense<0.000000e+00> : vector<784x16xf32>
    %2 = tpu.matmul %0, %1, %cst {dimension_numbers = #tpu.dot_dimension_numbers<[1], [0], [0], [1], [0, 0, 1, 1], [], []>} : vector<784x144xbf16>, vector<144x16xbf16>, vector<784x16xf32> -> vector<784x16xf32>
    %c0_3 = arith.constant 0 : index
    %c0_4 = arith.constant 0 : index
    %3 = vector.load %arg5[%c0_3, %c0_4] : memref<1x16xf32, #tpu.memory_space<vmem>>, vector<1x16xf32>
    %4 = vector.broadcast %3 : vector<1x16xf32> to vector<784x16xf32>
    %5 = arith.addf %2, %4 : vector<784x16xf32>
    %cst_5 = arith.constant 0.000000e+00 : f32
    %6 = vector.broadcast %cst_5 : f32 to vector<784x16xf32>
    %7 = arith.maximumf %5, %6 : vector<784x16xf32>
    %c0_6 = arith.constant 0 : index
    %c0_7 = arith.constant 0 : index
    %8 = vector.load %arg6[%c0_6, %c0_7] : memref<784x16xf32, #tpu.memory_space<vmem>>, vector<784x16xf32>
    tpu.vector_store %arg6[%c0_6, %c0_7], %7 {strides = array<i32>} : memref<784x16xf32, #tpu.memory_space<vmem>>, vector<784x16xf32>,
    return
  }
  func.func @transform_0(%arg0: i32, %arg1: i32, %arg2: i32) -> (i32, i32) {
    %c0_i32 = arith.constant 0 : i32
    return %arg0, %arg2 : i32, i32
  }
  func.func @transform_1(%arg0: i32, %arg1: i32, %arg2: i32) -> (i32, i32) {
    %c0_i32 = arith.constant 0 : i32
    return %arg2, %arg1 : i32, i32
  }
  func.func @transform_2(%arg0: i32, %arg1: i32, %arg2: i32) -> (i32, i32) {
    %c0_i32 = arith.constant 0 : i32
    %c0_i32_0 = arith.constant 0 : i32
    return %c0_i32, %arg1 : i32, i32
  }
  func.func @transform_3(%arg0: i32, %arg1: i32, %arg2: i32) -> (i32, i32) {
    %c0_i32 = arith.constant 0 : i32
    return %arg0, %arg1 : i32, i32
  }
}

module attributes {stable_mosaic.version = 11 : i64} {
  func.func @_pool_bn_kernel(%arg0: i32, %arg1: memref<1x28x448xf32, #tpu.memory_space<vmem>>, %arg2: memref<1x432xf32, #tpu.memory_space<vmem>>, %arg3: memref<1x432xf32, #tpu.memory_space<vmem>>, %arg4: memref<1x27x432xf32, #tpu.memory_space<vmem>>) attributes {dimension_semantics = [#tpu.dimension_semantics<parallel>], iteration_bounds = array<i64: 2>, scalar_prefetch = 0 : i64, scratch_operands = 0 : i64, tpu.core_type = #tpu.core_type<tc>, window_params = [{transform_indices = @transform_0, window_bounds = array<i64: 1, 28, 448>}, {pipeline_mode = #tpu.pipeline_mode<synchronous>, transform_indices = @transform_1, window_bounds = array<i64: 1, 432>}, {pipeline_mode = #tpu.pipeline_mode<synchronous>, transform_indices = @transform_2, window_bounds = array<i64: 1, 432>}, {transform_indices = @transform_3, window_bounds = array<i64: 1, 27, 432>}]} {
    %c0 = arith.constant 0 : index
    %c0_0 = arith.constant 0 : index
    %c0_1 = arith.constant 0 : index
    %0 = vector.load %arg1[%c0, %c0_0, %c0_1] : memref<1x28x448xf32, #tpu.memory_space<vmem>>, vector<1x28x448xf32>
    %1 = vector.shape_cast %0 : vector<1x28x448xf32> to vector<28x448xf32>
    %2 = vector.extract_strided_slice %1 {offsets = [0, 0], sizes = [27, 448], strides = [1, 1]} : vector<28x448xf32> to vector<27x448xf32>
    %3 = vector.extract_strided_slice %1 {offsets = [1, 0], sizes = [27, 448], strides = [1, 1]} : vector<28x448xf32> to vector<27x448xf32>
    %4 = arith.maximumf %2, %3 : vector<27x448xf32>
    %5 = vector.extract_strided_slice %4 {offsets = [0, 0], sizes = [27, 432], strides = [1, 1]} : vector<27x448xf32> to vector<27x432xf32>
    %6 = vector.extract_strided_slice %4 {offsets = [0, 16], sizes = [27, 432], strides = [1, 1]} : vector<27x448xf32> to vector<27x432xf32>
    %7 = arith.maximumf %5, %6 : vector<27x432xf32>
    %c0_2 = arith.constant 0 : index
    %c0_3 = arith.constant 0 : index
    %8 = vector.load %arg2[%c0_2, %c0_3] : memref<1x432xf32, #tpu.memory_space<vmem>>, vector<1x432xf32>
    %9 = vector.broadcast %8 : vector<1x432xf32> to vector<27x432xf32>
    %10 = arith.mulf %7, %9 : vector<27x432xf32>
    %c0_4 = arith.constant 0 : index
    %c0_5 = arith.constant 0 : index
    %11 = vector.load %arg3[%c0_4, %c0_5] : memref<1x432xf32, #tpu.memory_space<vmem>>, vector<1x432xf32>
    %12 = vector.broadcast %11 : vector<1x432xf32> to vector<27x432xf32>
    %13 = arith.addf %10, %12 : vector<27x432xf32>
    %c0_6 = arith.constant 0 : index
    %c0_7 = arith.constant 0 : index
    %c0_8 = arith.constant 0 : index
    %14 = vector.load %arg4[%c0_6, %c0_7, %c0_8] : memref<1x27x432xf32, #tpu.memory_space<vmem>>, vector<1x27x432xf32>
    %15 = vector.shape_cast %14 : vector<1x27x432xf32> to vector<27x432xf32>
    %16 = vector.shape_cast %13 : vector<27x432xf32> to vector<1x27x432xf32>
    tpu.vector_store %arg4[%c0_6, %c0_7, %c0_8], %16 {strides = array<i32>} : memref<1x27x432xf32, #tpu.memory_space<vmem>>, vector<1x27x432xf32>,
    return
  }
  func.func @transform_0(%arg0: i32) -> (i32, i32, i32) {
    %c0_i32 = arith.constant 0 : i32
    %c0_i32_0 = arith.constant 0 : i32
    %c0_i32_1 = arith.constant 0 : i32
    return %arg0, %c0_i32, %c0_i32_0 : i32, i32, i32
  }
  func.func @transform_1(%arg0: i32) -> (i32, i32) {
    %c0_i32 = arith.constant 0 : i32
    %c0_i32_0 = arith.constant 0 : i32
    %c0_i32_1 = arith.constant 0 : i32
    return %c0_i32, %c0_i32_0 : i32, i32
  }
  func.func @transform_2(%arg0: i32) -> (i32, i32) {
    %c0_i32 = arith.constant 0 : i32
    %c0_i32_0 = arith.constant 0 : i32
    %c0_i32_1 = arith.constant 0 : i32
    return %c0_i32, %c0_i32_0 : i32, i32
  }
  func.func @transform_3(%arg0: i32) -> (i32, i32, i32) {
    %c0_i32 = arith.constant 0 : i32
    %c0_i32_0 = arith.constant 0 : i32
    %c0_i32_1 = arith.constant 0 : i32
    return %arg0, %c0_i32, %c0_i32_0 : i32, i32, i32
  }
}

module attributes {stable_mosaic.version = 11 : i64} {
  func.func @_mm_bias_kernel(%arg0: i32, %arg1: i32, %arg2: i32, %arg3: memref<736x144xbf16, #tpu.memory_space<vmem>>, %arg4: memref<144x32xbf16, #tpu.memory_space<vmem>>, %arg5: memref<1x32xf32, #tpu.memory_space<vmem>>, %arg6: memref<736x32xf32, #tpu.memory_space<vmem>>) attributes {dimension_semantics = [#tpu.dimension_semantics<parallel>, #tpu.dimension_semantics<parallel>, #tpu.dimension_semantics<arbitrary>], iteration_bounds = array<i64: 2, 1, 1>, scalar_prefetch = 0 : i64, scratch_operands = 0 : i64, tpu.core_type = #tpu.core_type<tc>, window_params = [{transform_indices = @transform_0, window_bounds = array<i64: 736, 144>}, {transform_indices = @transform_1, window_bounds = array<i64: 144, 32>}, {transform_indices = @transform_2, window_bounds = array<i64: 1, 32>}, {transform_indices = @transform_3, window_bounds = array<i64: 736, 32>}]} {
    %c0 = arith.constant 0 : index
    %c0_0 = arith.constant 0 : index
    %0 = vector.load %arg3[%c0, %c0_0] : memref<736x144xbf16, #tpu.memory_space<vmem>>, vector<736x144xbf16>
    %c0_1 = arith.constant 0 : index
    %c0_2 = arith.constant 0 : index
    %1 = vector.load %arg4[%c0_1, %c0_2] : memref<144x32xbf16, #tpu.memory_space<vmem>>, vector<144x32xbf16>
    %cst = arith.constant dense<0.000000e+00> : vector<736x32xf32>
    %2 = tpu.matmul %0, %1, %cst {dimension_numbers = #tpu.dot_dimension_numbers<[1], [0], [0], [1], [0, 0, 1, 1], [], []>} : vector<736x144xbf16>, vector<144x32xbf16>, vector<736x32xf32> -> vector<736x32xf32>
    %c0_3 = arith.constant 0 : index
    %c0_4 = arith.constant 0 : index
    %3 = vector.load %arg5[%c0_3, %c0_4] : memref<1x32xf32, #tpu.memory_space<vmem>>, vector<1x32xf32>
    %4 = vector.broadcast %3 : vector<1x32xf32> to vector<736x32xf32>
    %5 = arith.addf %2, %4 : vector<736x32xf32>
    %cst_5 = arith.constant 0.000000e+00 : f32
    %6 = vector.broadcast %cst_5 : f32 to vector<736x32xf32>
    %7 = arith.maximumf %5, %6 : vector<736x32xf32>
    %c0_6 = arith.constant 0 : index
    %c0_7 = arith.constant 0 : index
    %8 = vector.load %arg6[%c0_6, %c0_7] : memref<736x32xf32, #tpu.memory_space<vmem>>, vector<736x32xf32>
    tpu.vector_store %arg6[%c0_6, %c0_7], %7 {strides = array<i32>} : memref<736x32xf32, #tpu.memory_space<vmem>>, vector<736x32xf32>,
    return
  }
  func.func @transform_0(%arg0: i32, %arg1: i32, %arg2: i32) -> (i32, i32) {
    %c0_i32 = arith.constant 0 : i32
    return %arg0, %arg2 : i32, i32
  }
  func.func @transform_1(%arg0: i32, %arg1: i32, %arg2: i32) -> (i32, i32) {
    %c0_i32 = arith.constant 0 : i32
    return %arg2, %arg1 : i32, i32
  }
  func.func @transform_2(%arg0: i32, %arg1: i32, %arg2: i32) -> (i32, i32) {
    %c0_i32 = arith.constant 0 : i32
    %c0_i32_0 = arith.constant 0 : i32
    return %c0_i32, %arg1 : i32, i32
  }
  func.func @transform_3(%arg0: i32, %arg1: i32, %arg2: i32) -> (i32, i32) {
    %c0_i32 = arith.constant 0 : i32
    return %arg0, %arg1 : i32, i32
  }
}

module attributes {stable_mosaic.version = 11 : i64} {
  func.func @_mm_bias_kernel(%arg0: i32, %arg1: i32, %arg2: i32, %arg3: memref<736x288xbf16, #tpu.memory_space<vmem>>, %arg4: memref<288x32xbf16, #tpu.memory_space<vmem>>, %arg5: memref<1x32xf32, #tpu.memory_space<vmem>>, %arg6: memref<736x32xf32, #tpu.memory_space<vmem>>) attributes {dimension_semantics = [#tpu.dimension_semantics<parallel>, #tpu.dimension_semantics<parallel>, #tpu.dimension_semantics<arbitrary>], iteration_bounds = array<i64: 2, 1, 1>, scalar_prefetch = 0 : i64, scratch_operands = 0 : i64, tpu.core_type = #tpu.core_type<tc>, window_params = [{transform_indices = @transform_0, window_bounds = array<i64: 736, 288>}, {transform_indices = @transform_1, window_bounds = array<i64: 288, 32>}, {transform_indices = @transform_2, window_bounds = array<i64: 1, 32>}, {transform_indices = @transform_3, window_bounds = array<i64: 736, 32>}]} {
    %c0 = arith.constant 0 : index
    %c0_0 = arith.constant 0 : index
    %0 = vector.load %arg3[%c0, %c0_0] : memref<736x288xbf16, #tpu.memory_space<vmem>>, vector<736x288xbf16>
    %c0_1 = arith.constant 0 : index
    %c0_2 = arith.constant 0 : index
    %1 = vector.load %arg4[%c0_1, %c0_2] : memref<288x32xbf16, #tpu.memory_space<vmem>>, vector<288x32xbf16>
    %cst = arith.constant dense<0.000000e+00> : vector<736x32xf32>
    %2 = tpu.matmul %0, %1, %cst {dimension_numbers = #tpu.dot_dimension_numbers<[1], [0], [0], [1], [0, 0, 1, 1], [], []>} : vector<736x288xbf16>, vector<288x32xbf16>, vector<736x32xf32> -> vector<736x32xf32>
    %c0_3 = arith.constant 0 : index
    %c0_4 = arith.constant 0 : index
    %3 = vector.load %arg5[%c0_3, %c0_4] : memref<1x32xf32, #tpu.memory_space<vmem>>, vector<1x32xf32>
    %4 = vector.broadcast %3 : vector<1x32xf32> to vector<736x32xf32>
    %5 = arith.addf %2, %4 : vector<736x32xf32>
    %cst_5 = arith.constant 0.000000e+00 : f32
    %6 = vector.broadcast %cst_5 : f32 to vector<736x32xf32>
    %7 = arith.maximumf %5, %6 : vector<736x32xf32>
    %c0_6 = arith.constant 0 : index
    %c0_7 = arith.constant 0 : index
    %8 = vector.load %arg6[%c0_6, %c0_7] : memref<736x32xf32, #tpu.memory_space<vmem>>, vector<736x32xf32>
    tpu.vector_store %arg6[%c0_6, %c0_7], %7 {strides = array<i32>} : memref<736x32xf32, #tpu.memory_space<vmem>>, vector<736x32xf32>,
    return
  }
  func.func @transform_0(%arg0: i32, %arg1: i32, %arg2: i32) -> (i32, i32) {
    %c0_i32 = arith.constant 0 : i32
    return %arg0, %arg2 : i32, i32
  }
  func.func @transform_1(%arg0: i32, %arg1: i32, %arg2: i32) -> (i32, i32) {
    %c0_i32 = arith.constant 0 : i32
    return %arg2, %arg1 : i32, i32
  }
  func.func @transform_2(%arg0: i32, %arg1: i32, %arg2: i32) -> (i32, i32) {
    %c0_i32 = arith.constant 0 : i32
    %c0_i32_0 = arith.constant 0 : i32
    return %c0_i32, %arg1 : i32, i32
  }
  func.func @transform_3(%arg0: i32, %arg1: i32, %arg2: i32) -> (i32, i32) {
    %c0_i32 = arith.constant 0 : i32
    return %arg0, %arg1 : i32, i32
  }
}

module attributes {stable_mosaic.version = 11 : i64} {
  func.func @_pool_bn_kernel(%arg0: i32, %arg1: memref<1x27x864xf32, #tpu.memory_space<vmem>>, %arg2: memref<1x832xf32, #tpu.memory_space<vmem>>, %arg3: memref<1x832xf32, #tpu.memory_space<vmem>>, %arg4: memref<1x26x832xf32, #tpu.memory_space<vmem>>) attributes {dimension_semantics = [#tpu.dimension_semantics<parallel>], iteration_bounds = array<i64: 2>, scalar_prefetch = 0 : i64, scratch_operands = 0 : i64, tpu.core_type = #tpu.core_type<tc>, window_params = [{transform_indices = @transform_0, window_bounds = array<i64: 1, 27, 864>}, {pipeline_mode = #tpu.pipeline_mode<synchronous>, transform_indices = @transform_1, window_bounds = array<i64: 1, 832>}, {pipeline_mode = #tpu.pipeline_mode<synchronous>, transform_indices = @transform_2, window_bounds = array<i64: 1, 832>}, {transform_indices = @transform_3, window_bounds = array<i64: 1, 26, 832>}]} {
    %c0 = arith.constant 0 : index
    %c0_0 = arith.constant 0 : index
    %c0_1 = arith.constant 0 : index
    %0 = vector.load %arg1[%c0, %c0_0, %c0_1] : memref<1x27x864xf32, #tpu.memory_space<vmem>>, vector<1x27x864xf32>
    %1 = vector.shape_cast %0 : vector<1x27x864xf32> to vector<27x864xf32>
    %2 = vector.extract_strided_slice %1 {offsets = [0, 0], sizes = [26, 864], strides = [1, 1]} : vector<27x864xf32> to vector<26x864xf32>
    %3 = vector.extract_strided_slice %1 {offsets = [1, 0], sizes = [26, 864], strides = [1, 1]} : vector<27x864xf32> to vector<26x864xf32>
    %4 = arith.maximumf %2, %3 : vector<26x864xf32>
    %5 = vector.extract_strided_slice %4 {offsets = [0, 0], sizes = [26, 832], strides = [1, 1]} : vector<26x864xf32> to vector<26x832xf32>
    %6 = vector.extract_strided_slice %4 {offsets = [0, 32], sizes = [26, 832], strides = [1, 1]} : vector<26x864xf32> to vector<26x832xf32>
    %7 = arith.maximumf %5, %6 : vector<26x832xf32>
    %c0_2 = arith.constant 0 : index
    %c0_3 = arith.constant 0 : index
    %8 = vector.load %arg2[%c0_2, %c0_3] : memref<1x832xf32, #tpu.memory_space<vmem>>, vector<1x832xf32>
    %9 = vector.broadcast %8 : vector<1x832xf32> to vector<26x832xf32>
    %10 = arith.mulf %7, %9 : vector<26x832xf32>
    %c0_4 = arith.constant 0 : index
    %c0_5 = arith.constant 0 : index
    %11 = vector.load %arg3[%c0_4, %c0_5] : memref<1x832xf32, #tpu.memory_space<vmem>>, vector<1x832xf32>
    %12 = vector.broadcast %11 : vector<1x832xf32> to vector<26x832xf32>
    %13 = arith.addf %10, %12 : vector<26x832xf32>
    %c0_6 = arith.constant 0 : index
    %c0_7 = arith.constant 0 : index
    %c0_8 = arith.constant 0 : index
    %14 = vector.load %arg4[%c0_6, %c0_7, %c0_8] : memref<1x26x832xf32, #tpu.memory_space<vmem>>, vector<1x26x832xf32>
    %15 = vector.shape_cast %14 : vector<1x26x832xf32> to vector<26x832xf32>
    %16 = vector.shape_cast %13 : vector<26x832xf32> to vector<1x26x832xf32>
    tpu.vector_store %arg4[%c0_6, %c0_7, %c0_8], %16 {strides = array<i32>} : memref<1x26x832xf32, #tpu.memory_space<vmem>>, vector<1x26x832xf32>,
    return
  }
  func.func @transform_0(%arg0: i32) -> (i32, i32, i32) {
    %c0_i32 = arith.constant 0 : i32
    %c0_i32_0 = arith.constant 0 : i32
    %c0_i32_1 = arith.constant 0 : i32
    return %arg0, %c0_i32, %c0_i32_0 : i32, i32, i32
  }
  func.func @transform_1(%arg0: i32) -> (i32, i32) {
    %c0_i32 = arith.constant 0 : i32
    %c0_i32_0 = arith.constant 0 : i32
    %c0_i32_1 = arith.constant 0 : i32
    return %c0_i32, %c0_i32_0 : i32, i32
  }
  func.func @transform_2(%arg0: i32) -> (i32, i32) {
    %c0_i32 = arith.constant 0 : i32
    %c0_i32_0 = arith.constant 0 : i32
    %c0_i32_1 = arith.constant 0 : i32
    return %c0_i32, %c0_i32_0 : i32, i32
  }
  func.func @transform_3(%arg0: i32) -> (i32, i32, i32) {
    %c0_i32 = arith.constant 0 : i32
    %c0_i32_0 = arith.constant 0 : i32
    %c0_i32_1 = arith.constant 0 : i32
    return %arg0, %c0_i32, %c0_i32_0 : i32, i32, i32
  }
}

module attributes {stable_mosaic.version = 11 : i64} {
  func.func @_mm_bias_acc_kernel(%arg0: i32, %arg1: i32, %arg2: i32, %arg3: memref<8x1664xbf16, #tpu.memory_space<vmem>>, %arg4: memref<1664x256xbf16, #tpu.memory_space<vmem>>, %arg5: memref<1x256xf32, #tpu.memory_space<vmem>>, %arg6: memref<8x256xf32, #tpu.memory_space<vmem>>, %arg7: memref<8x256xf32, #tpu.memory_space<vmem>>) attributes {dimension_semantics = [#tpu.dimension_semantics<parallel>, #tpu.dimension_semantics<parallel>, #tpu.dimension_semantics<arbitrary>], iteration_bounds = array<i64: 1, 2, 13>, scalar_prefetch = 0 : i64, scratch_operands = 1 : i64, tpu.core_type = #tpu.core_type<tc>, window_params = [{transform_indices = @transform_0, window_bounds = array<i64: 8, 1664>}, {transform_indices = @transform_1, window_bounds = array<i64: 1664, 256>}, {transform_indices = @transform_2, window_bounds = array<i64: 1, 256>}, {transform_indices = @transform_3, window_bounds = array<i64: 8, 256>}]} {
    %c0_i32 = arith.constant 0 : i32
    %0 = arith.cmpi eq, %arg2, %c0_i32 : i32
    %1 = arith.extui %0 : i1 to i32
    %c0_i32_0 = arith.constant 0 : i32
    %2 = arith.cmpi ne, %1, %c0_i32_0 : i32
    scf.if %2 {
      %cst_9 = arith.constant 0.000000e+00 : f32
      %12 = vector.broadcast %cst_9 : f32 to vector<8x256xf32>
      %c0_10 = arith.constant 0 : index
      %c0_11 = arith.constant 0 : index
      %13 = vector.load %arg7[%c0_10, %c0_11] : memref<8x256xf32, #tpu.memory_space<vmem>>, vector<8x256xf32>
      tpu.vector_store %arg7[%c0_10, %c0_11], %12 {strides = array<i32>} : memref<8x256xf32, #tpu.memory_space<vmem>>, vector<8x256xf32>,
    } else {
    }
    %c0 = arith.constant 0 : index
    %c0_1 = arith.constant 0 : index
    %3 = vector.load %arg7[%c0, %c0_1] : memref<8x256xf32, #tpu.memory_space<vmem>>, vector<8x256xf32>
    %c0_2 = arith.constant 0 : index
    %c0_3 = arith.constant 0 : index
    %4 = vector.load %arg3[%c0_2, %c0_3] : memref<8x1664xbf16, #tpu.memory_space<vmem>>, vector<8x1664xbf16>
    %c0_4 = arith.constant 0 : index
    %c0_5 = arith.constant 0 : index
    %5 = vector.load %arg4[%c0_4, %c0_5] : memref<1664x256xbf16, #tpu.memory_space<vmem>>, vector<1664x256xbf16>
    %cst = arith.constant dense<0.000000e+00> : vector<8x256xf32>
    %6 = tpu.matmul %4, %5, %cst {dimension_numbers = #tpu.dot_dimension_numbers<[1], [0], [0], [1], [0, 0, 1, 1], [], []>} : vector<8x1664xbf16>, vector<1664x256xbf16>, vector<8x256xf32> -> vector<8x256xf32>
    %7 = arith.addf %3, %6 : vector<8x256xf32>
    %c0_6 = arith.constant 0 : index
    %c0_7 = arith.constant 0 : index
    %8 = vector.load %arg7[%c0_6, %c0_7] : memref<8x256xf32, #tpu.memory_space<vmem>>, vector<8x256xf32>
    tpu.vector_store %arg7[%c0_6, %c0_7], %7 {strides = array<i32>} : memref<8x256xf32, #tpu.memory_space<vmem>>, vector<8x256xf32>,
    %c12_i32 = arith.constant 12 : i32
    %9 = arith.cmpi eq, %arg2, %c12_i32 : i32
    %10 = arith.extui %9 : i1 to i32
    %c0_i32_8 = arith.constant 0 : i32
    %11 = arith.cmpi ne, %10, %c0_i32_8 : i32
    scf.if %11 {
      %c0_9 = arith.constant 0 : index
      %c0_10 = arith.constant 0 : index
      %12 = vector.load %arg7[%c0_9, %c0_10] : memref<8x256xf32, #tpu.memory_space<vmem>>, vector<8x256xf32>
      %c0_11 = arith.constant 0 : index
      %c0_12 = arith.constant 0 : index
      %13 = vector.load %arg5[%c0_11, %c0_12] : memref<1x256xf32, #tpu.memory_space<vmem>>, vector<1x256xf32>
      %14 = vector.broadcast %13 : vector<1x256xf32> to vector<8x256xf32>
      %15 = arith.addf %12, %14 : vector<8x256xf32>
      %cst_13 = arith.constant 0.000000e+00 : f32
      %16 = vector.broadcast %cst_13 : f32 to vector<8x256xf32>
      %17 = arith.maximumf %15, %16 : vector<8x256xf32>
      %c0_14 = arith.constant 0 : index
      %c0_15 = arith.constant 0 : index
      %18 = vector.load %arg6[%c0_14, %c0_15] : memref<8x256xf32, #tpu.memory_space<vmem>>, vector<8x256xf32>
      tpu.vector_store %arg6[%c0_14, %c0_15], %17 {strides = array<i32>} : memref<8x256xf32, #tpu.memory_space<vmem>>, vector<8x256xf32>,
    } else {
    }
    return
  }
  func.func @transform_0(%arg0: i32, %arg1: i32, %arg2: i32) -> (i32, i32) {
    %c0_i32 = arith.constant 0 : i32
    return %arg0, %arg2 : i32, i32
  }
  func.func @transform_1(%arg0: i32, %arg1: i32, %arg2: i32) -> (i32, i32) {
    %c0_i32 = arith.constant 0 : i32
    return %arg2, %arg1 : i32, i32
  }
  func.func @transform_2(%arg0: i32, %arg1: i32, %arg2: i32) -> (i32, i32) {
    %c0_i32 = arith.constant 0 : i32
    %c0_i32_0 = arith.constant 0 : i32
    return %c0_i32, %arg1 : i32, i32
  }
  func.func @transform_3(%arg0: i32, %arg1: i32, %arg2: i32) -> (i32, i32) {
    %c0_i32 = arith.constant 0 : i32
    return %arg0, %arg1 : i32, i32
  }
}

module attributes {stable_mosaic.version = 11 : i64} {
  func.func @_mm_bias_kernel(%arg0: i32, %arg1: i32, %arg2: i32, %arg3: memref<8x512xbf16, #tpu.memory_space<vmem>>, %arg4: memref<512x10xbf16, #tpu.memory_space<vmem>>, %arg5: memref<1x10xf32, #tpu.memory_space<vmem>>, %arg6: memref<8x10xf32, #tpu.memory_space<vmem>>) attributes {dimension_semantics = [#tpu.dimension_semantics<parallel>, #tpu.dimension_semantics<parallel>, #tpu.dimension_semantics<arbitrary>], iteration_bounds = array<i64: 1, 1, 1>, scalar_prefetch = 0 : i64, scratch_operands = 0 : i64, tpu.core_type = #tpu.core_type<tc>, window_params = [{transform_indices = @transform_0, window_bounds = array<i64: 8, 512>}, {transform_indices = @transform_1, window_bounds = array<i64: 512, 10>}, {transform_indices = @transform_2, window_bounds = array<i64: 1, 10>}, {transform_indices = @transform_3, window_bounds = array<i64: 8, 10>}]} {
    %c0 = arith.constant 0 : index
    %c0_0 = arith.constant 0 : index
    %0 = vector.load %arg3[%c0, %c0_0] : memref<8x512xbf16, #tpu.memory_space<vmem>>, vector<8x512xbf16>
    %c0_1 = arith.constant 0 : index
    %c0_2 = arith.constant 0 : index
    %1 = vector.load %arg4[%c0_1, %c0_2] : memref<512x10xbf16, #tpu.memory_space<vmem>>, vector<512x10xbf16>
    %cst = arith.constant dense<0.000000e+00> : vector<8x10xf32>
    %2 = tpu.matmul %0, %1, %cst {dimension_numbers = #tpu.dot_dimension_numbers<[1], [0], [0], [1], [0, 0, 1, 1], [], []>} : vector<8x512xbf16>, vector<512x10xbf16>, vector<8x10xf32> -> vector<8x10xf32>
    %c0_3 = arith.constant 0 : index
    %c0_4 = arith.constant 0 : index
    %3 = vector.load %arg5[%c0_3, %c0_4] : memref<1x10xf32, #tpu.memory_space<vmem>>, vector<1x10xf32>
    %4 = vector.broadcast %3 : vector<1x10xf32> to vector<8x10xf32>
    %5 = arith.addf %2, %4 : vector<8x10xf32>
    %c0_5 = arith.constant 0 : index
    %c0_6 = arith.constant 0 : index
    %6 = vector.load %arg6[%c0_5, %c0_6] : memref<8x10xf32, #tpu.memory_space<vmem>>, vector<8x10xf32>
    tpu.vector_store %arg6[%c0_5, %c0_6], %5 {strides = array<i32>} : memref<8x10xf32, #tpu.memory_space<vmem>>, vector<8x10xf32>,
    return
  }
  func.func @transform_0(%arg0: i32, %arg1: i32, %arg2: i32) -> (i32, i32) {
    %c0_i32 = arith.constant 0 : i32
    return %arg0, %arg2 : i32, i32
  }
  func.func @transform_1(%arg0: i32, %arg1: i32, %arg2: i32) -> (i32, i32) {
    %c0_i32 = arith.constant 0 : i32
    return %arg2, %arg1 : i32, i32
  }
  func.func @transform_2(%arg0: i32, %arg1: i32, %arg2: i32) -> (i32, i32) {
    %c0_i32 = arith.constant 0 : i32
    %c0_i32_0 = arith.constant 0 : i32
    return %c0_i32, %arg1 : i32, i32
  }
  func.func @transform_3(%arg0: i32, %arg1: i32, %arg2: i32) -> (i32, i32) {
    %c0_i32 = arith.constant 0 : i32
    return %arg0, %arg1 : i32, i32
  }
}

</mosaic_0001>

<llo_original>
// kernel: forward.8
$region0: #{forward.8}
  #allocation0 [shape = 'u32[]', space=smem, size = 0x4, offset = 0x4, fixed_abs, tag = 'smem constant byte address 0x4 - core index']
  #allocation1 [shape = 'u32[144,128]{1,0:T(1,128)}', space=vmem, size = 0x12000, scoped, tag = 'internal scratch']
  %s0 = inlined_call_operand.vmem [shape: bf16[1568,9], index: 0, kind: input, shape index: {}]
  %s1 = inlined_call_operand.hbm [shape: bf16[9,16], index: 1, kind: input, shape index: {}]
  %s2 = inlined_call_operand.hbm [shape: f32[1,16], index: 2, kind: input, shape index: {}]
  %s3 = inlined_call_operand.vmem [shape: f32[1568,16], index: 3, kind: output, shape index: {}]
  %s4 = sld [smem:[#allocation0]]
  $region53: #{forward.8} parent=0
    _
  %s6 = ssub.s32 1, %s4
  %s7 = scalar_select 0, %s6, %s4
  $region1: #{forward.8} parent=0
    #allocation2 [shape = 'u8[4096]{0}', space=vmem, size = 0x1000, scoped, tag = 'input window, operand 1, single buffered']
    #allocation3 [shape = 's32[2]{0}', space=sflag, size = 0x8, scoped, tag = 'scoped memory for forward.8']
    #allocation4 [shape = 'u8[512]{0}', space=vmem, size = 0x400, scoped, tag = 'input window, operand 2, single buffered']
    #allocation5 [shape = 's32[1]{0}', space=sflag, size = 0x4, scoped, tag = 'scoped memory for forward.8']
    %8 = vsyncpa [#allocation3], 0
    %9 = vsyncpa [#allocation5], 0
    loop: start=0, step=1, limit=4
    $region2: #{forward.8} parent=1 // loop_pre_header
      _
    $region3: #{forward.8} parent=1 // loop_header
      %s11 = sphi 0, %s15
      %p12 = scmp.ge.s32.totalorder %s11, 4
      %s18 = sphi 0, %s37
      %s19 = sphi 0, %s33
      %s20 = sphi 0, %s29
      %s21 = sphi 0, %s18
      %s22 = sphi 0, %s19
      %s23 = sphi 0, %s20
      %s24 = sphi 0, %s21
      %s25 = sphi 0, %s22
      %s26 = sphi 0, %s23
      %s42 = sphi 0, %s44
      %s45 = sphi 0, %s42
      %s46 = sphi 0, %s45
      %s62 = sphi 0, %s46
      %s70 = sphi 0, %s72
      %s73 = sphi 0, %s70
      %s74 = sphi 0, %s73
      %s90 = sphi 0, %s74
      %s96 = sphi 0, %s98
      %s99 = sphi 0, %s96
      %s100 = sphi 0, %s99
      %s116 = sphi 0, %s100
      %s124 = sphi 0, %s126
      %s127 = sphi 0, %s124
      %s128 = sphi 0, %s127
      %s144 = sphi 0, %s128
    $region4: #{forward.8} parent=1 // loop_header_branch
      %14 = sbr.rel (%p12) target = $region8
    $region5: #{forward.8} parent=1 // loop_body
      %s16 = ssub.s32 %s11, 1
      %s17 = ssub.s32 %s11, 2
      %s27 = sadd.s32 1, %s20
      %p28 = scmp.ge.s32.totalorder %s27, 1
      %s29 = scalar_select %p28, 0, %s27
      %s30 = sadd.s32 1, %s19
      %s31 = scalar_select %p28, %s30, %s19
      %p32 = scmp.ge.s32.totalorder %s31, 1
      %s33 = scalar_select %p32, 0, %s31
      %s34 = sadd.s32 1, %s18
      %s35 = scalar_select %p32, %s34, %s18
      %p36 = scmp.ge.s32.totalorder %s35, 2
      %s37 = scalar_select %p36, 0, %s35
      %s38 = ssub.s32 %s18, %s37
      %s39 = ssub.s32 %s20, %s29
      %s40 = sor.u32 %s38, %s39
      %p41 = scmp.eq.s32.totalorder %s40, 0
      %s43 = sadd.s32 %s42, 1
      %s44 = scalar_select %p41, %s42, %s43
      %p47 = pneg %p41
      %p48 = scmp.eq.s32.totalorder %s11, 1
      %p49 = por %p47, %p48
      %p50 = scmp.ne.s32.totalorder %s42, %s45
      %p51 = scmp.eq.s32.totalorder %s11, 0
      %p52 = por %p50, %p51
      %p53 = scmp.ne.s32.totalorder %s42, %s45
      %p54 = scmp.eq.s32.totalorder %s16, 1
      %p55 = por %p53, %p54
      %p56 = scmp.ne.s32.totalorder %s45, %s46
      %p57 = scmp.eq.s32.totalorder %s16, 0
      %p58 = por %p56, %p57
      %p59 = scmp.ne.s32.totalorder %s45, %s46
      %p60 = scmp.eq.s32.totalorder %s17, 1
      %p61 = por %p59, %p60
      %p63 = scmp.ne.s32.totalorder %s46, %s62
      %p64 = scmp.eq.s32.totalorder %s17, 0
      %p65 = por %p63, %p64
      %s66 = ssub.s32 %s20, %s29
      %s67 = ssub.s32 %s19, %s33
      %s68 = sor.u32 %s66, %s67
      %p69 = scmp.eq.s32.totalorder %s68, 0
      %s71 = sadd.s32 %s70, 1
      %s72 = scalar_select %p69, %s70, %s71
      %p75 = pneg %p69
      %p76 = scmp.eq.s32.totalorder %s11, 1
      %p77 = por %p75, %p76
      %p78 = scmp.ne.s32.totalorder %s70, %s73
      %p79 = scmp.eq.s32.totalorder %s11, 0
      %p80 = por %p78, %p79
      %p81 = scmp.ne.s32.totalorder %s70, %s73
      %p82 = scmp.eq.s32.totalorder %s16, 1
      %p83 = por %p81, %p82
      %p84 = scmp.ne.s32.totalorder %s73, %s74
      %p85 = scmp.eq.s32.totalorder %s16, 0
      %p86 = por %p84, %p85
      %p87 = scmp.ne.s32.totalorder %s73, %s74
      %p88 = scmp.eq.s32.totalorder %s17, 1
      %p89 = por %p87, %p88
      %p91 = scmp.ne.s32.totalorder %s74, %s90
      %p92 = scmp.eq.s32.totalorder %s17, 0
      %p93 = por %p91, %p92
      %s94 = ssub.s32 %s19, %s33
      %p95 = scmp.eq.s32.totalorder %s94, 0
      %s97 = sadd.s32 %s96, 1
      %s98 = scalar_select %p95, %s96, %s97
      %p101 = pneg %p95
      %p102 = scmp.eq.s32.totalorder %s11, 1
      %p103 = por %p101, %p102
      %p104 = scmp.ne.s32.totalorder %s96, %s99
      %p105 = scmp.eq.s32.totalorder %s11, 0
      %p106 = por %p104, %p105
      %p107 = scmp.ne.s32.totalorder %s96, %s99
      %p108 = scmp.eq.s32.totalorder %s16, 1
      %p109 = por %p107, %p108
      %p110 = scmp.ne.s32.totalorder %s99, %s100
      %p111 = scmp.eq.s32.totalorder %s16, 0
      %p112 = por %p110, %p111
      %p113 = scmp.ne.s32.totalorder %s99, %s100
      %p114 = scmp.eq.s32.totalorder %s17, 1
      %p115 = por %p113, %p114
      %p117 = scmp.ne.s32.totalorder %s100, %s116
      %p118 = scmp.eq.s32.totalorder %s17, 0
      %p119 = por %p117, %p118
      %s120 = ssub.s32 %s18, %s37
      %s121 = ssub.s32 %s19, %s33
      %s122 = sor.u32 %s120, %s121
      %p123 = scmp.eq.s32.totalorder %s122, 0
      %s125 = sadd.s32 %s124, 1
      %s126 = scalar_select %p123, %s124, %s125
      %p129 = pneg %p123
      %p130 = scmp.eq.s32.totalorder %s11, 1
      %p131 = por %p129, %p130
      %p132 = scmp.ne.s32.totalorder %s124, %s127
      %p133 = scmp.eq.s32.totalorder %s11, 0
      %p134 = por %p132, %p133
      %p135 = scmp.ne.s32.totalorder %s124, %s127
      %p136 = scmp.eq.s32.totalorder %s16, 1
      %p137 = por %p135, %p136
      %p138 = scmp.ne.s32.totalorder %s127, %s128
      %p139 = scmp.eq.s32.totalorder %s16, 0
      %p140 = por %p138, %p139
      %p141 = scmp.ne.s32.totalorder %s127, %s128
      %p142 = scmp.eq.s32.totalorder %s17, 1
      %p143 = por %p141, %p142
      %p145 = scmp.ne.s32.totalorder %s128, %s144
      %p146 = scmp.eq.s32.totalorder %s17, 0
      %p147 = por %p145, %p146
      %p148 = scmp.le.s32.totalorder 1, %s11
      %p149 = scmp.lt.s32.totalorder %s11, 3
      %p150 = pnand %p148, %p149
      %p151 = pneg %p150
      // Predicated region
      $region9: #{forward.8} parent=5 // pred_check
        _
      $region10: #{forward.8} parent=5 // pred_check_branch
        %153 = sbr.rel (%p150) target = $region12
      $region11: #{forward.8} parent=5 // pred_region
        %s154 = ssub.s32 %s11, 1
        // Predicated region
        $region13: #{forward.8} parent=11 // pred_check
          %p155 = pneg %p86
        $region14: #{forward.8} parent=11 // pred_check_branch
          %157 = sbr.rel (%p155) target = $region16
        $region15: #{forward.8} parent=11 // pred_region
          %s158 = smul.u32 2, %s23
          %s160 = ssub.s32 128, 128
          %161 = vsyncadd [#allocation3], %s160
          %s162 = sadd.s32 %s22, %s158
          %s163 = smul.addr %s162, 64
          %s164 = scalar_lea.hbm %s1, %s163
          %s165 = sshll.u32 [#allocation2], 4
          %s166 = int_to_ptr.vmem [resolvable:$true] %s165
          %171 = dma.hbm_to_vmem [thread:$0]  %s164, 128, %s166, [#allocation3], 64, 64, 4
        $region16: #{forward.8} parent=11 // pred_fallthru
          _
        // Predicated region
        $region17: #{forward.8} parent=11 // pred_check
          %p172 = pneg %p112
        $region18: #{forward.8} parent=11 // pred_check_branch
          %174 = sbr.rel (%p172) target = $region20
        $region19: #{forward.8} parent=11 // pred_region
          %s176 = ssub.s32 16, 16
          %177 = vsyncadd [#allocation5], %s176
          %s178 = smul.addr %s22, 16
          %s179 = scalar_lea.hbm %s2, %s178
          %s181 = sshll.u32 [#allocation4], 4
          %s182 = int_to_ptr.vmem [resolvable:$true] %s181
          %184 = dma.hbm_to_vmem [thread:$0]  %s179, 16, %s182, [#allocation5]
        $region20: #{forward.8} parent=11 // pred_fallthru
          _
      $region12: #{forward.8} parent=5 // pred_fallthru
        _
      %p185 = scmp.lt.s32.totalorder %s11, 2
      // Predicated region
      $region21: #{forward.8} parent=5 // pred_check
        %p186 = pneg %p185
      $region22: #{forward.8} parent=5 // pred_check_branch
        %188 = sbr.rel (%p186) target = $region24
      $region23: #{forward.8} parent=5 // pred_region
        // Predicated region
        $region25: #{forward.8} parent=23 // pred_check
          %p189 = pneg %p52
        $region26: #{forward.8} parent=23 // pred_check_branch
          %191 = sbr.rel (%p189) target = $region28
        $region27: #{forward.8} parent=23 // pred_region
          %s192 = smul.u32 98, %s18
          %p193 = scmp.lt.s32.totalorder %s192, 195
          %s194 = scalar_select %p193, %s192, 195
          %p195 = scmp.lt.s32.totalorder %s20, 0
          %s196 = scalar_select %p195, %s20, 0
          %s197 = sadd.s32 %s196, %s194
          %s198 = smul.addr %s197, 4
          %s199 = scalar_lea.vmem %s0, %s198
          %s200 = smul.u32 98, %s18
        $region28: #{forward.8} parent=23 // pred_fallthru
          _
      $region24: #{forward.8} parent=5 // pred_fallthru
        _
      %p201 = scmp.le.s32.totalorder 1, %s11
      %p202 = scmp.lt.s32.totalorder %s11, 3
      %p203 = pnand %p201, %p202
      %p204 = pneg %p203
      // Predicated region
      $region29: #{forward.8} parent=5 // pred_check
        _
      $region30: #{forward.8} parent=5 // pred_check_branch
        %206 = sbr.rel (%p203) target = $region32
      $region31: #{forward.8} parent=5 // pred_region
        %s207 = ssub.s32 %s11, 1
        // Predicated region
        $region33: #{forward.8} parent=31 // pred_check
          %p208 = pneg %p86
        $region34: #{forward.8} parent=31 // pred_check_branch
          %210 = sbr.rel (%p208) target = $region36
        $region35: #{forward.8} parent=31 // pred_region
          %211 = dma.done [#allocation3], 128
        $region36: #{forward.8} parent=31 // pred_fallthru
          _
        // Predicated region
        $region37: #{forward.8} parent=31 // pred_check
          %p212 = pneg %p112
        $region38: #{forward.8} parent=31 // pred_check_branch
          %214 = sbr.rel (%p212) target = $region40
        $region39: #{forward.8} parent=31 // pred_region
          %215 = dma.done [#allocation5], 16
        $region40: #{forward.8} parent=31 // pred_fallthru
          _
        %s216 = smul.u32 98, %s21
        %p217 = scmp.lt.s32.totalorder %s216, 195
        %s218 = scalar_select %p217, %s216, 195
        %p219 = scmp.lt.s32.totalorder %s23, 0
        %s220 = scalar_select %p219, %s23, 0
        %s221 = sadd.s32 %s220, %s218
        %s222 = smul.addr %s221, 4
        %s223 = scalar_lea.vmem %s0, %s222
        %p224 = pneg %p58
        %p225 = pneg %p55
        %p226 = pneg %p86
        %p227 = pneg %p83
        %p228 = pneg %p112
        %p229 = pneg %p109
        %p230 = pneg %p140
        %p231 = pneg %p137
        %s232 = smul.u32 98, %s21
        %p233 = scmp.lt.s32.totalorder %s232, 195
        %s234 = scalar_select %p233, %s232, 195
        %p235 = scmp.lt.s32.totalorder %s22, 0
        %s236 = scalar_select %p235, %s22, 0
        %s237 = sadd.s32 %s236, %s234
        %s238 = smul.addr %s237, 8
        %s239 = scalar_lea.vmem %s3, %s238
        %s240 = smul.u32 98, %s21
        %p241 = scmp.lt.s32.totalorder %s240, 195
        %s242 = scalar_select %p241, %s240, 195
        %p243 = scmp.lt.s32.totalorder %s23, 0
        %s244 = scalar_select %p243, %s23, 0
        %s245 = sadd.s32 %s244, %s242
        %s246 = smul.addr %s245, 4
        %s247 = scalar_lea.vmem %s0, %s246
        %s248 = smul.u32 98, %s21
        %s249 = smul.u32 2, %s23
        %s250 = smul.u32 98, %s21
        %p251 = scmp.lt.s32.totalorder %s250, 195
        %s252 = scalar_select %p251, %s250, 195
        %p253 = scmp.lt.s32.totalorder %s22, 0
        %s254 = scalar_select %p253, %s22, 0
        %s255 = sadd.s32 %s254, %s252
        %s256 = smul.addr %s255, 8
        %s257 = scalar_lea.vmem %s3, %s256
        %s258 = smul.u32 98, %s21
        %v260 = vld [vmem:[%s247] sm:$0xf]
        %v261 = vld [vmem:[%s247 + $0x4] sm:$0xf]
        %v262 = vld [vmem:[%s247 + $0x8] sm:$0xf]
        %v263 = vld [vmem:[%s247 + $0xc] sm:$0xf]
        %v264 = vld [vmem:[%s247 + $0x10] sm:$0xf]
        %v265 = vld [vmem:[%s247 + $0x14] sm:$0xf]
        %v266 = vld [vmem:[%s247 + $0x18] sm:$0xf]
        %v267 = vld [vmem:[%s247 + $0x1c] sm:$0xf]
        %v268 = vld [vmem:[%s247 + $0x20] sm:$0xf]
        %v269 = vld [vmem:[%s247 + $0x24] sm:$0xf]
        %v270 = vld [vmem:[%s247 + $0x28] sm:$0xf]
        %v271 = vld [vmem:[%s247 + $0x2c] sm:$0xf]
        %v272 = vld [vmem:[%s247 + $0x30] sm:$0xf]
        %v273 = vld [vmem:[%s247 + $0x34] sm:$0xf]
        %v274 = vld [vmem:[%s247 + $0x38] sm:$0xf]
        %v275 = vld [vmem:[%s247 + $0x3c] sm:$0xf]
        %v276 = vld [vmem:[%s247 + $0x40] sm:$0xf]
        %v277 = vld [vmem:[%s247 + $0x44] sm:$0xf]
        %v278 = vld [vmem:[%s247 + $0x48] sm:$0xf]
        %v279 = vld [vmem:[%s247 + $0x4c] sm:$0xf]
        %v280 = vld [vmem:[%s247 + $0x50] sm:$0xf]
        %v281 = vld [vmem:[%s247 + $0x54] sm:$0xf]
        %v282 = vld [vmem:[%s247 + $0x58] sm:$0xf]
        %v283 = vld [vmem:[%s247 + $0x5c] sm:$0xf]
        %v284 = vld [vmem:[%s247 + $0x60] sm:$0xf]
        %v285 = vld [vmem:[%s247 + $0x64] sm:$0xf]
        %v286 = vld [vmem:[%s247 + $0x68] sm:$0xf]
        %v287 = vld [vmem:[%s247 + $0x6c] sm:$0xf]
        %v288 = vld [vmem:[%s247 + $0x70] sm:$0xf]
        %v289 = vld [vmem:[%s247 + $0x74] sm:$0xf]
        %v290 = vld [vmem:[%s247 + $0x78] sm:$0xf]
        %v291 = vld [vmem:[%s247 + $0x7c] sm:$0xf]
        %v292 = vld [vmem:[%s247 + $0x80] sm:$0xf]
        %v293 = vld [vmem:[%s247 + $0x84] sm:$0xf]
        %v294 = vld [vmem:[%s247 + $0x88] sm:$0xf]
        %v295 = vld [vmem:[%s247 + $0x8c] sm:$0xf]
        %v296 = vld [vmem:[%s247 + $0x90] sm:$0xf]
        %v297 = vld [vmem:[%s247 + $0x94] sm:$0xf]
        %v298 = vld [vmem:[%s247 + $0x98] sm:$0xf]
        %v299 = vld [vmem:[%s247 + $0x9c] sm:$0xf]
        %v300 = vld [vmem:[%s247 + $0xa0] sm:$0xf]
        %v301 = vld [vmem:[%s247 + $0xa4] sm:$0xf]
        %v302 = vld [vmem:[%s247 + $0xa8] sm:$0xf]
        %v303 = vld [vmem:[%s247 + $0xac] sm:$0xf]
        %v304 = vld [vmem:[%s247 + $0xb0] sm:$0xf]
        %v305 = vld [vmem:[%s247 + $0xb4] sm:$0xf]
        %v306 = vld [vmem:[%s247 + $0xb8] sm:$0xf]
        %v307 = vld [vmem:[%s247 + $0xbc] sm:$0xf]
        %v308 = vld [vmem:[%s247 + $0xc0] sm:$0xf]
        %v309 = vld [vmem:[%s247 + $0xc4] sm:$0xf]
        %v310 = vld [vmem:[%s247 + $0xc8] sm:$0xf]
        %v311 = vld [vmem:[%s247 + $0xcc] sm:$0xf]
        %v312 = vld [vmem:[%s247 + $0xd0] sm:$0xf]
        %v313 = vld [vmem:[%s247 + $0xd4] sm:$0xf]
        %v314 = vld [vmem:[%s247 + $0xd8] sm:$0xf]
        %v315 = vld [vmem:[%s247 + $0xdc] sm:$0xf]
        %v316 = vld [vmem:[%s247 + $0xe0] sm:$0xf]
        %v317 = vld [vmem:[%s247 + $0xe4] sm:$0xf]
        %v318 = vld [vmem:[%s247 + $0xe8] sm:$0xf]
        %v319 = vld [vmem:[%s247 + $0xec] sm:$0xf]
        %v320 = vld [vmem:[%s247 + $0xf0] sm:$0xf]
        %v321 = vld [vmem:[%s247 + $0xf4] sm:$0xf]
        %v322 = vld [vmem:[%s247 + $0xf8] sm:$0xf]
        %v323 = vld [vmem:[%s247 + $0xfc] sm:$0xf]
        %v324 = vld [vmem:[%s247 + $0x100] sm:$0xf]
        %v325 = vld [vmem:[%s247 + $0x104] sm:$0xf]
        %v326 = vld [vmem:[%s247 + $0x108] sm:$0xf]
        %v327 = vld [vmem:[%s247 + $0x10c] sm:$0xf]
        %v328 = vld [vmem:[%s247 + $0x110] sm:$0xf]
        %v329 = vld [vmem:[%s247 + $0x114] sm:$0xf]
        %v330 = vld [vmem:[%s247 + $0x118] sm:$0xf]
        %v331 = vld [vmem:[%s247 + $0x11c] sm:$0xf]
        %v332 = vld [vmem:[%s247 + $0x120] sm:$0xf]
        %v333 = vld [vmem:[%s247 + $0x124] sm:$0xf]
        %v334 = vld [vmem:[%s247 + $0x128] sm:$0xf]
        %v335 = vld [vmem:[%s247 + $0x12c] sm:$0xf]
        %v336 = vld [vmem:[%s247 + $0x130] sm:$0xf]
        %v337 = vld [vmem:[%s247 + $0x134] sm:$0xf]
        %v338 = vld [vmem:[%s247 + $0x138] sm:$0xf]
        %v339 = vld [vmem:[%s247 + $0x13c] sm:$0xf]
        %v340 = vld [vmem:[%s247 + $0x140] sm:$0xf]
        %v341 = vld [vmem:[%s247 + $0x144] sm:$0xf]
        %v342 = vld [vmem:[%s247 + $0x148] sm:$0xf]
        %v343 = vld [vmem:[%s247 + $0x14c] sm:$0xf]
        %v344 = vld [vmem:[%s247 + $0x150] sm:$0xf]
        %v345 = vld [vmem:[%s247 + $0x154] sm:$0xf]
        %v346 = vld [vmem:[%s247 + $0x158] sm:$0xf]
        %v347 = vld [vmem:[%s247 + $0x15c] sm:$0xf]
        %v348 = vld [vmem:[%s247 + $0x160] sm:$0xf]
        %v349 = vld [vmem:[%s247 + $0x164] sm:$0xf]
        %v350 = vld [vmem:[%s247 + $0x168] sm:$0xf]
        %v351 = vld [vmem:[%s247 + $0x16c] sm:$0xf]
        %v352 = vld [vmem:[%s247 + $0x170] sm:$0xf]
        %v353 = vld [vmem:[%s247 + $0x174] sm:$0xf]
        %v354 = vld [vmem:[%s247 + $0x178] sm:$0xf]
        %v355 = vld [vmem:[%s247 + $0x17c] sm:$0xf]
        %v356 = vld [vmem:[%s247 + $0x180] sm:$0xf]
        %v357 = vld [vmem:[%s247 + $0x184] sm:$0xf]
        %v358 = vld [vmem:[#allocation2] sm:$0xf]
        %v359 = vld [vmem:[#allocation2 + $0x4] sm:$0x1]
        %v360 = vld [vmem:[#allocation4] sm:$0x1]
        %v362 = vlaneseq
        %v363 = vshrl.u32 %v362, 7
        %v364 = vsub.s32 0, %v363
        %v365 = vrot.slane %v360, %v364
        %v465 = vunpack.c.l.b16 %v260
        %v466 = vunpack.c.l.b16 %v261
        %v467 = vunpack.c.l.b16 %v262
        %v468 = vunpack.c.l.b16 %v263
        %v469 = vunpack.c.l.b16 %v264
        %v470 = vunpack.c.l.b16 %v265
        %v471 = vunpack.c.l.b16 %v266
        %v472 = vunpack.c.l.b16 %v267
        %v473 = vunpack.c.l.b16 %v268
        %v474 = vunpack.c.l.b16 %v269
        %v475 = vunpack.c.l.b16 %v270
        %v476 = vunpack.c.l.b16 %v271
        %v477 = vunpack.c.l.b16 %v272
        %v478 = vunpack.c.l.b16 %v273
        %v479 = vunpack.c.l.b16 %v274
        %v480 = vunpack.c.l.b16 %v275
        %v481 = vunpack.c.l.b16 %v276
        %v482 = vunpack.c.l.b16 %v277
        %v483 = vunpack.c.l.b16 %v278
        %v484 = vunpack.c.l.b16 %v279
        %v485 = vunpack.c.l.b16 %v280
        %v486 = vunpack.c.l.b16 %v281
        %v487 = vunpack.c.l.b16 %v282
        %v488 = vunpack.c.l.b16 %v283
        %v489 = vunpack.c.l.b16 %v284
        %v490 = vunpack.c.l.b16 %v285
        %v491 = vunpack.c.l.b16 %v286
        %v492 = vunpack.c.l.b16 %v287
        %v493 = vunpack.c.l.b16 %v288
        %v494 = vunpack.c.l.b16 %v289
        %v495 = vunpack.c.l.b16 %v290
        %v496 = vunpack.c.l.b16 %v291
        %v497 = vunpack.c.l.b16 %v292
        %v498 = vunpack.c.l.b16 %v293
        %v499 = vunpack.c.l.b16 %v294
        %v500 = vunpack.c.l.b16 %v295
        %v501 = vunpack.c.l.b16 %v296
        %v502 = vunpack.c.l.b16 %v297
        %v503 = vunpack.c.l.b16 %v298
        %v504 = vunpack.c.l.b16 %v299
        %v505 = vunpack.c.l.b16 %v300
        %v506 = vunpack.c.l.b16 %v301
        %v507 = vunpack.c.l.b16 %v302
        %v508 = vunpack.c.l.b16 %v303
        %v509 = vunpack.c.l.b16 %v304
        %v510 = vunpack.c.l.b16 %v305
        %v511 = vunpack.c.l.b16 %v306
        %v512 = vunpack.c.l.b16 %v307
        %v513 = vunpack.c.l.b16 %v308
        %v514 = vunpack.c.l.b16 %v309
        %v515 = vunpack.c.l.b16 %v310
        %v516 = vunpack.c.l.b16 %v311
        %v517 = vunpack.c.l.b16 %v312
        %v518 = vunpack.c.l.b16 %v313
        %v519 = vunpack.c.l.b16 %v314
        %v520 = vunpack.c.l.b16 %v315
        %v521 = vunpack.c.l.b16 %v316
        %v522 = vunpack.c.l.b16 %v317
        %v523 = vunpack.c.l.b16 %v318
        %v524 = vunpack.c.l.b16 %v319
        %v525 = vunpack.c.l.b16 %v320
        %v526 = vunpack.c.l.b16 %v321
        %v527 = vunpack.c.l.b16 %v322
        %v528 = vunpack.c.l.b16 %v323
        %v529 = vunpack.c.l.b16 %v324
        %v530 = vunpack.c.l.b16 %v325
        %v531 = vunpack.c.l.b16 %v326
        %v532 = vunpack.c.l.b16 %v327
        %v533 = vunpack.c.l.b16 %v328
        %v534 = vunpack.c.l.b16 %v329
        %v535 = vunpack.c.l.b16 %v330
        %v536 = vunpack.c.l.b16 %v331
        %v537 = vunpack.c.l.b16 %v332
        %v538 = vunpack.c.l.b16 %v333
        %v539 = vunpack.c.l.b16 %v334
        %v540 = vunpack.c.l.b16 %v335
        %v541 = vunpack.c.l.b16 %v336
        %v542 = vunpack.c.l.b16 %v337
        %v543 = vunpack.c.l.b16 %v338
        %v544 = vunpack.c.l.b16 %v339
        %v545 = vunpack.c.l.b16 %v340
        %v546 = vunpack.c.l.b16 %v341
        %v547 = vunpack.c.l.b16 %v342
        %v548 = vunpack.c.l.b16 %v343
        %v549 = vunpack.c.l.b16 %v344
        %v550 = vunpack.c.l.b16 %v345
        %v551 = vunpack.c.l.b16 %v346
        %v552 = vunpack.c.l.b16 %v347
        %v553 = vunpack.c.l.b16 %v348
        %v554 = vunpack.c.l.b16 %v349
        %v555 = vunpack.c.l.b16 %v350
        %v556 = vunpack.c.l.b16 %v351
        %v557 = vunpack.c.l.b16 %v352
        %v558 = vunpack.c.l.b16 %v353
        %v559 = vunpack.c.l.b16 %v354
        %v560 = vunpack.c.l.b16 %v355
        %v561 = vunpack.c.l.b16 %v356
        %v562 = vunpack.c.l.b16 %v357
        %v563 = vpack.c.b16 %v466, %v465
        %v564 = vpack.c.b16 %v468, %v467
        %v565 = vpack.c.b16 %v470, %v469
        %v566 = vpack.c.b16 %v472, %v471
        %v567 = vpack.c.b16 %v474, %v473
        %v568 = vpack.c.b16 %v476, %v475
        %v569 = vpack.c.b16 %v478, %v477
        %v570 = vpack.c.b16 %v480, %v479
        %v571 = vpack.c.b16 %v482, %v481
        %v572 = vpack.c.b16 %v484, %v483
        %v573 = vpack.c.b16 %v486, %v485
        %v574 = vpack.c.b16 %v488, %v487
        %v575 = vpack.c.b16 %v490, %v489
        %v576 = vpack.c.b16 %v492, %v491
        %v577 = vpack.c.b16 %v494, %v493
        %v578 = vpack.c.b16 %v496, %v495
        %v579 = vpack.c.b16 %v498, %v497
        %v580 = vpack.c.b16 %v500, %v499
        %v581 = vpack.c.b16 %v502, %v501
        %v582 = vpack.c.b16 %v504, %v503
        %v583 = vpack.c.b16 %v506, %v505
        %v584 = vpack.c.b16 %v508, %v507
        %v585 = vpack.c.b16 %v510, %v509
        %v586 = vpack.c.b16 %v512, %v511
        %v587 = vpack.c.b16 %v514, %v513
        %v588 = vpack.c.b16 %v516, %v515
        %v589 = vpack.c.b16 %v518, %v517
        %v590 = vpack.c.b16 %v520, %v519
        %v591 = vpack.c.b16 %v522, %v521
        %v592 = vpack.c.b16 %v524, %v523
        %v593 = vpack.c.b16 %v526, %v525
        %v594 = vpack.c.b16 %v528, %v527
        %v595 = vpack.c.b16 %v530, %v529
        %v596 = vpack.c.b16 %v532, %v531
        %v597 = vpack.c.b16 %v534, %v533
        %v598 = vpack.c.b16 %v536, %v535
        %v599 = vpack.c.b16 %v538, %v537
        %v600 = vpack.c.b16 %v540, %v539
        %v601 = vpack.c.b16 %v542, %v541
        %v602 = vpack.c.b16 %v544, %v543
        %v603 = vpack.c.b16 %v546, %v545
        %v604 = vpack.c.b16 %v548, %v547
        %v605 = vpack.c.b16 %v550, %v549
        %v606 = vpack.c.b16 %v552, %v551
        %v607 = vpack.c.b16 %v554, %v553
        %v608 = vpack.c.b16 %v556, %v555
        %v609 = vpack.c.b16 %v558, %v557
        %v610 = vpack.c.b16 %v560, %v559
        %v611 = vpack.c.b16 %v562, %v561
        %v614 = vunpack.c.l.b16 %v358
        %v615 = vunpack.c.l.b16 %v359
        %v616 = vpack.c.b16 %v615, %v614
        %vm617 = vcmask 72704
        %v619 = vsel %vm617, %v563, 0
        %v622 = vsel %vm617, %v564, 0
        %v625 = vsel %vm617, %v565, 0
        %v628 = vsel %vm617, %v566, 0
        %v631 = vsel %vm617, %v567, 0
        %v634 = vsel %vm617, %v568, 0
        %v637 = vsel %vm617, %v569, 0
        %v640 = vsel %vm617, %v570, 0
        %v643 = vsel %vm617, %v571, 0
        %v646 = vsel %vm617, %v572, 0
        %v649 = vsel %vm617, %v573, 0
        %v652 = vsel %vm617, %v574, 0
        %v655 = vsel %vm617, %v575, 0
        %v658 = vsel %vm617, %v576, 0
        %v661 = vsel %vm617, %v577, 0
        %v664 = vsel %vm617, %v578, 0
        %v667 = vsel %vm617, %v579, 0
        %v670 = vsel %vm617, %v580, 0
        %v673 = vsel %vm617, %v581, 0
        %v676 = vsel %vm617, %v582, 0
        %v679 = vsel %vm617, %v583, 0
        %v682 = vsel %vm617, %v584, 0
        %v685 = vsel %vm617, %v585, 0
        %v688 = vsel %vm617, %v586, 0
        %v691 = vsel %vm617, %v587, 0
        %v694 = vsel %vm617, %v588, 0
        %v697 = vsel %vm617, %v589, 0
        %v700 = vsel %vm617, %v590, 0
        %v703 = vsel %vm617, %v591, 0
        %v706 = vsel %vm617, %v592, 0
        %v709 = vsel %vm617, %v593, 0
        %v712 = vsel %vm617, %v594, 0
        %v715 = vsel %vm617, %v595, 0
        %v718 = vsel %vm617, %v596, 0
        %v721 = vsel %vm617, %v597, 0
        %v724 = vsel %vm617, %v598, 0
        %v727 = vsel %vm617, %v599, 0
        %v730 = vsel %vm617, %v600, 0
        %v733 = vsel %vm617, %v601, 0
        %v736 = vsel %vm617, %v602, 0
        %v739 = vsel %vm617, %v603, 0
        %v742 = vsel %vm617, %v604, 0
        %v745 = vsel %vm617, %v605, 0
        %v748 = vsel %vm617, %v606, 0
        %v751 = vsel %vm617, %v607, 0
        %v754 = vsel %vm617, %v608, 0
        %v757 = vsel %vm617, %v609, 0
        %v760 = vsel %vm617, %v610, 0
        %v763 = vsel %vm617, %v611, 0
        %vm765 = vcmask 1043456
        %vm766 = vcmask 1044480
        %v767 = vsel %vm765, 4294967295, 65535
        %v768 = vsel %vm766, %v767, 0
        %v770 = vand.u32 %v616, %v768
        %772 = vmatprep.subr.bf16.mxu0 0
        %773 = vmatpush1.bf16.msra.mxu0 %v770
        %774 = vmatprep.subr.bf16.mxu0 0
        %775 = vmatpush1.bf16.msra.mxu0 0
        %776 = vmatprep.subr.bf16.mxu0 0
        %777 = vmatpush1.bf16.msra.mxu0 0
        %778 = vmatprep.subr.bf16.mxu0 0
        %779 = vmatpush1.bf16.msra.mxu0 0
        %780 = vmatprep.subr.bf16.mxu0 0
        %781 = vmatpush1.bf16.msra.mxu0 0
        %782 = vmatprep.subr.bf16.mxu0 0
        %783 = vmatpush1.bf16.msra.mxu0 0
        %784 = vmatprep.subr.bf16.mxu0 0
        %785 = vmatpush1.bf16.msra.mxu0 0
        %786 = vmatprep.subr.bf16.mxu0 0
        %787 = vmatpush1.bf16.msra.mxu0 0
        %788 = vmatprep.subr.bf16.mxu0 0
        %789 = vmatpush1.bf16.msra.mxu0 0
        %790 = vmatprep.subr.bf16.mxu0 0
        %791 = vmatpush1.bf16.msra.mxu0 0
        %792 = vmatprep.subr.bf16.mxu0 0
        %793 = vmatpush1.bf16.msra.mxu0 0
        %794 = vmatprep.subr.bf16.mxu0 0
        %795 = vmatpush1.bf16.msra.mxu0 0
        %796 = vmatprep.subr.bf16.mxu0 0
        %797 = vmatpush1.bf16.msra.mxu0 0
        %798 = vmatprep.subr.bf16.mxu0 0
        %799 = vmatpush1.bf16.msra.mxu0 0
        %800 = vmatprep.subr.bf16.mxu0 0
        %801 = vmatpush1.bf16.msra.mxu0 0
        %802 = vmatprep.subr.bf16.mxu0 0
        %803 = vmatpush1.bf16.msra.mxu0 0
        %804 = vmatprep.mubr.bf16.mxu0 0
        %805 = vmatmul.mubr.bf16.gmra.mrb[0].mxu0 %v619
        %v806 = vpop.f32.mrb[0].mxu0
        %v807 = vadd.f32 %v365, %v806
        %v808 = vpop.f32.mrb[0].mxu0
        %v809 = vpop.f32.mrb[0].mxu0
        %v810 = vadd.f32 %v365, %v809
        %v811 = vpop.f32.mrb[0].mxu0
        %812 = vmatprep.mubr.bf16.mxu0 0
        %813 = vmatmul.mubr.bf16.gmra.mrb[0].mxu0 %v622
        %v814 = vpop.f32.mrb[0].mxu0
        %v815 = vadd.f32 %v365, %v814
        %v816 = vpop.f32.mrb[0].mxu0
        %v817 = vpop.f32.mrb[0].mxu0
        %v818 = vadd.f32 %v365, %v817
        %v819 = vpop.f32.mrb[0].mxu0
        %820 = vmatprep.mubr.bf16.mxu0 0
        %821 = vmatmul.mubr.bf16.gmra.mrb[0].mxu0 %v625
        %v822 = vpop.f32.mrb[0].mxu0
        %v823 = vadd.f32 %v365, %v822
        %v824 = vpop.f32.mrb[0].mxu0
        %v825 = vpop.f32.mrb[0].mxu0
        %v826 = vadd.f32 %v365, %v825
        %v827 = vpop.f32.mrb[0].mxu0
        %828 = vmatprep.mubr.bf16.mxu0 0
        %829 = vmatmul.mubr.bf16.gmra.mrb[0].mxu0 %v628
        %v830 = vpop.f32.mrb[0].mxu0
        %v831 = vadd.f32 %v365, %v830
        %v832 = vpop.f32.mrb[0].mxu0
        %v833 = vpop.f32.mrb[0].mxu0
        %v834 = vadd.f32 %v365, %v833
        %v835 = vpop.f32.mrb[0].mxu0
        %836 = vmatprep.mubr.bf16.mxu0 0
        %837 = vmatmul.mubr.bf16.gmra.mrb[0].mxu0 %v631
        %v838 = vpop.f32.mrb[0].mxu0
        %v839 = vadd.f32 %v365, %v838
        %v840 = vpop.f32.mrb[0].mxu0
        %v841 = vpop.f32.mrb[0].mxu0
        %v842 = vadd.f32 %v365, %v841
        %v843 = vpop.f32.mrb[0].mxu0
        %844 = vmatprep.mubr.bf16.mxu0 0
        %845 = vmatmul.mubr.bf16.gmra.mrb[0].mxu0 %v634
        %v846 = vpop.f32.mrb[0].mxu0
        %v847 = vadd.f32 %v365, %v846
        %v848 = vpop.f32.mrb[0].mxu0
        %v849 = vpop.f32.mrb[0].mxu0
        %v850 = vadd.f32 %v365, %v849
        %v851 = vpop.f32.mrb[0].mxu0
        %852 = vmatprep.mubr.bf16.mxu0 0
        %853 = vmatmul.mubr.bf16.gmra.mrb[0].mxu0 %v637
        %v854 = vpop.f32.mrb[0].mxu0
        %v855 = vadd.f32 %v365, %v854
        %v856 = vpop.f32.mrb[0].mxu0
        %v857 = vpop.f32.mrb[0].mxu0
        %v858 = vadd.f32 %v365, %v857
        %v859 = vpop.f32.mrb[0].mxu0
        %860 = vmatprep.mubr.bf16.mxu0 0
        %861 = vmatmul.mubr.bf16.gmra.mrb[0].mxu0 %v640
        %v862 = vpop.f32.mrb[0].mxu0
        %v863 = vadd.f32 %v365, %v862
        %v864 = vpop.f32.mrb[0].mxu0
        %v865 = vpop.f32.mrb[0].mxu0
        %v866 = vadd.f32 %v365, %v865
        %v867 = vpop.f32.mrb[0].mxu0
        %868 = vmatprep.mubr.bf16.mxu0 0
        %869 = vmatmul.mubr.bf16.gmra.mrb[0].mxu0 %v643
        %v870 = vpop.f32.mrb[0].mxu0
        %v871 = vadd.f32 %v365, %v870
        %v872 = vpop.f32.mrb[0].mxu0
        %v873 = vpop.f32.mrb[0].mxu0
        %v874 = vadd.f32 %v365, %v873
        %v875 = vpop.f32.mrb[0].mxu0
        %876 = vmatprep.mubr.bf16.mxu0 0
        %877 = vmatmul.mubr.bf16.gmra.mrb[0].mxu0 %v646
        %v878 = vpop.f32.mrb[0].mxu0
        %v879 = vadd.f32 %v365, %v878
        %v880 = vpop.f32.mrb[0].mxu0
        %v881 = vpop.f32.mrb[0].mxu0
        %v882 = vadd.f32 %v365, %v881
        %v883 = vpop.f32.mrb[0].mxu0
        %884 = vmatprep.mubr.bf16.mxu0 0
        %885 = vmatmul.mubr.bf16.gmra.mrb[0].mxu0 %v649
        %v886 = vpop.f32.mrb[0].mxu0
        %v887 = vadd.f32 %v365, %v886
        %v888 = vpop.f32.mrb[0].mxu0
        %v889 = vpop.f32.mrb[0].mxu0
        %v890 = vadd.f32 %v365, %v889
        %v891 = vpop.f32.mrb[0].mxu0
        %892 = vmatprep.mubr.bf16.mxu0 0
        %893 = vmatmul.mubr.bf16.gmra.mrb[0].mxu0 %v652
        %v894 = vpop.f32.mrb[0].mxu0
        %v895 = vadd.f32 %v365, %v894
        %v896 = vpop.f32.mrb[0].mxu0
        %v897 = vpop.f32.mrb[0].mxu0
        %v898 = vadd.f32 %v365, %v897
        %v899 = vpop.f32.mrb[0].mxu0
        %900 = vmatprep.mubr.bf16.mxu0 0
        %901 = vmatmul.mubr.bf16.gmra.mrb[0].mxu0 %v655
        %v902 = vpop.f32.mrb[0].mxu0
        %v903 = vadd.f32 %v365, %v902
        %v904 = vpop.f32.mrb[0].mxu0
        %v905 = vpop.f32.mrb[0].mxu0
        %v906 = vadd.f32 %v365, %v905
        %v907 = vpop.f32.mrb[0].mxu0
        %908 = vmatprep.mubr.bf16.mxu0 0
        %909 = vmatmul.mubr.bf16.gmra.mrb[0].mxu0 %v658
        %v910 = vpop.f32.mrb[0].mxu0
        %v911 = vadd.f32 %v365, %v910
        %v912 = vpop.f32.mrb[0].mxu0
        %v913 = vpop.f32.mrb[0].mxu0
        %v914 = vadd.f32 %v365, %v913
        %v915 = vpop.f32.mrb[0].mxu0
        %916 = vmatprep.mubr.bf16.mxu0 0
        %917 = vmatmul.mubr.bf16.gmra.mrb[0].mxu0 %v661
        %v918 = vpop.f32.mrb[0].mxu0
        %v919 = vadd.f32 %v365, %v918
        %v920 = vpop.f32.mrb[0].mxu0
        %v921 = vpop.f32.mrb[0].mxu0
        %v922 = vadd.f32 %v365, %v921
        %v923 = vpop.f32.mrb[0].mxu0
        %924 = vmatprep.mubr.bf16.mxu0 0
        %925 = vmatmul.mubr.bf16.gmra.mrb[0].mxu0 %v664
        %v926 = vpop.f32.mrb[0].mxu0
        %v927 = vadd.f32 %v365, %v926
        %v928 = vpop.f32.mrb[0].mxu0
        %v929 = vpop.f32.mrb[0].mxu0
        %v930 = vadd.f32 %v365, %v929
        %v931 = vpop.f32.mrb[0].mxu0
        %932 = vmatprep.mubr.bf16.mxu0 0
        %933 = vmatmul.mubr.bf16.gmra.mrb[0].mxu0 %v667
        %v934 = vpop.f32.mrb[0].mxu0
        %v935 = vadd.f32 %v365, %v934
        %v936 = vpop.f32.mrb[0].mxu0
        %v937 = vpop.f32.mrb[0].mxu0
        %v938 = vadd.f32 %v365, %v937
        %v939 = vpop.f32.mrb[0].mxu0
        %940 = vmatprep.mubr.bf16.mxu0 0
        %941 = vmatmul.mubr.bf16.gmra.mrb[0].mxu0 %v670
        %v942 = vpop.f32.mrb[0].mxu0
        %v943 = vadd.f32 %v365, %v942
        %v944 = vpop.f32.mrb[0].mxu0
        %v945 = vpop.f32.mrb[0].mxu0
        %v946 = vadd.f32 %v365, %v945
        %v947 = vpop.f32.mrb[0].mxu0
        %948 = vmatprep.mubr.bf16.mxu0 0
        %949 = vmatmul.mubr.bf16.gmra.mrb[0].mxu0 %v673
        %v950 = vpop.f32.mrb[0].mxu0
        %v951 = vadd.f32 %v365, %v950
        %v952 = vpop.f32.mrb[0].mxu0
        %v953 = vpop.f32.mrb[0].mxu0
        %v954 = vadd.f32 %v365, %v953
        %v955 = vpop.f32.mrb[0].mxu0
        %956 = vmatprep.mubr.bf16.mxu0 0
        %957 = vmatmul.mubr.bf16.gmra.mrb[0].mxu0 %v676
        %v958 = vpop.f32.mrb[0].mxu0
        %v959 = vadd.f32 %v365, %v958
        %v960 = vpop.f32.mrb[0].mxu0
        %v961 = vpop.f32.mrb[0].mxu0
        %v962 = vadd.f32 %v365, %v961
        %v963 = vpop.f32.mrb[0].mxu0
        %964 = vmatprep.mubr.bf16.mxu0 0
        %965 = vmatmul.mubr.bf16.gmra.mrb[0].mxu0 %v679
        %v966 = vpop.f32.mrb[0].mxu0
        %v967 = vadd.f32 %v365, %v966
        %v968 = vpop.f32.mrb[0].mxu0
        %v969 = vpop.f32.mrb[0].mxu0
        %v970 = vadd.f32 %v365, %v969
        %v971 = vpop.f32.mrb[0].mxu0
        %972 = vmatprep.mubr.bf16.mxu0 0
        %973 = vmatmul.mubr.bf16.gmra.mrb[0].mxu0 %v682
        %v974 = vpop.f32.mrb[0].mxu0
        %v975 = vadd.f32 %v365, %v974
        %v976 = vpop.f32.mrb[0].mxu0
        %v977 = vpop.f32.mrb[0].mxu0
        %v978 = vadd.f32 %v365, %v977
        %v979 = vpop.f32.mrb[0].mxu0
        %980 = vmatprep.mubr.bf16.mxu0 0
        %981 = vmatmul.mubr.bf16.gmra.mrb[0].mxu0 %v685
        %v982 = vpop.f32.mrb[0].mxu0
        %v983 = vadd.f32 %v365, %v982
        %v984 = vpop.f32.mrb[0].mxu0
        %v985 = vpop.f32.mrb[0].mxu0
        %v986 = vadd.f32 %v365, %v985
        %v987 = vpop.f32.mrb[0].mxu0
        %988 = vmatprep.mubr.bf16.mxu0 0
        %989 = vmatmul.mubr.bf16.gmra.mrb[0].mxu0 %v688
        %v990 = vpop.f32.mrb[0].mxu0
        %v991 = vadd.f32 %v365, %v990
        %v992 = vpop.f32.mrb[0].mxu0
        %v993 = vpop.f32.mrb[0].mxu0
        %v994 = vadd.f32 %v365, %v993
        %v995 = vpop.f32.mrb[0].mxu0
        %996 = vmatprep.mubr.bf16.mxu0 0
        %997 = vmatmul.mubr.bf16.gmra.mrb[0].mxu0 %v691
        %v998 = vpop.f32.mrb[0].mxu0
        %v999 = vadd.f32 %v365, %v998
        %v1000 = vpop.f32.mrb[0].mxu0
        %v1001 = vpop.f32.mrb[0].mxu0
        %v1002 = vadd.f32 %v365, %v1001
        %v1003 = vpop.f32.mrb[0].mxu0
        %1004 = vmatprep.mubr.bf16.mxu0 0
        %1005 = vmatmul.mubr.bf16.gmra.mrb[0].mxu0 %v694
        %v1006 = vpop.f32.mrb[0].mxu0
        %v1007 = vadd.f32 %v365, %v1006
        %v1008 = vpop.f32.mrb[0].mxu0
        %v1009 = vpop.f32.mrb[0].mxu0
        %v1010 = vadd.f32 %v365, %v1009
        %v1011 = vpop.f32.mrb[0].mxu0
        %1012 = vmatprep.mubr.bf16.mxu0 0
        %1013 = vmatmul.mubr.bf16.gmra.mrb[0].mxu0 %v697
        %v1014 = vpop.f32.mrb[0].mxu0
        %v1015 = vadd.f32 %v365, %v1014
        %v1016 = vpop.f32.mrb[0].mxu0
        %v1017 = vpop.f32.mrb[0].mxu0
        %v1018 = vadd.f32 %v365, %v1017
        %v1019 = vpop.f32.mrb[0].mxu0
        %1020 = vmatprep.mubr.bf16.mxu0 0
        %1021 = vmatmul.mubr.bf16.gmra.mrb[0].mxu0 %v700
        %v1022 = vpop.f32.mrb[0].mxu0
        %v1023 = vadd.f32 %v365, %v1022
        %v1024 = vpop.f32.mrb[0].mxu0
        %v1025 = vpop.f32.mrb[0].mxu0
        %v1026 = vadd.f32 %v365, %v1025
        %v1027 = vpop.f32.mrb[0].mxu0
        %1028 = vmatprep.mubr.bf16.mxu0 0
        %1029 = vmatmul.mubr.bf16.gmra.mrb[0].mxu0 %v703
        %v1030 = vpop.f32.mrb[0].mxu0
        %v1031 = vadd.f32 %v365, %v1030
        %v1032 = vpop.f32.mrb[0].mxu0
        %v1033 = vpop.f32.mrb[0].mxu0
        %v1034 = vadd.f32 %v365, %v1033
        %v1035 = vpop.f32.mrb[0].mxu0
        %1036 = vmatprep.mubr.bf16.mxu0 0
        %1037 = vmatmul.mubr.bf16.gmra.mrb[0].mxu0 %v706
        %v1038 = vpop.f32.mrb[0].mxu0
        %v1039 = vadd.f32 %v365, %v1038
        %v1040 = vpop.f32.mrb[0].mxu0
        %v1041 = vpop.f32.mrb[0].mxu0
        %v1042 = vadd.f32 %v365, %v1041
        %v1043 = vpop.f32.mrb[0].mxu0
        %1044 = vmatprep.mubr.bf16.mxu0 0
        %1045 = vmatmul.mubr.bf16.gmra.mrb[0].mxu0 %v709
        %v1046 = vpop.f32.mrb[0].mxu0
        %v1047 = vadd.f32 %v365, %v1046
        %v1048 = vpop.f32.mrb[0].mxu0
        %v1049 = vpop.f32.mrb[0].mxu0
        %v1050 = vadd.f32 %v365, %v1049
        %v1051 = vpop.f32.mrb[0].mxu0
        %1052 = vmatprep.mubr.bf16.mxu0 0
        %1053 = vmatmul.mubr.bf16.gmra.mrb[0].mxu0 %v712
        %v1054 = vpop.f32.mrb[0].mxu0
        %v1055 = vadd.f32 %v365, %v1054
        %v1056 = vpop.f32.mrb[0].mxu0
        %v1057 = vpop.f32.mrb[0].mxu0
        %v1058 = vadd.f32 %v365, %v1057
        %v1059 = vpop.f32.mrb[0].mxu0
        %1060 = vmatprep.mubr.bf16.mxu0 0
        %1061 = vmatmul.mubr.bf16.gmra.mrb[0].mxu0 %v715
        %v1062 = vpop.f32.mrb[0].mxu0
        %v1063 = vadd.f32 %v365, %v1062
        %v1064 = vpop.f32.mrb[0].mxu0
        %v1065 = vpop.f32.mrb[0].mxu0
        %v1066 = vadd.f32 %v365, %v1065
        %v1067 = vpop.f32.mrb[0].mxu0
        %1068 = vmatprep.mubr.bf16.mxu0 0
        %1069 = vmatmul.mubr.bf16.gmra.mrb[0].mxu0 %v718
        %v1070 = vpop.f32.mrb[0].mxu0
        %v1071 = vadd.f32 %v365, %v1070
        %v1072 = vpop.f32.mrb[0].mxu0
        %v1073 = vpop.f32.mrb[0].mxu0
        %v1074 = vadd.f32 %v365, %v1073
        %v1075 = vpop.f32.mrb[0].mxu0
        %1076 = vmatprep.mubr.bf16.mxu0 0
        %1077 = vmatmul.mubr.bf16.gmra.mrb[0].mxu0 %v721
        %v1078 = vpop.f32.mrb[0].mxu0
        %v1079 = vadd.f32 %v365, %v1078
        %v1080 = vpop.f32.mrb[0].mxu0
        %v1081 = vpop.f32.mrb[0].mxu0
        %v1082 = vadd.f32 %v365, %v1081
        %v1083 = vpop.f32.mrb[0].mxu0
        %1084 = vmatprep.mubr.bf16.mxu0 0
        %1085 = vmatmul.mubr.bf16.gmra.mrb[0].mxu0 %v724
        %v1086 = vpop.f32.mrb[0].mxu0
        %v1087 = vadd.f32 %v365, %v1086
        %v1088 = vpop.f32.mrb[0].mxu0
        %v1089 = vpop.f32.mrb[0].mxu0
        %v1090 = vadd.f32 %v365, %v1089
        %v1091 = vpop.f32.mrb[0].mxu0
        %1092 = vmatprep.mubr.bf16.mxu0 0
        %1093 = vmatmul.mubr.bf16.gmra.mrb[0].mxu0 %v727
        %v1094 = vpop.f32.mrb[0].mxu0
        %v1095 = vadd.f32 %v365, %v1094
        %v1096 = vpop.f32.mrb[0].mxu0
        %v1097 = vpop.f32.mrb[0].mxu0
        %v1098 = vadd.f32 %v365, %v1097
        %v1099 = vpop.f32.mrb[0].mxu0
        %1100 = vmatprep.mubr.bf16.mxu0 0
        %1101 = vmatmul.mubr.bf16.gmra.mrb[0].mxu0 %v730
        %v1102 = vpop.f32.mrb[0].mxu0
        %v1103 = vadd.f32 %v365, %v1102
        %v1104 = vpop.f32.mrb[0].mxu0
        %v1105 = vpop.f32.mrb[0].mxu0
        %v1106 = vadd.f32 %v365, %v1105
        %v1107 = vpop.f32.mrb[0].mxu0
        %1108 = vmatprep.mubr.bf16.mxu0 0
        %1109 = vmatmul.mubr.bf16.gmra.mrb[0].mxu0 %v733
        %v1110 = vpop.f32.mrb[0].mxu0
        %v1111 = vadd.f32 %v365, %v1110
        %v1112 = vpop.f32.mrb[0].mxu0
        %v1113 = vpop.f32.mrb[0].mxu0
        %v1114 = vadd.f32 %v365, %v1113
        %v1115 = vpop.f32.mrb[0].mxu0
        %1116 = vmatprep.mubr.bf16.mxu0 0
        %1117 = vmatmul.mubr.bf16.gmra.mrb[0].mxu0 %v736
        %v1118 = vpop.f32.mrb[0].mxu0
        %v1119 = vadd.f32 %v365, %v1118
        %v1120 = vpop.f32.mrb[0].mxu0
        %v1121 = vpop.f32.mrb[0].mxu0
        %v1122 = vadd.f32 %v365, %v1121
        %v1123 = vpop.f32.mrb[0].mxu0
        %1124 = vmatprep.mubr.bf16.mxu0 0
        %1125 = vmatmul.mubr.bf16.gmra.mrb[0].mxu0 %v739
        %v1126 = vpop.f32.mrb[0].mxu0
        %v1127 = vadd.f32 %v365, %v1126
        %v1128 = vpop.f32.mrb[0].mxu0
        %v1129 = vpop.f32.mrb[0].mxu0
        %v1130 = vadd.f32 %v365, %v1129
        %v1131 = vpop.f32.mrb[0].mxu0
        %1132 = vmatprep.mubr.bf16.mxu0 0
        %1133 = vmatmul.mubr.bf16.gmra.mrb[0].mxu0 %v742
        %v1134 = vpop.f32.mrb[0].mxu0
        %v1135 = vadd.f32 %v365, %v1134
        %v1136 = vpop.f32.mrb[0].mxu0
        %v1137 = vpop.f32.mrb[0].mxu0
        %v1138 = vadd.f32 %v365, %v1137
        %v1139 = vpop.f32.mrb[0].mxu0
        %1140 = vmatprep.mubr.bf16.mxu0 0
        %1141 = vmatmul.mubr.bf16.gmra.mrb[0].mxu0 %v745
        %v1142 = vpop.f32.mrb[0].mxu0
        %v1143 = vadd.f32 %v365, %v1142
        %v1144 = vpop.f32.mrb[0].mxu0
        %v1145 = vpop.f32.mrb[0].mxu0
        %v1146 = vadd.f32 %v365, %v1145
        %v1147 = vpop.f32.mrb[0].mxu0
        %1148 = vmatprep.mubr.bf16.mxu0 0
        %1149 = vmatmul.mubr.bf16.gmra.mrb[0].mxu0 %v748
        %v1150 = vpop.f32.mrb[0].mxu0
        %v1151 = vadd.f32 %v365, %v1150
        %v1152 = vpop.f32.mrb[0].mxu0
        %v1153 = vpop.f32.mrb[0].mxu0
        %v1154 = vadd.f32 %v365, %v1153
        %v1155 = vpop.f32.mrb[0].mxu0
        %1156 = vmatprep.mubr.bf16.mxu0 0
        %1157 = vmatmul.mubr.bf16.gmra.mrb[0].mxu0 %v751
        %v1158 = vpop.f32.mrb[0].mxu0
        %v1159 = vadd.f32 %v365, %v1158
        %v1160 = vpop.f32.mrb[0].mxu0
        %v1161 = vpop.f32.mrb[0].mxu0
        %v1162 = vadd.f32 %v365, %v1161
        %v1163 = vpop.f32.mrb[0].mxu0
        %1164 = vmatprep.mubr.bf16.mxu0 0
        %1165 = vmatmul.mubr.bf16.gmra.mrb[0].mxu0 %v754
        %v1166 = vpop.f32.mrb[0].mxu0
        %v1167 = vadd.f32 %v365, %v1166
        %v1168 = vpop.f32.mrb[0].mxu0
        %v1169 = vpop.f32.mrb[0].mxu0
        %v1170 = vadd.f32 %v365, %v1169
        %v1171 = vpop.f32.mrb[0].mxu0
        %1172 = vmatprep.mubr.bf16.mxu0 0
        %1173 = vmatmul.mubr.bf16.gmra.mrb[0].mxu0 %v757
        %v1174 = vpop.f32.mrb[0].mxu0
        %v1175 = vadd.f32 %v365, %v1174
        %v1176 = vpop.f32.mrb[0].mxu0
        %v1177 = vpop.f32.mrb[0].mxu0
        %v1178 = vadd.f32 %v365, %v1177
        %v1179 = vpop.f32.mrb[0].mxu0
        %1180 = vmatprep.mubr.bf16.mxu0 0
        %1181 = vmatmul.mubr.bf16.gmra.mrb[0].mxu0 %v760
        %v1182 = vpop.f32.mrb[0].mxu0
        %v1183 = vadd.f32 %v365, %v1182
        %v1184 = vpop.f32.mrb[0].mxu0
        %v1185 = vpop.f32.mrb[0].mxu0
        %v1186 = vadd.f32 %v365, %v1185
        %v1187 = vpop.f32.mrb[0].mxu0
        %1188 = vmatprep.mubr.bf16.mxu0 0
        %1189 = vmatmul.mubr.bf16.gmra.mrb[0].mxu0 %v763
        %v1190 = vpop.f32.mrb[0].mxu0
        %v1191 = vadd.f32 %v365, %v1190
        %v1192 = vpop.f32.mrb[0].mxu0
        %v1193 = vpop.f32.mrb[0].mxu0
        %v1194 = vadd.f32 %v365, %v1193
        %v1195 = vpop.f32.mrb[0].mxu0
        %1196 = vdwg.mxu0
        %v1197 = vmax.f32 %v807, 0.0
        %v1198 = vmax.f32 %v810, 0.0
        %v1199 = vmax.f32 %v815, 0.0
        %v1200 = vmax.f32 %v818, 0.0
        %v1201 = vmax.f32 %v823, 0.0
        %v1202 = vmax.f32 %v826, 0.0
        %v1203 = vmax.f32 %v831, 0.0
        %v1204 = vmax.f32 %v834, 0.0
        %v1205 = vmax.f32 %v839, 0.0
        %v1206 = vmax.f32 %v842, 0.0
        %v1207 = vmax.f32 %v847, 0.0
        %v1208 = vmax.f32 %v850, 0.0
        %v1209 = vmax.f32 %v855, 0.0
        %v1210 = vmax.f32 %v858, 0.0
        %v1211 = vmax.f32 %v863, 0.0
        %v1212 = vmax.f32 %v866, 0.0
        %v1213 = vmax.f32 %v871, 0.0
        %v1214 = vmax.f32 %v874, 0.0
        %v1215 = vmax.f32 %v879, 0.0
        %v1216 = vmax.f32 %v882, 0.0
        %v1217 = vmax.f32 %v887, 0.0
        %v1218 = vmax.f32 %v890, 0.0
        %v1219 = vmax.f32 %v895, 0.0
        %v1220 = vmax.f32 %v898, 0.0
        %v1221 = vmax.f32 %v903, 0.0
        %v1222 = vmax.f32 %v906, 0.0
        %v1223 = vmax.f32 %v911, 0.0
        %v1224 = vmax.f32 %v914, 0.0
        %v1225 = vmax.f32 %v919, 0.0
        %v1226 = vmax.f32 %v922, 0.0
        %v1227 = vmax.f32 %v927, 0.0
        %v1228 = vmax.f32 %v930, 0.0
        %v1229 = vmax.f32 %v935, 0.0
        %v1230 = vmax.f32 %v938, 0.0
        %v1231 = vmax.f32 %v943, 0.0
        %v1232 = vmax.f32 %v946, 0.0
        %v1233 = vmax.f32 %v951, 0.0
        %v1234 = vmax.f32 %v954, 0.0
        %v1235 = vmax.f32 %v959, 0.0
        %v1236 = vmax.f32 %v962, 0.0
        %v1237 = vmax.f32 %v967, 0.0
        %v1238 = vmax.f32 %v970, 0.0
        %v1239 = vmax.f32 %v975, 0.0
        %v1240 = vmax.f32 %v978, 0.0
        %v1241 = vmax.f32 %v983, 0.0
        %v1242 = vmax.f32 %v986, 0.0
        %v1243 = vmax.f32 %v991, 0.0
        %v1244 = vmax.f32 %v994, 0.0
        %v1245 = vmax.f32 %v999, 0.0
        %v1246 = vmax.f32 %v1002, 0.0
        %v1247 = vmax.f32 %v1007, 0.0
        %v1248 = vmax.f32 %v1010, 0.0
        %v1249 = vmax.f32 %v1015, 0.0
        %v1250 = vmax.f32 %v1018, 0.0
        %v1251 = vmax.f32 %v1023, 0.0
        %v1252 = vmax.f32 %v1026, 0.0
        %v1253 = vmax.f32 %v1031, 0.0
        %v1254 = vmax.f32 %v1034, 0.0
        %v1255 = vmax.f32 %v1039, 0.0
        %v1256 = vmax.f32 %v1042, 0.0
        %v1257 = vmax.f32 %v1047, 0.0
        %v1258 = vmax.f32 %v1050, 0.0
        %v1259 = vmax.f32 %v1055, 0.0
        %v1260 = vmax.f32 %v1058, 0.0
        %v1261 = vmax.f32 %v1063, 0.0
        %v1262 = vmax.f32 %v1066, 0.0
        %v1263 = vmax.f32 %v1071, 0.0
        %v1264 = vmax.f32 %v1074, 0.0
        %v1265 = vmax.f32 %v1079, 0.0
        %v1266 = vmax.f32 %v1082, 0.0
        %v1267 = vmax.f32 %v1087, 0.0
        %v1268 = vmax.f32 %v1090, 0.0
        %v1269 = vmax.f32 %v1095, 0.0
        %v1270 = vmax.f32 %v1098, 0.0
        %v1271 = vmax.f32 %v1103, 0.0
        %v1272 = vmax.f32 %v1106, 0.0
        %v1273 = vmax.f32 %v1111, 0.0
        %v1274 = vmax.f32 %v1114, 0.0
        %v1275 = vmax.f32 %v1119, 0.0
        %v1276 = vmax.f32 %v1122, 0.0
        %v1277 = vmax.f32 %v1127, 0.0
        %v1278 = vmax.f32 %v1130, 0.0
        %v1279 = vmax.f32 %v1135, 0.0
        %v1280 = vmax.f32 %v1138, 0.0
        %v1281 = vmax.f32 %v1143, 0.0
        %v1282 = vmax.f32 %v1146, 0.0
        %v1283 = vmax.f32 %v1151, 0.0
        %v1284 = vmax.f32 %v1154, 0.0
        %v1285 = vmax.f32 %v1159, 0.0
        %v1286 = vmax.f32 %v1162, 0.0
        %v1287 = vmax.f32 %v1167, 0.0
        %v1288 = vmax.f32 %v1170, 0.0
        %v1289 = vmax.f32 %v1175, 0.0
        %v1290 = vmax.f32 %v1178, 0.0
        %v1291 = vmax.f32 %v1183, 0.0
        %v1292 = vmax.f32 %v1186, 0.0
        %v1293 = vmax.f32 %v1191, 0.0
        %v1294 = vmax.f32 %v1194, 0.0
        %vm1295 = vcmask 130048
        %1296 = vst.msk [vmem:[%s257] sm:$0xff] %vm1295, %v1197
        %1297 = vst.msk [vmem:[%s257 + $0x8] sm:$0xff] %vm1295, %v1198
        %1298 = vst.msk [vmem:[%s257 + $0x10] sm:$0xff] %vm1295, %v1199
        %1299 = vst.msk [vmem:[%s257 + $0x18] sm:$0xff] %vm1295, %v1200
        %1300 = vst.msk [vmem:[%s257 + $0x20] sm:$0xff] %vm1295, %v1201
        %1301 = vst.msk [vmem:[%s257 + $0x28] sm:$0xff] %vm1295, %v1202
        %1302 = vst.msk [vmem:[%s257 + $0x30] sm:$0xff] %vm1295, %v1203
        %1303 = vst.msk [vmem:[%s257 + $0x38] sm:$0xff] %vm1295, %v1204
        %1304 = vst.msk [vmem:[%s257 + $0x40] sm:$0xff] %vm1295, %v1205
        %1305 = vst.msk [vmem:[%s257 + $0x48] sm:$0xff] %vm1295, %v1206
        %1306 = vst.msk [vmem:[%s257 + $0x50] sm:$0xff] %vm1295, %v1207
        %1307 = vst.msk [vmem:[%s257 + $0x58] sm:$0xff] %vm1295, %v1208
        %1308 = vst.msk [vmem:[%s257 + $0x60] sm:$0xff] %vm1295, %v1209
        %1309 = vst.msk [vmem:[%s257 + $0x68] sm:$0xff] %vm1295, %v1210
        %1310 = vst.msk [vmem:[%s257 + $0x70] sm:$0xff] %vm1295, %v1211
        %1311 = vst.msk [vmem:[%s257 + $0x78] sm:$0xff] %vm1295, %v1212
        %1312 = vst.msk [vmem:[%s257 + $0x80] sm:$0xff] %vm1295, %v1213
        %1313 = vst.msk [vmem:[%s257 + $0x88] sm:$0xff] %vm1295, %v1214
        %1314 = vst.msk [vmem:[%s257 + $0x90] sm:$0xff] %vm1295, %v1215
        %1315 = vst.msk [vmem:[%s257 + $0x98] sm:$0xff] %vm1295, %v1216
        %1316 = vst.msk [vmem:[%s257 + $0xa0] sm:$0xff] %vm1295, %v1217
        %1317 = vst.msk [vmem:[%s257 + $0xa8] sm:$0xff] %vm1295, %v1218
        %1318 = vst.msk [vmem:[%s257 + $0xb0] sm:$0xff] %vm1295, %v1219
        %1319 = vst.msk [vmem:[%s257 + $0xb8] sm:$0xff] %vm1295, %v1220
        %1320 = vst.msk [vmem:[%s257 + $0xc0] sm:$0xff] %vm1295, %v1221
        %1321 = vst.msk [vmem:[%s257 + $0xc8] sm:$0xff] %vm1295, %v1222
        %1322 = vst.msk [vmem:[%s257 + $0xd0] sm:$0xff] %vm1295, %v1223
        %1323 = vst.msk [vmem:[%s257 + $0xd8] sm:$0xff] %vm1295, %v1224
        %1324 = vst.msk [vmem:[%s257 + $0xe0] sm:$0xff] %vm1295, %v1225
        %1325 = vst.msk [vmem:[%s257 + $0xe8] sm:$0xff] %vm1295, %v1226
        %1326 = vst.msk [vmem:[%s257 + $0xf0] sm:$0xff] %vm1295, %v1227
        %1327 = vst.msk [vmem:[%s257 + $0xf8] sm:$0xff] %vm1295, %v1228
        %1328 = vst.msk [vmem:[%s257 + $0x100] sm:$0xff] %vm1295, %v1229
        %1329 = vst.msk [vmem:[%s257 + $0x108] sm:$0xff] %vm1295, %v1230
        %1330 = vst.msk [vmem:[%s257 + $0x110] sm:$0xff] %vm1295, %v1231
        %1331 = vst.msk [vmem:[%s257 + $0x118] sm:$0xff] %vm1295, %v1232
        %1332 = vst.msk [vmem:[%s257 + $0x120] sm:$0xff] %vm1295, %v1233
        %1333 = vst.msk [vmem:[%s257 + $0x128] sm:$0xff] %vm1295, %v1234
        %1334 = vst.msk [vmem:[%s257 + $0x130] sm:$0xff] %vm1295, %v1235
        %1335 = vst.msk [vmem:[%s257 + $0x138] sm:$0xff] %vm1295, %v1236
        %1336 = vst.msk [vmem:[%s257 + $0x140] sm:$0xff] %vm1295, %v1237
        %1337 = vst.msk [vmem:[%s257 + $0x148] sm:$0xff] %vm1295, %v1238
        %1338 = vst.msk [vmem:[%s257 + $0x150] sm:$0xff] %vm1295, %v1239
        %1339 = vst.msk [vmem:[%s257 + $0x158] sm:$0xff] %vm1295, %v1240
        %1340 = vst.msk [vmem:[%s257 + $0x160] sm:$0xff] %vm1295, %v1241
        %1341 = vst.msk [vmem:[%s257 + $0x168] sm:$0xff] %vm1295, %v1242
        %1342 = vst.msk [vmem:[%s257 + $0x170] sm:$0xff] %vm1295, %v1243
        %1343 = vst.msk [vmem:[%s257 + $0x178] sm:$0xff] %vm1295, %v1244
        %1344 = vst.msk [vmem:[%s257 + $0x180] sm:$0xff] %vm1295, %v1245
        %1345 = vst.msk [vmem:[%s257 + $0x188] sm:$0xff] %vm1295, %v1246
        %1346 = vst.msk [vmem:[%s257 + $0x190] sm:$0xff] %vm1295, %v1247
        %1347 = vst.msk [vmem:[%s257 + $0x198] sm:$0xff] %vm1295, %v1248
        %1348 = vst.msk [vmem:[%s257 + $0x1a0] sm:$0xff] %vm1295, %v1249
        %1349 = vst.msk [vmem:[%s257 + $0x1a8] sm:$0xff] %vm1295, %v1250
        %1350 = vst.msk [vmem:[%s257 + $0x1b0] sm:$0xff] %vm1295, %v1251
        %1351 = vst.msk [vmem:[%s257 + $0x1b8] sm:$0xff] %vm1295, %v1252
        %1352 = vst.msk [vmem:[%s257 + $0x1c0] sm:$0xff] %vm1295, %v1253
        %1353 = vst.msk [vmem:[%s257 + $0x1c8] sm:$0xff] %vm1295, %v1254
        %1354 = vst.msk [vmem:[%s257 + $0x1d0] sm:$0xff] %vm1295, %v1255
        %1355 = vst.msk [vmem:[%s257 + $0x1d8] sm:$0xff] %vm1295, %v1256
        %1356 = vst.msk [vmem:[%s257 + $0x1e0] sm:$0xff] %vm1295, %v1257
        %1357 = vst.msk [vmem:[%s257 + $0x1e8] sm:$0xff] %vm1295, %v1258
        %1358 = vst.msk [vmem:[%s257 + $0x1f0] sm:$0xff] %vm1295, %v1259
        %1359 = vst.msk [vmem:[%s257 + $0x1f8] sm:$0xff] %vm1295, %v1260
        %1360 = vst.msk [vmem:[%s257 + $0x200] sm:$0xff] %vm1295, %v1261
        %1361 = vst.msk [vmem:[%s257 + $0x208] sm:$0xff] %vm1295, %v1262
        %1362 = vst.msk [vmem:[%s257 + $0x210] sm:$0xff] %vm1295, %v1263
        %1363 = vst.msk [vmem:[%s257 + $0x218] sm:$0xff] %vm1295, %v1264
        %1364 = vst.msk [vmem:[%s257 + $0x220] sm:$0xff] %vm1295, %v1265
        %1365 = vst.msk [vmem:[%s257 + $0x228] sm:$0xff] %vm1295, %v1266
        %1366 = vst.msk [vmem:[%s257 + $0x230] sm:$0xff] %vm1295, %v1267
        %1367 = vst.msk [vmem:[%s257 + $0x238] sm:$0xff] %vm1295, %v1268
        %1368 = vst.msk [vmem:[%s257 + $0x240] sm:$0xff] %vm1295, %v1269
        %1369 = vst.msk [vmem:[%s257 + $0x248] sm:$0xff] %vm1295, %v1270
        %1370 = vst.msk [vmem:[%s257 + $0x250] sm:$0xff] %vm1295, %v1271
        %1371 = vst.msk [vmem:[%s257 + $0x258] sm:$0xff] %vm1295, %v1272
        %1372 = vst.msk [vmem:[%s257 + $0x260] sm:$0xff] %vm1295, %v1273
        %1373 = vst.msk [vmem:[%s257 + $0x268] sm:$0xff] %vm1295, %v1274
        %1374 = vst.msk [vmem:[%s257 + $0x270] sm:$0xff] %vm1295, %v1275
        %1375 = vst.msk [vmem:[%s257 + $0x278] sm:$0xff] %vm1295, %v1276
        %1376 = vst.msk [vmem:[%s257 + $0x280] sm:$0xff] %vm1295, %v1277
        %1377 = vst.msk [vmem:[%s257 + $0x288] sm:$0xff] %vm1295, %v1278
        %1378 = vst.msk [vmem:[%s257 + $0x290] sm:$0xff] %vm1295, %v1279
        %1379 = vst.msk [vmem:[%s257 + $0x298] sm:$0xff] %vm1295, %v1280
        %1380 = vst.msk [vmem:[%s257 + $0x2a0] sm:$0xff] %vm1295, %v1281
        %1381 = vst.msk [vmem:[%s257 + $0x2a8] sm:$0xff] %vm1295, %v1282
        %1382 = vst.msk [vmem:[%s257 + $0x2b0] sm:$0xff] %vm1295, %v1283
        %1383 = vst.msk [vmem:[%s257 + $0x2b8] sm:$0xff] %vm1295, %v1284
        %1384 = vst.msk [vmem:[%s257 + $0x2c0] sm:$0xff] %vm1295, %v1285
        %1385 = vst.msk [vmem:[%s257 + $0x2c8] sm:$0xff] %vm1295, %v1286
        %1386 = vst.msk [vmem:[%s257 + $0x2d0] sm:$0xff] %vm1295, %v1287
        %1387 = vst.msk [vmem:[%s257 + $0x2d8] sm:$0xff] %vm1295, %v1288
        %1388 = vst.msk [vmem:[%s257 + $0x2e0] sm:$0xff] %vm1295, %v1289
        %1389 = vst.msk [vmem:[%s257 + $0x2e8] sm:$0xff] %vm1295, %v1290
        %1390 = vst.msk [vmem:[%s257 + $0x2f0] sm:$0xff] %vm1295, %v1291
        %1391 = vst.msk [vmem:[%s257 + $0x2f8] sm:$0xff] %vm1295, %v1292
        %1392 = vst.msk [vmem:[%s257 + $0x300] sm:$0xff] %vm1295, %v1293
        %1393 = vst.msk [vmem:[%s257 + $0x308] sm:$0xff] %vm1295, %v1294
        %s1394 = smul.u32 98, %s21
        %p1395 = scmp.lt.s32.totalorder %s1394, 195
        %s1396 = scalar_select %p1395, %s1394, 195
        %p1397 = scmp.lt.s32.totalorder %s22, 0
        %s1398 = scalar_select %p1397, %s22, 0
        %s1399 = sadd.s32 %s1398, %s1396
        %s1400 = smul.addr %s1399, 8
        %s1401 = scalar_lea.vmem %s3, %s1400
        // Predicated region
        $region41: #{forward.8} parent=31 // pred_check
          %p1402 = pneg %p137
        $region42: #{forward.8} parent=31 // pred_check_branch
          %1404 = sbr.rel (%p1402) target = $region44
        $region43: #{forward.8} parent=31 // pred_region
          %s1405 = smul.u32 98, %s21
        $region44: #{forward.8} parent=31 // pred_fallthru
          _
      $region32: #{forward.8} parent=5 // pred_fallthru
        _
      %p1406 = scmp.le.s32.totalorder 2, %s11
      // Predicated region
      $region45: #{forward.8} parent=5 // pred_check
        %p1407 = pneg %p1406
      $region46: #{forward.8} parent=5 // pred_check_branch
        %1409 = sbr.rel (%p1407) target = $region48
      $region47: #{forward.8} parent=5 // pred_region
        %s1410 = ssub.s32 %s11, 2
        // Predicated region
        $region49: #{forward.8} parent=47 // pred_check
          %p1411 = pneg %p143
        $region50: #{forward.8} parent=47 // pred_check_branch
          %1413 = sbr.rel (%p1411) target = $region52
        $region51: #{forward.8} parent=47 // pred_region
          %s1414 = smul.u32 98, %s24
          %p1415 = scmp.lt.s32.totalorder %s1414, 195
          %s1416 = scalar_select %p1415, %s1414, 195
          %p1417 = scmp.lt.s32.totalorder %s25, 0
          %s1418 = scalar_select %p1417, %s25, 0
          %s1419 = sadd.s32 %s1418, %s1416
          %s1420 = smul.addr %s1419, 8
          %s1421 = scalar_lea.vmem %s3, %s1420
        $region52: #{forward.8} parent=47 // pred_fallthru
          _
      $region48: #{forward.8} parent=5 // pred_fallthru
        _
    $region6: #{forward.8} parent=1 // loop_footer
      %s15 = sadd.s32 1, %s11
    $region7: #{forward.8} parent=1 // loop_footer_branch
      %10 = sbr.rel target = $region3
    $region8: #{forward.8} parent=1 // loop_exit
      _
    %1422 = vsyncpa [#allocation3], 1
    %s1423 = scalar_lea.sflag [#allocation3], 1
    %1424 = vsyncpa %s1423, 1
    %1425 = vsyncpa [#allocation5], 1

// kernel: forward.9
$region0: #{forward.9}
  #allocation0 [shape = 'u32[]', space=smem, size = 0x4, offset = 0x4, fixed_abs, tag = 'smem constant byte address 0x4 - core index']
  #allocation1 [shape = 'u32[144,128]{1,0:T(1,128)}', space=vmem, size = 0x12000, scoped, tag = 'internal scratch']
  %s0 = inlined_call_operand.vmem [shape: bf16[1568,144], index: 0, kind: input, shape index: {}]
  %s1 = inlined_call_operand.vmem [shape: bf16[144,16], index: 1, kind: input, shape index: {}]
  %s2 = inlined_call_operand.vmem [shape: f32[1,16], index: 2, kind: input, shape index: {}]
  %s3 = inlined_call_operand.vmem [shape: f32[1568,16], index: 3, kind: output, shape index: {}]
  %s4 = sld [smem:[#allocation0]]
  $region45: #{forward.9} parent=0
    _
  %s6 = ssub.s32 1, %s4
  %s7 = scalar_select 0, %s6, %s4
  loop: start=0, step=1, limit=4
  $region2: #{forward.9} parent=0 // loop_pre_header
    _
  $region3: #{forward.9} parent=0 // loop_header
    %s9 = sphi 0, %s13
    %p10 = scmp.ge.s32.totalorder %s9, 4
    %s16 = sphi 0, %s35
    %s17 = sphi 0, %s31
    %s18 = sphi 0, %s27
    %s19 = sphi 0, %s16
    %s20 = sphi 0, %s17
    %s21 = sphi 0, %s18
    %s22 = sphi 0, %s19
    %s23 = sphi 0, %s20
    %s24 = sphi 0, %s21
    %s40 = sphi 0, %s42
    %s43 = sphi 0, %s40
    %s44 = sphi 0, %s43
    %s60 = sphi 0, %s44
    %s68 = sphi 0, %s70
    %s71 = sphi 0, %s68
    %s72 = sphi 0, %s71
    %s88 = sphi 0, %s72
    %s94 = sphi 0, %s96
    %s97 = sphi 0, %s94
    %s98 = sphi 0, %s97
    %s114 = sphi 0, %s98
    %s122 = sphi 0, %s124
    %s125 = sphi 0, %s122
    %s126 = sphi 0, %s125
    %s142 = sphi 0, %s126
  $region4: #{forward.9} parent=0 // loop_header_branch
    %12 = sbr.rel (%p10) target = $region8
  $region5: #{forward.9} parent=0 // loop_body
    %s14 = ssub.s32 %s9, 1
    %s15 = ssub.s32 %s9, 2
    %s25 = sadd.s32 1, %s18
    %p26 = scmp.ge.s32.totalorder %s25, 1
    %s27 = scalar_select %p26, 0, %s25
    %s28 = sadd.s32 1, %s17
    %s29 = scalar_select %p26, %s28, %s17
    %p30 = scmp.ge.s32.totalorder %s29, 1
    %s31 = scalar_select %p30, 0, %s29
    %s32 = sadd.s32 1, %s16
    %s33 = scalar_select %p30, %s32, %s16
    %p34 = scmp.ge.s32.totalorder %s33, 2
    %s35 = scalar_select %p34, 0, %s33
    %s36 = ssub.s32 %s16, %s35
    %s37 = ssub.s32 %s18, %s27
    %s38 = sor.u32 %s36, %s37
    %p39 = scmp.eq.s32.totalorder %s38, 0
    %s41 = sadd.s32 %s40, 1
    %s42 = scalar_select %p39, %s40, %s41
    %p45 = pneg %p39
    %p46 = scmp.eq.s32.totalorder %s9, 1
    %p47 = por %p45, %p46
    %p48 = scmp.ne.s32.totalorder %s40, %s43
    %p49 = scmp.eq.s32.totalorder %s9, 0
    %p50 = por %p48, %p49
    %p51 = scmp.ne.s32.totalorder %s40, %s43
    %p52 = scmp.eq.s32.totalorder %s14, 1
    %p53 = por %p51, %p52
    %p54 = scmp.ne.s32.totalorder %s43, %s44
    %p55 = scmp.eq.s32.totalorder %s14, 0
    %p56 = por %p54, %p55
    %p57 = scmp.ne.s32.totalorder %s43, %s44
    %p58 = scmp.eq.s32.totalorder %s15, 1
    %p59 = por %p57, %p58
    %p61 = scmp.ne.s32.totalorder %s44, %s60
    %p62 = scmp.eq.s32.totalorder %s15, 0
    %p63 = por %p61, %p62
    %s64 = ssub.s32 %s18, %s27
    %s65 = ssub.s32 %s17, %s31
    %s66 = sor.u32 %s64, %s65
    %p67 = scmp.eq.s32.totalorder %s66, 0
    %s69 = sadd.s32 %s68, 1
    %s70 = scalar_select %p67, %s68, %s69
    %p73 = pneg %p67
    %p74 = scmp.eq.s32.totalorder %s9, 1
    %p75 = por %p73, %p74
    %p76 = scmp.ne.s32.totalorder %s68, %s71
    %p77 = scmp.eq.s32.totalorder %s9, 0
    %p78 = por %p76, %p77
    %p79 = scmp.ne.s32.totalorder %s68, %s71
    %p80 = scmp.eq.s32.totalorder %s14, 1
    %p81 = por %p79, %p80
    %p82 = scmp.ne.s32.totalorder %s71, %s72
    %p83 = scmp.eq.s32.totalorder %s14, 0
    %p84 = por %p82, %p83
    %p85 = scmp.ne.s32.totalorder %s71, %s72
    %p86 = scmp.eq.s32.totalorder %s15, 1
    %p87 = por %p85, %p86
    %p89 = scmp.ne.s32.totalorder %s72, %s88
    %p90 = scmp.eq.s32.totalorder %s15, 0
    %p91 = por %p89, %p90
    %s92 = ssub.s32 %s17, %s31
    %p93 = scmp.eq.s32.totalorder %s92, 0
    %s95 = sadd.s32 %s94, 1
    %s96 = scalar_select %p93, %s94, %s95
    %p99 = pneg %p93
    %p100 = scmp.eq.s32.totalorder %s9, 1
    %p101 = por %p99, %p100
    %p102 = scmp.ne.s32.totalorder %s94, %s97
    %p103 = scmp.eq.s32.totalorder %s9, 0
    %p104 = por %p102, %p103
    %p105 = scmp.ne.s32.totalorder %s94, %s97
    %p106 = scmp.eq.s32.totalorder %s14, 1
    %p107 = por %p105, %p106
    %p108 = scmp.ne.s32.totalorder %s97, %s98
    %p109 = scmp.eq.s32.totalorder %s14, 0
    %p110 = por %p108, %p109
    %p111 = scmp.ne.s32.totalorder %s97, %s98
    %p112 = scmp.eq.s32.totalorder %s15, 1
    %p113 = por %p111, %p112
    %p115 = scmp.ne.s32.totalorder %s98, %s114
    %p116 = scmp.eq.s32.totalorder %s15, 0
    %p117 = por %p115, %p116
    %s118 = ssub.s32 %s16, %s35
    %s119 = ssub.s32 %s17, %s31
    %s120 = sor.u32 %s118, %s119
    %p121 = scmp.eq.s32.totalorder %s120, 0
    %s123 = sadd.s32 %s122, 1
    %s124 = scalar_select %p121, %s122, %s123
    %p127 = pneg %p121
    %p128 = scmp.eq.s32.totalorder %s9, 1
    %p129 = por %p127, %p128
    %p130 = scmp.ne.s32.totalorder %s122, %s125
    %p131 = scmp.eq.s32.totalorder %s9, 0
    %p132 = por %p130, %p131
    %p133 = scmp.ne.s32.totalorder %s122, %s125
    %p134 = scmp.eq.s32.totalorder %s14, 1
    %p135 = por %p133, %p134
    %p136 = scmp.ne.s32.totalorder %s125, %s126
    %p137 = scmp.eq.s32.totalorder %s14, 0
    %p138 = por %p136, %p137
    %p139 = scmp.ne.s32.totalorder %s125, %s126
    %p140 = scmp.eq.s32.totalorder %s15, 1
    %p141 = por %p139, %p140
    %p143 = scmp.ne.s32.totalorder %s126, %s142
    %p144 = scmp.eq.s32.totalorder %s15, 0
    %p145 = por %p143, %p144
    %p146 = scmp.le.s32.totalorder 1, %s9
    %p147 = scmp.lt.s32.totalorder %s9, 3
    %p148 = pnand %p146, %p147
    %p149 = pneg %p148
    // Predicated region
    $region9: #{forward.9} parent=5 // pred_check
      _
    $region10: #{forward.9} parent=5 // pred_check_branch
      %151 = sbr.rel (%p148) target = $region12
    $region11: #{forward.9} parent=5 // pred_region
      %s152 = ssub.s32 %s9, 1
      // Predicated region
      $region13: #{forward.9} parent=11 // pred_check
        %p153 = pneg %p84
      $region14: #{forward.9} parent=11 // pred_check_branch
        %155 = sbr.rel (%p153) target = $region16
      $region15: #{forward.9} parent=11 // pred_region
        %s156 = smul.u32 18, %s21
        %p157 = scmp.lt.s32.totalorder %s156, 17
        %s158 = scalar_select %p157, %s156, 17
        %p159 = scmp.lt.s32.totalorder %s20, 0
        %s160 = scalar_select %p159, %s20, 0
        %s161 = sadd.s32 %s160, %s158
        %s162 = smul.addr %s161, 4
        %s163 = scalar_lea.vmem %s1, %s162
        %s164 = smul.u32 18, %s21
      $region16: #{forward.9} parent=11 // pred_fallthru
        _
      // Predicated region
      $region17: #{forward.9} parent=11 // pred_check
        %p165 = pneg %p110
      $region18: #{forward.9} parent=11 // pred_check_branch
        %167 = sbr.rel (%p165) target = $region20
      $region19: #{forward.9} parent=11 // pred_region
        %p168 = scmp.lt.s32.totalorder %s20, 0
        %s169 = scalar_select %p168, %s20, 0
        %s170 = scalar_lea.vmem %s2, %s169
      $region20: #{forward.9} parent=11 // pred_fallthru
        _
    $region12: #{forward.9} parent=5 // pred_fallthru
      _
    %p171 = scmp.lt.s32.totalorder %s9, 2
    // Predicated region
    $region21: #{forward.9} parent=5 // pred_check
      %p172 = pneg %p171
    $region22: #{forward.9} parent=5 // pred_check_branch
      %174 = sbr.rel (%p172) target = $region24
    $region23: #{forward.9} parent=5 // pred_region
      // Predicated region
      $region25: #{forward.9} parent=23 // pred_check
        %p175 = pneg %p50
      $region26: #{forward.9} parent=23 // pred_check_branch
        %177 = sbr.rel (%p175) target = $region28
      $region27: #{forward.9} parent=23 // pred_region
        %s178 = smul.u32 98, %s16
        %s179 = smul.u32 2, %s18
        %p180 = scmp.lt.s32.totalorder %s178, 195
        %s181 = scalar_select %p180, %s178, 195
        %p182 = scmp.lt.s32.totalorder %s179, 1
        %s183 = scalar_select %p182, %s179, 1
        %s184 = smul.addr %s181, 2
        %s185 = sadd.s32 %s183, %s184
        %s186 = smul.addr %s185, 4
        %s187 = scalar_lea.vmem %s0, %s186
        %s188 = smul.u32 98, %s16
        %s189 = smul.u32 2, %s18
      $region28: #{forward.9} parent=23 // pred_fallthru
        _
    $region24: #{forward.9} parent=5 // pred_fallthru
      _
    %p190 = scmp.le.s32.totalorder 1, %s9
    %p191 = scmp.lt.s32.totalorder %s9, 3
    %p192 = pnand %p190, %p191
    %p193 = pneg %p192
    // Predicated region
    $region29: #{forward.9} parent=5 // pred_check
      _
    $region30: #{forward.9} parent=5 // pred_check_branch
      %195 = sbr.rel (%p192) target = $region32
    $region31: #{forward.9} parent=5 // pred_region
      %s196 = ssub.s32 %s9, 1
      %s197 = smul.u32 98, %s19
      %s198 = smul.u32 2, %s21
      %p199 = scmp.lt.s32.totalorder %s197, 195
      %s200 = scalar_select %p199, %s197, 195
      %p201 = scmp.lt.s32.totalorder %s198, 1
      %s202 = scalar_select %p201, %s198, 1
      %s203 = smul.addr %s200, 2
      %s204 = sadd.s32 %s202, %s203
      %s205 = smul.addr %s204, 4
      %s206 = scalar_lea.vmem %s0, %s205
      %p207 = pneg %p56
      %p208 = pneg %p53
      %s209 = smul.u32 18, %s21
      %p210 = scmp.lt.s32.totalorder %s209, 17
      %s211 = scalar_select %p210, %s209, 17
      %p212 = scmp.lt.s32.totalorder %s20, 0
      %s213 = scalar_select %p212, %s20, 0
      %s214 = sadd.s32 %s213, %s211
      %s215 = smul.addr %s214, 4
      %s216 = scalar_lea.vmem %s1, %s215
      %p217 = pneg %p84
      %p218 = pneg %p81
      %p219 = scmp.lt.s32.totalorder %s20, 0
      %s220 = scalar_select %p219, %s20, 0
      %s221 = scalar_lea.vmem %s2, %s220
      %p222 = pneg %p110
      %p223 = pneg %p107
      %p224 = pneg %p138
      %p225 = pneg %p135
      %s226 = smul.u32 98, %s19
      %p227 = scmp.lt.s32.totalorder %s226, 195
      %s228 = scalar_select %p227, %s226, 195
      %p229 = scmp.lt.s32.totalorder %s20, 0
      %s230 = scalar_select %p229, %s20, 0
      %s231 = sadd.s32 %s230, %s228
      %s232 = smul.addr %s231, 8
      %s233 = scalar_lea.vmem %s3, %s232
      %s234 = smul.u32 98, %s19
      %s235 = smul.u32 2, %s21
      %p236 = scmp.lt.s32.totalorder %s234, 195
      %s237 = scalar_select %p236, %s234, 195
      %p238 = scmp.lt.s32.totalorder %s235, 1
      %s239 = scalar_select %p238, %s235, 1
      %s240 = smul.addr %s237, 2
      %s241 = sadd.s32 %s239, %s240
      %s242 = smul.addr %s241, 4
      %s243 = scalar_lea.vmem %s0, %s242
      %s244 = smul.u32 98, %s19
      %s245 = smul.u32 2, %s21
      %s246 = smul.u32 18, %s21
      %p247 = scmp.lt.s32.totalorder %s246, 17
      %s248 = scalar_select %p247, %s246, 17
      %p249 = scmp.lt.s32.totalorder %s20, 0
      %s250 = scalar_select %p249, %s20, 0
      %s251 = sadd.s32 %s250, %s248
      %s252 = smul.addr %s251, 4
      %s253 = scalar_lea.vmem %s1, %s252
      %s254 = smul.u32 18, %s21
      %p255 = scmp.lt.s32.totalorder %s20, 0
      %s256 = scalar_select %p255, %s20, 0
      %s257 = scalar_lea.vmem %s2, %s256
      %s258 = smul.u32 98, %s19
      %p259 = scmp.lt.s32.totalorder %s258, 195
      %s260 = scalar_select %p259, %s258, 195
      %p261 = scmp.lt.s32.totalorder %s20, 0
      %s262 = scalar_select %p261, %s20, 0
      %s263 = sadd.s32 %s262, %s260
      %s264 = smul.addr %s263, 8
      %s265 = scalar_lea.vmem %s3, %s264
      %s266 = smul.u32 98, %s19
      %v268 = vld [vmem:[%s243] sm:$0xff]
      %v269 = vld [vmem:[%s243 + $0x8] sm:$0xff]
      %v270 = vld [vmem:[%s243 + $0x10] sm:$0xff]
      %v271 = vld [vmem:[%s243 + $0x18] sm:$0xff]
      %v272 = vld [vmem:[%s243 + $0x20] sm:$0xff]
      %v273 = vld [vmem:[%s243 + $0x28] sm:$0xff]
      %v274 = vld [vmem:[%s243 + $0x30] sm:$0xff]
      %v275 = vld [vmem:[%s243 + $0x38] sm:$0xff]
      %v276 = vld [vmem:[%s243 + $0x40] sm:$0xff]
      %v277 = vld [vmem:[%s243 + $0x48] sm:$0xff]
      %v278 = vld [vmem:[%s243 + $0x50] sm:$0xff]
      %v279 = vld [vmem:[%s243 + $0x58] sm:$0xff]
      %v280 = vld [vmem:[%s243 + $0x60] sm:$0xff]
      %v281 = vld [vmem:[%s243 + $0x68] sm:$0xff]
      %v282 = vld [vmem:[%s243 + $0x70] sm:$0xff]
      %v283 = vld [vmem:[%s243 + $0x78] sm:$0xff]
      %v284 = vld [vmem:[%s243 + $0x80] sm:$0xff]
      %v285 = vld [vmem:[%s243 + $0x88] sm:$0xff]
      %v286 = vld [vmem:[%s243 + $0x90] sm:$0xff]
      %v287 = vld [vmem:[%s243 + $0x98] sm:$0xff]
      %v288 = vld [vmem:[%s243 + $0xa0] sm:$0xff]
      %v289 = vld [vmem:[%s243 + $0xa8] sm:$0xff]
      %v290 = vld [vmem:[%s243 + $0xb0] sm:$0xff]
      %v291 = vld [vmem:[%s243 + $0xb8] sm:$0xff]
      %v292 = vld [vmem:[%s243 + $0xc0] sm:$0xff]
      %v293 = vld [vmem:[%s243 + $0xc8] sm:$0xff]
      %v294 = vld [vmem:[%s243 + $0xd0] sm:$0xff]
      %v295 = vld [vmem:[%s243 + $0xd8] sm:$0xff]
      %v296 = vld [vmem:[%s243 + $0xe0] sm:$0xff]
      %v297 = vld [vmem:[%s243 + $0xe8] sm:$0xff]
      %v298 = vld [vmem:[%s243 + $0xf0] sm:$0xff]
      %v299 = vld [vmem:[%s243 + $0xf8] sm:$0xff]
      %v300 = vld [vmem:[%s243 + $0x100] sm:$0xff]
      %v301 = vld [vmem:[%s243 + $0x108] sm:$0xff]
      %v302 = vld [vmem:[%s243 + $0x110] sm:$0xff]
      %v303 = vld [vmem:[%s243 + $0x118] sm:$0xff]
      %v304 = vld [vmem:[%s243 + $0x120] sm:$0xff]
      %v305 = vld [vmem:[%s243 + $0x128] sm:$0xff]
      %v306 = vld [vmem:[%s243 + $0x130] sm:$0xff]
      %v307 = vld [vmem:[%s243 + $0x138] sm:$0xff]
      %v308 = vld [vmem:[%s243 + $0x140] sm:$0xff]
      %v309 = vld [vmem:[%s243 + $0x148] sm:$0xff]
      %v310 = vld [vmem:[%s243 + $0x150] sm:$0xff]
      %v311 = vld [vmem:[%s243 + $0x158] sm:$0xff]
      %v312 = vld [vmem:[%s243 + $0x160] sm:$0xff]
      %v313 = vld [vmem:[%s243 + $0x168] sm:$0xff]
      %v314 = vld [vmem:[%s243 + $0x170] sm:$0xff]
      %v315 = vld [vmem:[%s243 + $0x178] sm:$0xff]
      %v316 = vld [vmem:[%s243 + $0x180] sm:$0xff]
      %v317 = vld [vmem:[%s243 + $0x188] sm:$0xff]
      %v318 = vld [vmem:[%s243 + $0x190] sm:$0xff]
      %v319 = vld [vmem:[%s243 + $0x198] sm:$0xff]
      %v320 = vld [vmem:[%s243 + $0x1a0] sm:$0xff]
      %v321 = vld [vmem:[%s243 + $0x1a8] sm:$0xff]
      %v322 = vld [vmem:[%s243 + $0x1b0] sm:$0xff]
      %v323 = vld [vmem:[%s243 + $0x1b8] sm:$0xff]
      %v324 = vld [vmem:[%s243 + $0x1c0] sm:$0xff]
      %v325 = vld [vmem:[%s243 + $0x1c8] sm:$0xff]
      %v326 = vld [vmem:[%s243 + $0x1d0] sm:$0xff]
      %v327 = vld [vmem:[%s243 + $0x1d8] sm:$0xff]
      %v328 = vld [vmem:[%s243 + $0x1e0] sm:$0xff]
      %v329 = vld [vmem:[%s243 + $0x1e8] sm:$0xff]
      %v330 = vld [vmem:[%s243 + $0x1f0] sm:$0xff]
      %v331 = vld [vmem:[%s243 + $0x1f8] sm:$0xff]
      %v332 = vld [vmem:[%s243 + $0x200] sm:$0xff]
      %v333 = vld [vmem:[%s243 + $0x208] sm:$0xff]
      %v334 = vld [vmem:[%s243 + $0x210] sm:$0xff]
      %v335 = vld [vmem:[%s243 + $0x218] sm:$0xff]
      %v336 = vld [vmem:[%s243 + $0x220] sm:$0xff]
      %v337 = vld [vmem:[%s243 + $0x228] sm:$0xff]
      %v338 = vld [vmem:[%s243 + $0x230] sm:$0xff]
      %v339 = vld [vmem:[%s243 + $0x238] sm:$0xff]
      %v340 = vld [vmem:[%s243 + $0x240] sm:$0xff]
      %v341 = vld [vmem:[%s243 + $0x248] sm:$0xff]
      %v342 = vld [vmem:[%s243 + $0x250] sm:$0xff]
      %v343 = vld [vmem:[%s243 + $0x258] sm:$0xff]
      %v344 = vld [vmem:[%s243 + $0x260] sm:$0xff]
      %v345 = vld [vmem:[%s243 + $0x268] sm:$0xff]
      %v346 = vld [vmem:[%s243 + $0x270] sm:$0xff]
      %v347 = vld [vmem:[%s243 + $0x278] sm:$0xff]
      %v348 = vld [vmem:[%s243 + $0x280] sm:$0xff]
      %v349 = vld [vmem:[%s243 + $0x288] sm:$0xff]
      %v350 = vld [vmem:[%s243 + $0x290] sm:$0xff]
      %v351 = vld [vmem:[%s243 + $0x298] sm:$0xff]
      %v352 = vld [vmem:[%s243 + $0x2a0] sm:$0xff]
      %v353 = vld [vmem:[%s243 + $0x2a8] sm:$0xff]
      %v354 = vld [vmem:[%s243 + $0x2b0] sm:$0xff]
      %v355 = vld [vmem:[%s243 + $0x2b8] sm:$0xff]
      %v356 = vld [vmem:[%s243 + $0x2c0] sm:$0xff]
      %v357 = vld [vmem:[%s243 + $0x2c8] sm:$0xff]
      %v358 = vld [vmem:[%s243 + $0x2d0] sm:$0xff]
      %v359 = vld [vmem:[%s243 + $0x2d8] sm:$0xff]
      %v360 = vld [vmem:[%s243 + $0x2e0] sm:$0xff]
      %v361 = vld [vmem:[%s243 + $0x2e8] sm:$0xff]
      %v362 = vld [vmem:[%s243 + $0x2f0] sm:$0xff]
      %v363 = vld [vmem:[%s243 + $0x2f8] sm:$0xff]
      %v364 = vld [vmem:[%s243 + $0x300] sm:$0xff]
      %v365 = vld [vmem:[%s243 + $0x308] sm:$0xff]
      %v366 = vld [vmem:[%s253] sm:$0xf]
      %v367 = vld [vmem:[%s253 + $0x4] sm:$0xf]
      %v368 = vld [vmem:[%s253 + $0x8] sm:$0xf]
      %v369 = vld [vmem:[%s253 + $0xc] sm:$0xf]
      %v370 = vld [vmem:[%s253 + $0x10] sm:$0xf]
      %v371 = vld [vmem:[%s253 + $0x14] sm:$0xf]
      %v372 = vld [vmem:[%s253 + $0x18] sm:$0xf]
      %v373 = vld [vmem:[%s253 + $0x1c] sm:$0xf]
      %v374 = vld [vmem:[%s253 + $0x20] sm:$0xf]
      %v375 = vld [vmem:[%s253 + $0x24] sm:$0xf]
      %v376 = vld [vmem:[%s253 + $0x28] sm:$0xf]
      %v377 = vld [vmem:[%s253 + $0x2c] sm:$0xf]
      %v378 = vld [vmem:[%s253 + $0x30] sm:$0xf]
      %v379 = vld [vmem:[%s253 + $0x34] sm:$0xf]
      %v380 = vld [vmem:[%s253 + $0x38] sm:$0xf]
      %v381 = vld [vmem:[%s253 + $0x3c] sm:$0xf]
      %v382 = vld [vmem:[%s253 + $0x40] sm:$0xf]
      %v383 = vld [vmem:[%s253 + $0x44] sm:$0xf]
      %v384 = vld [vmem:[%s257] sm:$0x1]
      %v386 = vlaneseq
      %v387 = vshrl.u32 %v386, 7
      %v388 = vsub.s32 0, %v387
      %v389 = vrot.slane %v384, %v388
      %v489 = vunpack.c.l.b16 %v268
      %v490 = vunpack.c.h.b16 %v268
      %v491 = vunpack.c.l.b16 %v269
      %v492 = vunpack.c.h.b16 %v269
      %v493 = vunpack.c.l.b16 %v270
      %v494 = vunpack.c.h.b16 %v270
      %v495 = vunpack.c.l.b16 %v271
      %v496 = vunpack.c.h.b16 %v271
      %v497 = vunpack.c.l.b16 %v272
      %v498 = vunpack.c.h.b16 %v272
      %v499 = vunpack.c.l.b16 %v273
      %v500 = vunpack.c.h.b16 %v273
      %v501 = vunpack.c.l.b16 %v274
      %v502 = vunpack.c.h.b16 %v274
      %v503 = vunpack.c.l.b16 %v275
      %v504 = vunpack.c.h.b16 %v275
      %v505 = vunpack.c.l.b16 %v276
      %v506 = vunpack.c.h.b16 %v276
      %v507 = vunpack.c.l.b16 %v277
      %v508 = vunpack.c.h.b16 %v277
      %v509 = vunpack.c.l.b16 %v278
      %v510 = vunpack.c.h.b16 %v278
      %v511 = vunpack.c.l.b16 %v279
      %v512 = vunpack.c.h.b16 %v279
      %v513 = vunpack.c.l.b16 %v280
      %v514 = vunpack.c.h.b16 %v280
      %v515 = vunpack.c.l.b16 %v281
      %v516 = vunpack.c.h.b16 %v281
      %v517 = vunpack.c.l.b16 %v282
      %v518 = vunpack.c.h.b16 %v282
      %v519 = vunpack.c.l.b16 %v283
      %v520 = vunpack.c.h.b16 %v283
      %v521 = vunpack.c.l.b16 %v284
      %v522 = vunpack.c.h.b16 %v284
      %v523 = vunpack.c.l.b16 %v285
      %v524 = vunpack.c.h.b16 %v285
      %v525 = vunpack.c.l.b16 %v286
      %v526 = vunpack.c.h.b16 %v286
      %v527 = vunpack.c.l.b16 %v287
      %v528 = vunpack.c.h.b16 %v287
      %v529 = vunpack.c.l.b16 %v288
      %v530 = vunpack.c.h.b16 %v288
      %v531 = vunpack.c.l.b16 %v289
      %v532 = vunpack.c.h.b16 %v289
      %v533 = vunpack.c.l.b16 %v290
      %v534 = vunpack.c.h.b16 %v290
      %v535 = vunpack.c.l.b16 %v291
      %v536 = vunpack.c.h.b16 %v291
      %v537 = vunpack.c.l.b16 %v292
      %v538 = vunpack.c.h.b16 %v292
      %v539 = vunpack.c.l.b16 %v293
      %v540 = vunpack.c.h.b16 %v293
      %v541 = vunpack.c.l.b16 %v294
      %v542 = vunpack.c.h.b16 %v294
      %v543 = vunpack.c.l.b16 %v295
      %v544 = vunpack.c.h.b16 %v295
      %v545 = vunpack.c.l.b16 %v296
      %v546 = vunpack.c.h.b16 %v296
      %v547 = vunpack.c.l.b16 %v297
      %v548 = vunpack.c.h.b16 %v297
      %v549 = vunpack.c.l.b16 %v298
      %v550 = vunpack.c.h.b16 %v298
      %v551 = vunpack.c.l.b16 %v299
      %v552 = vunpack.c.h.b16 %v299
      %v553 = vunpack.c.l.b16 %v300
      %v554 = vunpack.c.h.b16 %v300
      %v555 = vunpack.c.l.b16 %v301
      %v556 = vunpack.c.h.b16 %v301
      %v557 = vunpack.c.l.b16 %v302
      %v558 = vunpack.c.h.b16 %v302
      %v559 = vunpack.c.l.b16 %v303
      %v560 = vunpack.c.h.b16 %v303
      %v561 = vunpack.c.l.b16 %v304
      %v562 = vunpack.c.h.b16 %v304
      %v563 = vunpack.c.l.b16 %v305
      %v564 = vunpack.c.h.b16 %v305
      %v565 = vunpack.c.l.b16 %v306
      %v566 = vunpack.c.h.b16 %v306
      %v567 = vunpack.c.l.b16 %v307
      %v568 = vunpack.c.h.b16 %v307
      %v569 = vunpack.c.l.b16 %v308
      %v570 = vunpack.c.h.b16 %v308
      %v571 = vunpack.c.l.b16 %v309
      %v572 = vunpack.c.h.b16 %v309
      %v573 = vunpack.c.l.b16 %v310
      %v574 = vunpack.c.h.b16 %v310
      %v575 = vunpack.c.l.b16 %v311
      %v576 = vunpack.c.h.b16 %v311
      %v577 = vunpack.c.l.b16 %v312
      %v578 = vunpack.c.h.b16 %v312
      %v579 = vunpack.c.l.b16 %v313
      %v580 = vunpack.c.h.b16 %v313
      %v581 = vunpack.c.l.b16 %v314
      %v582 = vunpack.c.h.b16 %v314
      %v583 = vunpack.c.l.b16 %v315
      %v584 = vunpack.c.h.b16 %v315
      %v585 = vunpack.c.l.b16 %v316
      %v586 = vunpack.c.h.b16 %v316
      %v587 = vunpack.c.l.b16 %v317
      %v588 = vunpack.c.h.b16 %v317
      %v589 = vunpack.c.l.b16 %v318
      %v590 = vunpack.c.h.b16 %v318
      %v591 = vunpack.c.l.b16 %v319
      %v592 = vunpack.c.h.b16 %v319
      %v593 = vunpack.c.l.b16 %v320
      %v594 = vunpack.c.h.b16 %v320
      %v595 = vunpack.c.l.b16 %v321
      %v596 = vunpack.c.h.b16 %v321
      %v597 = vunpack.c.l.b16 %v322
      %v598 = vunpack.c.h.b16 %v322
      %v599 = vunpack.c.l.b16 %v323
      %v600 = vunpack.c.h.b16 %v323
      %v601 = vunpack.c.l.b16 %v324
      %v602 = vunpack.c.h.b16 %v324
      %v603 = vunpack.c.l.b16 %v325
      %v604 = vunpack.c.h.b16 %v325
      %v605 = vunpack.c.l.b16 %v326
      %v606 = vunpack.c.h.b16 %v326
      %v607 = vunpack.c.l.b16 %v327
      %v608 = vunpack.c.h.b16 %v327
      %v609 = vunpack.c.l.b16 %v328
      %v610 = vunpack.c.h.b16 %v328
      %v611 = vunpack.c.l.b16 %v329
      %v612 = vunpack.c.h.b16 %v329
      %v613 = vunpack.c.l.b16 %v330
      %v614 = vunpack.c.h.b16 %v330
      %v615 = vunpack.c.l.b16 %v331
      %v616 = vunpack.c.h.b16 %v331
      %v617 = vunpack.c.l.b16 %v332
      %v618 = vunpack.c.h.b16 %v332
      %v619 = vunpack.c.l.b16 %v333
      %v620 = vunpack.c.h.b16 %v333
      %v621 = vunpack.c.l.b16 %v334
      %v622 = vunpack.c.h.b16 %v334
      %v623 = vunpack.c.l.b16 %v335
      %v624 = vunpack.c.h.b16 %v335
      %v625 = vunpack.c.l.b16 %v336
      %v626 = vunpack.c.h.b16 %v336
      %v627 = vunpack.c.l.b16 %v337
      %v628 = vunpack.c.h.b16 %v337
      %v629 = vunpack.c.l.b16 %v338
      %v630 = vunpack.c.h.b16 %v338
      %v631 = vunpack.c.l.b16 %v339
      %v632 = vunpack.c.h.b16 %v339
      %v633 = vunpack.c.l.b16 %v340
      %v634 = vunpack.c.h.b16 %v340
      %v635 = vunpack.c.l.b16 %v341
      %v636 = vunpack.c.h.b16 %v341
      %v637 = vunpack.c.l.b16 %v342
      %v638 = vunpack.c.h.b16 %v342
      %v639 = vunpack.c.l.b16 %v343
      %v640 = vunpack.c.h.b16 %v343
      %v641 = vunpack.c.l.b16 %v344
      %v642 = vunpack.c.h.b16 %v344
      %v643 = vunpack.c.l.b16 %v345
      %v644 = vunpack.c.h.b16 %v345
      %v645 = vunpack.c.l.b16 %v346
      %v646 = vunpack.c.h.b16 %v346
      %v647 = vunpack.c.l.b16 %v347
      %v648 = vunpack.c.h.b16 %v347
      %v649 = vunpack.c.l.b16 %v348
      %v650 = vunpack.c.h.b16 %v348
      %v651 = vunpack.c.l.b16 %v349
      %v652 = vunpack.c.h.b16 %v349
      %v653 = vunpack.c.l.b16 %v350
      %v654 = vunpack.c.h.b16 %v350
      %v655 = vunpack.c.l.b16 %v351
      %v656 = vunpack.c.h.b16 %v351
      %v657 = vunpack.c.l.b16 %v352
      %v658 = vunpack.c.h.b16 %v352
      %v659 = vunpack.c.l.b16 %v353
      %v660 = vunpack.c.h.b16 %v353
      %v661 = vunpack.c.l.b16 %v354
      %v662 = vunpack.c.h.b16 %v354
      %v663 = vunpack.c.l.b16 %v355
      %v664 = vunpack.c.h.b16 %v355
      %v665 = vunpack.c.l.b16 %v356
      %v666 = vunpack.c.h.b16 %v356
      %v667 = vunpack.c.l.b16 %v357
      %v668 = vunpack.c.h.b16 %v357
      %v669 = vunpack.c.l.b16 %v358
      %v670 = vunpack.c.h.b16 %v358
      %v671 = vunpack.c.l.b16 %v359
      %v672 = vunpack.c.h.b16 %v359
      %v673 = vunpack.c.l.b16 %v360
      %v674 = vunpack.c.h.b16 %v360
      %v675 = vunpack.c.l.b16 %v361
      %v676 = vunpack.c.h.b16 %v361
      %v677 = vunpack.c.l.b16 %v362
      %v678 = vunpack.c.h.b16 %v362
      %v679 = vunpack.c.l.b16 %v363
      %v680 = vunpack.c.h.b16 %v363
      %v681 = vunpack.c.l.b16 %v364
      %v682 = vunpack.c.h.b16 %v364
      %v683 = vunpack.c.l.b16 %v365
      %v684 = vunpack.c.h.b16 %v365
      %v685 = vpack.c.b16 %v491, %v489
      %v686 = vpack.c.b16 %v492, %v490
      %v687 = vpack.c.b16 %v495, %v493
      %v688 = vpack.c.b16 %v496, %v494
      %v689 = vpack.c.b16 %v499, %v497
      %v690 = vpack.c.b16 %v500, %v498
      %v691 = vpack.c.b16 %v503, %v501
      %v692 = vpack.c.b16 %v504, %v502
      %v693 = vpack.c.b16 %v507, %v505
      %v694 = vpack.c.b16 %v508, %v506
      %v695 = vpack.c.b16 %v511, %v509
      %v696 = vpack.c.b16 %v512, %v510
      %v697 = vpack.c.b16 %v515, %v513
      %v698 = vpack.c.b16 %v516, %v514
      %v699 = vpack.c.b16 %v519, %v517
      %v700 = vpack.c.b16 %v520, %v518
      %v701 = vpack.c.b16 %v523, %v521
      %v702 = vpack.c.b16 %v524, %v522
      %v703 = vpack.c.b16 %v527, %v525
      %v704 = vpack.c.b16 %v528, %v526
      %v705 = vpack.c.b16 %v531, %v529
      %v706 = vpack.c.b16 %v532, %v530
      %v707 = vpack.c.b16 %v535, %v533
      %v708 = vpack.c.b16 %v536, %v534
      %v709 = vpack.c.b16 %v539, %v537
      %v710 = vpack.c.b16 %v540, %v538
      %v711 = vpack.c.b16 %v543, %v541
      %v712 = vpack.c.b16 %v544, %v542
      %v713 = vpack.c.b16 %v547, %v545
      %v714 = vpack.c.b16 %v548, %v546
      %v715 = vpack.c.b16 %v551, %v549
      %v716 = vpack.c.b16 %v552, %v550
      %v717 = vpack.c.b16 %v555, %v553
      %v718 = vpack.c.b16 %v556, %v554
      %v719 = vpack.c.b16 %v559, %v557
      %v720 = vpack.c.b16 %v560, %v558
      %v721 = vpack.c.b16 %v563, %v561
      %v722 = vpack.c.b16 %v564, %v562
      %v723 = vpack.c.b16 %v567, %v565
      %v724 = vpack.c.b16 %v568, %v566
      %v725 = vpack.c.b16 %v571, %v569
      %v726 = vpack.c.b16 %v572, %v570
      %v727 = vpack.c.b16 %v575, %v573
      %v728 = vpack.c.b16 %v576, %v574
      %v729 = vpack.c.b16 %v579, %v577
      %v730 = vpack.c.b16 %v580, %v578
      %v731 = vpack.c.b16 %v583, %v581
      %v732 = vpack.c.b16 %v584, %v582
      %v733 = vpack.c.b16 %v587, %v585
      %v734 = vpack.c.b16 %v588, %v586
      %v735 = vpack.c.b16 %v591, %v589
      %v736 = vpack.c.b16 %v592, %v590
      %v737 = vpack.c.b16 %v595, %v593
      %v738 = vpack.c.b16 %v596, %v594
      %v739 = vpack.c.b16 %v599, %v597
      %v740 = vpack.c.b16 %v600, %v598
      %v741 = vpack.c.b16 %v603, %v601
      %v742 = vpack.c.b16 %v604, %v602
      %v743 = vpack.c.b16 %v607, %v605
      %v744 = vpack.c.b16 %v608, %v606
      %v745 = vpack.c.b16 %v611, %v609
      %v746 = vpack.c.b16 %v612, %v610
      %v747 = vpack.c.b16 %v615, %v613
      %v748 = vpack.c.b16 %v616, %v614
      %v749 = vpack.c.b16 %v619, %v617
      %v750 = vpack.c.b16 %v620, %v618
      %v751 = vpack.c.b16 %v623, %v621
      %v752 = vpack.c.b16 %v624, %v622
      %v753 = vpack.c.b16 %v627, %v625
      %v754 = vpack.c.b16 %v628, %v626
      %v755 = vpack.c.b16 %v631, %v629
      %v756 = vpack.c.b16 %v632, %v630
      %v757 = vpack.c.b16 %v635, %v633
      %v758 = vpack.c.b16 %v636, %v634
      %v759 = vpack.c.b16 %v639, %v637
      %v760 = vpack.c.b16 %v640, %v638
      %v761 = vpack.c.b16 %v643, %v641
      %v762 = vpack.c.b16 %v644, %v642
      %v763 = vpack.c.b16 %v647, %v645
      %v764 = vpack.c.b16 %v648, %v646
      %v765 = vpack.c.b16 %v651, %v649
      %v766 = vpack.c.b16 %v652, %v650
      %v767 = vpack.c.b16 %v655, %v653
      %v768 = vpack.c.b16 %v656, %v654
      %v769 = vpack.c.b16 %v659, %v657
      %v770 = vpack.c.b16 %v660, %v658
      %v771 = vpack.c.b16 %v663, %v661
      %v772 = vpack.c.b16 %v664, %v662
      %v773 = vpack.c.b16 %v667, %v665
      %v774 = vpack.c.b16 %v668, %v666
      %v775 = vpack.c.b16 %v671, %v669
      %v776 = vpack.c.b16 %v672, %v670
      %v777 = vpack.c.b16 %v675, %v673
      %v778 = vpack.c.b16 %v676, %v674
      %v779 = vpack.c.b16 %v679, %v677
      %v780 = vpack.c.b16 %v680, %v678
      %v781 = vpack.c.b16 %v683, %v681
      %v782 = vpack.c.b16 %v684, %v682
      %v850 = vunpack.c.l.b16 %v366
      %v851 = vunpack.c.l.b16 %v367
      %v852 = vunpack.c.l.b16 %v368
      %v853 = vunpack.c.l.b16 %v369
      %v854 = vunpack.c.l.b16 %v370
      %v855 = vunpack.c.l.b16 %v371
      %v856 = vunpack.c.l.b16 %v372
      %v857 = vunpack.c.l.b16 %v373
      %v858 = vunpack.c.l.b16 %v374
      %v859 = vunpack.c.l.b16 %v375
      %v860 = vunpack.c.l.b16 %v376
      %v861 = vunpack.c.l.b16 %v377
      %v862 = vunpack.c.l.b16 %v378
      %v863 = vunpack.c.l.b16 %v379
      %v864 = vunpack.c.l.b16 %v380
      %v865 = vunpack.c.l.b16 %v381
      %v866 = vunpack.c.l.b16 %v382
      %v867 = vunpack.c.l.b16 %v383
      %v868 = vpack.c.b16 %v851, %v850
      %v869 = vpack.c.b16 %v853, %v852
      %v870 = vpack.c.b16 %v855, %v854
      %v871 = vpack.c.b16 %v857, %v856
      %v872 = vpack.c.b16 %v859, %v858
      %v873 = vpack.c.b16 %v861, %v860
      %v874 = vpack.c.b16 %v863, %v862
      %v875 = vpack.c.b16 %v865, %v864
      %v876 = vpack.c.b16 %v867, %v866
      %vm886 = vcmask 130048
      %v888 = vsel %vm886, %v686, 0
      %v891 = vsel %vm886, %v688, 0
      %v894 = vsel %vm886, %v690, 0
      %v897 = vsel %vm886, %v692, 0
      %v900 = vsel %vm886, %v694, 0
      %v903 = vsel %vm886, %v696, 0
      %v906 = vsel %vm886, %v698, 0
      %v909 = vsel %vm886, %v700, 0
      %v912 = vsel %vm886, %v702, 0
      %v915 = vsel %vm886, %v704, 0
      %v918 = vsel %vm886, %v706, 0
      %v921 = vsel %vm886, %v708, 0
      %v924 = vsel %vm886, %v710, 0
      %v927 = vsel %vm886, %v712, 0
      %v930 = vsel %vm886, %v714, 0
      %v933 = vsel %vm886, %v716, 0
      %v936 = vsel %vm886, %v718, 0
      %v939 = vsel %vm886, %v720, 0
      %v942 = vsel %vm886, %v722, 0
      %v945 = vsel %vm886, %v724, 0
      %v948 = vsel %vm886, %v726, 0
      %v951 = vsel %vm886, %v728, 0
      %v954 = vsel %vm886, %v730, 0
      %v957 = vsel %vm886, %v732, 0
      %v960 = vsel %vm886, %v734, 0
      %v963 = vsel %vm886, %v736, 0
      %v966 = vsel %vm886, %v738, 0
      %v969 = vsel %vm886, %v740, 0
      %v972 = vsel %vm886, %v742, 0
      %v975 = vsel %vm886, %v744, 0
      %v978 = vsel %vm886, %v746, 0
      %v981 = vsel %vm886, %v748, 0
      %v984 = vsel %vm886, %v750, 0
      %v987 = vsel %vm886, %v752, 0
      %v990 = vsel %vm886, %v754, 0
      %v993 = vsel %vm886, %v756, 0
      %v996 = vsel %vm886, %v758, 0
      %v999 = vsel %vm886, %v760, 0
      %v1002 = vsel %vm886, %v762, 0
      %v1005 = vsel %vm886, %v764, 0
      %v1008 = vsel %vm886, %v766, 0
      %v1011 = vsel %vm886, %v768, 0
      %v1014 = vsel %vm886, %v770, 0
      %v1017 = vsel %vm886, %v772, 0
      %v1020 = vsel %vm886, %v774, 0
      %v1023 = vsel %vm886, %v776, 0
      %v1026 = vsel %vm886, %v778, 0
      %v1029 = vsel %vm886, %v780, 0
      %v1032 = vsel %vm886, %v782, 0
      %1034 = vmatprep.subr.bf16.mxu0 0
      %1035 = vmatpush1.bf16.msra.mxu0 %v868
      %1036 = vmatprep.subr.bf16.mxu0 0
      %1037 = vmatpush1.bf16.msra.mxu0 %v869
      %1038 = vmatprep.subr.bf16.mxu0 0
      %1039 = vmatpush1.bf16.msra.mxu0 %v870
      %1040 = vmatprep.subr.bf16.mxu0 0
      %1041 = vmatpush1.bf16.msra.mxu0 %v871
      %1042 = vmatprep.subr.bf16.mxu0 0
      %1043 = vmatpush1.bf16.msra.mxu0 %v872
      %1044 = vmatprep.subr.bf16.mxu0 0
      %1045 = vmatpush1.bf16.msra.mxu0 %v873
      %1046 = vmatprep.subr.bf16.mxu0 0
      %1047 = vmatpush1.bf16.msra.mxu0 %v874
      %1048 = vmatprep.subr.bf16.mxu0 0
      %1049 = vmatpush1.bf16.msra.mxu0 %v875
      %1050 = vmatprep.subr.bf16.mxu0 0
      %1051 = vmatpush1.bf16.msra.mxu0 %v876
      %1052 = vmatprep.subr.bf16.mxu0 0
      %1053 = vmatpush1.bf16.msra.mxu0 0
      %1054 = vmatprep.subr.bf16.mxu0 0
      %1055 = vmatpush1.bf16.msra.mxu0 0
      %1056 = vmatprep.subr.bf16.mxu0 0
      %1057 = vmatpush1.bf16.msra.mxu0 0
      %1058 = vmatprep.subr.bf16.mxu0 0
      %1059 = vmatpush1.bf16.msra.mxu0 0
      %1060 = vmatprep.subr.bf16.mxu0 0
      %1061 = vmatpush1.bf16.msra.mxu0 0
      %1062 = vmatprep.subr.bf16.mxu0 0
      %1063 = vmatpush1.bf16.msra.mxu0 0
      %1064 = vmatprep.subr.bf16.mxu0 0
      %1065 = vmatpush1.bf16.msra.mxu0 0
      %1066 = vmatprep.mubr.bf16.mxu0 %v888
      %1067 = vmatmul.mubr.bf16.gmra.mrb[0].mxu0 %v685
      %v1068 = vpop.f32.mrb[0].mxu0
      %v1069 = vadd.f32 %v389, %v1068
      %v1070 = vpop.f32.mrb[0].mxu0
      %v1071 = vpop.f32.mrb[0].mxu0
      %v1072 = vadd.f32 %v389, %v1071
      %v1073 = vpop.f32.mrb[0].mxu0
      %1074 = vmatprep.mubr.bf16.mxu0 %v891
      %1075 = vmatmul.mubr.bf16.gmra.mrb[0].mxu0 %v687
      %v1076 = vpop.f32.mrb[0].mxu0
      %v1077 = vadd.f32 %v389, %v1076
      %v1078 = vpop.f32.mrb[0].mxu0
      %v1079 = vpop.f32.mrb[0].mxu0
      %v1080 = vadd.f32 %v389, %v1079
      %v1081 = vpop.f32.mrb[0].mxu0
      %1082 = vmatprep.mubr.bf16.mxu0 %v894
      %1083 = vmatmul.mubr.bf16.gmra.mrb[0].mxu0 %v689
      %v1084 = vpop.f32.mrb[0].mxu0
      %v1085 = vadd.f32 %v389, %v1084
      %v1086 = vpop.f32.mrb[0].mxu0
      %v1087 = vpop.f32.mrb[0].mxu0
      %v1088 = vadd.f32 %v389, %v1087
      %v1089 = vpop.f32.mrb[0].mxu0
      %1090 = vmatprep.mubr.bf16.mxu0 %v897
      %1091 = vmatmul.mubr.bf16.gmra.mrb[0].mxu0 %v691
      %v1092 = vpop.f32.mrb[0].mxu0
      %v1093 = vadd.f32 %v389, %v1092
      %v1094 = vpop.f32.mrb[0].mxu0
      %v1095 = vpop.f32.mrb[0].mxu0
      %v1096 = vadd.f32 %v389, %v1095
      %v1097 = vpop.f32.mrb[0].mxu0
      %1098 = vmatprep.mubr.bf16.mxu0 %v900
      %1099 = vmatmul.mubr.bf16.gmra.mrb[0].mxu0 %v693
      %v1100 = vpop.f32.mrb[0].mxu0
      %v1101 = vadd.f32 %v389, %v1100
      %v1102 = vpop.f32.mrb[0].mxu0
      %v1103 = vpop.f32.mrb[0].mxu0
      %v1104 = vadd.f32 %v389, %v1103
      %v1105 = vpop.f32.mrb[0].mxu0
      %1106 = vmatprep.mubr.bf16.mxu0 %v903
      %1107 = vmatmul.mubr.bf16.gmra.mrb[0].mxu0 %v695
      %v1108 = vpop.f32.mrb[0].mxu0
      %v1109 = vadd.f32 %v389, %v1108
      %v1110 = vpop.f32.mrb[0].mxu0
      %v1111 = vpop.f32.mrb[0].mxu0
      %v1112 = vadd.f32 %v389, %v1111
      %v1113 = vpop.f32.mrb[0].mxu0
      %1114 = vmatprep.mubr.bf16.mxu0 %v906
      %1115 = vmatmul.mubr.bf16.gmra.mrb[0].mxu0 %v697
      %v1116 = vpop.f32.mrb[0].mxu0
      %v1117 = vadd.f32 %v389, %v1116
      %v1118 = vpop.f32.mrb[0].mxu0
      %v1119 = vpop.f32.mrb[0].mxu0
      %v1120 = vadd.f32 %v389, %v1119
      %v1121 = vpop.f32.mrb[0].mxu0
      %1122 = vmatprep.mubr.bf16.mxu0 %v909
      %1123 = vmatmul.mubr.bf16.gmra.mrb[0].mxu0 %v699
      %v1124 = vpop.f32.mrb[0].mxu0
      %v1125 = vadd.f32 %v389, %v1124
      %v1126 = vpop.f32.mrb[0].mxu0
      %v1127 = vpop.f32.mrb[0].mxu0
      %v1128 = vadd.f32 %v389, %v1127
      %v1129 = vpop.f32.mrb[0].mxu0
      %1130 = vmatprep.mubr.bf16.mxu0 %v912
      %1131 = vmatmul.mubr.bf16.gmra.mrb[0].mxu0 %v701
      %v1132 = vpop.f32.mrb[0].mxu0
      %v1133 = vadd.f32 %v389, %v1132
      %v1134 = vpop.f32.mrb[0].mxu0
      %v1135 = vpop.f32.mrb[0].mxu0
      %v1136 = vadd.f32 %v389, %v1135
      %v1137 = vpop.f32.mrb[0].mxu0
      %1138 = vmatprep.mubr.bf16.mxu0 %v915
      %1139 = vmatmul.mubr.bf16.gmra.mrb[0].mxu0 %v703
      %v1140 = vpop.f32.mrb[0].mxu0
      %v1141 = vadd.f32 %v389, %v1140
      %v1142 = vpop.f32.mrb[0].mxu0
      %v1143 = vpop.f32.mrb[0].mxu0
      %v1144 = vadd.f32 %v389, %v1143
      %v1145 = vpop.f32.mrb[0].mxu0
      %1146 = vmatprep.mubr.bf16.mxu0 %v918
      %1147 = vmatmul.mubr.bf16.gmra.mrb[0].mxu0 %v705
      %v1148 = vpop.f32.mrb[0].mxu0
      %v1149 = vadd.f32 %v389, %v1148
      %v1150 = vpop.f32.mrb[0].mxu0
      %v1151 = vpop.f32.mrb[0].mxu0
      %v1152 = vadd.f32 %v389, %v1151
      %v1153 = vpop.f32.mrb[0].mxu0
      %1154 = vmatprep.mubr.bf16.mxu0 %v921
      %1155 = vmatmul.mubr.bf16.gmra.mrb[0].mxu0 %v707
      %v1156 = vpop.f32.mrb[0].mxu0
      %v1157 = vadd.f32 %v389, %v1156
      %v1158 = vpop.f32.mrb[0].mxu0
      %v1159 = vpop.f32.mrb[0].mxu0
      %v1160 = vadd.f32 %v389, %v1159
      %v1161 = vpop.f32.mrb[0].mxu0
      %1162 = vmatprep.mubr.bf16.mxu0 %v924
      %1163 = vmatmul.mubr.bf16.gmra.mrb[0].mxu0 %v709
      %v1164 = vpop.f32.mrb[0].mxu0
      %v1165 = vadd.f32 %v389, %v1164
      %v1166 = vpop.f32.mrb[0].mxu0
      %v1167 = vpop.f32.mrb[0].mxu0
      %v1168 = vadd.f32 %v389, %v1167
      %v1169 = vpop.f32.mrb[0].mxu0
      %1170 = vmatprep.mubr.bf16.mxu0 %v927
      %1171 = vmatmul.mubr.bf16.gmra.mrb[0].mxu0 %v711
      %v1172 = vpop.f32.mrb[0].mxu0
      %v1173 = vadd.f32 %v389, %v1172
      %v1174 = vpop.f32.mrb[0].mxu0
      %v1175 = vpop.f32.mrb[0].mxu0
      %v1176 = vadd.f32 %v389, %v1175
      %v1177 = vpop.f32.mrb[0].mxu0
      %1178 = vmatprep.mubr.bf16.mxu0 %v930
      %1179 = vmatmul.mubr.bf16.gmra.mrb[0].mxu0 %v713
      %v1180 = vpop.f32.mrb[0].mxu0
      %v1181 = vadd.f32 %v389, %v1180
      %v1182 = vpop.f32.mrb[0].mxu0
      %v1183 = vpop.f32.mrb[0].mxu0
      %v1184 = vadd.f32 %v389, %v1183
      %v1185 = vpop.f32.mrb[0].mxu0
      %1186 = vmatprep.mubr.bf16.mxu0 %v933
      %1187 = vmatmul.mubr.bf16.gmra.mrb[0].mxu0 %v715
      %v1188 = vpop.f32.mrb[0].mxu0
      %v1189 = vadd.f32 %v389, %v1188
      %v1190 = vpop.f32.mrb[0].mxu0
      %v1191 = vpop.f32.mrb[0].mxu0
      %v1192 = vadd.f32 %v389, %v1191
      %v1193 = vpop.f32.mrb[0].mxu0
      %1194 = vmatprep.mubr.bf16.mxu0 %v936
      %1195 = vmatmul.mubr.bf16.gmra.mrb[0].mxu0 %v717
      %v1196 = vpop.f32.mrb[0].mxu0
      %v1197 = vadd.f32 %v389, %v1196
      %v1198 = vpop.f32.mrb[0].mxu0
      %v1199 = vpop.f32.mrb[0].mxu0
      %v1200 = vadd.f32 %v389, %v1199
      %v1201 = vpop.f32.mrb[0].mxu0
      %1202 = vmatprep.mubr.bf16.mxu0 %v939
      %1203 = vmatmul.mubr.bf16.gmra.mrb[0].mxu0 %v719
      %v1204 = vpop.f32.mrb[0].mxu0
      %v1205 = vadd.f32 %v389, %v1204
      %v1206 = vpop.f32.mrb[0].mxu0
      %v1207 = vpop.f32.mrb[0].mxu0
      %v1208 = vadd.f32 %v389, %v1207
      %v1209 = vpop.f32.mrb[0].mxu0
      %1210 = vmatprep.mubr.bf16.mxu0 %v942
      %1211 = vmatmul.mubr.bf16.gmra.mrb[0].mxu0 %v721
      %v1212 = vpop.f32.mrb[0].mxu0
      %v1213 = vadd.f32 %v389, %v1212
      %v1214 = vpop.f32.mrb[0].mxu0
      %v1215 = vpop.f32.mrb[0].mxu0
      %v1216 = vadd.f32 %v389, %v1215
      %v1217 = vpop.f32.mrb[0].mxu0
      %1218 = vmatprep.mubr.bf16.mxu0 %v945
      %1219 = vmatmul.mubr.bf16.gmra.mrb[0].mxu0 %v723
      %v1220 = vpop.f32.mrb[0].mxu0
      %v1221 = vadd.f32 %v389, %v1220
      %v1222 = vpop.f32.mrb[0].mxu0
      %v1223 = vpop.f32.mrb[0].mxu0
      %v1224 = vadd.f32 %v389, %v1223
      %v1225 = vpop.f32.mrb[0].mxu0
      %1226 = vmatprep.mubr.bf16.mxu0 %v948
      %1227 = vmatmul.mubr.bf16.gmra.mrb[0].mxu0 %v725
      %v1228 = vpop.f32.mrb[0].mxu0
      %v1229 = vadd.f32 %v389, %v1228
      %v1230 = vpop.f32.mrb[0].mxu0
      %v1231 = vpop.f32.mrb[0].mxu0
      %v1232 = vadd.f32 %v389, %v1231
      %v1233 = vpop.f32.mrb[0].mxu0
      %1234 = vmatprep.mubr.bf16.mxu0 %v951
      %1235 = vmatmul.mubr.bf16.gmra.mrb[0].mxu0 %v727
      %v1236 = vpop.f32.mrb[0].mxu0
      %v1237 = vadd.f32 %v389, %v1236
      %v1238 = vpop.f32.mrb[0].mxu0
      %v1239 = vpop.f32.mrb[0].mxu0
      %v1240 = vadd.f32 %v389, %v1239
      %v1241 = vpop.f32.mrb[0].mxu0
      %1242 = vmatprep.mubr.bf16.mxu0 %v954
      %1243 = vmatmul.mubr.bf16.gmra.mrb[0].mxu0 %v729
      %v1244 = vpop.f32.mrb[0].mxu0
      %v1245 = vadd.f32 %v389, %v1244
      %v1246 = vpop.f32.mrb[0].mxu0
      %v1247 = vpop.f32.mrb[0].mxu0
      %v1248 = vadd.f32 %v389, %v1247
      %v1249 = vpop.f32.mrb[0].mxu0
      %1250 = vmatprep.mubr.bf16.mxu0 %v957
      %1251 = vmatmul.mubr.bf16.gmra.mrb[0].mxu0 %v731
      %v1252 = vpop.f32.mrb[0].mxu0
      %v1253 = vadd.f32 %v389, %v1252
      %v1254 = vpop.f32.mrb[0].mxu0
      %v1255 = vpop.f32.mrb[0].mxu0
      %v1256 = vadd.f32 %v389, %v1255
      %v1257 = vpop.f32.mrb[0].mxu0
      %1258 = vmatprep.mubr.bf16.mxu0 %v960
      %1259 = vmatmul.mubr.bf16.gmra.mrb[0].mxu0 %v733
      %v1260 = vpop.f32.mrb[0].mxu0
      %v1261 = vadd.f32 %v389, %v1260
      %v1262 = vpop.f32.mrb[0].mxu0
      %v1263 = vpop.f32.mrb[0].mxu0
      %v1264 = vadd.f32 %v389, %v1263
      %v1265 = vpop.f32.mrb[0].mxu0
      %1266 = vmatprep.mubr.bf16.mxu0 %v963
      %1267 = vmatmul.mubr.bf16.gmra.mrb[0].mxu0 %v735
      %v1268 = vpop.f32.mrb[0].mxu0
      %v1269 = vadd.f32 %v389, %v1268
      %v1270 = vpop.f32.mrb[0].mxu0
      %v1271 = vpop.f32.mrb[0].mxu0
      %v1272 = vadd.f32 %v389, %v1271
      %v1273 = vpop.f32.mrb[0].mxu0
      %1274 = vmatprep.mubr.bf16.mxu0 %v966
      %1275 = vmatmul.mubr.bf16.gmra.mrb[0].mxu0 %v737
      %v1276 = vpop.f32.mrb[0].mxu0
      %v1277 = vadd.f32 %v389, %v1276
      %v1278 = vpop.f32.mrb[0].mxu0
      %v1279 = vpop.f32.mrb[0].mxu0
      %v1280 = vadd.f32 %v389, %v1279
      %v1281 = vpop.f32.mrb[0].mxu0
      %1282 = vmatprep.mubr.bf16.mxu0 %v969
      %1283 = vmatmul.mubr.bf16.gmra.mrb[0].mxu0 %v739
      %v1284 = vpop.f32.mrb[0].mxu0
      %v1285 = vadd.f32 %v389, %v1284
      %v1286 = vpop.f32.mrb[0].mxu0
      %v1287 = vpop.f32.mrb[0].mxu0
      %v1288 = vadd.f32 %v389, %v1287
      %v1289 = vpop.f32.mrb[0].mxu0
      %1290 = vmatprep.mubr.bf16.mxu0 %v972
      %1291 = vmatmul.mubr.bf16.gmra.mrb[0].mxu0 %v741
      %v1292 = vpop.f32.mrb[0].mxu0
      %v1293 = vadd.f32 %v389, %v1292
      %v1294 = vpop.f32.mrb[0].mxu0
      %v1295 = vpop.f32.mrb[0].mxu0
      %v1296 = vadd.f32 %v389, %v1295
      %v1297 = vpop.f32.mrb[0].mxu0
      %1298 = vmatprep.mubr.bf16.mxu0 %v975
      %1299 = vmatmul.mubr.bf16.gmra.mrb[0].mxu0 %v743
      %v1300 = vpop.f32.mrb[0].mxu0
      %v1301 = vadd.f32 %v389, %v1300
      %v1302 = vpop.f32.mrb[0].mxu0
      %v1303 = vpop.f32.mrb[0].mxu0
      %v1304 = vadd.f32 %v389, %v1303
      %v1305 = vpop.f32.mrb[0].mxu0
      %1306 = vmatprep.mubr.bf16.mxu0 %v978
      %1307 = vmatmul.mubr.bf16.gmra.mrb[0].mxu0 %v745
      %v1308 = vpop.f32.mrb[0].mxu0
      %v1309 = vadd.f32 %v389, %v1308
      %v1310 = vpop.f32.mrb[0].mxu0
      %v1311 = vpop.f32.mrb[0].mxu0
      %v1312 = vadd.f32 %v389, %v1311
      %v1313 = vpop.f32.mrb[0].mxu0
      %1314 = vmatprep.mubr.bf16.mxu0 %v981
      %1315 = vmatmul.mubr.bf16.gmra.mrb[0].mxu0 %v747
      %v1316 = vpop.f32.mrb[0].mxu0
      %v1317 = vadd.f32 %v389, %v1316
      %v1318 = vpop.f32.mrb[0].mxu0
      %v1319 = vpop.f32.mrb[0].mxu0
      %v1320 = vadd.f32 %v389, %v1319
      %v1321 = vpop.f32.mrb[0].mxu0
      %1322 = vmatprep.mubr.bf16.mxu0 %v984
      %1323 = vmatmul.mubr.bf16.gmra.mrb[0].mxu0 %v749
      %v1324 = vpop.f32.mrb[0].mxu0
      %v1325 = vadd.f32 %v389, %v1324
      %v1326 = vpop.f32.mrb[0].mxu0
      %v1327 = vpop.f32.mrb[0].mxu0
      %v1328 = vadd.f32 %v389, %v1327
      %v1329 = vpop.f32.mrb[0].mxu0
      %1330 = vmatprep.mubr.bf16.mxu0 %v987
      %1331 = vmatmul.mubr.bf16.gmra.mrb[0].mxu0 %v751
      %v1332 = vpop.f32.mrb[0].mxu0
      %v1333 = vadd.f32 %v389, %v1332
      %v1334 = vpop.f32.mrb[0].mxu0
      %v1335 = vpop.f32.mrb[0].mxu0
      %v1336 = vadd.f32 %v389, %v1335
      %v1337 = vpop.f32.mrb[0].mxu0
      %1338 = vmatprep.mubr.bf16.mxu0 %v990
      %1339 = vmatmul.mubr.bf16.gmra.mrb[0].mxu0 %v753
      %v1340 = vpop.f32.mrb[0].mxu0
      %v1341 = vadd.f32 %v389, %v1340
      %v1342 = vpop.f32.mrb[0].mxu0
      %v1343 = vpop.f32.mrb[0].mxu0
      %v1344 = vadd.f32 %v389, %v1343
      %v1345 = vpop.f32.mrb[0].mxu0
      %1346 = vmatprep.mubr.bf16.mxu0 %v993
      %1347 = vmatmul.mubr.bf16.gmra.mrb[0].mxu0 %v755
      %v1348 = vpop.f32.mrb[0].mxu0
      %v1349 = vadd.f32 %v389, %v1348
      %v1350 = vpop.f32.mrb[0].mxu0
      %v1351 = vpop.f32.mrb[0].mxu0
      %v1352 = vadd.f32 %v389, %v1351
      %v1353 = vpop.f32.mrb[0].mxu0
      %1354 = vmatprep.mubr.bf16.mxu0 %v996
      %1355 = vmatmul.mubr.bf16.gmra.mrb[0].mxu0 %v757
      %v1356 = vpop.f32.mrb[0].mxu0
      %v1357 = vadd.f32 %v389, %v1356
      %v1358 = vpop.f32.mrb[0].mxu0
      %v1359 = vpop.f32.mrb[0].mxu0
      %v1360 = vadd.f32 %v389, %v1359
      %v1361 = vpop.f32.mrb[0].mxu0
      %1362 = vmatprep.mubr.bf16.mxu0 %v999
      %1363 = vmatmul.mubr.bf16.gmra.mrb[0].mxu0 %v759
      %v1364 = vpop.f32.mrb[0].mxu0
      %v1365 = vadd.f32 %v389, %v1364
      %v1366 = vpop.f32.mrb[0].mxu0
      %v1367 = vpop.f32.mrb[0].mxu0
      %v1368 = vadd.f32 %v389, %v1367
      %v1369 = vpop.f32.mrb[0].mxu0
      %1370 = vmatprep.mubr.bf16.mxu0 %v1002
      %1371 = vmatmul.mubr.bf16.gmra.mrb[0].mxu0 %v761
      %v1372 = vpop.f32.mrb[0].mxu0
      %v1373 = vadd.f32 %v389, %v1372
      %v1374 = vpop.f32.mrb[0].mxu0
      %v1375 = vpop.f32.mrb[0].mxu0
      %v1376 = vadd.f32 %v389, %v1375
      %v1377 = vpop.f32.mrb[0].mxu0
      %1378 = vmatprep.mubr.bf16.mxu0 %v1005
      %1379 = vmatmul.mubr.bf16.gmra.mrb[0].mxu0 %v763
      %v1380 = vpop.f32.mrb[0].mxu0
      %v1381 = vadd.f32 %v389, %v1380
      %v1382 = vpop.f32.mrb[0].mxu0
      %v1383 = vpop.f32.mrb[0].mxu0
      %v1384 = vadd.f32 %v389, %v1383
      %v1385 = vpop.f32.mrb[0].mxu0
      %1386 = vmatprep.mubr.bf16.mxu0 %v1008
      %1387 = vmatmul.mubr.bf16.gmra.mrb[0].mxu0 %v765
      %v1388 = vpop.f32.mrb[0].mxu0
      %v1389 = vadd.f32 %v389, %v1388
      %v1390 = vpop.f32.mrb[0].mxu0
      %v1391 = vpop.f32.mrb[0].mxu0
      %v1392 = vadd.f32 %v389, %v1391
      %v1393 = vpop.f32.mrb[0].mxu0
      %1394 = vmatprep.mubr.bf16.mxu0 %v1011
      %1395 = vmatmul.mubr.bf16.gmra.mrb[0].mxu0 %v767
      %v1396 = vpop.f32.mrb[0].mxu0
      %v1397 = vadd.f32 %v389, %v1396
      %v1398 = vpop.f32.mrb[0].mxu0
      %v1399 = vpop.f32.mrb[0].mxu0
      %v1400 = vadd.f32 %v389, %v1399
      %v1401 = vpop.f32.mrb[0].mxu0
      %1402 = vmatprep.mubr.bf16.mxu0 %v1014
      %1403 = vmatmul.mubr.bf16.gmra.mrb[0].mxu0 %v769
      %v1404 = vpop.f32.mrb[0].mxu0
      %v1405 = vadd.f32 %v389, %v1404
      %v1406 = vpop.f32.mrb[0].mxu0
      %v1407 = vpop.f32.mrb[0].mxu0
      %v1408 = vadd.f32 %v389, %v1407
      %v1409 = vpop.f32.mrb[0].mxu0
      %1410 = vmatprep.mubr.bf16.mxu0 %v1017
      %1411 = vmatmul.mubr.bf16.gmra.mrb[0].mxu0 %v771
      %v1412 = vpop.f32.mrb[0].mxu0
      %v1413 = vadd.f32 %v389, %v1412
      %v1414 = vpop.f32.mrb[0].mxu0
      %v1415 = vpop.f32.mrb[0].mxu0
      %v1416 = vadd.f32 %v389, %v1415
      %v1417 = vpop.f32.mrb[0].mxu0
      %1418 = vmatprep.mubr.bf16.mxu0 %v1020
      %1419 = vmatmul.mubr.bf16.gmra.mrb[0].mxu0 %v773
      %v1420 = vpop.f32.mrb[0].mxu0
      %v1421 = vadd.f32 %v389, %v1420
      %v1422 = vpop.f32.mrb[0].mxu0
      %v1423 = vpop.f32.mrb[0].mxu0
      %v1424 = vadd.f32 %v389, %v1423
      %v1425 = vpop.f32.mrb[0].mxu0
      %1426 = vmatprep.mubr.bf16.mxu0 %v1023
      %1427 = vmatmul.mubr.bf16.gmra.mrb[0].mxu0 %v775
      %v1428 = vpop.f32.mrb[0].mxu0
      %v1429 = vadd.f32 %v389, %v1428
      %v1430 = vpop.f32.mrb[0].mxu0
      %v1431 = vpop.f32.mrb[0].mxu0
      %v1432 = vadd.f32 %v389, %v1431
      %v1433 = vpop.f32.mrb[0].mxu0
      %1434 = vmatprep.mubr.bf16.mxu0 %v1026
      %1435 = vmatmul.mubr.bf16.gmra.mrb[0].mxu0 %v777
      %v1436 = vpop.f32.mrb[0].mxu0
      %v1437 = vadd.f32 %v389, %v1436
      %v1438 = vpop.f32.mrb[0].mxu0
      %v1439 = vpop.f32.mrb[0].mxu0
      %v1440 = vadd.f32 %v389, %v1439
      %v1441 = vpop.f32.mrb[0].mxu0
      %1442 = vmatprep.mubr.bf16.mxu0 %v1029
      %1443 = vmatmul.mubr.bf16.gmra.mrb[0].mxu0 %v779
      %v1444 = vpop.f32.mrb[0].mxu0
      %v1445 = vadd.f32 %v389, %v1444
      %v1446 = vpop.f32.mrb[0].mxu0
      %v1447 = vpop.f32.mrb[0].mxu0
      %v1448 = vadd.f32 %v389, %v1447
      %v1449 = vpop.f32.mrb[0].mxu0
      %1450 = vmatprep.mubr.bf16.mxu0 %v1032
      %1451 = vmatmul.mubr.bf16.gmra.mrb[0].mxu0 %v781
      %v1452 = vpop.f32.mrb[0].mxu0
      %v1453 = vadd.f32 %v389, %v1452
      %v1454 = vpop.f32.mrb[0].mxu0
      %v1455 = vpop.f32.mrb[0].mxu0
      %v1456 = vadd.f32 %v389, %v1455
      %v1457 = vpop.f32.mrb[0].mxu0
      %1458 = vdwg.mxu0
      %v1459 = vmax.f32 %v1069, 0.0
      %v1460 = vmax.f32 %v1072, 0.0
      %v1461 = vmax.f32 %v1077, 0.0
      %v1462 = vmax.f32 %v1080, 0.0
      %v1463 = vmax.f32 %v1085, 0.0
      %v1464 = vmax.f32 %v1088, 0.0
      %v1465 = vmax.f32 %v1093, 0.0
      %v1466 = vmax.f32 %v1096, 0.0
      %v1467 = vmax.f32 %v1101, 0.0
      %v1468 = vmax.f32 %v1104, 0.0
      %v1469 = vmax.f32 %v1109, 0.0
      %v1470 = vmax.f32 %v1112, 0.0
      %v1471 = vmax.f32 %v1117, 0.0
      %v1472 = vmax.f32 %v1120, 0.0
      %v1473 = vmax.f32 %v1125, 0.0
      %v1474 = vmax.f32 %v1128, 0.0
      %v1475 = vmax.f32 %v1133, 0.0
      %v1476 = vmax.f32 %v1136, 0.0
      %v1477 = vmax.f32 %v1141, 0.0
      %v1478 = vmax.f32 %v1144, 0.0
      %v1479 = vmax.f32 %v1149, 0.0
      %v1480 = vmax.f32 %v1152, 0.0
      %v1481 = vmax.f32 %v1157, 0.0
      %v1482 = vmax.f32 %v1160, 0.0
      %v1483 = vmax.f32 %v1165, 0.0
      %v1484 = vmax.f32 %v1168, 0.0
      %v1485 = vmax.f32 %v1173, 0.0
      %v1486 = vmax.f32 %v1176, 0.0
      %v1487 = vmax.f32 %v1181, 0.0
      %v1488 = vmax.f32 %v1184, 0.0
      %v1489 = vmax.f32 %v1189, 0.0
      %v1490 = vmax.f32 %v1192, 0.0
      %v1491 = vmax.f32 %v1197, 0.0
      %v1492 = vmax.f32 %v1200, 0.0
      %v1493 = vmax.f32 %v1205, 0.0
      %v1494 = vmax.f32 %v1208, 0.0
      %v1495 = vmax.f32 %v1213, 0.0
      %v1496 = vmax.f32 %v1216, 0.0
      %v1497 = vmax.f32 %v1221, 0.0
      %v1498 = vmax.f32 %v1224, 0.0
      %v1499 = vmax.f32 %v1229, 0.0
      %v1500 = vmax.f32 %v1232, 0.0
      %v1501 = vmax.f32 %v1237, 0.0
      %v1502 = vmax.f32 %v1240, 0.0
      %v1503 = vmax.f32 %v1245, 0.0
      %v1504 = vmax.f32 %v1248, 0.0
      %v1505 = vmax.f32 %v1253, 0.0
      %v1506 = vmax.f32 %v1256, 0.0
      %v1507 = vmax.f32 %v1261, 0.0
      %v1508 = vmax.f32 %v1264, 0.0
      %v1509 = vmax.f32 %v1269, 0.0
      %v1510 = vmax.f32 %v1272, 0.0
      %v1511 = vmax.f32 %v1277, 0.0
      %v1512 = vmax.f32 %v1280, 0.0
      %v1513 = vmax.f32 %v1285, 0.0
      %v1514 = vmax.f32 %v1288, 0.0
      %v1515 = vmax.f32 %v1293, 0.0
      %v1516 = vmax.f32 %v1296, 0.0
      %v1517 = vmax.f32 %v1301, 0.0
      %v1518 = vmax.f32 %v1304, 0.0
      %v1519 = vmax.f32 %v1309, 0.0
      %v1520 = vmax.f32 %v1312, 0.0
      %v1521 = vmax.f32 %v1317, 0.0
      %v1522 = vmax.f32 %v1320, 0.0
      %v1523 = vmax.f32 %v1325, 0.0
      %v1524 = vmax.f32 %v1328, 0.0
      %v1525 = vmax.f32 %v1333, 0.0
      %v1526 = vmax.f32 %v1336, 0.0
      %v1527 = vmax.f32 %v1341, 0.0
      %v1528 = vmax.f32 %v1344, 0.0
      %v1529 = vmax.f32 %v1349, 0.0
      %v1530 = vmax.f32 %v1352, 0.0
      %v1531 = vmax.f32 %v1357, 0.0
      %v1532 = vmax.f32 %v1360, 0.0
      %v1533 = vmax.f32 %v1365, 0.0
      %v1534 = vmax.f32 %v1368, 0.0
      %v1535 = vmax.f32 %v1373, 0.0
      %v1536 = vmax.f32 %v1376, 0.0
      %v1537 = vmax.f32 %v1381, 0.0
      %v1538 = vmax.f32 %v1384, 0.0
      %v1539 = vmax.f32 %v1389, 0.0
      %v1540 = vmax.f32 %v1392, 0.0
      %v1541 = vmax.f32 %v1397, 0.0
      %v1542 = vmax.f32 %v1400, 0.0
      %v1543 = vmax.f32 %v1405, 0.0
      %v1544 = vmax.f32 %v1408, 0.0
      %v1545 = vmax.f32 %v1413, 0.0
      %v1546 = vmax.f32 %v1416, 0.0
      %v1547 = vmax.f32 %v1421, 0.0
      %v1548 = vmax.f32 %v1424, 0.0
      %v1549 = vmax.f32 %v1429, 0.0
      %v1550 = vmax.f32 %v1432, 0.0
      %v1551 = vmax.f32 %v1437, 0.0
      %v1552 = vmax.f32 %v1440, 0.0
      %v1553 = vmax.f32 %v1445, 0.0
      %v1554 = vmax.f32 %v1448, 0.0
      %v1555 = vmax.f32 %v1453, 0.0
      %v1556 = vmax.f32 %v1456, 0.0
      %1557 = vst.msk [vmem:[%s265] sm:$0xff] %vm886, %v1459
      %1558 = vst.msk [vmem:[%s265 + $0x8] sm:$0xff] %vm886, %v1460
      %1559 = vst.msk [vmem:[%s265 + $0x10] sm:$0xff] %vm886, %v1461
      %1560 = vst.msk [vmem:[%s265 + $0x18] sm:$0xff] %vm886, %v1462
      %1561 = vst.msk [vmem:[%s265 + $0x20] sm:$0xff] %vm886, %v1463
      %1562 = vst.msk [vmem:[%s265 + $0x28] sm:$0xff] %vm886, %v1464
      %1563 = vst.msk [vmem:[%s265 + $0x30] sm:$0xff] %vm886, %v1465
      %1564 = vst.msk [vmem:[%s265 + $0x38] sm:$0xff] %vm886, %v1466
      %1565 = vst.msk [vmem:[%s265 + $0x40] sm:$0xff] %vm886, %v1467
      %1566 = vst.msk [vmem:[%s265 + $0x48] sm:$0xff] %vm886, %v1468
      %1567 = vst.msk [vmem:[%s265 + $0x50] sm:$0xff] %vm886, %v1469
      %1568 = vst.msk [vmem:[%s265 + $0x58] sm:$0xff] %vm886, %v1470
      %1569 = vst.msk [vmem:[%s265 + $0x60] sm:$0xff] %vm886, %v1471
      %1570 = vst.msk [vmem:[%s265 + $0x68] sm:$0xff] %vm886, %v1472
      %1571 = vst.msk [vmem:[%s265 + $0x70] sm:$0xff] %vm886, %v1473
      %1572 = vst.msk [vmem:[%s265 + $0x78] sm:$0xff] %vm886, %v1474
      %1573 = vst.msk [vmem:[%s265 + $0x80] sm:$0xff] %vm886, %v1475
      %1574 = vst.msk [vmem:[%s265 + $0x88] sm:$0xff] %vm886, %v1476
      %1575 = vst.msk [vmem:[%s265 + $0x90] sm:$0xff] %vm886, %v1477
      %1576 = vst.msk [vmem:[%s265 + $0x98] sm:$0xff] %vm886, %v1478
      %1577 = vst.msk [vmem:[%s265 + $0xa0] sm:$0xff] %vm886, %v1479
      %1578 = vst.msk [vmem:[%s265 + $0xa8] sm:$0xff] %vm886, %v1480
      %1579 = vst.msk [vmem:[%s265 + $0xb0] sm:$0xff] %vm886, %v1481
      %1580 = vst.msk [vmem:[%s265 + $0xb8] sm:$0xff] %vm886, %v1482
      %1581 = vst.msk [vmem:[%s265 + $0xc0] sm:$0xff] %vm886, %v1483
      %1582 = vst.msk [vmem:[%s265 + $0xc8] sm:$0xff] %vm886, %v1484
      %1583 = vst.msk [vmem:[%s265 + $0xd0] sm:$0xff] %vm886, %v1485
      %1584 = vst.msk [vmem:[%s265 + $0xd8] sm:$0xff] %vm886, %v1486
      %1585 = vst.msk [vmem:[%s265 + $0xe0] sm:$0xff] %vm886, %v1487
      %1586 = vst.msk [vmem:[%s265 + $0xe8] sm:$0xff] %vm886, %v1488
      %1587 = vst.msk [vmem:[%s265 + $0xf0] sm:$0xff] %vm886, %v1489
      %1588 = vst.msk [vmem:[%s265 + $0xf8] sm:$0xff] %vm886, %v1490
      %1589 = vst.msk [vmem:[%s265 + $0x100] sm:$0xff] %vm886, %v1491
      %1590 = vst.msk [vmem:[%s265 + $0x108] sm:$0xff] %vm886, %v1492
      %1591 = vst.msk [vmem:[%s265 + $0x110] sm:$0xff] %vm886, %v1493
      %1592 = vst.msk [vmem:[%s265 + $0x118] sm:$0xff] %vm886, %v1494
      %1593 = vst.msk [vmem:[%s265 + $0x120] sm:$0xff] %vm886, %v1495
      %1594 = vst.msk [vmem:[%s265 + $0x128] sm:$0xff] %vm886, %v1496
      %1595 = vst.msk [vmem:[%s265 + $0x130] sm:$0xff] %vm886, %v1497
      %1596 = vst.msk [vmem:[%s265 + $0x138] sm:$0xff] %vm886, %v1498
      %1597 = vst.msk [vmem:[%s265 + $0x140] sm:$0xff] %vm886, %v1499
      %1598 = vst.msk [vmem:[%s265 + $0x148] sm:$0xff] %vm886, %v1500
      %1599 = vst.msk [vmem:[%s265 + $0x150] sm:$0xff] %vm886, %v1501
      %1600 = vst.msk [vmem:[%s265 + $0x158] sm:$0xff] %vm886, %v1502
      %1601 = vst.msk [vmem:[%s265 + $0x160] sm:$0xff] %vm886, %v1503
      %1602 = vst.msk [vmem:[%s265 + $0x168] sm:$0xff] %vm886, %v1504
      %1603 = vst.msk [vmem:[%s265 + $0x170] sm:$0xff] %vm886, %v1505
      %1604 = vst.msk [vmem:[%s265 + $0x178] sm:$0xff] %vm886, %v1506
      %1605 = vst.msk [vmem:[%s265 + $0x180] sm:$0xff] %vm886, %v1507
      %1606 = vst.msk [vmem:[%s265 + $0x188] sm:$0xff] %vm886, %v1508
      %1607 = vst.msk [vmem:[%s265 + $0x190] sm:$0xff] %vm886, %v1509
      %1608 = vst.msk [vmem:[%s265 + $0x198] sm:$0xff] %vm886, %v1510
      %1609 = vst.msk [vmem:[%s265 + $0x1a0] sm:$0xff] %vm886, %v1511
      %1610 = vst.msk [vmem:[%s265 + $0x1a8] sm:$0xff] %vm886, %v1512
      %1611 = vst.msk [vmem:[%s265 + $0x1b0] sm:$0xff] %vm886, %v1513
      %1612 = vst.msk [vmem:[%s265 + $0x1b8] sm:$0xff] %vm886, %v1514
      %1613 = vst.msk [vmem:[%s265 + $0x1c0] sm:$0xff] %vm886, %v1515
      %1614 = vst.msk [vmem:[%s265 + $0x1c8] sm:$0xff] %vm886, %v1516
      %1615 = vst.msk [vmem:[%s265 + $0x1d0] sm:$0xff] %vm886, %v1517
      %1616 = vst.msk [vmem:[%s265 + $0x1d8] sm:$0xff] %vm886, %v1518
      %1617 = vst.msk [vmem:[%s265 + $0x1e0] sm:$0xff] %vm886, %v1519
      %1618 = vst.msk [vmem:[%s265 + $0x1e8] sm:$0xff] %vm886, %v1520
      %1619 = vst.msk [vmem:[%s265 + $0x1f0] sm:$0xff] %vm886, %v1521
      %1620 = vst.msk [vmem:[%s265 + $0x1f8] sm:$0xff] %vm886, %v1522
      %1621 = vst.msk [vmem:[%s265 + $0x200] sm:$0xff] %vm886, %v1523
      %1622 = vst.msk [vmem:[%s265 + $0x208] sm:$0xff] %vm886, %v1524
      %1623 = vst.msk [vmem:[%s265 + $0x210] sm:$0xff] %vm886, %v1525
      %1624 = vst.msk [vmem:[%s265 + $0x218] sm:$0xff] %vm886, %v1526
      %1625 = vst.msk [vmem:[%s265 + $0x220] sm:$0xff] %vm886, %v1527
      %1626 = vst.msk [vmem:[%s265 + $0x228] sm:$0xff] %vm886, %v1528
      %1627 = vst.msk [vmem:[%s265 + $0x230] sm:$0xff] %vm886, %v1529
      %1628 = vst.msk [vmem:[%s265 + $0x238] sm:$0xff] %vm886, %v1530
      %1629 = vst.msk [vmem:[%s265 + $0x240] sm:$0xff] %vm886, %v1531
      %1630 = vst.msk [vmem:[%s265 + $0x248] sm:$0xff] %vm886, %v1532
      %1631 = vst.msk [vmem:[%s265 + $0x250] sm:$0xff] %vm886, %v1533
      %1632 = vst.msk [vmem:[%s265 + $0x258] sm:$0xff] %vm886, %v1534
      %1633 = vst.msk [vmem:[%s265 + $0x260] sm:$0xff] %vm886, %v1535
      %1634 = vst.msk [vmem:[%s265 + $0x268] sm:$0xff] %vm886, %v1536
      %1635 = vst.msk [vmem:[%s265 + $0x270] sm:$0xff] %vm886, %v1537
      %1636 = vst.msk [vmem:[%s265 + $0x278] sm:$0xff] %vm886, %v1538
      %1637 = vst.msk [vmem:[%s265 + $0x280] sm:$0xff] %vm886, %v1539
      %1638 = vst.msk [vmem:[%s265 + $0x288] sm:$0xff] %vm886, %v1540
      %1639 = vst.msk [vmem:[%s265 + $0x290] sm:$0xff] %vm886, %v1541
      %1640 = vst.msk [vmem:[%s265 + $0x298] sm:$0xff] %vm886, %v1542
      %1641 = vst.msk [vmem:[%s265 + $0x2a0] sm:$0xff] %vm886, %v1543
      %1642 = vst.msk [vmem:[%s265 + $0x2a8] sm:$0xff] %vm886, %v1544
      %1643 = vst.msk [vmem:[%s265 + $0x2b0] sm:$0xff] %vm886, %v1545
      %1644 = vst.msk [vmem:[%s265 + $0x2b8] sm:$0xff] %vm886, %v1546
      %1645 = vst.msk [vmem:[%s265 + $0x2c0] sm:$0xff] %vm886, %v1547
      %1646 = vst.msk [vmem:[%s265 + $0x2c8] sm:$0xff] %vm886, %v1548
      %1647 = vst.msk [vmem:[%s265 + $0x2d0] sm:$0xff] %vm886, %v1549
      %1648 = vst.msk [vmem:[%s265 + $0x2d8] sm:$0xff] %vm886, %v1550
      %1649 = vst.msk [vmem:[%s265 + $0x2e0] sm:$0xff] %vm886, %v1551
      %1650 = vst.msk [vmem:[%s265 + $0x2e8] sm:$0xff] %vm886, %v1552
      %1651 = vst.msk [vmem:[%s265 + $0x2f0] sm:$0xff] %vm886, %v1553
      %1652 = vst.msk [vmem:[%s265 + $0x2f8] sm:$0xff] %vm886, %v1554
      %1653 = vst.msk [vmem:[%s265 + $0x300] sm:$0xff] %vm886, %v1555
      %1654 = vst.msk [vmem:[%s265 + $0x308] sm:$0xff] %vm886, %v1556
      %s1655 = smul.u32 98, %s19
      %p1656 = scmp.lt.s32.totalorder %s1655, 195
      %s1657 = scalar_select %p1656, %s1655, 195
      %p1658 = scmp.lt.s32.totalorder %s20, 0
      %s1659 = scalar_select %p1658, %s20, 0
      %s1660 = sadd.s32 %s1659, %s1657
      %s1661 = smul.addr %s1660, 8
      %s1662 = scalar_lea.vmem %s3, %s1661
      // Predicated region
      $region33: #{forward.9} parent=31 // pred_check
        %p1663 = pneg %p135
      $region34: #{forward.9} parent=31 // pred_check_branch
        %1665 = sbr.rel (%p1663) target = $region36
      $region35: #{forward.9} parent=31 // pred_region
        %s1666 = smul.u32 98, %s19
      $region36: #{forward.9} parent=31 // pred_fallthru
        _
    $region32: #{forward.9} parent=5 // pred_fallthru
      _
    %p1667 = scmp.le.s32.totalorder 2, %s9
    // Predicated region
    $region37: #{forward.9} parent=5 // pred_check
      %p1668 = pneg %p1667
    $region38: #{forward.9} parent=5 // pred_check_branch
      %1670 = sbr.rel (%p1668) target = $region40
    $region39: #{forward.9} parent=5 // pred_region
      %s1671 = ssub.s32 %s9, 2
      // Predicated region
      $region41: #{forward.9} parent=39 // pred_check
        %p1672 = pneg %p141
      $region42: #{forward.9} parent=39 // pred_check_branch
        %1674 = sbr.rel (%p1672) target = $region44
      $region43: #{forward.9} parent=39 // pred_region
        %s1675 = smul.u32 98, %s22
        %p1676 = scmp.lt.s32.totalorder %s1675, 195
        %s1677 = scalar_select %p1676, %s1675, 195
        %p1678 = scmp.lt.s32.totalorder %s23, 0
        %s1679 = scalar_select %p1678, %s23, 0
        %s1680 = sadd.s32 %s1679, %s1677
        %s1681 = smul.addr %s1680, 8
        %s1682 = scalar_lea.vmem %s3, %s1681
      $region44: #{forward.9} parent=39 // pred_fallthru
        _
    $region40: #{forward.9} parent=5 // pred_fallthru
      _
  $region6: #{forward.9} parent=0 // loop_footer
    %s13 = sadd.s32 1, %s9
  $region7: #{forward.9} parent=0 // loop_footer_branch
    %8 = sbr.rel target = $region3
  $region8: #{forward.9} parent=0 // loop_exit
    _

// kernel: tile.23
$region0: #{tile.23}
  #allocation0 [shape = 's32[1]{0}', space=sflag, size = 0x4, scoped, tag = 'scoped memory for tile.23']
  %s0 = inlined_call_operand.vmem [shape: f32[16], index: 0, kind: input, shape index: {}]
  %s1 = inlined_call_operand.vmem [shape: f32[27,16], index: 1, kind: output, shape index: {}]
  // Predicated region
  $region2: #{tile.23} parent=0 // pred_check
    _
  $region3: #{tile.23} parent=0 // pred_check_branch
    %3 = sbr.rel (0) target = $region5
  $region4: #{tile.23} parent=0 // pred_region
    _
  $region5: #{tile.23} parent=0 // pred_fallthru
    _
  %v4 = vld [vmem:[%s0] ss:$0 sm:$0xff]
  %5 = vst [vmem:[%s1] sm:$0xff] %v4
  %s6 = scalar_lea.vmem %s1, 8
  %7 = vst [vmem:[%s6] sm:$0xff] %v4
  %s8 = scalar_lea.vmem %s1, 16
  %9 = vst [vmem:[%s8] sm:$0xff] %v4
  %s10 = scalar_lea.vmem %s1, 24
  %11 = vst [vmem:[%s10] sm:$0xff] %v4

// kernel: tile.24
$region0: #{tile.24}
  %s0 = inlined_call_operand.vmem [shape: f32[27,16], index: 0, kind: input, shape index: {}]
  %s1 = inlined_call_operand.vmem [shape: f32[1,432], index: 1, kind: output, shape index: {}]
  $region1: #{tile.24} parent=0
    #allocation0 [shape = 'u8[16384]{0}', space=vmem, size = 0x4000, scoped, tag = 'scoped mem for output reshape']
    %v2 = vld [vmem:[%s0] ss:$8 sm:$0xf]
    %vm3 = vcmask 130048
    %4 = vst.msk [vmem:[#allocation0] ss:$8 sm:$0xf] %vm3, %v2
    %s5 = scalar_lea.vmem %s0, 7
    %v6 = vld [vmem:[%s5] ss:$8 sm:$0x7]
    %7 = vrot.lane.b32.xlu0 %v6, 112
    %v8 = vpop.permute.xlu0 %7
    %vm9 = vcmask 1048448
    %10 = vst.msk [vmem:[#allocation0] ss:$8 sm:$0x7] %vm9, %v8
    %s11 = scalar_lea.vmem %s0, 6
    %v12 = vld [vmem:[%s11] ss:$8 sm:$0x7]
    %13 = vrot.lane.b32.xlu0 %v12, 96
    %v14 = vpop.permute.xlu0 %13
    %vm15 = vcmask 917248
    %16 = vst.msk [vmem:[#allocation0] ss:$8 sm:$0x7] %vm15, %v14
    %s17 = scalar_lea.vmem %s0, 5
    %v18 = vld [vmem:[%s17] ss:$8 sm:$0x7]
    %19 = vrot.lane.b32.xlu0 %v18, 80
    %v20 = vpop.permute.xlu0 %19
    %vm21 = vcmask 786048
    %22 = vst.msk [vmem:[#allocation0] ss:$8 sm:$0x7] %vm21, %v20
    %s23 = scalar_lea.vmem %s0, 4
    %v24 = vld [vmem:[%s23] ss:$8 sm:$0x7]
    %25 = vrot.lane.b32.xlu0 %v24, 64
    %v26 = vpop.permute.xlu0 %25
    %vm27 = vcmask 654848
    %28 = vst.msk [vmem:[#allocation0] ss:$8 sm:$0x7] %vm27, %v26
    %s29 = scalar_lea.vmem %s0, 3
    %v30 = vld [vmem:[%s29] ss:$8 sm:$0x7]
    %31 = vrot.lane.b32.xlu0 %v30, 48
    %v32 = vpop.permute.xlu0 %31
    %vm33 = vcmask 523648
    %34 = vst.msk [vmem:[#allocation0] ss:$8 sm:$0x7] %vm33, %v32
    %s35 = scalar_lea.vmem %s0, 2
    %v36 = vld [vmem:[%s35] ss:$8 sm:$0xf]
    %37 = vrot.lane.b32.xlu0 %v36, 32
    %v38 = vpop.permute.xlu0 %37
    %vm39 = vcmask 392448
    %40 = vst.msk [vmem:[#allocation0] ss:$8 sm:$0xf] %vm39, %v38
    %s41 = scalar_lea.vmem %s0, 1
    %v42 = vld [vmem:[%s41] ss:$8 sm:$0xf]
    %43 = vrot.lane.b32.xlu0 %v42, 16
    %v44 = vpop.permute.xlu0 %43
    %vm45 = vcmask 261248
    %46 = vst.msk [vmem:[#allocation0] ss:$8 sm:$0xf] %vm45, %v44
    %s48 = sshllo.u32 0, 1
    %v50 = vld [vmem:[#allocation0] sm:%s48]
    %s51 = sshllo.u32 0, 1
    %52 = vst [vmem:[%s1] sm:%s51] %v50
    %s53 = scalar_lea.vmem [#allocation0], 8
    %v54 = vld [vmem:[%s53] sm:%s48]
    %s55 = sshllo.u32 0, 1
    %s56 = scalar_lea.vmem %s1, 1
    %57 = vst [vmem:[%s56] sm:%s55] %v54
    %s58 = scalar_lea.vmem [#allocation0], 16
    %v59 = vld [vmem:[%s58] sm:%s48]
    %s60 = sshllo.u32 0, 1
    %s61 = smul.addr 1, 2
    %s62 = scalar_lea.vmem %s1, %s61
    %63 = vst [vmem:[%s62] sm:%s60] %v59
    %s64 = scalar_lea.vmem [#allocation0], 24
    %v65 = vld [vmem:[%s64] sm:%s48]
    %s66 = sshllo.u32 0, 1
    %s67 = smul.addr 1, 3
    %s68 = scalar_lea.vmem %s1, %s67
    %69 = vst [vmem:[%s68] sm:%s66] %v65

// kernel: forward.10
$region0: #{forward.10}
  #allocation0 [shape = 'u32[]', space=smem, size = 0x4, offset = 0x4, fixed_abs, tag = 'smem constant byte address 0x4 - core index']
  #allocation1 [shape = 'u32[144,128]{1,0:T(1,128)}', space=vmem, size = 0x12000, scoped, tag = 'internal scratch']
  %s0 = inlined_call_operand.vmem [shape: f32[2,28,448], index: 0, kind: input, shape index: {}]
  %s1 = inlined_call_operand.vmem [shape: f32[1,432], index: 1, kind: input, shape index: {}]
  %s2 = inlined_call_operand.vmem [shape: f32[1,432], index: 2, kind: input, shape index: {}]
  %s3 = inlined_call_operand.vmem [shape: f32[2,27,432], index: 3, kind: output, shape index: {}]
  %s4 = sld [smem:[#allocation0]]
  $region45: #{forward.10} parent=0
    _
  %s6 = ssub.s32 1, %s4
  %s7 = scalar_select 0, %s6, %s4
  loop: start=0, step=1, limit=4
  $region2: #{forward.10} parent=0 // loop_pre_header
    _
  $region3: #{forward.10} parent=0 // loop_header
    %s9 = sphi 0, %s13
    %p10 = scmp.ge.s32.totalorder %s9, 4
    %s19 = sphi 0, %s21
    %s22 = sphi 0, %s19
    %s23 = sphi 0, %s22
    %s39 = sphi 0, %s23
    %s43 = sphi 0, %s43
    %s45 = sphi 0, %s43
    %s46 = sphi 0, %s45
    %s60 = sphi 0, %s46
    %s64 = sphi 0, %s64
    %s66 = sphi 0, %s64
    %s67 = sphi 0, %s66
    %s81 = sphi 0, %s67
    %s87 = sphi 0, %s89
    %s90 = sphi 0, %s87
    %s91 = sphi 0, %s90
    %s107 = sphi 0, %s91
  $region4: #{forward.10} parent=0 // loop_header_branch
    %12 = sbr.rel (%p10) target = $region8
  $region5: #{forward.10} parent=0 // loop_body
    %s14 = ssub.s32 %s9, 1
    %s15 = ssub.s32 %s9, 2
    %s16 = sadd.s32 %s9, 1
    %s17 = ssub.s32 %s9, %s16
    %p18 = scmp.eq.s32.totalorder %s17, 0
    %s20 = sadd.s32 %s19, 1
    %s21 = scalar_select %p18, %s19, %s20
    %p24 = pneg %p18
    %p25 = scmp.eq.s32.totalorder %s9, 1
    %p26 = por %p24, %p25
    %p27 = scmp.ne.s32.totalorder %s19, %s22
    %p28 = scmp.eq.s32.totalorder %s9, 0
    %p29 = por %p27, %p28
    %p30 = scmp.ne.s32.totalorder %s19, %s22
    %p31 = scmp.eq.s32.totalorder %s14, 1
    %p32 = por %p30, %p31
    %p33 = scmp.ne.s32.totalorder %s22, %s23
    %p34 = scmp.eq.s32.totalorder %s14, 0
    %p35 = por %p33, %p34
    %p36 = scmp.ne.s32.totalorder %s22, %s23
    %p37 = scmp.eq.s32.totalorder %s15, 1
    %p38 = por %p36, %p37
    %p40 = scmp.ne.s32.totalorder %s23, %s39
    %p41 = scmp.eq.s32.totalorder %s15, 0
    %p42 = por %p40, %p41
    %s44 = sadd.s32 %s43, 1
    %p47 = scmp.eq.s32.totalorder %s9, 1
    %p48 = scmp.ne.s32.totalorder %s43, %s45
    %p49 = scmp.eq.s32.totalorder %s9, 0
    %p50 = por %p48, %p49
    %p51 = scmp.ne.s32.totalorder %s43, %s45
    %p52 = scmp.eq.s32.totalorder %s14, 1
    %p53 = por %p51, %p52
    %p54 = scmp.ne.s32.totalorder %s45, %s46
    %p55 = scmp.eq.s32.totalorder %s14, 0
    %p56 = por %p54, %p55
    %p57 = scmp.ne.s32.totalorder %s45, %s46
    %p58 = scmp.eq.s32.totalorder %s15, 1
    %p59 = por %p57, %p58
    %p61 = scmp.ne.s32.totalorder %s46, %s60
    %p62 = scmp.eq.s32.totalorder %s15, 0
    %p63 = por %p61, %p62
    %s65 = sadd.s32 %s64, 1
    %p68 = scmp.eq.s32.totalorder %s9, 1
    %p69 = scmp.ne.s32.totalorder %s64, %s66
    %p70 = scmp.eq.s32.totalorder %s9, 0
    %p71 = por %p69, %p70
    %p72 = scmp.ne.s32.totalorder %s64, %s66
    %p73 = scmp.eq.s32.totalorder %s14, 1
    %p74 = por %p72, %p73
    %p75 = scmp.ne.s32.totalorder %s66, %s67
    %p76 = scmp.eq.s32.totalorder %s14, 0
    %p77 = por %p75, %p76
    %p78 = scmp.ne.s32.totalorder %s66, %s67
    %p79 = scmp.eq.s32.totalorder %s15, 1
    %p80 = por %p78, %p79
    %p82 = scmp.ne.s32.totalorder %s67, %s81
    %p83 = scmp.eq.s32.totalorder %s15, 0
    %p84 = por %p82, %p83
    %s85 = ssub.s32 %s9, %s16
    %p86 = scmp.eq.s32.totalorder %s85, 0
    %s88 = sadd.s32 %s87, 1
    %s89 = scalar_select %p86, %s87, %s88
    %p92 = pneg %p86
    %p93 = scmp.eq.s32.totalorder %s9, 1
    %p94 = por %p92, %p93
    %p95 = scmp.ne.s32.totalorder %s87, %s90
    %p96 = scmp.eq.s32.totalorder %s9, 0
    %p97 = por %p95, %p96
    %p98 = scmp.ne.s32.totalorder %s87, %s90
    %p99 = scmp.eq.s32.totalorder %s14, 1
    %p100 = por %p98, %p99
    %p101 = scmp.ne.s32.totalorder %s90, %s91
    %p102 = scmp.eq.s32.totalorder %s14, 0
    %p103 = por %p101, %p102
    %p104 = scmp.ne.s32.totalorder %s90, %s91
    %p105 = scmp.eq.s32.totalorder %s15, 1
    %p106 = por %p104, %p105
    %p108 = scmp.ne.s32.totalorder %s91, %s107
    %p109 = scmp.eq.s32.totalorder %s15, 0
    %p110 = por %p108, %p109
    %p111 = scmp.le.s32.totalorder 1, %s9
    %p112 = scmp.lt.s32.totalorder %s9, 3
    %p113 = pnand %p111, %p112
    %p114 = pneg %p113
    // Predicated region
    $region9: #{forward.10} parent=5 // pred_check
      _
    $region10: #{forward.10} parent=5 // pred_check_branch
      %116 = sbr.rel (%p113) target = $region12
    $region11: #{forward.10} parent=5 // pred_region
      %s117 = ssub.s32 %s9, 1
      // Predicated region
      $region13: #{forward.10} parent=11 // pred_check
        %p118 = pneg %p56
      $region14: #{forward.10} parent=11 // pred_check_branch
        %120 = sbr.rel (%p118) target = $region16
      $region15: #{forward.10} parent=11 // pred_region
        _
      $region16: #{forward.10} parent=11 // pred_fallthru
        _
      // Predicated region
      $region17: #{forward.10} parent=11 // pred_check
        %p121 = pneg %p77
      $region18: #{forward.10} parent=11 // pred_check_branch
        %123 = sbr.rel (%p121) target = $region20
      $region19: #{forward.10} parent=11 // pred_region
        _
      $region20: #{forward.10} parent=11 // pred_fallthru
        _
    $region12: #{forward.10} parent=5 // pred_fallthru
      _
    %p124 = scmp.lt.s32.totalorder %s9, 2
    // Predicated region
    $region21: #{forward.10} parent=5 // pred_check
      %p125 = pneg %p124
    $region22: #{forward.10} parent=5 // pred_check_branch
      %127 = sbr.rel (%p125) target = $region24
    $region23: #{forward.10} parent=5 // pred_region
      // Predicated region
      $region25: #{forward.10} parent=23 // pred_check
        %p128 = pneg %p29
      $region26: #{forward.10} parent=23 // pred_check_branch
        %130 = sbr.rel (%p128) target = $region28
      $region27: #{forward.10} parent=23 // pred_region
        %p131 = scmp.lt.s32.totalorder %s9, 1
        %s132 = scalar_select %p131, %s9, 1
        %s133 = smul.addr %s132, 16
        %s134 = smul.addr %s133, 8
        %s135 = scalar_lea.vmem %s0, %s134
      $region28: #{forward.10} parent=23 // pred_fallthru
        _
    $region24: #{forward.10} parent=5 // pred_fallthru
      _
    %p136 = scmp.le.s32.totalorder 1, %s9
    %p137 = scmp.lt.s32.totalorder %s9, 3
    %p138 = pnand %p136, %p137
    %p139 = pneg %p138
    // Predicated region
    $region29: #{forward.10} parent=5 // pred_check
      _
    $region30: #{forward.10} parent=5 // pred_check_branch
      %141 = sbr.rel (%p138) target = $region32
    $region31: #{forward.10} parent=5 // pred_region
      %s142 = ssub.s32 %s9, 1
      %p143 = scmp.lt.s32.totalorder %s14, 1
      %s144 = scalar_select %p143, %s14, 1
      %s145 = smul.addr %s144, 16
      %s146 = smul.addr %s145, 8
      %s147 = scalar_lea.vmem %s0, %s146
      %p148 = pneg %p35
      %p149 = pneg %p32
      %p150 = pneg %p56
      %p151 = pneg %p53
      %p152 = pneg %p77
      %p153 = pneg %p74
      %p154 = pneg %p103
      %p155 = pneg %p100
      %p156 = scmp.lt.s32.totalorder %s14, 1
      %s157 = scalar_select %p156, %s14, 1
      %s158 = smul.addr %s157, 16
      %s159 = smul.addr %s158, 8
      %s160 = scalar_lea.vmem %s3, %s159
      %p161 = scmp.lt.s32.totalorder %s14, 1
      %s162 = scalar_select %p161, %s14, 1
      %s163 = smul.addr %s162, 16
      %s164 = smul.addr %s163, 8
      %s165 = scalar_lea.vmem %s0, %s164
      %p166 = scmp.lt.s32.totalorder %s14, 1
      %s167 = scalar_select %p166, %s14, 1
      %s168 = smul.addr %s167, 16
      %s169 = smul.addr %s168, 8
      %s170 = scalar_lea.vmem %s3, %s169
      %v171 = vld [vmem:[%s165] sm:$0xff]
      %v172 = vld [vmem:[%s165 + $0x8] sm:$0xff]
      %v173 = vld [vmem:[%s165 + $0x10] sm:$0xff]
      %v174 = vld [vmem:[%s165 + $0x18] sm:$0xff]
      %v175 = vld [vmem:[%s165 + $0x20] sm:$0xff]
      %v176 = vld [vmem:[%s165 + $0x28] sm:$0xff]
      %v177 = vld [vmem:[%s165 + $0x30] sm:$0xff]
      %v178 = vld [vmem:[%s165 + $0x38] sm:$0xff]
      %v179 = vld [vmem:[%s165 + $0x40] sm:$0xff]
      %v180 = vld [vmem:[%s165 + $0x48] sm:$0xff]
      %v181 = vld [vmem:[%s165 + $0x50] sm:$0xff]
      %v182 = vld [vmem:[%s165 + $0x58] sm:$0xff]
      %v183 = vld [vmem:[%s165 + $0x60] sm:$0xf]
      %v184 = vld [vmem:[%s165 + $0x68] sm:$0xf]
      %v185 = vld [vmem:[%s165 + $0x70] sm:$0xf]
      %v186 = vld [vmem:[%s165 + $0x78] sm:$0xf]
      %vm203 = vcmask 1046528
      %v204 = vrot.slane %v171, 1
      %v205 = vrot.slane %v175, 1
      %v206 = vsel %vm203, %v204, %v205
      %v207 = vrot.slane %v172, 1
      %v208 = vrot.slane %v176, 1
      %v209 = vsel %vm203, %v207, %v208
      %v210 = vrot.slane %v173, 1
      %v211 = vrot.slane %v177, 1
      %v212 = vsel %vm203, %v210, %v211
      %v213 = vrot.slane %v174, 1
      %v214 = vrot.slane %v178, 1
      %v215 = vsel %vm203, %v213, %v214
      %v216 = vrot.slane %v179, 1
      %v217 = vsel %vm203, %v205, %v216
      %v218 = vrot.slane %v180, 1
      %v219 = vsel %vm203, %v208, %v218
      %v220 = vrot.slane %v181, 1
      %v221 = vsel %vm203, %v211, %v220
      %v222 = vrot.slane %v182, 1
      %v223 = vsel %vm203, %v214, %v222
      %v224 = vrot.slane %v183, 1
      %v225 = vsel %vm203, %v216, %v224
      %v226 = vrot.slane %v184, 1
      %v227 = vsel %vm203, %v218, %v226
      %v228 = vrot.slane %v185, 1
      %v229 = vsel %vm203, %v220, %v228
      %v230 = vrot.slane %v186, 1
      %v231 = vsel %vm203, %v222, %v230
      %v248 = vmax.f32 %v171, %v206
      %v249 = vmax.f32 %v172, %v209
      %v250 = vmax.f32 %v173, %v212
      %v251 = vmax.f32 %v174, %v215
      %v252 = vmax.f32 %v175, %v217
      %v253 = vmax.f32 %v176, %v219
      %v254 = vmax.f32 %v177, %v221
      %v255 = vmax.f32 %v178, %v223
      %v256 = vmax.f32 %v179, %v225
      %v257 = vmax.f32 %v180, %v227
      %v258 = vmax.f32 %v181, %v229
      %v259 = vmax.f32 %v182, %v231
      %v260 = vmax.f32 %v183, %v224
      %v261 = vmax.f32 %v184, %v226
      %v262 = vmax.f32 %v185, %v228
      %v263 = vmax.f32 %v186, %v230
      %280 = vrot.lane.b32.xlu0 %v248, 112
      %v281 = vpop.permute.xlu0 %280
      %282 = vrot.lane.b32.xlu0 %v249, 112
      %v283 = vpop.permute.xlu0 %282
      %284 = vrot.lane.b32.xlu0 %v250, 112
      %v285 = vpop.permute.xlu0 %284
      %286 = vrot.lane.b32.xlu0 %v251, 112
      %v287 = vpop.permute.xlu0 %286
      %288 = vrot.lane.b32.xlu0 %v252, 112
      %v289 = vpop.permute.xlu0 %288
      %290 = vrot.lane.b32.xlu0 %v253, 112
      %v291 = vpop.permute.xlu0 %290
      %292 = vrot.lane.b32.xlu0 %v254, 112
      %v293 = vpop.permute.xlu0 %292
      %294 = vrot.lane.b32.xlu0 %v255, 112
      %v295 = vpop.permute.xlu0 %294
      %296 = vrot.lane.b32.xlu0 %v256, 112
      %v297 = vpop.permute.xlu0 %296
      %298 = vrot.lane.b32.xlu0 %v257, 112
      %v299 = vpop.permute.xlu0 %298
      %300 = vrot.lane.b32.xlu0 %v258, 112
      %v301 = vpop.permute.xlu0 %300
      %302 = vrot.lane.b32.xlu0 %v259, 112
      %v303 = vpop.permute.xlu0 %302
      %304 = vrot.lane.b32.xlu0 %v260, 112
      %v305 = vpop.permute.xlu0 %304
      %306 = vrot.lane.b32.xlu0 %v261, 112
      %v307 = vpop.permute.xlu0 %306
      %308 = vrot.lane.b32.xlu0 %v262, 112
      %v309 = vpop.permute.xlu0 %308
      %310 = vrot.lane.b32.xlu0 %v263, 112
      %v311 = vpop.permute.xlu0 %310
      %vm312 = vcmask 916480
      %v313 = vsel %vm312, %v281, %v283
      %v314 = vsel %vm312, %v283, %v285
      %v315 = vsel %vm312, %v285, %v287
      %v316 = vsel %vm312, %v289, %v291
      %v317 = vsel %vm312, %v291, %v293
      %v318 = vsel %vm312, %v293, %v295
      %v319 = vsel %vm312, %v297, %v299
      %v320 = vsel %vm312, %v299, %v301
      %v321 = vsel %vm312, %v301, %v303
      %v322 = vsel %vm312, %v305, %v307
      %v323 = vsel %vm312, %v307, %v309
      %v324 = vsel %vm312, %v309, %v311
      %v341 = vmax.f32 %v248, %v313
      %v342 = vmax.f32 %v249, %v314
      %v343 = vmax.f32 %v250, %v315
      %v344 = vmax.f32 %v251, %v287
      %v345 = vmax.f32 %v252, %v316
      %v346 = vmax.f32 %v253, %v317
      %v347 = vmax.f32 %v254, %v318
      %v348 = vmax.f32 %v255, %v295
      %v349 = vmax.f32 %v256, %v319
      %v350 = vmax.f32 %v257, %v320
      %v351 = vmax.f32 %v258, %v321
      %v352 = vmax.f32 %v259, %v303
      %v353 = vmax.f32 %v260, %v322
      %v354 = vmax.f32 %v261, %v323
      %v355 = vmax.f32 %v262, %v324
      %v356 = vmax.f32 %v263, %v311
      %v357 = vld [vmem:[%s1] sm:$0xf]
      %v359 = vlaneseq
      %v360 = vshrl.u32 %v359, 7
      %v361 = vsub.s32 0, %v360
      %v362 = vrot.slane %v357, %v361
      %v363 = vlaneseq
      %v364 = vshrl.u32 %v363, 7
      %v365 = vsub.s32 1, %v364
      %v366 = vrot.slane %v357, %v365
      %v367 = vlaneseq
      %v368 = vshrl.u32 %v367, 7
      %v369 = vsub.s32 2, %v368
      %v370 = vrot.slane %v357, %v369
      %v371 = vlaneseq
      %v372 = vshrl.u32 %v371, 7
      %v373 = vsub.s32 3, %v372
      %v374 = vrot.slane %v357, %v373
      %v379 = vmul.f32 %v341, %v362
      %v380 = vmul.f32 %v342, %v366
      %v381 = vmul.f32 %v343, %v370
      %v382 = vmul.f32 %v344, %v374
      %v383 = vmul.f32 %v345, %v362
      %v384 = vmul.f32 %v346, %v366
      %v385 = vmul.f32 %v347, %v370
      %v386 = vmul.f32 %v348, %v374
      %v387 = vmul.f32 %v349, %v362
      %v388 = vmul.f32 %v350, %v366
      %v389 = vmul.f32 %v351, %v370
      %v390 = vmul.f32 %v352, %v374
      %v391 = vmul.f32 %v353, %v362
      %v392 = vmul.f32 %v354, %v366
      %v393 = vmul.f32 %v355, %v370
      %v394 = vmul.f32 %v356, %v374
      %v395 = vld [vmem:[%s2] sm:$0xf]
      %v397 = vlaneseq
      %v398 = vshrl.u32 %v397, 7
      %v399 = vsub.s32 0, %v398
      %v400 = vrot.slane %v395, %v399
      %v401 = vlaneseq
      %v402 = vshrl.u32 %v401, 7
      %v403 = vsub.s32 1, %v402
      %v404 = vrot.slane %v395, %v403
      %v405 = vlaneseq
      %v406 = vshrl.u32 %v405, 7
      %v407 = vsub.s32 2, %v406
      %v408 = vrot.slane %v395, %v407
      %v409 = vlaneseq
      %v410 = vshrl.u32 %v409, 7
      %v411 = vsub.s32 3, %v410
      %v412 = vrot.slane %v395, %v411
      %v417 = vadd.f32 %v379, %v400
      %v418 = vadd.f32 %v380, %v404
      %v419 = vadd.f32 %v381, %v408
      %v420 = vadd.f32 %v382, %v412
      %v421 = vadd.f32 %v383, %v400
      %v422 = vadd.f32 %v384, %v404
      %v423 = vadd.f32 %v385, %v408
      %v424 = vadd.f32 %v386, %v412
      %v425 = vadd.f32 %v387, %v400
      %v426 = vadd.f32 %v388, %v404
      %v427 = vadd.f32 %v389, %v408
      %v428 = vadd.f32 %v390, %v412
      %v429 = vadd.f32 %v391, %v400
      %v430 = vadd.f32 %v392, %v404
      %v431 = vadd.f32 %v393, %v408
      %v432 = vadd.f32 %v394, %v412
      %433 = vst [vmem:[%s170] sm:$0xff] %v417
      %434 = vst [vmem:[%s170 + $0x8] sm:$0xff] %v418
      %435 = vst [vmem:[%s170 + $0x10] sm:$0xff] %v419
      %vm436 = vcmask 392192
      %437 = vst.msk [vmem:[%s170 + $0x18] sm:$0xff] %vm436, %v420
      %438 = vst [vmem:[%s170 + $0x20] sm:$0xff] %v421
      %439 = vst [vmem:[%s170 + $0x28] sm:$0xff] %v422
      %440 = vst [vmem:[%s170 + $0x30] sm:$0xff] %v423
      %441 = vst.msk [vmem:[%s170 + $0x38] sm:$0xff] %vm436, %v424
      %442 = vst [vmem:[%s170 + $0x40] sm:$0xff] %v425
      %443 = vst [vmem:[%s170 + $0x48] sm:$0xff] %v426
      %444 = vst [vmem:[%s170 + $0x50] sm:$0xff] %v427
      %445 = vst.msk [vmem:[%s170 + $0x58] sm:$0xff] %vm436, %v428
      %446 = vst [vmem:[%s170 + $0x60] sm:$0x7] %v429
      %447 = vst [vmem:[%s170 + $0x68] sm:$0x7] %v430
      %448 = vst [vmem:[%s170 + $0x70] sm:$0x7] %v431
      %vm449 = vcmask 387072
      %450 = vst.msk [vmem:[%s170 + $0x78] sm:$0x7] %vm449, %v432
      %p451 = scmp.lt.s32.totalorder %s14, 1
      %s452 = scalar_select %p451, %s14, 1
      %s453 = smul.addr %s452, 16
      %s454 = smul.addr %s453, 8
      %s455 = scalar_lea.vmem %s3, %s454
      // Predicated region
      $region33: #{forward.10} parent=31 // pred_check
        %p456 = pneg %p100
      $region34: #{forward.10} parent=31 // pred_check_branch
        %458 = sbr.rel (%p456) target = $region36
      $region35: #{forward.10} parent=31 // pred_region
        _
      $region36: #{forward.10} parent=31 // pred_fallthru
        _
    $region32: #{forward.10} parent=5 // pred_fallthru
      _
    %p459 = scmp.le.s32.totalorder 2, %s9
    // Predicated region
    $region37: #{forward.10} parent=5 // pred_check
      %p460 = pneg %p459
    $region38: #{forward.10} parent=5 // pred_check_branch
      %462 = sbr.rel (%p460) target = $region40
    $region39: #{forward.10} parent=5 // pred_region
      %s463 = ssub.s32 %s9, 2
      // Predicated region
      $region41: #{forward.10} parent=39 // pred_check
        %p464 = pneg %p106
      $region42: #{forward.10} parent=39 // pred_check_branch
        %466 = sbr.rel (%p464) target = $region44
      $region43: #{forward.10} parent=39 // pred_region
        %p467 = scmp.lt.s32.totalorder %s15, 1
        %s468 = scalar_select %p467, %s15, 1
        %s469 = smul.addr %s468, 16
        %s470 = smul.addr %s469, 8
        %s471 = scalar_lea.vmem %s3, %s470
      $region44: #{forward.10} parent=39 // pred_fallthru
        _
    $region40: #{forward.10} parent=5 // pred_fallthru
      _
  $region6: #{forward.10} parent=0 // loop_footer
    %s13 = sadd.s32 1, %s9
  $region7: #{forward.10} parent=0 // loop_footer_branch
    %8 = sbr.rel target = $region3
  $region8: #{forward.10} parent=0 // loop_exit
    _

// kernel: forward.11
$region0: #{forward.11}
  #allocation0 [shape = 'u32[]', space=smem, size = 0x4, offset = 0x4, fixed_abs, tag = 'smem constant byte address 0x4 - core index']
  #allocation1 [shape = 'u32[144,128]{1,0:T(1,128)}', space=vmem, size = 0x12000, scoped, tag = 'internal scratch']
  %s0 = inlined_call_operand.vmem [shape: bf16[1472,144], index: 0, kind: input, shape index: {}]
  %s1 = inlined_call_operand.vmem [shape: bf16[144,32], index: 1, kind: input, shape index: {}]
  %s2 = inlined_call_operand.vmem [shape: f32[1,32], index: 2, kind: input, shape index: {}]
  %s3 = inlined_call_operand.vmem [shape: f32[1472,32], index: 3, kind: output, shape index: {}]
  %s4 = sld [smem:[#allocation0]]
  $region45: #{forward.11} parent=0
    _
  %s6 = ssub.s32 1, %s4
  %s7 = scalar_select 0, %s6, %s4
  loop: start=0, step=1, limit=4
  $region2: #{forward.11} parent=0 // loop_pre_header
    _
  $region3: #{forward.11} parent=0 // loop_header
    %s9 = sphi 0, %s13
    %p10 = scmp.ge.s32.totalorder %s9, 4
    %s16 = sphi 0, %s35
    %s17 = sphi 0, %s31
    %s18 = sphi 0, %s27
    %s19 = sphi 0, %s16
    %s20 = sphi 0, %s17
    %s21 = sphi 0, %s18
    %s22 = sphi 0, %s19
    %s23 = sphi 0, %s20
    %s24 = sphi 0, %s21
    %s40 = sphi 0, %s42
    %s43 = sphi 0, %s40
    %s44 = sphi 0, %s43
    %s60 = sphi 0, %s44
    %s68 = sphi 0, %s70
    %s71 = sphi 0, %s68
    %s72 = sphi 0, %s71
    %s88 = sphi 0, %s72
    %s94 = sphi 0, %s96
    %s97 = sphi 0, %s94
    %s98 = sphi 0, %s97
    %s114 = sphi 0, %s98
    %s122 = sphi 0, %s124
    %s125 = sphi 0, %s122
    %s126 = sphi 0, %s125
    %s142 = sphi 0, %s126
  $region4: #{forward.11} parent=0 // loop_header_branch
    %12 = sbr.rel (%p10) target = $region8
  $region5: #{forward.11} parent=0 // loop_body
    %s14 = ssub.s32 %s9, 1
    %s15 = ssub.s32 %s9, 2
    %s25 = sadd.s32 1, %s18
    %p26 = scmp.ge.s32.totalorder %s25, 1
    %s27 = scalar_select %p26, 0, %s25
    %s28 = sadd.s32 1, %s17
    %s29 = scalar_select %p26, %s28, %s17
    %p30 = scmp.ge.s32.totalorder %s29, 1
    %s31 = scalar_select %p30, 0, %s29
    %s32 = sadd.s32 1, %s16
    %s33 = scalar_select %p30, %s32, %s16
    %p34 = scmp.ge.s32.totalorder %s33, 2
    %s35 = scalar_select %p34, 0, %s33
    %s36 = ssub.s32 %s16, %s35
    %s37 = ssub.s32 %s18, %s27
    %s38 = sor.u32 %s36, %s37
    %p39 = scmp.eq.s32.totalorder %s38, 0
    %s41 = sadd.s32 %s40, 1
    %s42 = scalar_select %p39, %s40, %s41
    %p45 = pneg %p39
    %p46 = scmp.eq.s32.totalorder %s9, 1
    %p47 = por %p45, %p46
    %p48 = scmp.ne.s32.totalorder %s40, %s43
    %p49 = scmp.eq.s32.totalorder %s9, 0
    %p50 = por %p48, %p49
    %p51 = scmp.ne.s32.totalorder %s40, %s43
    %p52 = scmp.eq.s32.totalorder %s14, 1
    %p53 = por %p51, %p52
    %p54 = scmp.ne.s32.totalorder %s43, %s44
    %p55 = scmp.eq.s32.totalorder %s14, 0
    %p56 = por %p54, %p55
    %p57 = scmp.ne.s32.totalorder %s43, %s44
    %p58 = scmp.eq.s32.totalorder %s15, 1
    %p59 = por %p57, %p58
    %p61 = scmp.ne.s32.totalorder %s44, %s60
    %p62 = scmp.eq.s32.totalorder %s15, 0
    %p63 = por %p61, %p62
    %s64 = ssub.s32 %s18, %s27
    %s65 = ssub.s32 %s17, %s31
    %s66 = sor.u32 %s64, %s65
    %p67 = scmp.eq.s32.totalorder %s66, 0
    %s69 = sadd.s32 %s68, 1
    %s70 = scalar_select %p67, %s68, %s69
    %p73 = pneg %p67
    %p74 = scmp.eq.s32.totalorder %s9, 1
    %p75 = por %p73, %p74
    %p76 = scmp.ne.s32.totalorder %s68, %s71
    %p77 = scmp.eq.s32.totalorder %s9, 0
    %p78 = por %p76, %p77
    %p79 = scmp.ne.s32.totalorder %s68, %s71
    %p80 = scmp.eq.s32.totalorder %s14, 1
    %p81 = por %p79, %p80
    %p82 = scmp.ne.s32.totalorder %s71, %s72
    %p83 = scmp.eq.s32.totalorder %s14, 0
    %p84 = por %p82, %p83
    %p85 = scmp.ne.s32.totalorder %s71, %s72
    %p86 = scmp.eq.s32.totalorder %s15, 1
    %p87 = por %p85, %p86
    %p89 = scmp.ne.s32.totalorder %s72, %s88
    %p90 = scmp.eq.s32.totalorder %s15, 0
    %p91 = por %p89, %p90
    %s92 = ssub.s32 %s17, %s31
    %p93 = scmp.eq.s32.totalorder %s92, 0
    %s95 = sadd.s32 %s94, 1
    %s96 = scalar_select %p93, %s94, %s95
    %p99 = pneg %p93
    %p100 = scmp.eq.s32.totalorder %s9, 1
    %p101 = por %p99, %p100
    %p102 = scmp.ne.s32.totalorder %s94, %s97
    %p103 = scmp.eq.s32.totalorder %s9, 0
    %p104 = por %p102, %p103
    %p105 = scmp.ne.s32.totalorder %s94, %s97
    %p106 = scmp.eq.s32.totalorder %s14, 1
    %p107 = por %p105, %p106
    %p108 = scmp.ne.s32.totalorder %s97, %s98
    %p109 = scmp.eq.s32.totalorder %s14, 0
    %p110 = por %p108, %p109
    %p111 = scmp.ne.s32.totalorder %s97, %s98
    %p112 = scmp.eq.s32.totalorder %s15, 1
    %p113 = por %p111, %p112
    %p115 = scmp.ne.s32.totalorder %s98, %s114
    %p116 = scmp.eq.s32.totalorder %s15, 0
    %p117 = por %p115, %p116
    %s118 = ssub.s32 %s16, %s35
    %s119 = ssub.s32 %s17, %s31
    %s120 = sor.u32 %s118, %s119
    %p121 = scmp.eq.s32.totalorder %s120, 0
    %s123 = sadd.s32 %s122, 1
    %s124 = scalar_select %p121, %s122, %s123
    %p127 = pneg %p121
    %p128 = scmp.eq.s32.totalorder %s9, 1
    %p129 = por %p127, %p128
    %p130 = scmp.ne.s32.totalorder %s122, %s125
    %p131 = scmp.eq.s32.totalorder %s9, 0
    %p132 = por %p130, %p131
    %p133 = scmp.ne.s32.totalorder %s122, %s125
    %p134 = scmp.eq.s32.totalorder %s14, 1
    %p135 = por %p133, %p134
    %p136 = scmp.ne.s32.totalorder %s125, %s126
    %p137 = scmp.eq.s32.totalorder %s14, 0
    %p138 = por %p136, %p137
    %p139 = scmp.ne.s32.totalorder %s125, %s126
    %p140 = scmp.eq.s32.totalorder %s15, 1
    %p141 = por %p139, %p140
    %p143 = scmp.ne.s32.totalorder %s126, %s142
    %p144 = scmp.eq.s32.totalorder %s15, 0
    %p145 = por %p143, %p144
    %p146 = scmp.le.s32.totalorder 1, %s9
    %p147 = scmp.lt.s32.totalorder %s9, 3
    %p148 = pnand %p146, %p147
    %p149 = pneg %p148
    // Predicated region
    $region9: #{forward.11} parent=5 // pred_check
      _
    $region10: #{forward.11} parent=5 // pred_check_branch
      %151 = sbr.rel (%p148) target = $region12
    $region11: #{forward.11} parent=5 // pred_region
      %s152 = ssub.s32 %s9, 1
      // Predicated region
      $region13: #{forward.11} parent=11 // pred_check
        %p153 = pneg %p84
      $region14: #{forward.11} parent=11 // pred_check_branch
        %155 = sbr.rel (%p153) target = $region16
      $region15: #{forward.11} parent=11 // pred_region
        %s156 = smul.u32 18, %s21
        %p157 = scmp.lt.s32.totalorder %s156, 17
        %s158 = scalar_select %p157, %s156, 17
        %p159 = scmp.lt.s32.totalorder %s20, 0
        %s160 = scalar_select %p159, %s20, 0
        %s161 = sadd.s32 %s160, %s158
        %s162 = smul.addr %s161, 4
        %s163 = scalar_lea.vmem %s1, %s162
        %s164 = smul.u32 18, %s21
      $region16: #{forward.11} parent=11 // pred_fallthru
        _
      // Predicated region
      $region17: #{forward.11} parent=11 // pred_check
        %p165 = pneg %p110
      $region18: #{forward.11} parent=11 // pred_check_branch
        %167 = sbr.rel (%p165) target = $region20
      $region19: #{forward.11} parent=11 // pred_region
        %p168 = scmp.lt.s32.totalorder %s20, 0
        %s169 = scalar_select %p168, %s20, 0
        %s170 = scalar_lea.vmem %s2, %s169
      $region20: #{forward.11} parent=11 // pred_fallthru
        _
    $region12: #{forward.11} parent=5 // pred_fallthru
      _
    %p171 = scmp.lt.s32.totalorder %s9, 2
    // Predicated region
    $region21: #{forward.11} parent=5 // pred_check
      %p172 = pneg %p171
    $region22: #{forward.11} parent=5 // pred_check_branch
      %174 = sbr.rel (%p172) target = $region24
    $region23: #{forward.11} parent=5 // pred_region
      // Predicated region
      $region25: #{forward.11} parent=23 // pred_check
        %p175 = pneg %p50
      $region26: #{forward.11} parent=23 // pred_check_branch
        %177 = sbr.rel (%p175) target = $region28
      $region27: #{forward.11} parent=23 // pred_region
        %s178 = smul.u32 92, %s16
        %s179 = smul.u32 2, %s18
        %p180 = scmp.lt.s32.totalorder %s178, 183
        %s181 = scalar_select %p180, %s178, 183
        %p182 = scmp.lt.s32.totalorder %s179, 1
        %s183 = scalar_select %p182, %s179, 1
        %s184 = smul.addr %s181, 2
        %s185 = sadd.s32 %s183, %s184
        %s186 = smul.addr %s185, 4
        %s187 = scalar_lea.vmem %s0, %s186
        %s188 = smul.u32 92, %s16
        %s189 = smul.u32 2, %s18
      $region28: #{forward.11} parent=23 // pred_fallthru
        _
    $region24: #{forward.11} parent=5 // pred_fallthru
      _
    %p190 = scmp.le.s32.totalorder 1, %s9
    %p191 = scmp.lt.s32.totalorder %s9, 3
    %p192 = pnand %p190, %p191
    %p193 = pneg %p192
    // Predicated region
    $region29: #{forward.11} parent=5 // pred_check
      _
    $region30: #{forward.11} parent=5 // pred_check_branch
      %195 = sbr.rel (%p192) target = $region32
    $region31: #{forward.11} parent=5 // pred_region
      %s196 = ssub.s32 %s9, 1
      %s197 = smul.u32 92, %s19
      %s198 = smul.u32 2, %s21
      %p199 = scmp.lt.s32.totalorder %s197, 183
      %s200 = scalar_select %p199, %s197, 183
      %p201 = scmp.lt.s32.totalorder %s198, 1
      %s202 = scalar_select %p201, %s198, 1
      %s203 = smul.addr %s200, 2
      %s204 = sadd.s32 %s202, %s203
      %s205 = smul.addr %s204, 4
      %s206 = scalar_lea.vmem %s0, %s205
      %p207 = pneg %p56
      %p208 = pneg %p53
      %s209 = smul.u32 18, %s21
      %p210 = scmp.lt.s32.totalorder %s209, 17
      %s211 = scalar_select %p210, %s209, 17
      %p212 = scmp.lt.s32.totalorder %s20, 0
      %s213 = scalar_select %p212, %s20, 0
      %s214 = sadd.s32 %s213, %s211
      %s215 = smul.addr %s214, 4
      %s216 = scalar_lea.vmem %s1, %s215
      %p217 = pneg %p84
      %p218 = pneg %p81
      %p219 = scmp.lt.s32.totalorder %s20, 0
      %s220 = scalar_select %p219, %s20, 0
      %s221 = scalar_lea.vmem %s2, %s220
      %p222 = pneg %p110
      %p223 = pneg %p107
      %p224 = pneg %p138
      %p225 = pneg %p135
      %s226 = smul.u32 92, %s19
      %p227 = scmp.lt.s32.totalorder %s226, 183
      %s228 = scalar_select %p227, %s226, 183
      %p229 = scmp.lt.s32.totalorder %s20, 0
      %s230 = scalar_select %p229, %s20, 0
      %s231 = sadd.s32 %s230, %s228
      %s232 = smul.addr %s231, 8
      %s233 = scalar_lea.vmem %s3, %s232
      %s234 = smul.u32 92, %s19
      %s235 = smul.u32 2, %s21
      %p236 = scmp.lt.s32.totalorder %s234, 183
      %s237 = scalar_select %p236, %s234, 183
      %p238 = scmp.lt.s32.totalorder %s235, 1
      %s239 = scalar_select %p238, %s235, 1
      %s240 = smul.addr %s237, 2
      %s241 = sadd.s32 %s239, %s240
      %s242 = smul.addr %s241, 4
      %s243 = scalar_lea.vmem %s0, %s242
      %s244 = smul.u32 92, %s19
      %s245 = smul.u32 2, %s21
      %s246 = smul.u32 18, %s21
      %p247 = scmp.lt.s32.totalorder %s246, 17
      %s248 = scalar_select %p247, %s246, 17
      %p249 = scmp.lt.s32.totalorder %s20, 0
      %s250 = scalar_select %p249, %s20, 0
      %s251 = sadd.s32 %s250, %s248
      %s252 = smul.addr %s251, 4
      %s253 = scalar_lea.vmem %s1, %s252
      %s254 = smul.u32 18, %s21
      %p255 = scmp.lt.s32.totalorder %s20, 0
      %s256 = scalar_select %p255, %s20, 0
      %s257 = scalar_lea.vmem %s2, %s256
      %s258 = smul.u32 92, %s19
      %p259 = scmp.lt.s32.totalorder %s258, 183
      %s260 = scalar_select %p259, %s258, 183
      %p261 = scmp.lt.s32.totalorder %s20, 0
      %s262 = scalar_select %p261, %s20, 0
      %s263 = sadd.s32 %s262, %s260
      %s264 = smul.addr %s263, 8
      %s265 = scalar_lea.vmem %s3, %s264
      %s266 = smul.u32 92, %s19
      %v268 = vld [vmem:[%s243] sm:$0xff]
      %v269 = vld [vmem:[%s243 + $0x8] sm:$0xff]
      %v270 = vld [vmem:[%s243 + $0x10] sm:$0xff]
      %v271 = vld [vmem:[%s243 + $0x18] sm:$0xff]
      %v272 = vld [vmem:[%s243 + $0x20] sm:$0xff]
      %v273 = vld [vmem:[%s243 + $0x28] sm:$0xff]
      %v274 = vld [vmem:[%s243 + $0x30] sm:$0xff]
      %v275 = vld [vmem:[%s243 + $0x38] sm:$0xff]
      %v276 = vld [vmem:[%s243 + $0x40] sm:$0xff]
      %v277 = vld [vmem:[%s243 + $0x48] sm:$0xff]
      %v278 = vld [vmem:[%s243 + $0x50] sm:$0xff]
      %v279 = vld [vmem:[%s243 + $0x58] sm:$0xff]
      %v280 = vld [vmem:[%s243 + $0x60] sm:$0xff]
      %v281 = vld [vmem:[%s243 + $0x68] sm:$0xff]
      %v282 = vld [vmem:[%s243 + $0x70] sm:$0xff]
      %v283 = vld [vmem:[%s243 + $0x78] sm:$0xff]
      %v284 = vld [vmem:[%s243 + $0x80] sm:$0xff]
      %v285 = vld [vmem:[%s243 + $0x88] sm:$0xff]
      %v286 = vld [vmem:[%s243 + $0x90] sm:$0xff]
      %v287 = vld [vmem:[%s243 + $0x98] sm:$0xff]
      %v288 = vld [vmem:[%s243 + $0xa0] sm:$0xff]
      %v289 = vld [vmem:[%s243 + $0xa8] sm:$0xff]
      %v290 = vld [vmem:[%s243 + $0xb0] sm:$0xff]
      %v291 = vld [vmem:[%s243 + $0xb8] sm:$0xff]
      %v292 = vld [vmem:[%s243 + $0xc0] sm:$0xff]
      %v293 = vld [vmem:[%s243 + $0xc8] sm:$0xff]
      %v294 = vld [vmem:[%s243 + $0xd0] sm:$0xff]
      %v295 = vld [vmem:[%s243 + $0xd8] sm:$0xff]
      %v296 = vld [vmem:[%s243 + $0xe0] sm:$0xff]
      %v297 = vld [vmem:[%s243 + $0xe8] sm:$0xff]
      %v298 = vld [vmem:[%s243 + $0xf0] sm:$0xff]
      %v299 = vld [vmem:[%s243 + $0xf8] sm:$0xff]
      %v300 = vld [vmem:[%s243 + $0x100] sm:$0xff]
      %v301 = vld [vmem:[%s243 + $0x108] sm:$0xff]
      %v302 = vld [vmem:[%s243 + $0x110] sm:$0xff]
      %v303 = vld [vmem:[%s243 + $0x118] sm:$0xff]
      %v304 = vld [vmem:[%s243 + $0x120] sm:$0xff]
      %v305 = vld [vmem:[%s243 + $0x128] sm:$0xff]
      %v306 = vld [vmem:[%s243 + $0x130] sm:$0xff]
      %v307 = vld [vmem:[%s243 + $0x138] sm:$0xff]
      %v308 = vld [vmem:[%s243 + $0x140] sm:$0xff]
      %v309 = vld [vmem:[%s243 + $0x148] sm:$0xff]
      %v310 = vld [vmem:[%s243 + $0x150] sm:$0xff]
      %v311 = vld [vmem:[%s243 + $0x158] sm:$0xff]
      %v312 = vld [vmem:[%s243 + $0x160] sm:$0xff]
      %v313 = vld [vmem:[%s243 + $0x168] sm:$0xff]
      %v314 = vld [vmem:[%s243 + $0x170] sm:$0xff]
      %v315 = vld [vmem:[%s243 + $0x178] sm:$0xff]
      %v316 = vld [vmem:[%s243 + $0x180] sm:$0xff]
      %v317 = vld [vmem:[%s243 + $0x188] sm:$0xff]
      %v318 = vld [vmem:[%s243 + $0x190] sm:$0xff]
      %v319 = vld [vmem:[%s243 + $0x198] sm:$0xff]
      %v320 = vld [vmem:[%s243 + $0x1a0] sm:$0xff]
      %v321 = vld [vmem:[%s243 + $0x1a8] sm:$0xff]
      %v322 = vld [vmem:[%s243 + $0x1b0] sm:$0xff]
      %v323 = vld [vmem:[%s243 + $0x1b8] sm:$0xff]
      %v324 = vld [vmem:[%s243 + $0x1c0] sm:$0xff]
      %v325 = vld [vmem:[%s243 + $0x1c8] sm:$0xff]
      %v326 = vld [vmem:[%s243 + $0x1d0] sm:$0xff]
      %v327 = vld [vmem:[%s243 + $0x1d8] sm:$0xff]
      %v328 = vld [vmem:[%s243 + $0x1e0] sm:$0xff]
      %v329 = vld [vmem:[%s243 + $0x1e8] sm:$0xff]
      %v330 = vld [vmem:[%s243 + $0x1f0] sm:$0xff]
      %v331 = vld [vmem:[%s243 + $0x1f8] sm:$0xff]
      %v332 = vld [vmem:[%s243 + $0x200] sm:$0xff]
      %v333 = vld [vmem:[%s243 + $0x208] sm:$0xff]
      %v334 = vld [vmem:[%s243 + $0x210] sm:$0xff]
      %v335 = vld [vmem:[%s243 + $0x218] sm:$0xff]
      %v336 = vld [vmem:[%s243 + $0x220] sm:$0xff]
      %v337 = vld [vmem:[%s243 + $0x228] sm:$0xff]
      %v338 = vld [vmem:[%s243 + $0x230] sm:$0xff]
      %v339 = vld [vmem:[%s243 + $0x238] sm:$0xff]
      %v340 = vld [vmem:[%s243 + $0x240] sm:$0xff]
      %v341 = vld [vmem:[%s243 + $0x248] sm:$0xff]
      %v342 = vld [vmem:[%s243 + $0x250] sm:$0xff]
      %v343 = vld [vmem:[%s243 + $0x258] sm:$0xff]
      %v344 = vld [vmem:[%s243 + $0x260] sm:$0xff]
      %v345 = vld [vmem:[%s243 + $0x268] sm:$0xff]
      %v346 = vld [vmem:[%s243 + $0x270] sm:$0xff]
      %v347 = vld [vmem:[%s243 + $0x278] sm:$0xff]
      %v348 = vld [vmem:[%s243 + $0x280] sm:$0xff]
      %v349 = vld [vmem:[%s243 + $0x288] sm:$0xff]
      %v350 = vld [vmem:[%s243 + $0x290] sm:$0xff]
      %v351 = vld [vmem:[%s243 + $0x298] sm:$0xff]
      %v352 = vld [vmem:[%s243 + $0x2a0] sm:$0xff]
      %v353 = vld [vmem:[%s243 + $0x2a8] sm:$0xff]
      %v354 = vld [vmem:[%s243 + $0x2b0] sm:$0xff]
      %v355 = vld [vmem:[%s243 + $0x2b8] sm:$0xff]
      %v356 = vld [vmem:[%s243 + $0x2c0] sm:$0xff]
      %v357 = vld [vmem:[%s243 + $0x2c8] sm:$0xff]
      %v358 = vld [vmem:[%s243 + $0x2d0] sm:$0xff]
      %v359 = vld [vmem:[%s243 + $0x2d8] sm:$0xff]
      %v360 = vld [vmem:[%s253] sm:$0xf]
      %v361 = vld [vmem:[%s253 + $0x4] sm:$0xf]
      %v362 = vld [vmem:[%s253 + $0x8] sm:$0xf]
      %v363 = vld [vmem:[%s253 + $0xc] sm:$0xf]
      %v364 = vld [vmem:[%s253 + $0x10] sm:$0xf]
      %v365 = vld [vmem:[%s253 + $0x14] sm:$0xf]
      %v366 = vld [vmem:[%s253 + $0x18] sm:$0xf]
      %v367 = vld [vmem:[%s253 + $0x1c] sm:$0xf]
      %v368 = vld [vmem:[%s253 + $0x20] sm:$0xf]
      %v369 = vld [vmem:[%s253 + $0x24] sm:$0xf]
      %v370 = vld [vmem:[%s253 + $0x28] sm:$0xf]
      %v371 = vld [vmem:[%s253 + $0x2c] sm:$0xf]
      %v372 = vld [vmem:[%s253 + $0x30] sm:$0xf]
      %v373 = vld [vmem:[%s253 + $0x34] sm:$0xf]
      %v374 = vld [vmem:[%s253 + $0x38] sm:$0xf]
      %v375 = vld [vmem:[%s253 + $0x3c] sm:$0xf]
      %v376 = vld [vmem:[%s253 + $0x40] sm:$0xf]
      %v377 = vld [vmem:[%s253 + $0x44] sm:$0xf]
      %v378 = vld [vmem:[%s257] sm:$0x1]
      %v380 = vlaneseq
      %v381 = vshrl.u32 %v380, 7
      %v382 = vsub.s32 0, %v381
      %v383 = vrot.slane %v378, %v382
      %v477 = vunpack.c.l.b16 %v268
      %v478 = vunpack.c.h.b16 %v268
      %v479 = vunpack.c.l.b16 %v269
      %v480 = vunpack.c.h.b16 %v269
      %v481 = vunpack.c.l.b16 %v270
      %v482 = vunpack.c.h.b16 %v270
      %v483 = vunpack.c.l.b16 %v271
      %v484 = vunpack.c.h.b16 %v271
      %v485 = vunpack.c.l.b16 %v272
      %v486 = vunpack.c.h.b16 %v272
      %v487 = vunpack.c.l.b16 %v273
      %v488 = vunpack.c.h.b16 %v273
      %v489 = vunpack.c.l.b16 %v274
      %v490 = vunpack.c.h.b16 %v274
      %v491 = vunpack.c.l.b16 %v275
      %v492 = vunpack.c.h.b16 %v275
      %v493 = vunpack.c.l.b16 %v276
      %v494 = vunpack.c.h.b16 %v276
      %v495 = vunpack.c.l.b16 %v277
      %v496 = vunpack.c.h.b16 %v277
      %v497 = vunpack.c.l.b16 %v278
      %v498 = vunpack.c.h.b16 %v278
      %v499 = vunpack.c.l.b16 %v279
      %v500 = vunpack.c.h.b16 %v279
      %v501 = vunpack.c.l.b16 %v280
      %v502 = vunpack.c.h.b16 %v280
      %v503 = vunpack.c.l.b16 %v281
      %v504 = vunpack.c.h.b16 %v281
      %v505 = vunpack.c.l.b16 %v282
      %v506 = vunpack.c.h.b16 %v282
      %v507 = vunpack.c.l.b16 %v283
      %v508 = vunpack.c.h.b16 %v283
      %v509 = vunpack.c.l.b16 %v284
      %v510 = vunpack.c.h.b16 %v284
      %v511 = vunpack.c.l.b16 %v285
      %v512 = vunpack.c.h.b16 %v285
      %v513 = vunpack.c.l.b16 %v286
      %v514 = vunpack.c.h.b16 %v286
      %v515 = vunpack.c.l.b16 %v287
      %v516 = vunpack.c.h.b16 %v287
      %v517 = vunpack.c.l.b16 %v288
      %v518 = vunpack.c.h.b16 %v288
      %v519 = vunpack.c.l.b16 %v289
      %v520 = vunpack.c.h.b16 %v289
      %v521 = vunpack.c.l.b16 %v290
      %v522 = vunpack.c.h.b16 %v290
      %v523 = vunpack.c.l.b16 %v291
      %v524 = vunpack.c.h.b16 %v291
      %v525 = vunpack.c.l.b16 %v292
      %v526 = vunpack.c.h.b16 %v292
      %v527 = vunpack.c.l.b16 %v293
      %v528 = vunpack.c.h.b16 %v293
      %v529 = vunpack.c.l.b16 %v294
      %v530 = vunpack.c.h.b16 %v294
      %v531 = vunpack.c.l.b16 %v295
      %v532 = vunpack.c.h.b16 %v295
      %v533 = vunpack.c.l.b16 %v296
      %v534 = vunpack.c.h.b16 %v296
      %v535 = vunpack.c.l.b16 %v297
      %v536 = vunpack.c.h.b16 %v297
      %v537 = vunpack.c.l.b16 %v298
      %v538 = vunpack.c.h.b16 %v298
      %v539 = vunpack.c.l.b16 %v299
      %v540 = vunpack.c.h.b16 %v299
      %v541 = vunpack.c.l.b16 %v300
      %v542 = vunpack.c.h.b16 %v300
      %v543 = vunpack.c.l.b16 %v301
      %v544 = vunpack.c.h.b16 %v301
      %v545 = vunpack.c.l.b16 %v302
      %v546 = vunpack.c.h.b16 %v302
      %v547 = vunpack.c.l.b16 %v303
      %v548 = vunpack.c.h.b16 %v303
      %v549 = vunpack.c.l.b16 %v304
      %v550 = vunpack.c.h.b16 %v304
      %v551 = vunpack.c.l.b16 %v305
      %v552 = vunpack.c.h.b16 %v305
      %v553 = vunpack.c.l.b16 %v306
      %v554 = vunpack.c.h.b16 %v306
      %v555 = vunpack.c.l.b16 %v307
      %v556 = vunpack.c.h.b16 %v307
      %v557 = vunpack.c.l.b16 %v308
      %v558 = vunpack.c.h.b16 %v308
      %v559 = vunpack.c.l.b16 %v309
      %v560 = vunpack.c.h.b16 %v309
      %v561 = vunpack.c.l.b16 %v310
      %v562 = vunpack.c.h.b16 %v310
      %v563 = vunpack.c.l.b16 %v311
      %v564 = vunpack.c.h.b16 %v311
      %v565 = vunpack.c.l.b16 %v312
      %v566 = vunpack.c.h.b16 %v312
      %v567 = vunpack.c.l.b16 %v313
      %v568 = vunpack.c.h.b16 %v313
      %v569 = vunpack.c.l.b16 %v314
      %v570 = vunpack.c.h.b16 %v314
      %v571 = vunpack.c.l.b16 %v315
      %v572 = vunpack.c.h.b16 %v315
      %v573 = vunpack.c.l.b16 %v316
      %v574 = vunpack.c.h.b16 %v316
      %v575 = vunpack.c.l.b16 %v317
      %v576 = vunpack.c.h.b16 %v317
      %v577 = vunpack.c.l.b16 %v318
      %v578 = vunpack.c.h.b16 %v318
      %v579 = vunpack.c.l.b16 %v319
      %v580 = vunpack.c.h.b16 %v319
      %v581 = vunpack.c.l.b16 %v320
      %v582 = vunpack.c.h.b16 %v320
      %v583 = vunpack.c.l.b16 %v321
      %v584 = vunpack.c.h.b16 %v321
      %v585 = vunpack.c.l.b16 %v322
      %v586 = vunpack.c.h.b16 %v322
      %v587 = vunpack.c.l.b16 %v323
      %v588 = vunpack.c.h.b16 %v323
      %v589 = vunpack.c.l.b16 %v324
      %v590 = vunpack.c.h.b16 %v324
      %v591 = vunpack.c.l.b16 %v325
      %v592 = vunpack.c.h.b16 %v325
      %v593 = vunpack.c.l.b16 %v326
      %v594 = vunpack.c.h.b16 %v326
      %v595 = vunpack.c.l.b16 %v327
      %v596 = vunpack.c.h.b16 %v327
      %v597 = vunpack.c.l.b16 %v328
      %v598 = vunpack.c.h.b16 %v328
      %v599 = vunpack.c.l.b16 %v329
      %v600 = vunpack.c.h.b16 %v329
      %v601 = vunpack.c.l.b16 %v330
      %v602 = vunpack.c.h.b16 %v330
      %v603 = vunpack.c.l.b16 %v331
      %v604 = vunpack.c.h.b16 %v331
      %v605 = vunpack.c.l.b16 %v332
      %v606 = vunpack.c.h.b16 %v332
      %v607 = vunpack.c.l.b16 %v333
      %v608 = vunpack.c.h.b16 %v333
      %v609 = vunpack.c.l.b16 %v334
      %v610 = vunpack.c.h.b16 %v334
      %v611 = vunpack.c.l.b16 %v335
      %v612 = vunpack.c.h.b16 %v335
      %v613 = vunpack.c.l.b16 %v336
      %v614 = vunpack.c.h.b16 %v336
      %v615 = vunpack.c.l.b16 %v337
      %v616 = vunpack.c.h.b16 %v337
      %v617 = vunpack.c.l.b16 %v338
      %v618 = vunpack.c.h.b16 %v338
      %v619 = vunpack.c.l.b16 %v339
      %v620 = vunpack.c.h.b16 %v339
      %v621 = vunpack.c.l.b16 %v340
      %v622 = vunpack.c.h.b16 %v340
      %v623 = vunpack.c.l.b16 %v341
      %v624 = vunpack.c.h.b16 %v341
      %v625 = vunpack.c.l.b16 %v342
      %v626 = vunpack.c.h.b16 %v342
      %v627 = vunpack.c.l.b16 %v343
      %v628 = vunpack.c.h.b16 %v343
      %v629 = vunpack.c.l.b16 %v344
      %v630 = vunpack.c.h.b16 %v344
      %v631 = vunpack.c.l.b16 %v345
      %v632 = vunpack.c.h.b16 %v345
      %v633 = vunpack.c.l.b16 %v346
      %v634 = vunpack.c.h.b16 %v346
      %v635 = vunpack.c.l.b16 %v347
      %v636 = vunpack.c.h.b16 %v347
      %v637 = vunpack.c.l.b16 %v348
      %v638 = vunpack.c.h.b16 %v348
      %v639 = vunpack.c.l.b16 %v349
      %v640 = vunpack.c.h.b16 %v349
      %v641 = vunpack.c.l.b16 %v350
      %v642 = vunpack.c.h.b16 %v350
      %v643 = vunpack.c.l.b16 %v351
      %v644 = vunpack.c.h.b16 %v351
      %v645 = vunpack.c.l.b16 %v352
      %v646 = vunpack.c.h.b16 %v352
      %v647 = vunpack.c.l.b16 %v353
      %v648 = vunpack.c.h.b16 %v353
      %v649 = vunpack.c.l.b16 %v354
      %v650 = vunpack.c.h.b16 %v354
      %v651 = vunpack.c.l.b16 %v355
      %v652 = vunpack.c.h.b16 %v355
      %v653 = vunpack.c.l.b16 %v356
      %v654 = vunpack.c.h.b16 %v356
      %v655 = vunpack.c.l.b16 %v357
      %v656 = vunpack.c.h.b16 %v357
      %v657 = vunpack.c.l.b16 %v358
      %v658 = vunpack.c.h.b16 %v358
      %v659 = vunpack.c.l.b16 %v359
      %v660 = vunpack.c.h.b16 %v359
      %v661 = vpack.c.b16 %v479, %v477
      %v662 = vpack.c.b16 %v480, %v478
      %v663 = vpack.c.b16 %v483, %v481
      %v664 = vpack.c.b16 %v484, %v482
      %v665 = vpack.c.b16 %v487, %v485
      %v666 = vpack.c.b16 %v488, %v486
      %v667 = vpack.c.b16 %v491, %v489
      %v668 = vpack.c.b16 %v492, %v490
      %v669 = vpack.c.b16 %v495, %v493
      %v670 = vpack.c.b16 %v496, %v494
      %v671 = vpack.c.b16 %v499, %v497
      %v672 = vpack.c.b16 %v500, %v498
      %v673 = vpack.c.b16 %v503, %v501
      %v674 = vpack.c.b16 %v504, %v502
      %v675 = vpack.c.b16 %v507, %v505
      %v676 = vpack.c.b16 %v508, %v506
      %v677 = vpack.c.b16 %v511, %v509
      %v678 = vpack.c.b16 %v512, %v510
      %v679 = vpack.c.b16 %v515, %v513
      %v680 = vpack.c.b16 %v516, %v514
      %v681 = vpack.c.b16 %v519, %v517
      %v682 = vpack.c.b16 %v520, %v518
      %v683 = vpack.c.b16 %v523, %v521
      %v684 = vpack.c.b16 %v524, %v522
      %v685 = vpack.c.b16 %v527, %v525
      %v686 = vpack.c.b16 %v528, %v526
      %v687 = vpack.c.b16 %v531, %v529
      %v688 = vpack.c.b16 %v532, %v530
      %v689 = vpack.c.b16 %v535, %v533
      %v690 = vpack.c.b16 %v536, %v534
      %v691 = vpack.c.b16 %v539, %v537
      %v692 = vpack.c.b16 %v540, %v538
      %v693 = vpack.c.b16 %v543, %v541
      %v694 = vpack.c.b16 %v544, %v542
      %v695 = vpack.c.b16 %v547, %v545
      %v696 = vpack.c.b16 %v548, %v546
      %v697 = vpack.c.b16 %v551, %v549
      %v698 = vpack.c.b16 %v552, %v550
      %v699 = vpack.c.b16 %v555, %v553
      %v700 = vpack.c.b16 %v556, %v554
      %v701 = vpack.c.b16 %v559, %v557
      %v702 = vpack.c.b16 %v560, %v558
      %v703 = vpack.c.b16 %v563, %v561
      %v704 = vpack.c.b16 %v564, %v562
      %v705 = vpack.c.b16 %v567, %v565
      %v706 = vpack.c.b16 %v568, %v566
      %v707 = vpack.c.b16 %v571, %v569
      %v708 = vpack.c.b16 %v572, %v570
      %v709 = vpack.c.b16 %v575, %v573
      %v710 = vpack.c.b16 %v576, %v574
      %v711 = vpack.c.b16 %v579, %v577
      %v712 = vpack.c.b16 %v580, %v578
      %v713 = vpack.c.b16 %v583, %v581
      %v714 = vpack.c.b16 %v584, %v582
      %v715 = vpack.c.b16 %v587, %v585
      %v716 = vpack.c.b16 %v588, %v586
      %v717 = vpack.c.b16 %v591, %v589
      %v718 = vpack.c.b16 %v592, %v590
      %v719 = vpack.c.b16 %v595, %v593
      %v720 = vpack.c.b16 %v596, %v594
      %v721 = vpack.c.b16 %v599, %v597
      %v722 = vpack.c.b16 %v600, %v598
      %v723 = vpack.c.b16 %v603, %v601
      %v724 = vpack.c.b16 %v604, %v602
      %v725 = vpack.c.b16 %v607, %v605
      %v726 = vpack.c.b16 %v608, %v606
      %v727 = vpack.c.b16 %v611, %v609
      %v728 = vpack.c.b16 %v612, %v610
      %v729 = vpack.c.b16 %v615, %v613
      %v730 = vpack.c.b16 %v616, %v614
      %v731 = vpack.c.b16 %v619, %v617
      %v732 = vpack.c.b16 %v620, %v618
      %v733 = vpack.c.b16 %v623, %v621
      %v734 = vpack.c.b16 %v624, %v622
      %v735 = vpack.c.b16 %v627, %v625
      %v736 = vpack.c.b16 %v628, %v626
      %v737 = vpack.c.b16 %v631, %v629
      %v738 = vpack.c.b16 %v632, %v630
      %v739 = vpack.c.b16 %v635, %v633
      %v740 = vpack.c.b16 %v636, %v634
      %v741 = vpack.c.b16 %v639, %v637
      %v742 = vpack.c.b16 %v640, %v638
      %v743 = vpack.c.b16 %v643, %v641
      %v744 = vpack.c.b16 %v644, %v642
      %v745 = vpack.c.b16 %v647, %v645
      %v746 = vpack.c.b16 %v648, %v646
      %v747 = vpack.c.b16 %v651, %v649
      %v748 = vpack.c.b16 %v652, %v650
      %v749 = vpack.c.b16 %v655, %v653
      %v750 = vpack.c.b16 %v656, %v654
      %v751 = vpack.c.b16 %v659, %v657
      %v752 = vpack.c.b16 %v660, %v658
      %v817 = vunpack.c.l.b16 %v360
      %v818 = vunpack.c.l.b16 %v361
      %v819 = vunpack.c.l.b16 %v362
      %v820 = vunpack.c.l.b16 %v363
      %v821 = vunpack.c.l.b16 %v364
      %v822 = vunpack.c.l.b16 %v365
      %v823 = vunpack.c.l.b16 %v366
      %v824 = vunpack.c.l.b16 %v367
      %v825 = vunpack.c.l.b16 %v368
      %v826 = vunpack.c.l.b16 %v369
      %v827 = vunpack.c.l.b16 %v370
      %v828 = vunpack.c.l.b16 %v371
      %v829 = vunpack.c.l.b16 %v372
      %v830 = vunpack.c.l.b16 %v373
      %v831 = vunpack.c.l.b16 %v374
      %v832 = vunpack.c.l.b16 %v375
      %v833 = vunpack.c.l.b16 %v376
      %v834 = vunpack.c.l.b16 %v377
      %v835 = vpack.c.b16 %v818, %v817
      %v836 = vpack.c.b16 %v820, %v819
      %v837 = vpack.c.b16 %v822, %v821
      %v838 = vpack.c.b16 %v824, %v823
      %v839 = vpack.c.b16 %v826, %v825
      %v840 = vpack.c.b16 %v828, %v827
      %v841 = vpack.c.b16 %v830, %v829
      %v842 = vpack.c.b16 %v832, %v831
      %v843 = vpack.c.b16 %v834, %v833
      %vm853 = vcmask 130048
      %v855 = vsel %vm853, %v662, 0
      %v858 = vsel %vm853, %v664, 0
      %v861 = vsel %vm853, %v666, 0
      %v864 = vsel %vm853, %v668, 0
      %v867 = vsel %vm853, %v670, 0
      %v870 = vsel %vm853, %v672, 0
      %v873 = vsel %vm853, %v674, 0
      %v876 = vsel %vm853, %v676, 0
      %v879 = vsel %vm853, %v678, 0
      %v882 = vsel %vm853, %v680, 0
      %v885 = vsel %vm853, %v682, 0
      %v888 = vsel %vm853, %v684, 0
      %v891 = vsel %vm853, %v686, 0
      %v894 = vsel %vm853, %v688, 0
      %v897 = vsel %vm853, %v690, 0
      %v900 = vsel %vm853, %v692, 0
      %v903 = vsel %vm853, %v694, 0
      %v906 = vsel %vm853, %v696, 0
      %v909 = vsel %vm853, %v698, 0
      %v912 = vsel %vm853, %v700, 0
      %v915 = vsel %vm853, %v702, 0
      %v918 = vsel %vm853, %v704, 0
      %v921 = vsel %vm853, %v706, 0
      %v924 = vsel %vm853, %v708, 0
      %v927 = vsel %vm853, %v710, 0
      %v930 = vsel %vm853, %v712, 0
      %v933 = vsel %vm853, %v714, 0
      %v936 = vsel %vm853, %v716, 0
      %v939 = vsel %vm853, %v718, 0
      %v942 = vsel %vm853, %v720, 0
      %v945 = vsel %vm853, %v722, 0
      %v948 = vsel %vm853, %v724, 0
      %v951 = vsel %vm853, %v726, 0
      %v954 = vsel %vm853, %v728, 0
      %v957 = vsel %vm853, %v730, 0
      %v960 = vsel %vm853, %v732, 0
      %v963 = vsel %vm853, %v734, 0
      %v966 = vsel %vm853, %v736, 0
      %v969 = vsel %vm853, %v738, 0
      %v972 = vsel %vm853, %v740, 0
      %v975 = vsel %vm853, %v742, 0
      %v978 = vsel %vm853, %v744, 0
      %v981 = vsel %vm853, %v746, 0
      %v984 = vsel %vm853, %v748, 0
      %v987 = vsel %vm853, %v750, 0
      %v990 = vsel %vm853, %v752, 0
      %992 = vmatprep.subr.bf16.mxu0 0
      %993 = vmatpush1.bf16.msra.mxu0 %v835
      %994 = vmatprep.subr.bf16.mxu0 0
      %995 = vmatpush1.bf16.msra.mxu0 %v836
      %996 = vmatprep.subr.bf16.mxu0 0
      %997 = vmatpush1.bf16.msra.mxu0 %v837
      %998 = vmatprep.subr.bf16.mxu0 0
      %999 = vmatpush1.bf16.msra.mxu0 %v838
      %1000 = vmatprep.subr.bf16.mxu0 0
      %1001 = vmatpush1.bf16.msra.mxu0 %v839
      %1002 = vmatprep.subr.bf16.mxu0 0
      %1003 = vmatpush1.bf16.msra.mxu0 %v840
      %1004 = vmatprep.subr.bf16.mxu0 0
      %1005 = vmatpush1.bf16.msra.mxu0 %v841
      %1006 = vmatprep.subr.bf16.mxu0 0
      %1007 = vmatpush1.bf16.msra.mxu0 %v842
      %1008 = vmatprep.subr.bf16.mxu0 0
      %1009 = vmatpush1.bf16.msra.mxu0 %v843
      %1010 = vmatprep.subr.bf16.mxu0 0
      %1011 = vmatpush1.bf16.msra.mxu0 0
      %1012 = vmatprep.subr.bf16.mxu0 0
      %1013 = vmatpush1.bf16.msra.mxu0 0
      %1014 = vmatprep.subr.bf16.mxu0 0
      %1015 = vmatpush1.bf16.msra.mxu0 0
      %1016 = vmatprep.subr.bf16.mxu0 0
      %1017 = vmatpush1.bf16.msra.mxu0 0
      %1018 = vmatprep.subr.bf16.mxu0 0
      %1019 = vmatpush1.bf16.msra.mxu0 0
      %1020 = vmatprep.subr.bf16.mxu0 0
      %1021 = vmatpush1.bf16.msra.mxu0 0
      %1022 = vmatprep.subr.bf16.mxu0 0
      %1023 = vmatpush1.bf16.msra.mxu0 0
      %1024 = vmatprep.mubr.bf16.mxu0 %v855
      %1025 = vmatmul.mubr.bf16.gmra.mrb[0].mxu0 %v661
      %v1026 = vpop.f32.mrb[0].mxu0
      %v1027 = vadd.f32 %v383, %v1026
      %v1028 = vpop.f32.mrb[0].mxu0
      %v1029 = vpop.f32.mrb[0].mxu0
      %v1030 = vadd.f32 %v383, %v1029
      %v1031 = vpop.f32.mrb[0].mxu0
      %1032 = vmatprep.mubr.bf16.mxu0 %v858
      %1033 = vmatmul.mubr.bf16.gmra.mrb[0].mxu0 %v663
      %v1034 = vpop.f32.mrb[0].mxu0
      %v1035 = vadd.f32 %v383, %v1034
      %v1036 = vpop.f32.mrb[0].mxu0
      %v1037 = vpop.f32.mrb[0].mxu0
      %v1038 = vadd.f32 %v383, %v1037
      %v1039 = vpop.f32.mrb[0].mxu0
      %1040 = vmatprep.mubr.bf16.mxu0 %v861
      %1041 = vmatmul.mubr.bf16.gmra.mrb[0].mxu0 %v665
      %v1042 = vpop.f32.mrb[0].mxu0
      %v1043 = vadd.f32 %v383, %v1042
      %v1044 = vpop.f32.mrb[0].mxu0
      %v1045 = vpop.f32.mrb[0].mxu0
      %v1046 = vadd.f32 %v383, %v1045
      %v1047 = vpop.f32.mrb[0].mxu0
      %1048 = vmatprep.mubr.bf16.mxu0 %v864
      %1049 = vmatmul.mubr.bf16.gmra.mrb[0].mxu0 %v667
      %v1050 = vpop.f32.mrb[0].mxu0
      %v1051 = vadd.f32 %v383, %v1050
      %v1052 = vpop.f32.mrb[0].mxu0
      %v1053 = vpop.f32.mrb[0].mxu0
      %v1054 = vadd.f32 %v383, %v1053
      %v1055 = vpop.f32.mrb[0].mxu0
      %1056 = vmatprep.mubr.bf16.mxu0 %v867
      %1057 = vmatmul.mubr.bf16.gmra.mrb[0].mxu0 %v669
      %v1058 = vpop.f32.mrb[0].mxu0
      %v1059 = vadd.f32 %v383, %v1058
      %v1060 = vpop.f32.mrb[0].mxu0
      %v1061 = vpop.f32.mrb[0].mxu0
      %v1062 = vadd.f32 %v383, %v1061
      %v1063 = vpop.f32.mrb[0].mxu0
      %1064 = vmatprep.mubr.bf16.mxu0 %v870
      %1065 = vmatmul.mubr.bf16.gmra.mrb[0].mxu0 %v671
      %v1066 = vpop.f32.mrb[0].mxu0
      %v1067 = vadd.f32 %v383, %v1066
      %v1068 = vpop.f32.mrb[0].mxu0
      %v1069 = vpop.f32.mrb[0].mxu0
      %v1070 = vadd.f32 %v383, %v1069
      %v1071 = vpop.f32.mrb[0].mxu0
      %1072 = vmatprep.mubr.bf16.mxu0 %v873
      %1073 = vmatmul.mubr.bf16.gmra.mrb[0].mxu0 %v673
      %v1074 = vpop.f32.mrb[0].mxu0
      %v1075 = vadd.f32 %v383, %v1074
      %v1076 = vpop.f32.mrb[0].mxu0
      %v1077 = vpop.f32.mrb[0].mxu0
      %v1078 = vadd.f32 %v383, %v1077
      %v1079 = vpop.f32.mrb[0].mxu0
      %1080 = vmatprep.mubr.bf16.mxu0 %v876
      %1081 = vmatmul.mubr.bf16.gmra.mrb[0].mxu0 %v675
      %v1082 = vpop.f32.mrb[0].mxu0
      %v1083 = vadd.f32 %v383, %v1082
      %v1084 = vpop.f32.mrb[0].mxu0
      %v1085 = vpop.f32.mrb[0].mxu0
      %v1086 = vadd.f32 %v383, %v1085
      %v1087 = vpop.f32.mrb[0].mxu0
      %1088 = vmatprep.mubr.bf16.mxu0 %v879
      %1089 = vmatmul.mubr.bf16.gmra.mrb[0].mxu0 %v677
      %v1090 = vpop.f32.mrb[0].mxu0
      %v1091 = vadd.f32 %v383, %v1090
      %v1092 = vpop.f32.mrb[0].mxu0
      %v1093 = vpop.f32.mrb[0].mxu0
      %v1094 = vadd.f32 %v383, %v1093
      %v1095 = vpop.f32.mrb[0].mxu0
      %1096 = vmatprep.mubr.bf16.mxu0 %v882
      %1097 = vmatmul.mubr.bf16.gmra.mrb[0].mxu0 %v679
      %v1098 = vpop.f32.mrb[0].mxu0
      %v1099 = vadd.f32 %v383, %v1098
      %v1100 = vpop.f32.mrb[0].mxu0
      %v1101 = vpop.f32.mrb[0].mxu0
      %v1102 = vadd.f32 %v383, %v1101
      %v1103 = vpop.f32.mrb[0].mxu0
      %1104 = vmatprep.mubr.bf16.mxu0 %v885
      %1105 = vmatmul.mubr.bf16.gmra.mrb[0].mxu0 %v681
      %v1106 = vpop.f32.mrb[0].mxu0
      %v1107 = vadd.f32 %v383, %v1106
      %v1108 = vpop.f32.mrb[0].mxu0
      %v1109 = vpop.f32.mrb[0].mxu0
      %v1110 = vadd.f32 %v383, %v1109
      %v1111 = vpop.f32.mrb[0].mxu0
      %1112 = vmatprep.mubr.bf16.mxu0 %v888
      %1113 = vmatmul.mubr.bf16.gmra.mrb[0].mxu0 %v683
      %v1114 = vpop.f32.mrb[0].mxu0
      %v1115 = vadd.f32 %v383, %v1114
      %v1116 = vpop.f32.mrb[0].mxu0
      %v1117 = vpop.f32.mrb[0].mxu0
      %v1118 = vadd.f32 %v383, %v1117
      %v1119 = vpop.f32.mrb[0].mxu0
      %1120 = vmatprep.mubr.bf16.mxu0 %v891
      %1121 = vmatmul.mubr.bf16.gmra.mrb[0].mxu0 %v685
      %v1122 = vpop.f32.mrb[0].mxu0
      %v1123 = vadd.f32 %v383, %v1122
      %v1124 = vpop.f32.mrb[0].mxu0
      %v1125 = vpop.f32.mrb[0].mxu0
      %v1126 = vadd.f32 %v383, %v1125
      %v1127 = vpop.f32.mrb[0].mxu0
      %1128 = vmatprep.mubr.bf16.mxu0 %v894
      %1129 = vmatmul.mubr.bf16.gmra.mrb[0].mxu0 %v687
      %v1130 = vpop.f32.mrb[0].mxu0
      %v1131 = vadd.f32 %v383, %v1130
      %v1132 = vpop.f32.mrb[0].mxu0
      %v1133 = vpop.f32.mrb[0].mxu0
      %v1134 = vadd.f32 %v383, %v1133
      %v1135 = vpop.f32.mrb[0].mxu0
      %1136 = vmatprep.mubr.bf16.mxu0 %v897
      %1137 = vmatmul.mubr.bf16.gmra.mrb[0].mxu0 %v689
      %v1138 = vpop.f32.mrb[0].mxu0
      %v1139 = vadd.f32 %v383, %v1138
      %v1140 = vpop.f32.mrb[0].mxu0
      %v1141 = vpop.f32.mrb[0].mxu0
      %v1142 = vadd.f32 %v383, %v1141
      %v1143 = vpop.f32.mrb[0].mxu0
      %1144 = vmatprep.mubr.bf16.mxu0 %v900
      %1145 = vmatmul.mubr.bf16.gmra.mrb[0].mxu0 %v691
      %v1146 = vpop.f32.mrb[0].mxu0
      %v1147 = vadd.f32 %v383, %v1146
      %v1148 = vpop.f32.mrb[0].mxu0
      %v1149 = vpop.f32.mrb[0].mxu0
      %v1150 = vadd.f32 %v383, %v1149
      %v1151 = vpop.f32.mrb[0].mxu0
      %1152 = vmatprep.mubr.bf16.mxu0 %v903
      %1153 = vmatmul.mubr.bf16.gmra.mrb[0].mxu0 %v693
      %v1154 = vpop.f32.mrb[0].mxu0
      %v1155 = vadd.f32 %v383, %v1154
      %v1156 = vpop.f32.mrb[0].mxu0
      %v1157 = vpop.f32.mrb[0].mxu0
      %v1158 = vadd.f32 %v383, %v1157
      %v1159 = vpop.f32.mrb[0].mxu0
      %1160 = vmatprep.mubr.bf16.mxu0 %v906
      %1161 = vmatmul.mubr.bf16.gmra.mrb[0].mxu0 %v695
      %v1162 = vpop.f32.mrb[0].mxu0
      %v1163 = vadd.f32 %v383, %v1162
      %v1164 = vpop.f32.mrb[0].mxu0
      %v1165 = vpop.f32.mrb[0].mxu0
      %v1166 = vadd.f32 %v383, %v1165
      %v1167 = vpop.f32.mrb[0].mxu0
      %1168 = vmatprep.mubr.bf16.mxu0 %v909
      %1169 = vmatmul.mubr.bf16.gmra.mrb[0].mxu0 %v697
      %v1170 = vpop.f32.mrb[0].mxu0
      %v1171 = vadd.f32 %v383, %v1170
      %v1172 = vpop.f32.mrb[0].mxu0
      %v1173 = vpop.f32.mrb[0].mxu0
      %v1174 = vadd.f32 %v383, %v1173
      %v1175 = vpop.f32.mrb[0].mxu0
      %1176 = vmatprep.mubr.bf16.mxu0 %v912
      %1177 = vmatmul.mubr.bf16.gmra.mrb[0].mxu0 %v699
      %v1178 = vpop.f32.mrb[0].mxu0
      %v1179 = vadd.f32 %v383, %v1178
      %v1180 = vpop.f32.mrb[0].mxu0
      %v1181 = vpop.f32.mrb[0].mxu0
      %v1182 = vadd.f32 %v383, %v1181
      %v1183 = vpop.f32.mrb[0].mxu0
      %1184 = vmatprep.mubr.bf16.mxu0 %v915
      %1185 = vmatmul.mubr.bf16.gmra.mrb[0].mxu0 %v701
      %v1186 = vpop.f32.mrb[0].mxu0
      %v1187 = vadd.f32 %v383, %v1186
      %v1188 = vpop.f32.mrb[0].mxu0
      %v1189 = vpop.f32.mrb[0].mxu0
      %v1190 = vadd.f32 %v383, %v1189
      %v1191 = vpop.f32.mrb[0].mxu0
      %1192 = vmatprep.mubr.bf16.mxu0 %v918
      %1193 = vmatmul.mubr.bf16.gmra.mrb[0].mxu0 %v703
      %v1194 = vpop.f32.mrb[0].mxu0
      %v1195 = vadd.f32 %v383, %v1194
      %v1196 = vpop.f32.mrb[0].mxu0
      %v1197 = vpop.f32.mrb[0].mxu0
      %v1198 = vadd.f32 %v383, %v1197
      %v1199 = vpop.f32.mrb[0].mxu0
      %1200 = vmatprep.mubr.bf16.mxu0 %v921
      %1201 = vmatmul.mubr.bf16.gmra.mrb[0].mxu0 %v705
      %v1202 = vpop.f32.mrb[0].mxu0
      %v1203 = vadd.f32 %v383, %v1202
      %v1204 = vpop.f32.mrb[0].mxu0
      %v1205 = vpop.f32.mrb[0].mxu0
      %v1206 = vadd.f32 %v383, %v1205
      %v1207 = vpop.f32.mrb[0].mxu0
      %1208 = vmatprep.mubr.bf16.mxu0 %v924
      %1209 = vmatmul.mubr.bf16.gmra.mrb[0].mxu0 %v707
      %v1210 = vpop.f32.mrb[0].mxu0
      %v1211 = vadd.f32 %v383, %v1210
      %v1212 = vpop.f32.mrb[0].mxu0
      %v1213 = vpop.f32.mrb[0].mxu0
      %v1214 = vadd.f32 %v383, %v1213
      %v1215 = vpop.f32.mrb[0].mxu0
      %1216 = vmatprep.mubr.bf16.mxu0 %v927
      %1217 = vmatmul.mubr.bf16.gmra.mrb[0].mxu0 %v709
      %v1218 = vpop.f32.mrb[0].mxu0
      %v1219 = vadd.f32 %v383, %v1218
      %v1220 = vpop.f32.mrb[0].mxu0
      %v1221 = vpop.f32.mrb[0].mxu0
      %v1222 = vadd.f32 %v383, %v1221
      %v1223 = vpop.f32.mrb[0].mxu0
      %1224 = vmatprep.mubr.bf16.mxu0 %v930
      %1225 = vmatmul.mubr.bf16.gmra.mrb[0].mxu0 %v711
      %v1226 = vpop.f32.mrb[0].mxu0
      %v1227 = vadd.f32 %v383, %v1226
      %v1228 = vpop.f32.mrb[0].mxu0
      %v1229 = vpop.f32.mrb[0].mxu0
      %v1230 = vadd.f32 %v383, %v1229
      %v1231 = vpop.f32.mrb[0].mxu0
      %1232 = vmatprep.mubr.bf16.mxu0 %v933
      %1233 = vmatmul.mubr.bf16.gmra.mrb[0].mxu0 %v713
      %v1234 = vpop.f32.mrb[0].mxu0
      %v1235 = vadd.f32 %v383, %v1234
      %v1236 = vpop.f32.mrb[0].mxu0
      %v1237 = vpop.f32.mrb[0].mxu0
      %v1238 = vadd.f32 %v383, %v1237
      %v1239 = vpop.f32.mrb[0].mxu0
      %1240 = vmatprep.mubr.bf16.mxu0 %v936
      %1241 = vmatmul.mubr.bf16.gmra.mrb[0].mxu0 %v715
      %v1242 = vpop.f32.mrb[0].mxu0
      %v1243 = vadd.f32 %v383, %v1242
      %v1244 = vpop.f32.mrb[0].mxu0
      %v1245 = vpop.f32.mrb[0].mxu0
      %v1246 = vadd.f32 %v383, %v1245
      %v1247 = vpop.f32.mrb[0].mxu0
      %1248 = vmatprep.mubr.bf16.mxu0 %v939
      %1249 = vmatmul.mubr.bf16.gmra.mrb[0].mxu0 %v717
      %v1250 = vpop.f32.mrb[0].mxu0
      %v1251 = vadd.f32 %v383, %v1250
      %v1252 = vpop.f32.mrb[0].mxu0
      %v1253 = vpop.f32.mrb[0].mxu0
      %v1254 = vadd.f32 %v383, %v1253
      %v1255 = vpop.f32.mrb[0].mxu0
      %1256 = vmatprep.mubr.bf16.mxu0 %v942
      %1257 = vmatmul.mubr.bf16.gmra.mrb[0].mxu0 %v719
      %v1258 = vpop.f32.mrb[0].mxu0
      %v1259 = vadd.f32 %v383, %v1258
      %v1260 = vpop.f32.mrb[0].mxu0
      %v1261 = vpop.f32.mrb[0].mxu0
      %v1262 = vadd.f32 %v383, %v1261
      %v1263 = vpop.f32.mrb[0].mxu0
      %1264 = vmatprep.mubr.bf16.mxu0 %v945
      %1265 = vmatmul.mubr.bf16.gmra.mrb[0].mxu0 %v721
      %v1266 = vpop.f32.mrb[0].mxu0
      %v1267 = vadd.f32 %v383, %v1266
      %v1268 = vpop.f32.mrb[0].mxu0
      %v1269 = vpop.f32.mrb[0].mxu0
      %v1270 = vadd.f32 %v383, %v1269
      %v1271 = vpop.f32.mrb[0].mxu0
      %1272 = vmatprep.mubr.bf16.mxu0 %v948
      %1273 = vmatmul.mubr.bf16.gmra.mrb[0].mxu0 %v723
      %v1274 = vpop.f32.mrb[0].mxu0
      %v1275 = vadd.f32 %v383, %v1274
      %v1276 = vpop.f32.mrb[0].mxu0
      %v1277 = vpop.f32.mrb[0].mxu0
      %v1278 = vadd.f32 %v383, %v1277
      %v1279 = vpop.f32.mrb[0].mxu0
      %1280 = vmatprep.mubr.bf16.mxu0 %v951
      %1281 = vmatmul.mubr.bf16.gmra.mrb[0].mxu0 %v725
      %v1282 = vpop.f32.mrb[0].mxu0
      %v1283 = vadd.f32 %v383, %v1282
      %v1284 = vpop.f32.mrb[0].mxu0
      %v1285 = vpop.f32.mrb[0].mxu0
      %v1286 = vadd.f32 %v383, %v1285
      %v1287 = vpop.f32.mrb[0].mxu0
      %1288 = vmatprep.mubr.bf16.mxu0 %v954
      %1289 = vmatmul.mubr.bf16.gmra.mrb[0].mxu0 %v727
      %v1290 = vpop.f32.mrb[0].mxu0
      %v1291 = vadd.f32 %v383, %v1290
      %v1292 = vpop.f32.mrb[0].mxu0
      %v1293 = vpop.f32.mrb[0].mxu0
      %v1294 = vadd.f32 %v383, %v1293
      %v1295 = vpop.f32.mrb[0].mxu0
      %1296 = vmatprep.mubr.bf16.mxu0 %v957
      %1297 = vmatmul.mubr.bf16.gmra.mrb[0].mxu0 %v729
      %v1298 = vpop.f32.mrb[0].mxu0
      %v1299 = vadd.f32 %v383, %v1298
      %v1300 = vpop.f32.mrb[0].mxu0
      %v1301 = vpop.f32.mrb[0].mxu0
      %v1302 = vadd.f32 %v383, %v1301
      %v1303 = vpop.f32.mrb[0].mxu0
      %1304 = vmatprep.mubr.bf16.mxu0 %v960
      %1305 = vmatmul.mubr.bf16.gmra.mrb[0].mxu0 %v731
      %v1306 = vpop.f32.mrb[0].mxu0
      %v1307 = vadd.f32 %v383, %v1306
      %v1308 = vpop.f32.mrb[0].mxu0
      %v1309 = vpop.f32.mrb[0].mxu0
      %v1310 = vadd.f32 %v383, %v1309
      %v1311 = vpop.f32.mrb[0].mxu0
      %1312 = vmatprep.mubr.bf16.mxu0 %v963
      %1313 = vmatmul.mubr.bf16.gmra.mrb[0].mxu0 %v733
      %v1314 = vpop.f32.mrb[0].mxu0
      %v1315 = vadd.f32 %v383, %v1314
      %v1316 = vpop.f32.mrb[0].mxu0
      %v1317 = vpop.f32.mrb[0].mxu0
      %v1318 = vadd.f32 %v383, %v1317
      %v1319 = vpop.f32.mrb[0].mxu0
      %1320 = vmatprep.mubr.bf16.mxu0 %v966
      %1321 = vmatmul.mubr.bf16.gmra.mrb[0].mxu0 %v735
      %v1322 = vpop.f32.mrb[0].mxu0
      %v1323 = vadd.f32 %v383, %v1322
      %v1324 = vpop.f32.mrb[0].mxu0
      %v1325 = vpop.f32.mrb[0].mxu0
      %v1326 = vadd.f32 %v383, %v1325
      %v1327 = vpop.f32.mrb[0].mxu0
      %1328 = vmatprep.mubr.bf16.mxu0 %v969
      %1329 = vmatmul.mubr.bf16.gmra.mrb[0].mxu0 %v737
      %v1330 = vpop.f32.mrb[0].mxu0
      %v1331 = vadd.f32 %v383, %v1330
      %v1332 = vpop.f32.mrb[0].mxu0
      %v1333 = vpop.f32.mrb[0].mxu0
      %v1334 = vadd.f32 %v383, %v1333
      %v1335 = vpop.f32.mrb[0].mxu0
      %1336 = vmatprep.mubr.bf16.mxu0 %v972
      %1337 = vmatmul.mubr.bf16.gmra.mrb[0].mxu0 %v739
      %v1338 = vpop.f32.mrb[0].mxu0
      %v1339 = vadd.f32 %v383, %v1338
      %v1340 = vpop.f32.mrb[0].mxu0
      %v1341 = vpop.f32.mrb[0].mxu0
      %v1342 = vadd.f32 %v383, %v1341
      %v1343 = vpop.f32.mrb[0].mxu0
      %1344 = vmatprep.mubr.bf16.mxu0 %v975
      %1345 = vmatmul.mubr.bf16.gmra.mrb[0].mxu0 %v741
      %v1346 = vpop.f32.mrb[0].mxu0
      %v1347 = vadd.f32 %v383, %v1346
      %v1348 = vpop.f32.mrb[0].mxu0
      %v1349 = vpop.f32.mrb[0].mxu0
      %v1350 = vadd.f32 %v383, %v1349
      %v1351 = vpop.f32.mrb[0].mxu0
      %1352 = vmatprep.mubr.bf16.mxu0 %v978
      %1353 = vmatmul.mubr.bf16.gmra.mrb[0].mxu0 %v743
      %v1354 = vpop.f32.mrb[0].mxu0
      %v1355 = vadd.f32 %v383, %v1354
      %v1356 = vpop.f32.mrb[0].mxu0
      %v1357 = vpop.f32.mrb[0].mxu0
      %v1358 = vadd.f32 %v383, %v1357
      %v1359 = vpop.f32.mrb[0].mxu0
      %1360 = vmatprep.mubr.bf16.mxu0 %v981
      %1361 = vmatmul.mubr.bf16.gmra.mrb[0].mxu0 %v745
      %v1362 = vpop.f32.mrb[0].mxu0
      %v1363 = vadd.f32 %v383, %v1362
      %v1364 = vpop.f32.mrb[0].mxu0
      %v1365 = vpop.f32.mrb[0].mxu0
      %v1366 = vadd.f32 %v383, %v1365
      %v1367 = vpop.f32.mrb[0].mxu0
      %1368 = vmatprep.mubr.bf16.mxu0 %v984
      %1369 = vmatmul.mubr.bf16.gmra.mrb[0].mxu0 %v747
      %v1370 = vpop.f32.mrb[0].mxu0
      %v1371 = vadd.f32 %v383, %v1370
      %v1372 = vpop.f32.mrb[0].mxu0
      %v1373 = vpop.f32.mrb[0].mxu0
      %v1374 = vadd.f32 %v383, %v1373
      %v1375 = vpop.f32.mrb[0].mxu0
      %1376 = vmatprep.mubr.bf16.mxu0 %v987
      %1377 = vmatmul.mubr.bf16.gmra.mrb[0].mxu0 %v749
      %v1378 = vpop.f32.mrb[0].mxu0
      %v1379 = vadd.f32 %v383, %v1378
      %v1380 = vpop.f32.mrb[0].mxu0
      %v1381 = vpop.f32.mrb[0].mxu0
      %v1382 = vadd.f32 %v383, %v1381
      %v1383 = vpop.f32.mrb[0].mxu0
      %1384 = vmatprep.mubr.bf16.mxu0 %v990
      %1385 = vmatmul.mubr.bf16.gmra.mrb[0].mxu0 %v751
      %v1386 = vpop.f32.mrb[0].mxu0
      %v1387 = vadd.f32 %v383, %v1386
      %v1388 = vpop.f32.mrb[0].mxu0
      %v1389 = vpop.f32.mrb[0].mxu0
      %v1390 = vadd.f32 %v383, %v1389
      %v1391 = vpop.f32.mrb[0].mxu0
      %1392 = vdwg.mxu0
      %v1393 = vmax.f32 %v1027, 0.0
      %v1394 = vmax.f32 %v1030, 0.0
      %v1395 = vmax.f32 %v1035, 0.0
      %v1396 = vmax.f32 %v1038, 0.0
      %v1397 = vmax.f32 %v1043, 0.0
      %v1398 = vmax.f32 %v1046, 0.0
      %v1399 = vmax.f32 %v1051, 0.0
      %v1400 = vmax.f32 %v1054, 0.0
      %v1401 = vmax.f32 %v1059, 0.0
      %v1402 = vmax.f32 %v1062, 0.0
      %v1403 = vmax.f32 %v1067, 0.0
      %v1404 = vmax.f32 %v1070, 0.0
      %v1405 = vmax.f32 %v1075, 0.0
      %v1406 = vmax.f32 %v1078, 0.0
      %v1407 = vmax.f32 %v1083, 0.0
      %v1408 = vmax.f32 %v1086, 0.0
      %v1409 = vmax.f32 %v1091, 0.0
      %v1410 = vmax.f32 %v1094, 0.0
      %v1411 = vmax.f32 %v1099, 0.0
      %v1412 = vmax.f32 %v1102, 0.0
      %v1413 = vmax.f32 %v1107, 0.0
      %v1414 = vmax.f32 %v1110, 0.0
      %v1415 = vmax.f32 %v1115, 0.0
      %v1416 = vmax.f32 %v1118, 0.0
      %v1417 = vmax.f32 %v1123, 0.0
      %v1418 = vmax.f32 %v1126, 0.0
      %v1419 = vmax.f32 %v1131, 0.0
      %v1420 = vmax.f32 %v1134, 0.0
      %v1421 = vmax.f32 %v1139, 0.0
      %v1422 = vmax.f32 %v1142, 0.0
      %v1423 = vmax.f32 %v1147, 0.0
      %v1424 = vmax.f32 %v1150, 0.0
      %v1425 = vmax.f32 %v1155, 0.0
      %v1426 = vmax.f32 %v1158, 0.0
      %v1427 = vmax.f32 %v1163, 0.0
      %v1428 = vmax.f32 %v1166, 0.0
      %v1429 = vmax.f32 %v1171, 0.0
      %v1430 = vmax.f32 %v1174, 0.0
      %v1431 = vmax.f32 %v1179, 0.0
      %v1432 = vmax.f32 %v1182, 0.0
      %v1433 = vmax.f32 %v1187, 0.0
      %v1434 = vmax.f32 %v1190, 0.0
      %v1435 = vmax.f32 %v1195, 0.0
      %v1436 = vmax.f32 %v1198, 0.0
      %v1437 = vmax.f32 %v1203, 0.0
      %v1438 = vmax.f32 %v1206, 0.0
      %v1439 = vmax.f32 %v1211, 0.0
      %v1440 = vmax.f32 %v1214, 0.0
      %v1441 = vmax.f32 %v1219, 0.0
      %v1442 = vmax.f32 %v1222, 0.0
      %v1443 = vmax.f32 %v1227, 0.0
      %v1444 = vmax.f32 %v1230, 0.0
      %v1445 = vmax.f32 %v1235, 0.0
      %v1446 = vmax.f32 %v1238, 0.0
      %v1447 = vmax.f32 %v1243, 0.0
      %v1448 = vmax.f32 %v1246, 0.0
      %v1449 = vmax.f32 %v1251, 0.0
      %v1450 = vmax.f32 %v1254, 0.0
      %v1451 = vmax.f32 %v1259, 0.0
      %v1452 = vmax.f32 %v1262, 0.0
      %v1453 = vmax.f32 %v1267, 0.0
      %v1454 = vmax.f32 %v1270, 0.0
      %v1455 = vmax.f32 %v1275, 0.0
      %v1456 = vmax.f32 %v1278, 0.0
      %v1457 = vmax.f32 %v1283, 0.0
      %v1458 = vmax.f32 %v1286, 0.0
      %v1459 = vmax.f32 %v1291, 0.0
      %v1460 = vmax.f32 %v1294, 0.0
      %v1461 = vmax.f32 %v1299, 0.0
      %v1462 = vmax.f32 %v1302, 0.0
      %v1463 = vmax.f32 %v1307, 0.0
      %v1464 = vmax.f32 %v1310, 0.0
      %v1465 = vmax.f32 %v1315, 0.0
      %v1466 = vmax.f32 %v1318, 0.0
      %v1467 = vmax.f32 %v1323, 0.0
      %v1468 = vmax.f32 %v1326, 0.0
      %v1469 = vmax.f32 %v1331, 0.0
      %v1470 = vmax.f32 %v1334, 0.0
      %v1471 = vmax.f32 %v1339, 0.0
      %v1472 = vmax.f32 %v1342, 0.0
      %v1473 = vmax.f32 %v1347, 0.0
      %v1474 = vmax.f32 %v1350, 0.0
      %v1475 = vmax.f32 %v1355, 0.0
      %v1476 = vmax.f32 %v1358, 0.0
      %v1477 = vmax.f32 %v1363, 0.0
      %v1478 = vmax.f32 %v1366, 0.0
      %v1479 = vmax.f32 %v1371, 0.0
      %v1480 = vmax.f32 %v1374, 0.0
      %v1481 = vmax.f32 %v1379, 0.0
      %v1482 = vmax.f32 %v1382, 0.0
      %v1483 = vmax.f32 %v1387, 0.0
      %v1484 = vmax.f32 %v1390, 0.0
      %vm1485 = vcmask 261120
      %1486 = vst.msk [vmem:[%s265] sm:$0xff] %vm1485, %v1393
      %1487 = vst.msk [vmem:[%s265 + $0x8] sm:$0xff] %vm1485, %v1394
      %1488 = vst.msk [vmem:[%s265 + $0x10] sm:$0xff] %vm1485, %v1395
      %1489 = vst.msk [vmem:[%s265 + $0x18] sm:$0xff] %vm1485, %v1396
      %1490 = vst.msk [vmem:[%s265 + $0x20] sm:$0xff] %vm1485, %v1397
      %1491 = vst.msk [vmem:[%s265 + $0x28] sm:$0xff] %vm1485, %v1398
      %1492 = vst.msk [vmem:[%s265 + $0x30] sm:$0xff] %vm1485, %v1399
      %1493 = vst.msk [vmem:[%s265 + $0x38] sm:$0xff] %vm1485, %v1400
      %1494 = vst.msk [vmem:[%s265 + $0x40] sm:$0xff] %vm1485, %v1401
      %1495 = vst.msk [vmem:[%s265 + $0x48] sm:$0xff] %vm1485, %v1402
      %1496 = vst.msk [vmem:[%s265 + $0x50] sm:$0xff] %vm1485, %v1403
      %1497 = vst.msk [vmem:[%s265 + $0x58] sm:$0xff] %vm1485, %v1404
      %1498 = vst.msk [vmem:[%s265 + $0x60] sm:$0xff] %vm1485, %v1405
      %1499 = vst.msk [vmem:[%s265 + $0x68] sm:$0xff] %vm1485, %v1406
      %1500 = vst.msk [vmem:[%s265 + $0x70] sm:$0xff] %vm1485, %v1407
      %1501 = vst.msk [vmem:[%s265 + $0x78] sm:$0xff] %vm1485, %v1408
      %1502 = vst.msk [vmem:[%s265 + $0x80] sm:$0xff] %vm1485, %v1409
      %1503 = vst.msk [vmem:[%s265 + $0x88] sm:$0xff] %vm1485, %v1410
      %1504 = vst.msk [vmem:[%s265 + $0x90] sm:$0xff] %vm1485, %v1411
      %1505 = vst.msk [vmem:[%s265 + $0x98] sm:$0xff] %vm1485, %v1412
      %1506 = vst.msk [vmem:[%s265 + $0xa0] sm:$0xff] %vm1485, %v1413
      %1507 = vst.msk [vmem:[%s265 + $0xa8] sm:$0xff] %vm1485, %v1414
      %1508 = vst.msk [vmem:[%s265 + $0xb0] sm:$0xff] %vm1485, %v1415
      %1509 = vst.msk [vmem:[%s265 + $0xb8] sm:$0xff] %vm1485, %v1416
      %1510 = vst.msk [vmem:[%s265 + $0xc0] sm:$0xff] %vm1485, %v1417
      %1511 = vst.msk [vmem:[%s265 + $0xc8] sm:$0xff] %vm1485, %v1418
      %1512 = vst.msk [vmem:[%s265 + $0xd0] sm:$0xff] %vm1485, %v1419
      %1513 = vst.msk [vmem:[%s265 + $0xd8] sm:$0xff] %vm1485, %v1420
      %1514 = vst.msk [vmem:[%s265 + $0xe0] sm:$0xff] %vm1485, %v1421
      %1515 = vst.msk [vmem:[%s265 + $0xe8] sm:$0xff] %vm1485, %v1422
      %1516 = vst.msk [vmem:[%s265 + $0xf0] sm:$0xff] %vm1485, %v1423
      %1517 = vst.msk [vmem:[%s265 + $0xf8] sm:$0xff] %vm1485, %v1424
      %1518 = vst.msk [vmem:[%s265 + $0x100] sm:$0xff] %vm1485, %v1425
      %1519 = vst.msk [vmem:[%s265 + $0x108] sm:$0xff] %vm1485, %v1426
      %1520 = vst.msk [vmem:[%s265 + $0x110] sm:$0xff] %vm1485, %v1427
      %1521 = vst.msk [vmem:[%s265 + $0x118] sm:$0xff] %vm1485, %v1428
      %1522 = vst.msk [vmem:[%s265 + $0x120] sm:$0xff] %vm1485, %v1429
      %1523 = vst.msk [vmem:[%s265 + $0x128] sm:$0xff] %vm1485, %v1430
      %1524 = vst.msk [vmem:[%s265 + $0x130] sm:$0xff] %vm1485, %v1431
      %1525 = vst.msk [vmem:[%s265 + $0x138] sm:$0xff] %vm1485, %v1432
      %1526 = vst.msk [vmem:[%s265 + $0x140] sm:$0xff] %vm1485, %v1433
      %1527 = vst.msk [vmem:[%s265 + $0x148] sm:$0xff] %vm1485, %v1434
      %1528 = vst.msk [vmem:[%s265 + $0x150] sm:$0xff] %vm1485, %v1435
      %1529 = vst.msk [vmem:[%s265 + $0x158] sm:$0xff] %vm1485, %v1436
      %1530 = vst.msk [vmem:[%s265 + $0x160] sm:$0xff] %vm1485, %v1437
      %1531 = vst.msk [vmem:[%s265 + $0x168] sm:$0xff] %vm1485, %v1438
      %1532 = vst.msk [vmem:[%s265 + $0x170] sm:$0xff] %vm1485, %v1439
      %1533 = vst.msk [vmem:[%s265 + $0x178] sm:$0xff] %vm1485, %v1440
      %1534 = vst.msk [vmem:[%s265 + $0x180] sm:$0xff] %vm1485, %v1441
      %1535 = vst.msk [vmem:[%s265 + $0x188] sm:$0xff] %vm1485, %v1442
      %1536 = vst.msk [vmem:[%s265 + $0x190] sm:$0xff] %vm1485, %v1443
      %1537 = vst.msk [vmem:[%s265 + $0x198] sm:$0xff] %vm1485, %v1444
      %1538 = vst.msk [vmem:[%s265 + $0x1a0] sm:$0xff] %vm1485, %v1445
      %1539 = vst.msk [vmem:[%s265 + $0x1a8] sm:$0xff] %vm1485, %v1446
      %1540 = vst.msk [vmem:[%s265 + $0x1b0] sm:$0xff] %vm1485, %v1447
      %1541 = vst.msk [vmem:[%s265 + $0x1b8] sm:$0xff] %vm1485, %v1448
      %1542 = vst.msk [vmem:[%s265 + $0x1c0] sm:$0xff] %vm1485, %v1449
      %1543 = vst.msk [vmem:[%s265 + $0x1c8] sm:$0xff] %vm1485, %v1450
      %1544 = vst.msk [vmem:[%s265 + $0x1d0] sm:$0xff] %vm1485, %v1451
      %1545 = vst.msk [vmem:[%s265 + $0x1d8] sm:$0xff] %vm1485, %v1452
      %1546 = vst.msk [vmem:[%s265 + $0x1e0] sm:$0xff] %vm1485, %v1453
      %1547 = vst.msk [vmem:[%s265 + $0x1e8] sm:$0xff] %vm1485, %v1454
      %1548 = vst.msk [vmem:[%s265 + $0x1f0] sm:$0xff] %vm1485, %v1455
      %1549 = vst.msk [vmem:[%s265 + $0x1f8] sm:$0xff] %vm1485, %v1456
      %1550 = vst.msk [vmem:[%s265 + $0x200] sm:$0xff] %vm1485, %v1457
      %1551 = vst.msk [vmem:[%s265 + $0x208] sm:$0xff] %vm1485, %v1458
      %1552 = vst.msk [vmem:[%s265 + $0x210] sm:$0xff] %vm1485, %v1459
      %1553 = vst.msk [vmem:[%s265 + $0x218] sm:$0xff] %vm1485, %v1460
      %1554 = vst.msk [vmem:[%s265 + $0x220] sm:$0xff] %vm1485, %v1461
      %1555 = vst.msk [vmem:[%s265 + $0x228] sm:$0xff] %vm1485, %v1462
      %1556 = vst.msk [vmem:[%s265 + $0x230] sm:$0xff] %vm1485, %v1463
      %1557 = vst.msk [vmem:[%s265 + $0x238] sm:$0xff] %vm1485, %v1464
      %1558 = vst.msk [vmem:[%s265 + $0x240] sm:$0xff] %vm1485, %v1465
      %1559 = vst.msk [vmem:[%s265 + $0x248] sm:$0xff] %vm1485, %v1466
      %1560 = vst.msk [vmem:[%s265 + $0x250] sm:$0xff] %vm1485, %v1467
      %1561 = vst.msk [vmem:[%s265 + $0x258] sm:$0xff] %vm1485, %v1468
      %1562 = vst.msk [vmem:[%s265 + $0x260] sm:$0xff] %vm1485, %v1469
      %1563 = vst.msk [vmem:[%s265 + $0x268] sm:$0xff] %vm1485, %v1470
      %1564 = vst.msk [vmem:[%s265 + $0x270] sm:$0xff] %vm1485, %v1471
      %1565 = vst.msk [vmem:[%s265 + $0x278] sm:$0xff] %vm1485, %v1472
      %1566 = vst.msk [vmem:[%s265 + $0x280] sm:$0xff] %vm1485, %v1473
      %1567 = vst.msk [vmem:[%s265 + $0x288] sm:$0xff] %vm1485, %v1474
      %1568 = vst.msk [vmem:[%s265 + $0x290] sm:$0xff] %vm1485, %v1475
      %1569 = vst.msk [vmem:[%s265 + $0x298] sm:$0xff] %vm1485, %v1476
      %1570 = vst.msk [vmem:[%s265 + $0x2a0] sm:$0xff] %vm1485, %v1477
      %1571 = vst.msk [vmem:[%s265 + $0x2a8] sm:$0xff] %vm1485, %v1478
      %1572 = vst.msk [vmem:[%s265 + $0x2b0] sm:$0xff] %vm1485, %v1479
      %1573 = vst.msk [vmem:[%s265 + $0x2b8] sm:$0xff] %vm1485, %v1480
      %1574 = vst.msk [vmem:[%s265 + $0x2c0] sm:$0xff] %vm1485, %v1481
      %1575 = vst.msk [vmem:[%s265 + $0x2c8] sm:$0xff] %vm1485, %v1482
      %1576 = vst.msk [vmem:[%s265 + $0x2d0] sm:$0xff] %vm1485, %v1483
      %1577 = vst.msk [vmem:[%s265 + $0x2d8] sm:$0xff] %vm1485, %v1484
      %s1578 = smul.u32 92, %s19
      %p1579 = scmp.lt.s32.totalorder %s1578, 183
      %s1580 = scalar_select %p1579, %s1578, 183
      %p1581 = scmp.lt.s32.totalorder %s20, 0
      %s1582 = scalar_select %p1581, %s20, 0
      %s1583 = sadd.s32 %s1582, %s1580
      %s1584 = smul.addr %s1583, 8
      %s1585 = scalar_lea.vmem %s3, %s1584
      // Predicated region
      $region33: #{forward.11} parent=31 // pred_check
        %p1586 = pneg %p135
      $region34: #{forward.11} parent=31 // pred_check_branch
        %1588 = sbr.rel (%p1586) target = $region36
      $region35: #{forward.11} parent=31 // pred_region
        %s1589 = smul.u32 92, %s19
      $region36: #{forward.11} parent=31 // pred_fallthru
        _
    $region32: #{forward.11} parent=5 // pred_fallthru
      _
    %p1590 = scmp.le.s32.totalorder 2, %s9
    // Predicated region
    $region37: #{forward.11} parent=5 // pred_check
      %p1591 = pneg %p1590
    $region38: #{forward.11} parent=5 // pred_check_branch
      %1593 = sbr.rel (%p1591) target = $region40
    $region39: #{forward.11} parent=5 // pred_region
      %s1594 = ssub.s32 %s9, 2
      // Predicated region
      $region41: #{forward.11} parent=39 // pred_check
        %p1595 = pneg %p141
      $region42: #{forward.11} parent=39 // pred_check_branch
        %1597 = sbr.rel (%p1595) target = $region44
      $region43: #{forward.11} parent=39 // pred_region
        %s1598 = smul.u32 92, %s22
        %p1599 = scmp.lt.s32.totalorder %s1598, 183
        %s1600 = scalar_select %p1599, %s1598, 183
        %p1601 = scmp.lt.s32.totalorder %s23, 0
        %s1602 = scalar_select %p1601, %s23, 0
        %s1603 = sadd.s32 %s1602, %s1600
        %s1604 = smul.addr %s1603, 8
        %s1605 = scalar_lea.vmem %s3, %s1604
      $region44: #{forward.11} parent=39 // pred_fallthru
        _
    $region40: #{forward.11} parent=5 // pred_fallthru
      _
  $region6: #{forward.11} parent=0 // loop_footer
    %s13 = sadd.s32 1, %s9
  $region7: #{forward.11} parent=0 // loop_footer_branch
    %8 = sbr.rel target = $region3
  $region8: #{forward.11} parent=0 // loop_exit
    _

// kernel: forward.12
$region0: #{forward.12}
  #allocation0 [shape = 'u32[]', space=smem, size = 0x4, offset = 0x4, fixed_abs, tag = 'smem constant byte address 0x4 - core index']
  #allocation1 [shape = 'u32[144,128]{1,0:T(1,128)}', space=vmem, size = 0x12000, scoped, tag = 'internal scratch']
  %s0 = inlined_call_operand.vmem [shape: bf16[1472,288], index: 0, kind: input, shape index: {}]
  %s1 = inlined_call_operand.vmem [shape: bf16[288,32], index: 1, kind: input, shape index: {}]
  %s2 = inlined_call_operand.vmem [shape: f32[1,32], index: 2, kind: input, shape index: {}]
  %s3 = inlined_call_operand.vmem [shape: f32[1472,32], index: 3, kind: output, shape index: {}]
  %s4 = sld [smem:[#allocation0]]
  $region45: #{forward.12} parent=0
    _
  %s6 = ssub.s32 1, %s4
  %s7 = scalar_select 0, %s6, %s4
  loop: start=0, step=1, limit=4
  $region2: #{forward.12} parent=0 // loop_pre_header
    _
  $region3: #{forward.12} parent=0 // loop_header
    %s9 = sphi 0, %s13
    %p10 = scmp.ge.s32.totalorder %s9, 4
    %s16 = sphi 0, %s35
    %s17 = sphi 0, %s31
    %s18 = sphi 0, %s27
    %s19 = sphi 0, %s16
    %s20 = sphi 0, %s17
    %s21 = sphi 0, %s18
    %s22 = sphi 0, %s19
    %s23 = sphi 0, %s20
    %s24 = sphi 0, %s21
    %s40 = sphi 0, %s42
    %s43 = sphi 0, %s40
    %s44 = sphi 0, %s43
    %s60 = sphi 0, %s44
    %s68 = sphi 0, %s70
    %s71 = sphi 0, %s68
    %s72 = sphi 0, %s71
    %s88 = sphi 0, %s72
    %s94 = sphi 0, %s96
    %s97 = sphi 0, %s94
    %s98 = sphi 0, %s97
    %s114 = sphi 0, %s98
    %s122 = sphi 0, %s124
    %s125 = sphi 0, %s122
    %s126 = sphi 0, %s125
    %s142 = sphi 0, %s126
  $region4: #{forward.12} parent=0 // loop_header_branch
    %12 = sbr.rel (%p10) target = $region8
  $region5: #{forward.12} parent=0 // loop_body
    %s14 = ssub.s32 %s9, 1
    %s15 = ssub.s32 %s9, 2
    %s25 = sadd.s32 1, %s18
    %p26 = scmp.ge.s32.totalorder %s25, 1
    %s27 = scalar_select %p26, 0, %s25
    %s28 = sadd.s32 1, %s17
    %s29 = scalar_select %p26, %s28, %s17
    %p30 = scmp.ge.s32.totalorder %s29, 1
    %s31 = scalar_select %p30, 0, %s29
    %s32 = sadd.s32 1, %s16
    %s33 = scalar_select %p30, %s32, %s16
    %p34 = scmp.ge.s32.totalorder %s33, 2
    %s35 = scalar_select %p34, 0, %s33
    %s36 = ssub.s32 %s16, %s35
    %s37 = ssub.s32 %s18, %s27
    %s38 = sor.u32 %s36, %s37
    %p39 = scmp.eq.s32.totalorder %s38, 0
    %s41 = sadd.s32 %s40, 1
    %s42 = scalar_select %p39, %s40, %s41
    %p45 = pneg %p39
    %p46 = scmp.eq.s32.totalorder %s9, 1
    %p47 = por %p45, %p46
    %p48 = scmp.ne.s32.totalorder %s40, %s43
    %p49 = scmp.eq.s32.totalorder %s9, 0
    %p50 = por %p48, %p49
    %p51 = scmp.ne.s32.totalorder %s40, %s43
    %p52 = scmp.eq.s32.totalorder %s14, 1
    %p53 = por %p51, %p52
    %p54 = scmp.ne.s32.totalorder %s43, %s44
    %p55 = scmp.eq.s32.totalorder %s14, 0
    %p56 = por %p54, %p55
    %p57 = scmp.ne.s32.totalorder %s43, %s44
    %p58 = scmp.eq.s32.totalorder %s15, 1
    %p59 = por %p57, %p58
    %p61 = scmp.ne.s32.totalorder %s44, %s60
    %p62 = scmp.eq.s32.totalorder %s15, 0
    %p63 = por %p61, %p62
    %s64 = ssub.s32 %s18, %s27
    %s65 = ssub.s32 %s17, %s31
    %s66 = sor.u32 %s64, %s65
    %p67 = scmp.eq.s32.totalorder %s66, 0
    %s69 = sadd.s32 %s68, 1
    %s70 = scalar_select %p67, %s68, %s69
    %p73 = pneg %p67
    %p74 = scmp.eq.s32.totalorder %s9, 1
    %p75 = por %p73, %p74
    %p76 = scmp.ne.s32.totalorder %s68, %s71
    %p77 = scmp.eq.s32.totalorder %s9, 0
    %p78 = por %p76, %p77
    %p79 = scmp.ne.s32.totalorder %s68, %s71
    %p80 = scmp.eq.s32.totalorder %s14, 1
    %p81 = por %p79, %p80
    %p82 = scmp.ne.s32.totalorder %s71, %s72
    %p83 = scmp.eq.s32.totalorder %s14, 0
    %p84 = por %p82, %p83
    %p85 = scmp.ne.s32.totalorder %s71, %s72
    %p86 = scmp.eq.s32.totalorder %s15, 1
    %p87 = por %p85, %p86
    %p89 = scmp.ne.s32.totalorder %s72, %s88
    %p90 = scmp.eq.s32.totalorder %s15, 0
    %p91 = por %p89, %p90
    %s92 = ssub.s32 %s17, %s31
    %p93 = scmp.eq.s32.totalorder %s92, 0
    %s95 = sadd.s32 %s94, 1
    %s96 = scalar_select %p93, %s94, %s95
    %p99 = pneg %p93
    %p100 = scmp.eq.s32.totalorder %s9, 1
    %p101 = por %p99, %p100
    %p102 = scmp.ne.s32.totalorder %s94, %s97
    %p103 = scmp.eq.s32.totalorder %s9, 0
    %p104 = por %p102, %p103
    %p105 = scmp.ne.s32.totalorder %s94, %s97
    %p106 = scmp.eq.s32.totalorder %s14, 1
    %p107 = por %p105, %p106
    %p108 = scmp.ne.s32.totalorder %s97, %s98
    %p109 = scmp.eq.s32.totalorder %s14, 0
    %p110 = por %p108, %p109
    %p111 = scmp.ne.s32.totalorder %s97, %s98
    %p112 = scmp.eq.s32.totalorder %s15, 1
    %p113 = por %p111, %p112
    %p115 = scmp.ne.s32.totalorder %s98, %s114
    %p116 = scmp.eq.s32.totalorder %s15, 0
    %p117 = por %p115, %p116
    %s118 = ssub.s32 %s16, %s35
    %s119 = ssub.s32 %s17, %s31
    %s120 = sor.u32 %s118, %s119
    %p121 = scmp.eq.s32.totalorder %s120, 0
    %s123 = sadd.s32 %s122, 1
    %s124 = scalar_select %p121, %s122, %s123
    %p127 = pneg %p121
    %p128 = scmp.eq.s32.totalorder %s9, 1
    %p129 = por %p127, %p128
    %p130 = scmp.ne.s32.totalorder %s122, %s125
    %p131 = scmp.eq.s32.totalorder %s9, 0
    %p132 = por %p130, %p131
    %p133 = scmp.ne.s32.totalorder %s122, %s125
    %p134 = scmp.eq.s32.totalorder %s14, 1
    %p135 = por %p133, %p134
    %p136 = scmp.ne.s32.totalorder %s125, %s126
    %p137 = scmp.eq.s32.totalorder %s14, 0
    %p138 = por %p136, %p137
    %p139 = scmp.ne.s32.totalorder %s125, %s126
    %p140 = scmp.eq.s32.totalorder %s15, 1
    %p141 = por %p139, %p140
    %p143 = scmp.ne.s32.totalorder %s126, %s142
    %p144 = scmp.eq.s32.totalorder %s15, 0
    %p145 = por %p143, %p144
    %p146 = scmp.le.s32.totalorder 1, %s9
    %p147 = scmp.lt.s32.totalorder %s9, 3
    %p148 = pnand %p146, %p147
    %p149 = pneg %p148
    // Predicated region
    $region9: #{forward.12} parent=5 // pred_check
      _
    $region10: #{forward.12} parent=5 // pred_check_branch
      %151 = sbr.rel (%p148) target = $region12
    $region11: #{forward.12} parent=5 // pred_region
      %s152 = ssub.s32 %s9, 1
      // Predicated region
      $region13: #{forward.12} parent=11 // pred_check
        %p153 = pneg %p84
      $region14: #{forward.12} parent=11 // pred_check_branch
        %155 = sbr.rel (%p153) target = $region16
      $region15: #{forward.12} parent=11 // pred_region
        %s156 = smul.u32 36, %s21
        %p157 = scmp.lt.s32.totalorder %s156, 35
        %s158 = scalar_select %p157, %s156, 35
        %p159 = scmp.lt.s32.totalorder %s20, 0
        %s160 = scalar_select %p159, %s20, 0
        %s161 = sadd.s32 %s160, %s158
        %s162 = smul.addr %s161, 4
        %s163 = scalar_lea.vmem %s1, %s162
        %s164 = smul.u32 36, %s21
      $region16: #{forward.12} parent=11 // pred_fallthru
        _
      // Predicated region
      $region17: #{forward.12} parent=11 // pred_check
        %p165 = pneg %p110
      $region18: #{forward.12} parent=11 // pred_check_branch
        %167 = sbr.rel (%p165) target = $region20
      $region19: #{forward.12} parent=11 // pred_region
        %p168 = scmp.lt.s32.totalorder %s20, 0
        %s169 = scalar_select %p168, %s20, 0
        %s170 = scalar_lea.vmem %s2, %s169
      $region20: #{forward.12} parent=11 // pred_fallthru
        _
    $region12: #{forward.12} parent=5 // pred_fallthru
      _
    %p171 = scmp.lt.s32.totalorder %s9, 2
    // Predicated region
    $region21: #{forward.12} parent=5 // pred_check
      %p172 = pneg %p171
    $region22: #{forward.12} parent=5 // pred_check_branch
      %174 = sbr.rel (%p172) target = $region24
    $region23: #{forward.12} parent=5 // pred_region
      // Predicated region
      $region25: #{forward.12} parent=23 // pred_check
        %p175 = pneg %p50
      $region26: #{forward.12} parent=23 // pred_check_branch
        %177 = sbr.rel (%p175) target = $region28
      $region27: #{forward.12} parent=23 // pred_region
        %s178 = smul.u32 92, %s16
        %s179 = smul.u32 3, %s18
        %p180 = scmp.lt.s32.totalorder %s178, 183
        %s181 = scalar_select %p180, %s178, 183
        %p182 = scmp.lt.s32.totalorder %s179, 2
        %s183 = scalar_select %p182, %s179, 2
        %s184 = smul.addr %s181, 3
        %s185 = sadd.s32 %s183, %s184
        %s186 = smul.addr %s185, 4
        %s187 = scalar_lea.vmem %s0, %s186
        %s188 = smul.u32 92, %s16
        %s189 = smul.u32 3, %s18
      $region28: #{forward.12} parent=23 // pred_fallthru
        _
    $region24: #{forward.12} parent=5 // pred_fallthru
      _
    %p190 = scmp.le.s32.totalorder 1, %s9
    %p191 = scmp.lt.s32.totalorder %s9, 3
    %p192 = pnand %p190, %p191
    %p193 = pneg %p192
    // Predicated region
    $region29: #{forward.12} parent=5 // pred_check
      _
    $region30: #{forward.12} parent=5 // pred_check_branch
      %195 = sbr.rel (%p192) target = $region32
    $region31: #{forward.12} parent=5 // pred_region
      %s196 = ssub.s32 %s9, 1
      %s197 = smul.u32 92, %s19
      %s198 = smul.u32 3, %s21
      %p199 = scmp.lt.s32.totalorder %s197, 183
      %s200 = scalar_select %p199, %s197, 183
      %p201 = scmp.lt.s32.totalorder %s198, 2
      %s202 = scalar_select %p201, %s198, 2
      %s203 = smul.addr %s200, 3
      %s204 = sadd.s32 %s202, %s203
      %s205 = smul.addr %s204, 4
      %s206 = scalar_lea.vmem %s0, %s205
      %p207 = pneg %p56
      %p208 = pneg %p53
      %s209 = smul.u32 36, %s21
      %p210 = scmp.lt.s32.totalorder %s209, 35
      %s211 = scalar_select %p210, %s209, 35
      %p212 = scmp.lt.s32.totalorder %s20, 0
      %s213 = scalar_select %p212, %s20, 0
      %s214 = sadd.s32 %s213, %s211
      %s215 = smul.addr %s214, 4
      %s216 = scalar_lea.vmem %s1, %s215
      %p217 = pneg %p84
      %p218 = pneg %p81
      %p219 = scmp.lt.s32.totalorder %s20, 0
      %s220 = scalar_select %p219, %s20, 0
      %s221 = scalar_lea.vmem %s2, %s220
      %p222 = pneg %p110
      %p223 = pneg %p107
      %p224 = pneg %p138
      %p225 = pneg %p135
      %s226 = smul.u32 92, %s19
      %p227 = scmp.lt.s32.totalorder %s226, 183
      %s228 = scalar_select %p227, %s226, 183
      %p229 = scmp.lt.s32.totalorder %s20, 0
      %s230 = scalar_select %p229, %s20, 0
      %s231 = sadd.s32 %s230, %s228
      %s232 = smul.addr %s231, 8
      %s233 = scalar_lea.vmem %s3, %s232
      %s234 = smul.u32 92, %s19
      %s235 = smul.u32 3, %s21
      %p236 = scmp.lt.s32.totalorder %s234, 183
      %s237 = scalar_select %p236, %s234, 183
      %p238 = scmp.lt.s32.totalorder %s235, 2
      %s239 = scalar_select %p238, %s235, 2
      %s240 = smul.addr %s237, 3
      %s241 = sadd.s32 %s239, %s240
      %s242 = smul.addr %s241, 4
      %s243 = scalar_lea.vmem %s0, %s242
      %s244 = smul.u32 92, %s19
      %s245 = smul.u32 3, %s21
      %s246 = smul.u32 36, %s21
      %p247 = scmp.lt.s32.totalorder %s246, 35
      %s248 = scalar_select %p247, %s246, 35
      %p249 = scmp.lt.s32.totalorder %s20, 0
      %s250 = scalar_select %p249, %s20, 0
      %s251 = sadd.s32 %s250, %s248
      %s252 = smul.addr %s251, 4
      %s253 = scalar_lea.vmem %s1, %s252
      %s254 = smul.u32 36, %s21
      %p255 = scmp.lt.s32.totalorder %s20, 0
      %s256 = scalar_select %p255, %s20, 0
      %s257 = scalar_lea.vmem %s2, %s256
      %s258 = smul.u32 92, %s19
      %p259 = scmp.lt.s32.totalorder %s258, 183
      %s260 = scalar_select %p259, %s258, 183
      %p261 = scmp.lt.s32.totalorder %s20, 0
      %s262 = scalar_select %p261, %s20, 0
      %s263 = sadd.s32 %s262, %s260
      %s264 = smul.addr %s263, 8
      %s265 = scalar_lea.vmem %s3, %s264
      %s266 = smul.u32 92, %s19
      %v268 = vld [vmem:[%s243] sm:$0xff]
      %v269 = vld [vmem:[%s243 + $0x8] sm:$0xf]
      %v270 = vld [vmem:[%s243 + $0xc] sm:$0xff]
      %v271 = vld [vmem:[%s243 + $0x14] sm:$0xf]
      %v272 = vld [vmem:[%s243 + $0x18] sm:$0xff]
      %v273 = vld [vmem:[%s243 + $0x20] sm:$0xf]
      %v274 = vld [vmem:[%s243 + $0x24] sm:$0xff]
      %v275 = vld [vmem:[%s243 + $0x2c] sm:$0xf]
      %v276 = vld [vmem:[%s243 + $0x30] sm:$0xff]
      %v277 = vld [vmem:[%s243 + $0x38] sm:$0xf]
      %v278 = vld [vmem:[%s243 + $0x3c] sm:$0xff]
      %v279 = vld [vmem:[%s243 + $0x44] sm:$0xf]
      %v280 = vld [vmem:[%s243 + $0x48] sm:$0xff]
      %v281 = vld [vmem:[%s243 + $0x50] sm:$0xf]
      %v282 = vld [vmem:[%s243 + $0x54] sm:$0xff]
      %v283 = vld [vmem:[%s243 + $0x5c] sm:$0xf]
      %v284 = vld [vmem:[%s243 + $0x60] sm:$0xff]
      %v285 = vld [vmem:[%s243 + $0x68] sm:$0xf]
      %v286 = vld [vmem:[%s243 + $0x6c] sm:$0xff]
      %v287 = vld [vmem:[%s243 + $0x74] sm:$0xf]
      %v288 = vld [vmem:[%s243 + $0x78] sm:$0xff]
      %v289 = vld [vmem:[%s243 + $0x80] sm:$0xf]
      %v290 = vld [vmem:[%s243 + $0x84] sm:$0xff]
      %v291 = vld [vmem:[%s243 + $0x8c] sm:$0xf]
      %v292 = vld [vmem:[%s243 + $0x90] sm:$0xff]
      %v293 = vld [vmem:[%s243 + $0x98] sm:$0xf]
      %v294 = vld [vmem:[%s243 + $0x9c] sm:$0xff]
      %v295 = vld [vmem:[%s243 + $0xa4] sm:$0xf]
      %v296 = vld [vmem:[%s243 + $0xa8] sm:$0xff]
      %v297 = vld [vmem:[%s243 + $0xb0] sm:$0xf]
      %v298 = vld [vmem:[%s243 + $0xb4] sm:$0xff]
      %v299 = vld [vmem:[%s243 + $0xbc] sm:$0xf]
      %v300 = vld [vmem:[%s243 + $0xc0] sm:$0xff]
      %v301 = vld [vmem:[%s243 + $0xc8] sm:$0xf]
      %v302 = vld [vmem:[%s243 + $0xcc] sm:$0xff]
      %v303 = vld [vmem:[%s243 + $0xd4] sm:$0xf]
      %v304 = vld [vmem:[%s243 + $0xd8] sm:$0xff]
      %v305 = vld [vmem:[%s243 + $0xe0] sm:$0xf]
      %v306 = vld [vmem:[%s243 + $0xe4] sm:$0xff]
      %v307 = vld [vmem:[%s243 + $0xec] sm:$0xf]
      %v308 = vld [vmem:[%s243 + $0xf0] sm:$0xff]
      %v309 = vld [vmem:[%s243 + $0xf8] sm:$0xf]
      %v310 = vld [vmem:[%s243 + $0xfc] sm:$0xff]
      %v311 = vld [vmem:[%s243 + $0x104] sm:$0xf]
      %v312 = vld [vmem:[%s243 + $0x108] sm:$0xff]
      %v313 = vld [vmem:[%s243 + $0x110] sm:$0xf]
      %v314 = vld [vmem:[%s243 + $0x114] sm:$0xff]
      %v315 = vld [vmem:[%s243 + $0x11c] sm:$0xf]
      %v316 = vld [vmem:[%s243 + $0x120] sm:$0xff]
      %v317 = vld [vmem:[%s243 + $0x128] sm:$0xf]
      %v318 = vld [vmem:[%s243 + $0x12c] sm:$0xff]
      %v319 = vld [vmem:[%s243 + $0x134] sm:$0xf]
      %v320 = vld [vmem:[%s243 + $0x138] sm:$0xff]
      %v321 = vld [vmem:[%s243 + $0x140] sm:$0xf]
      %v322 = vld [vmem:[%s243 + $0x144] sm:$0xff]
      %v323 = vld [vmem:[%s243 + $0x14c] sm:$0xf]
      %v324 = vld [vmem:[%s243 + $0x150] sm:$0xff]
      %v325 = vld [vmem:[%s243 + $0x158] sm:$0xf]
      %v326 = vld [vmem:[%s243 + $0x15c] sm:$0xff]
      %v327 = vld [vmem:[%s243 + $0x164] sm:$0xf]
      %v328 = vld [vmem:[%s243 + $0x168] sm:$0xff]
      %v329 = vld [vmem:[%s243 + $0x170] sm:$0xf]
      %v330 = vld [vmem:[%s243 + $0x174] sm:$0xff]
      %v331 = vld [vmem:[%s243 + $0x17c] sm:$0xf]
      %v332 = vld [vmem:[%s243 + $0x180] sm:$0xff]
      %v333 = vld [vmem:[%s243 + $0x188] sm:$0xf]
      %v334 = vld [vmem:[%s243 + $0x18c] sm:$0xff]
      %v335 = vld [vmem:[%s243 + $0x194] sm:$0xf]
      %v336 = vld [vmem:[%s243 + $0x198] sm:$0xff]
      %v337 = vld [vmem:[%s243 + $0x1a0] sm:$0xf]
      %v338 = vld [vmem:[%s243 + $0x1a4] sm:$0xff]
      %v339 = vld [vmem:[%s243 + $0x1ac] sm:$0xf]
      %v340 = vld [vmem:[%s243 + $0x1b0] sm:$0xff]
      %v341 = vld [vmem:[%s243 + $0x1b8] sm:$0xf]
      %v342 = vld [vmem:[%s243 + $0x1bc] sm:$0xff]
      %v343 = vld [vmem:[%s243 + $0x1c4] sm:$0xf]
      %v344 = vld [vmem:[%s243 + $0x1c8] sm:$0xff]
      %v345 = vld [vmem:[%s243 + $0x1d0] sm:$0xf]
      %v346 = vld [vmem:[%s243 + $0x1d4] sm:$0xff]
      %v347 = vld [vmem:[%s243 + $0x1dc] sm:$0xf]
      %v348 = vld [vmem:[%s243 + $0x1e0] sm:$0xff]
      %v349 = vld [vmem:[%s243 + $0x1e8] sm:$0xf]
      %v350 = vld [vmem:[%s243 + $0x1ec] sm:$0xff]
      %v351 = vld [vmem:[%s243 + $0x1f4] sm:$0xf]
      %v352 = vld [vmem:[%s243 + $0x1f8] sm:$0xff]
      %v353 = vld [vmem:[%s243 + $0x200] sm:$0xf]
      %v354 = vld [vmem:[%s243 + $0x204] sm:$0xff]
      %v355 = vld [vmem:[%s243 + $0x20c] sm:$0xf]
      %v356 = vld [vmem:[%s243 + $0x210] sm:$0xff]
      %v357 = vld [vmem:[%s243 + $0x218] sm:$0xf]
      %v358 = vld [vmem:[%s243 + $0x21c] sm:$0xff]
      %v359 = vld [vmem:[%s243 + $0x224] sm:$0xf]
      %v360 = vld [vmem:[%s243 + $0x228] sm:$0xff]
      %v361 = vld [vmem:[%s243 + $0x230] sm:$0xf]
      %v362 = vld [vmem:[%s243 + $0x234] sm:$0xff]
      %v363 = vld [vmem:[%s243 + $0x23c] sm:$0xf]
      %v364 = vld [vmem:[%s243 + $0x240] sm:$0xff]
      %v365 = vld [vmem:[%s243 + $0x248] sm:$0xf]
      %v366 = vld [vmem:[%s243 + $0x24c] sm:$0xff]
      %v367 = vld [vmem:[%s243 + $0x254] sm:$0xf]
      %v368 = vld [vmem:[%s243 + $0x258] sm:$0xff]
      %v369 = vld [vmem:[%s243 + $0x260] sm:$0xf]
      %v370 = vld [vmem:[%s243 + $0x264] sm:$0xff]
      %v371 = vld [vmem:[%s243 + $0x26c] sm:$0xf]
      %v372 = vld [vmem:[%s243 + $0x270] sm:$0xff]
      %v373 = vld [vmem:[%s243 + $0x278] sm:$0xf]
      %v374 = vld [vmem:[%s243 + $0x27c] sm:$0xff]
      %v375 = vld [vmem:[%s243 + $0x284] sm:$0xf]
      %v376 = vld [vmem:[%s243 + $0x288] sm:$0xff]
      %v377 = vld [vmem:[%s243 + $0x290] sm:$0xf]
      %v378 = vld [vmem:[%s243 + $0x294] sm:$0xff]
      %v379 = vld [vmem:[%s243 + $0x29c] sm:$0xf]
      %v380 = vld [vmem:[%s243 + $0x2a0] sm:$0xff]
      %v381 = vld [vmem:[%s243 + $0x2a8] sm:$0xf]
      %v382 = vld [vmem:[%s243 + $0x2ac] sm:$0xff]
      %v383 = vld [vmem:[%s243 + $0x2b4] sm:$0xf]
      %v384 = vld [vmem:[%s243 + $0x2b8] sm:$0xff]
      %v385 = vld [vmem:[%s243 + $0x2c0] sm:$0xf]
      %v386 = vld [vmem:[%s243 + $0x2c4] sm:$0xff]
      %v387 = vld [vmem:[%s243 + $0x2cc] sm:$0xf]
      %v388 = vld [vmem:[%s243 + $0x2d0] sm:$0xff]
      %v389 = vld [vmem:[%s243 + $0x2d8] sm:$0xf]
      %v390 = vld [vmem:[%s243 + $0x2dc] sm:$0xff]
      %v391 = vld [vmem:[%s243 + $0x2e4] sm:$0xf]
      %v392 = vld [vmem:[%s243 + $0x2e8] sm:$0xff]
      %v393 = vld [vmem:[%s243 + $0x2f0] sm:$0xf]
      %v394 = vld [vmem:[%s243 + $0x2f4] sm:$0xff]
      %v395 = vld [vmem:[%s243 + $0x2fc] sm:$0xf]
      %v396 = vld [vmem:[%s243 + $0x300] sm:$0xff]
      %v397 = vld [vmem:[%s243 + $0x308] sm:$0xf]
      %v398 = vld [vmem:[%s243 + $0x30c] sm:$0xff]
      %v399 = vld [vmem:[%s243 + $0x314] sm:$0xf]
      %v400 = vld [vmem:[%s243 + $0x318] sm:$0xff]
      %v401 = vld [vmem:[%s243 + $0x320] sm:$0xf]
      %v402 = vld [vmem:[%s243 + $0x324] sm:$0xff]
      %v403 = vld [vmem:[%s243 + $0x32c] sm:$0xf]
      %v404 = vld [vmem:[%s243 + $0x330] sm:$0xff]
      %v405 = vld [vmem:[%s243 + $0x338] sm:$0xf]
      %v406 = vld [vmem:[%s243 + $0x33c] sm:$0xff]
      %v407 = vld [vmem:[%s243 + $0x344] sm:$0xf]
      %v408 = vld [vmem:[%s243 + $0x348] sm:$0xff]
      %v409 = vld [vmem:[%s243 + $0x350] sm:$0xf]
      %v410 = vld [vmem:[%s243 + $0x354] sm:$0xff]
      %v411 = vld [vmem:[%s243 + $0x35c] sm:$0xf]
      %v412 = vld [vmem:[%s243 + $0x360] sm:$0xff]
      %v413 = vld [vmem:[%s243 + $0x368] sm:$0xf]
      %v414 = vld [vmem:[%s243 + $0x36c] sm:$0xff]
      %v415 = vld [vmem:[%s243 + $0x374] sm:$0xf]
      %v416 = vld [vmem:[%s243 + $0x378] sm:$0xff]
      %v417 = vld [vmem:[%s243 + $0x380] sm:$0xf]
      %v418 = vld [vmem:[%s243 + $0x384] sm:$0xff]
      %v419 = vld [vmem:[%s243 + $0x38c] sm:$0xf]
      %v420 = vld [vmem:[%s243 + $0x390] sm:$0xff]
      %v421 = vld [vmem:[%s243 + $0x398] sm:$0xf]
      %v422 = vld [vmem:[%s243 + $0x39c] sm:$0xff]
      %v423 = vld [vmem:[%s243 + $0x3a4] sm:$0xf]
      %v424 = vld [vmem:[%s243 + $0x3a8] sm:$0xff]
      %v425 = vld [vmem:[%s243 + $0x3b0] sm:$0xf]
      %v426 = vld [vmem:[%s243 + $0x3b4] sm:$0xff]
      %v427 = vld [vmem:[%s243 + $0x3bc] sm:$0xf]
      %v428 = vld [vmem:[%s243 + $0x3c0] sm:$0xff]
      %v429 = vld [vmem:[%s243 + $0x3c8] sm:$0xf]
      %v430 = vld [vmem:[%s243 + $0x3cc] sm:$0xff]
      %v431 = vld [vmem:[%s243 + $0x3d4] sm:$0xf]
      %v432 = vld [vmem:[%s243 + $0x3d8] sm:$0xff]
      %v433 = vld [vmem:[%s243 + $0x3e0] sm:$0xf]
      %v434 = vld [vmem:[%s243 + $0x3e4] sm:$0xff]
      %v435 = vld [vmem:[%s243 + $0x3ec] sm:$0xf]
      %v436 = vld [vmem:[%s243 + $0x3f0] sm:$0xff]
      %v437 = vld [vmem:[%s243 + $0x3f8] sm:$0xf]
      %v438 = vld [vmem:[%s243 + $0x3fc] sm:$0xff]
      %v439 = vld [vmem:[%s243 + $0x404] sm:$0xf]
      %v440 = vld [vmem:[%s243 + $0x408] sm:$0xff]
      %v441 = vld [vmem:[%s243 + $0x410] sm:$0xf]
      %v442 = vld [vmem:[%s243 + $0x414] sm:$0xff]
      %v443 = vld [vmem:[%s243 + $0x41c] sm:$0xf]
      %v444 = vld [vmem:[%s243 + $0x420] sm:$0xff]
      %v445 = vld [vmem:[%s243 + $0x428] sm:$0xf]
      %v446 = vld [vmem:[%s243 + $0x42c] sm:$0xff]
      %v447 = vld [vmem:[%s243 + $0x434] sm:$0xf]
      %v448 = vld [vmem:[%s243 + $0x438] sm:$0xff]
      %v449 = vld [vmem:[%s243 + $0x440] sm:$0xf]
      %v450 = vld [vmem:[%s243 + $0x444] sm:$0xff]
      %v451 = vld [vmem:[%s243 + $0x44c] sm:$0xf]
      %v452 = vld [vmem:[%s253] sm:$0xf]
      %v453 = vld [vmem:[%s253 + $0x4] sm:$0xf]
      %v454 = vld [vmem:[%s253 + $0x8] sm:$0xf]
      %v455 = vld [vmem:[%s253 + $0xc] sm:$0xf]
      %v456 = vld [vmem:[%s253 + $0x10] sm:$0xf]
      %v457 = vld [vmem:[%s253 + $0x14] sm:$0xf]
      %v458 = vld [vmem:[%s253 + $0x18] sm:$0xf]
      %v459 = vld [vmem:[%s253 + $0x1c] sm:$0xf]
      %v460 = vld [vmem:[%s253 + $0x20] sm:$0xf]
      %v461 = vld [vmem:[%s253 + $0x24] sm:$0xf]
      %v462 = vld [vmem:[%s253 + $0x28] sm:$0xf]
      %v463 = vld [vmem:[%s253 + $0x2c] sm:$0xf]
      %v464 = vld [vmem:[%s253 + $0x30] sm:$0xf]
      %v465 = vld [vmem:[%s253 + $0x34] sm:$0xf]
      %v466 = vld [vmem:[%s253 + $0x38] sm:$0xf]
      %v467 = vld [vmem:[%s253 + $0x3c] sm:$0xf]
      %v468 = vld [vmem:[%s253 + $0x40] sm:$0xf]
      %v469 = vld [vmem:[%s253 + $0x44] sm:$0xf]
      %v470 = vld [vmem:[%s253 + $0x48] sm:$0xf]
      %v471 = vld [vmem:[%s253 + $0x4c] sm:$0xf]
      %v472 = vld [vmem:[%s253 + $0x50] sm:$0xf]
      %v473 = vld [vmem:[%s253 + $0x54] sm:$0xf]
      %v474 = vld [vmem:[%s253 + $0x58] sm:$0xf]
      %v475 = vld [vmem:[%s253 + $0x5c] sm:$0xf]
      %v476 = vld [vmem:[%s253 + $0x60] sm:$0xf]
      %v477 = vld [vmem:[%s253 + $0x64] sm:$0xf]
      %v478 = vld [vmem:[%s253 + $0x68] sm:$0xf]
      %v479 = vld [vmem:[%s253 + $0x6c] sm:$0xf]
      %v480 = vld [vmem:[%s253 + $0x70] sm:$0xf]
      %v481 = vld [vmem:[%s253 + $0x74] sm:$0xf]
      %v482 = vld [vmem:[%s253 + $0x78] sm:$0xf]
      %v483 = vld [vmem:[%s253 + $0x7c] sm:$0xf]
      %v484 = vld [vmem:[%s253 + $0x80] sm:$0xf]
      %v485 = vld [vmem:[%s253 + $0x84] sm:$0xf]
      %v486 = vld [vmem:[%s253 + $0x88] sm:$0xf]
      %v487 = vld [vmem:[%s253 + $0x8c] sm:$0xf]
      %v488 = vld [vmem:[%s257] sm:$0x1]
      %v490 = vlaneseq
      %v491 = vshrl.u32 %v490, 7
      %v492 = vsub.s32 0, %v491
      %v493 = vrot.slane %v488, %v492
      %v679 = vunpack.c.l.b16 %v268
      %v680 = vunpack.c.h.b16 %v268
      %v681 = vunpack.c.l.b16 %v269
      %v682 = vunpack.c.l.b16 %v270
      %v683 = vunpack.c.h.b16 %v270
      %v684 = vunpack.c.l.b16 %v271
      %v685 = vunpack.c.l.b16 %v272
      %v686 = vunpack.c.h.b16 %v272
      %v687 = vunpack.c.l.b16 %v273
      %v688 = vunpack.c.l.b16 %v274
      %v689 = vunpack.c.h.b16 %v274
      %v690 = vunpack.c.l.b16 %v275
      %v691 = vunpack.c.l.b16 %v276
      %v692 = vunpack.c.h.b16 %v276
      %v693 = vunpack.c.l.b16 %v277
      %v694 = vunpack.c.l.b16 %v278
      %v695 = vunpack.c.h.b16 %v278
      %v696 = vunpack.c.l.b16 %v279
      %v697 = vunpack.c.l.b16 %v280
      %v698 = vunpack.c.h.b16 %v280
      %v699 = vunpack.c.l.b16 %v281
      %v700 = vunpack.c.l.b16 %v282
      %v701 = vunpack.c.h.b16 %v282
      %v702 = vunpack.c.l.b16 %v283
      %v703 = vunpack.c.l.b16 %v284
      %v704 = vunpack.c.h.b16 %v284
      %v705 = vunpack.c.l.b16 %v285
      %v706 = vunpack.c.l.b16 %v286
      %v707 = vunpack.c.h.b16 %v286
      %v708 = vunpack.c.l.b16 %v287
      %v709 = vunpack.c.l.b16 %v288
      %v710 = vunpack.c.h.b16 %v288
      %v711 = vunpack.c.l.b16 %v289
      %v712 = vunpack.c.l.b16 %v290
      %v713 = vunpack.c.h.b16 %v290
      %v714 = vunpack.c.l.b16 %v291
      %v715 = vunpack.c.l.b16 %v292
      %v716 = vunpack.c.h.b16 %v292
      %v717 = vunpack.c.l.b16 %v293
      %v718 = vunpack.c.l.b16 %v294
      %v719 = vunpack.c.h.b16 %v294
      %v720 = vunpack.c.l.b16 %v295
      %v721 = vunpack.c.l.b16 %v296
      %v722 = vunpack.c.h.b16 %v296
      %v723 = vunpack.c.l.b16 %v297
      %v724 = vunpack.c.l.b16 %v298
      %v725 = vunpack.c.h.b16 %v298
      %v726 = vunpack.c.l.b16 %v299
      %v727 = vunpack.c.l.b16 %v300
      %v728 = vunpack.c.h.b16 %v300
      %v729 = vunpack.c.l.b16 %v301
      %v730 = vunpack.c.l.b16 %v302
      %v731 = vunpack.c.h.b16 %v302
      %v732 = vunpack.c.l.b16 %v303
      %v733 = vunpack.c.l.b16 %v304
      %v734 = vunpack.c.h.b16 %v304
      %v735 = vunpack.c.l.b16 %v305
      %v736 = vunpack.c.l.b16 %v306
      %v737 = vunpack.c.h.b16 %v306
      %v738 = vunpack.c.l.b16 %v307
      %v739 = vunpack.c.l.b16 %v308
      %v740 = vunpack.c.h.b16 %v308
      %v741 = vunpack.c.l.b16 %v309
      %v742 = vunpack.c.l.b16 %v310
      %v743 = vunpack.c.h.b16 %v310
      %v744 = vunpack.c.l.b16 %v311
      %v745 = vunpack.c.l.b16 %v312
      %v746 = vunpack.c.h.b16 %v312
      %v747 = vunpack.c.l.b16 %v313
      %v748 = vunpack.c.l.b16 %v314
      %v749 = vunpack.c.h.b16 %v314
      %v750 = vunpack.c.l.b16 %v315
      %v751 = vunpack.c.l.b16 %v316
      %v752 = vunpack.c.h.b16 %v316
      %v753 = vunpack.c.l.b16 %v317
      %v754 = vunpack.c.l.b16 %v318
      %v755 = vunpack.c.h.b16 %v318
      %v756 = vunpack.c.l.b16 %v319
      %v757 = vunpack.c.l.b16 %v320
      %v758 = vunpack.c.h.b16 %v320
      %v759 = vunpack.c.l.b16 %v321
      %v760 = vunpack.c.l.b16 %v322
      %v761 = vunpack.c.h.b16 %v322
      %v762 = vunpack.c.l.b16 %v323
      %v763 = vunpack.c.l.b16 %v324
      %v764 = vunpack.c.h.b16 %v324
      %v765 = vunpack.c.l.b16 %v325
      %v766 = vunpack.c.l.b16 %v326
      %v767 = vunpack.c.h.b16 %v326
      %v768 = vunpack.c.l.b16 %v327
      %v769 = vunpack.c.l.b16 %v328
      %v770 = vunpack.c.h.b16 %v328
      %v771 = vunpack.c.l.b16 %v329
      %v772 = vunpack.c.l.b16 %v330
      %v773 = vunpack.c.h.b16 %v330
      %v774 = vunpack.c.l.b16 %v331
      %v775 = vunpack.c.l.b16 %v332
      %v776 = vunpack.c.h.b16 %v332
      %v777 = vunpack.c.l.b16 %v333
      %v778 = vunpack.c.l.b16 %v334
      %v779 = vunpack.c.h.b16 %v334
      %v780 = vunpack.c.l.b16 %v335
      %v781 = vunpack.c.l.b16 %v336
      %v782 = vunpack.c.h.b16 %v336
      %v783 = vunpack.c.l.b16 %v337
      %v784 = vunpack.c.l.b16 %v338
      %v785 = vunpack.c.h.b16 %v338
      %v786 = vunpack.c.l.b16 %v339
      %v787 = vunpack.c.l.b16 %v340
      %v788 = vunpack.c.h.b16 %v340
      %v789 = vunpack.c.l.b16 %v341
      %v790 = vunpack.c.l.b16 %v342
      %v791 = vunpack.c.h.b16 %v342
      %v792 = vunpack.c.l.b16 %v343
      %v793 = vunpack.c.l.b16 %v344
      %v794 = vunpack.c.h.b16 %v344
      %v795 = vunpack.c.l.b16 %v345
      %v796 = vunpack.c.l.b16 %v346
      %v797 = vunpack.c.h.b16 %v346
      %v798 = vunpack.c.l.b16 %v347
      %v799 = vunpack.c.l.b16 %v348
      %v800 = vunpack.c.h.b16 %v348
      %v801 = vunpack.c.l.b16 %v349
      %v802 = vunpack.c.l.b16 %v350
      %v803 = vunpack.c.h.b16 %v350
      %v804 = vunpack.c.l.b16 %v351
      %v805 = vunpack.c.l.b16 %v352
      %v806 = vunpack.c.h.b16 %v352
      %v807 = vunpack.c.l.b16 %v353
      %v808 = vunpack.c.l.b16 %v354
      %v809 = vunpack.c.h.b16 %v354
      %v810 = vunpack.c.l.b16 %v355
      %v811 = vunpack.c.l.b16 %v356
      %v812 = vunpack.c.h.b16 %v356
      %v813 = vunpack.c.l.b16 %v357
      %v814 = vunpack.c.l.b16 %v358
      %v815 = vunpack.c.h.b16 %v358
      %v816 = vunpack.c.l.b16 %v359
      %v817 = vunpack.c.l.b16 %v360
      %v818 = vunpack.c.h.b16 %v360
      %v819 = vunpack.c.l.b16 %v361
      %v820 = vunpack.c.l.b16 %v362
      %v821 = vunpack.c.h.b16 %v362
      %v822 = vunpack.c.l.b16 %v363
      %v823 = vunpack.c.l.b16 %v364
      %v824 = vunpack.c.h.b16 %v364
      %v825 = vunpack.c.l.b16 %v365
      %v826 = vunpack.c.l.b16 %v366
      %v827 = vunpack.c.h.b16 %v366
      %v828 = vunpack.c.l.b16 %v367
      %v829 = vunpack.c.l.b16 %v368
      %v830 = vunpack.c.h.b16 %v368
      %v831 = vunpack.c.l.b16 %v369
      %v832 = vunpack.c.l.b16 %v370
      %v833 = vunpack.c.h.b16 %v370
      %v834 = vunpack.c.l.b16 %v371
      %v835 = vunpack.c.l.b16 %v372
      %v836 = vunpack.c.h.b16 %v372
      %v837 = vunpack.c.l.b16 %v373
      %v838 = vunpack.c.l.b16 %v374
      %v839 = vunpack.c.h.b16 %v374
      %v840 = vunpack.c.l.b16 %v375
      %v841 = vunpack.c.l.b16 %v376
      %v842 = vunpack.c.h.b16 %v376
      %v843 = vunpack.c.l.b16 %v377
      %v844 = vunpack.c.l.b16 %v378
      %v845 = vunpack.c.h.b16 %v378
      %v846 = vunpack.c.l.b16 %v379
      %v847 = vunpack.c.l.b16 %v380
      %v848 = vunpack.c.h.b16 %v380
      %v849 = vunpack.c.l.b16 %v381
      %v850 = vunpack.c.l.b16 %v382
      %v851 = vunpack.c.h.b16 %v382
      %v852 = vunpack.c.l.b16 %v383
      %v853 = vunpack.c.l.b16 %v384
      %v854 = vunpack.c.h.b16 %v384
      %v855 = vunpack.c.l.b16 %v385
      %v856 = vunpack.c.l.b16 %v386
      %v857 = vunpack.c.h.b16 %v386
      %v858 = vunpack.c.l.b16 %v387
      %v859 = vunpack.c.l.b16 %v388
      %v860 = vunpack.c.h.b16 %v388
      %v861 = vunpack.c.l.b16 %v389
      %v862 = vunpack.c.l.b16 %v390
      %v863 = vunpack.c.h.b16 %v390
      %v864 = vunpack.c.l.b16 %v391
      %v865 = vunpack.c.l.b16 %v392
      %v866 = vunpack.c.h.b16 %v392
      %v867 = vunpack.c.l.b16 %v393
      %v868 = vunpack.c.l.b16 %v394
      %v869 = vunpack.c.h.b16 %v394
      %v870 = vunpack.c.l.b16 %v395
      %v871 = vunpack.c.l.b16 %v396
      %v872 = vunpack.c.h.b16 %v396
      %v873 = vunpack.c.l.b16 %v397
      %v874 = vunpack.c.l.b16 %v398
      %v875 = vunpack.c.h.b16 %v398
      %v876 = vunpack.c.l.b16 %v399
      %v877 = vunpack.c.l.b16 %v400
      %v878 = vunpack.c.h.b16 %v400
      %v879 = vunpack.c.l.b16 %v401
      %v880 = vunpack.c.l.b16 %v402
      %v881 = vunpack.c.h.b16 %v402
      %v882 = vunpack.c.l.b16 %v403
      %v883 = vunpack.c.l.b16 %v404
      %v884 = vunpack.c.h.b16 %v404
      %v885 = vunpack.c.l.b16 %v405
      %v886 = vunpack.c.l.b16 %v406
      %v887 = vunpack.c.h.b16 %v406
      %v888 = vunpack.c.l.b16 %v407
      %v889 = vunpack.c.l.b16 %v408
      %v890 = vunpack.c.h.b16 %v408
      %v891 = vunpack.c.l.b16 %v409
      %v892 = vunpack.c.l.b16 %v410
      %v893 = vunpack.c.h.b16 %v410
      %v894 = vunpack.c.l.b16 %v411
      %v895 = vunpack.c.l.b16 %v412
      %v896 = vunpack.c.h.b16 %v412
      %v897 = vunpack.c.l.b16 %v413
      %v898 = vunpack.c.l.b16 %v414
      %v899 = vunpack.c.h.b16 %v414
      %v900 = vunpack.c.l.b16 %v415
      %v901 = vunpack.c.l.b16 %v416
      %v902 = vunpack.c.h.b16 %v416
      %v903 = vunpack.c.l.b16 %v417
      %v904 = vunpack.c.l.b16 %v418
      %v905 = vunpack.c.h.b16 %v418
      %v906 = vunpack.c.l.b16 %v419
      %v907 = vunpack.c.l.b16 %v420
      %v908 = vunpack.c.h.b16 %v420
      %v909 = vunpack.c.l.b16 %v421
      %v910 = vunpack.c.l.b16 %v422
      %v911 = vunpack.c.h.b16 %v422
      %v912 = vunpack.c.l.b16 %v423
      %v913 = vunpack.c.l.b16 %v424
      %v914 = vunpack.c.h.b16 %v424
      %v915 = vunpack.c.l.b16 %v425
      %v916 = vunpack.c.l.b16 %v426
      %v917 = vunpack.c.h.b16 %v426
      %v918 = vunpack.c.l.b16 %v427
      %v919 = vunpack.c.l.b16 %v428
      %v920 = vunpack.c.h.b16 %v428
      %v921 = vunpack.c.l.b16 %v429
      %v922 = vunpack.c.l.b16 %v430
      %v923 = vunpack.c.h.b16 %v430
      %v924 = vunpack.c.l.b16 %v431
      %v925 = vunpack.c.l.b16 %v432
      %v926 = vunpack.c.h.b16 %v432
      %v927 = vunpack.c.l.b16 %v433
      %v928 = vunpack.c.l.b16 %v434
      %v929 = vunpack.c.h.b16 %v434
      %v930 = vunpack.c.l.b16 %v435
      %v931 = vunpack.c.l.b16 %v436
      %v932 = vunpack.c.h.b16 %v436
      %v933 = vunpack.c.l.b16 %v437
      %v934 = vunpack.c.l.b16 %v438
      %v935 = vunpack.c.h.b16 %v438
      %v936 = vunpack.c.l.b16 %v439
      %v937 = vunpack.c.l.b16 %v440
      %v938 = vunpack.c.h.b16 %v440
      %v939 = vunpack.c.l.b16 %v441
      %v940 = vunpack.c.l.b16 %v442
      %v941 = vunpack.c.h.b16 %v442
      %v942 = vunpack.c.l.b16 %v443
      %v943 = vunpack.c.l.b16 %v444
      %v944 = vunpack.c.h.b16 %v444
      %v945 = vunpack.c.l.b16 %v445
      %v946 = vunpack.c.l.b16 %v446
      %v947 = vunpack.c.h.b16 %v446
      %v948 = vunpack.c.l.b16 %v447
      %v949 = vunpack.c.l.b16 %v448
      %v950 = vunpack.c.h.b16 %v448
      %v951 = vunpack.c.l.b16 %v449
      %v952 = vunpack.c.l.b16 %v450
      %v953 = vunpack.c.h.b16 %v450
      %v954 = vunpack.c.l.b16 %v451
      %v955 = vpack.c.b16 %v682, %v679
      %v956 = vpack.c.b16 %v683, %v680
      %v957 = vpack.c.b16 %v684, %v681
      %v958 = vpack.c.b16 %v688, %v685
      %v959 = vpack.c.b16 %v689, %v686
      %v960 = vpack.c.b16 %v690, %v687
      %v961 = vpack.c.b16 %v694, %v691
      %v962 = vpack.c.b16 %v695, %v692
      %v963 = vpack.c.b16 %v696, %v693
      %v964 = vpack.c.b16 %v700, %v697
      %v965 = vpack.c.b16 %v701, %v698
      %v966 = vpack.c.b16 %v702, %v699
      %v967 = vpack.c.b16 %v706, %v703
      %v968 = vpack.c.b16 %v707, %v704
      %v969 = vpack.c.b16 %v708, %v705
      %v970 = vpack.c.b16 %v712, %v709
      %v971 = vpack.c.b16 %v713, %v710
      %v972 = vpack.c.b16 %v714, %v711
      %v973 = vpack.c.b16 %v718, %v715
      %v974 = vpack.c.b16 %v719, %v716
      %v975 = vpack.c.b16 %v720, %v717
      %v976 = vpack.c.b16 %v724, %v721
      %v977 = vpack.c.b16 %v725, %v722
      %v978 = vpack.c.b16 %v726, %v723
      %v979 = vpack.c.b16 %v730, %v727
      %v980 = vpack.c.b16 %v731, %v728
      %v981 = vpack.c.b16 %v732, %v729
      %v982 = vpack.c.b16 %v736, %v733
      %v983 = vpack.c.b16 %v737, %v734
      %v984 = vpack.c.b16 %v738, %v735
      %v985 = vpack.c.b16 %v742, %v739
      %v986 = vpack.c.b16 %v743, %v740
      %v987 = vpack.c.b16 %v744, %v741
      %v988 = vpack.c.b16 %v748, %v745
      %v989 = vpack.c.b16 %v749, %v746
      %v990 = vpack.c.b16 %v750, %v747
      %v991 = vpack.c.b16 %v754, %v751
      %v992 = vpack.c.b16 %v755, %v752
      %v993 = vpack.c.b16 %v756, %v753
      %v994 = vpack.c.b16 %v760, %v757
      %v995 = vpack.c.b16 %v761, %v758
      %v996 = vpack.c.b16 %v762, %v759
      %v997 = vpack.c.b16 %v766, %v763
      %v998 = vpack.c.b16 %v767, %v764
      %v999 = vpack.c.b16 %v768, %v765
      %v1000 = vpack.c.b16 %v772, %v769
      %v1001 = vpack.c.b16 %v773, %v770
      %v1002 = vpack.c.b16 %v774, %v771
      %v1003 = vpack.c.b16 %v778, %v775
      %v1004 = vpack.c.b16 %v779, %v776
      %v1005 = vpack.c.b16 %v780, %v777
      %v1006 = vpack.c.b16 %v784, %v781
      %v1007 = vpack.c.b16 %v785, %v782
      %v1008 = vpack.c.b16 %v786, %v783
      %v1009 = vpack.c.b16 %v790, %v787
      %v1010 = vpack.c.b16 %v791, %v788
      %v1011 = vpack.c.b16 %v792, %v789
      %v1012 = vpack.c.b16 %v796, %v793
      %v1013 = vpack.c.b16 %v797, %v794
      %v1014 = vpack.c.b16 %v798, %v795
      %v1015 = vpack.c.b16 %v802, %v799
      %v1016 = vpack.c.b16 %v803, %v800
      %v1017 = vpack.c.b16 %v804, %v801
      %v1018 = vpack.c.b16 %v808, %v805
      %v1019 = vpack.c.b16 %v809, %v806
      %v1020 = vpack.c.b16 %v810, %v807
      %v1021 = vpack.c.b16 %v814, %v811
      %v1022 = vpack.c.b16 %v815, %v812
      %v1023 = vpack.c.b16 %v816, %v813
      %v1024 = vpack.c.b16 %v820, %v817
      %v1025 = vpack.c.b16 %v821, %v818
      %v1026 = vpack.c.b16 %v822, %v819
      %v1027 = vpack.c.b16 %v826, %v823
      %v1028 = vpack.c.b16 %v827, %v824
      %v1029 = vpack.c.b16 %v828, %v825
      %v1030 = vpack.c.b16 %v832, %v829
      %v1031 = vpack.c.b16 %v833, %v830
      %v1032 = vpack.c.b16 %v834, %v831
      %v1033 = vpack.c.b16 %v838, %v835
      %v1034 = vpack.c.b16 %v839, %v836
      %v1035 = vpack.c.b16 %v840, %v837
      %v1036 = vpack.c.b16 %v844, %v841
      %v1037 = vpack.c.b16 %v845, %v842
      %v1038 = vpack.c.b16 %v846, %v843
      %v1039 = vpack.c.b16 %v850, %v847
      %v1040 = vpack.c.b16 %v851, %v848
      %v1041 = vpack.c.b16 %v852, %v849
      %v1042 = vpack.c.b16 %v856, %v853
      %v1043 = vpack.c.b16 %v857, %v854
      %v1044 = vpack.c.b16 %v858, %v855
      %v1045 = vpack.c.b16 %v862, %v859
      %v1046 = vpack.c.b16 %v863, %v860
      %v1047 = vpack.c.b16 %v864, %v861
      %v1048 = vpack.c.b16 %v868, %v865
      %v1049 = vpack.c.b16 %v869, %v866
      %v1050 = vpack.c.b16 %v870, %v867
      %v1051 = vpack.c.b16 %v874, %v871
      %v1052 = vpack.c.b16 %v875, %v872
      %v1053 = vpack.c.b16 %v876, %v873
      %v1054 = vpack.c.b16 %v880, %v877
      %v1055 = vpack.c.b16 %v881, %v878
      %v1056 = vpack.c.b16 %v882, %v879
      %v1057 = vpack.c.b16 %v886, %v883
      %v1058 = vpack.c.b16 %v887, %v884
      %v1059 = vpack.c.b16 %v888, %v885
      %v1060 = vpack.c.b16 %v892, %v889
      %v1061 = vpack.c.b16 %v893, %v890
      %v1062 = vpack.c.b16 %v894, %v891
      %v1063 = vpack.c.b16 %v898, %v895
      %v1064 = vpack.c.b16 %v899, %v896
      %v1065 = vpack.c.b16 %v900, %v897
      %v1066 = vpack.c.b16 %v904, %v901
      %v1067 = vpack.c.b16 %v905, %v902
      %v1068 = vpack.c.b16 %v906, %v903
      %v1069 = vpack.c.b16 %v910, %v907
      %v1070 = vpack.c.b16 %v911, %v908
      %v1071 = vpack.c.b16 %v912, %v909
      %v1072 = vpack.c.b16 %v916, %v913
      %v1073 = vpack.c.b16 %v917, %v914
      %v1074 = vpack.c.b16 %v918, %v915
      %v1075 = vpack.c.b16 %v922, %v919
      %v1076 = vpack.c.b16 %v923, %v920
      %v1077 = vpack.c.b16 %v924, %v921
      %v1078 = vpack.c.b16 %v928, %v925
      %v1079 = vpack.c.b16 %v929, %v926
      %v1080 = vpack.c.b16 %v930, %v927
      %v1081 = vpack.c.b16 %v934, %v931
      %v1082 = vpack.c.b16 %v935, %v932
      %v1083 = vpack.c.b16 %v936, %v933
      %v1084 = vpack.c.b16 %v940, %v937
      %v1085 = vpack.c.b16 %v941, %v938
      %v1086 = vpack.c.b16 %v942, %v939
      %v1087 = vpack.c.b16 %v946, %v943
      %v1088 = vpack.c.b16 %v947, %v944
      %v1089 = vpack.c.b16 %v948, %v945
      %v1090 = vpack.c.b16 %v952, %v949
      %v1091 = vpack.c.b16 %v953, %v950
      %v1092 = vpack.c.b16 %v954, %v951
      %v1221 = vunpack.c.l.b16 %v452
      %v1222 = vunpack.c.l.b16 %v453
      %v1223 = vunpack.c.l.b16 %v454
      %v1224 = vunpack.c.l.b16 %v455
      %v1225 = vunpack.c.l.b16 %v456
      %v1226 = vunpack.c.l.b16 %v457
      %v1227 = vunpack.c.l.b16 %v458
      %v1228 = vunpack.c.l.b16 %v459
      %v1229 = vunpack.c.l.b16 %v460
      %v1230 = vunpack.c.l.b16 %v461
      %v1231 = vunpack.c.l.b16 %v462
      %v1232 = vunpack.c.l.b16 %v463
      %v1233 = vunpack.c.l.b16 %v464
      %v1234 = vunpack.c.l.b16 %v465
      %v1235 = vunpack.c.l.b16 %v466
      %v1236 = vunpack.c.l.b16 %v467
      %v1237 = vunpack.c.l.b16 %v468
      %v1238 = vunpack.c.l.b16 %v469
      %v1239 = vunpack.c.l.b16 %v470
      %v1240 = vunpack.c.l.b16 %v471
      %v1241 = vunpack.c.l.b16 %v472
      %v1242 = vunpack.c.l.b16 %v473
      %v1243 = vunpack.c.l.b16 %v474
      %v1244 = vunpack.c.l.b16 %v475
      %v1245 = vunpack.c.l.b16 %v476
      %v1246 = vunpack.c.l.b16 %v477
      %v1247 = vunpack.c.l.b16 %v478
      %v1248 = vunpack.c.l.b16 %v479
      %v1249 = vunpack.c.l.b16 %v480
      %v1250 = vunpack.c.l.b16 %v481
      %v1251 = vunpack.c.l.b16 %v482
      %v1252 = vunpack.c.l.b16 %v483
      %v1253 = vunpack.c.l.b16 %v484
      %v1254 = vunpack.c.l.b16 %v485
      %v1255 = vunpack.c.l.b16 %v486
      %v1256 = vunpack.c.l.b16 %v487
      %v1257 = vpack.c.b16 %v1222, %v1221
      %v1258 = vpack.c.b16 %v1224, %v1223
      %v1259 = vpack.c.b16 %v1226, %v1225
      %v1260 = vpack.c.b16 %v1228, %v1227
      %v1261 = vpack.c.b16 %v1230, %v1229
      %v1262 = vpack.c.b16 %v1232, %v1231
      %v1263 = vpack.c.b16 %v1234, %v1233
      %v1264 = vpack.c.b16 %v1236, %v1235
      %v1265 = vpack.c.b16 %v1238, %v1237
      %v1266 = vpack.c.b16 %v1240, %v1239
      %v1267 = vpack.c.b16 %v1242, %v1241
      %v1268 = vpack.c.b16 %v1244, %v1243
      %v1269 = vpack.c.b16 %v1246, %v1245
      %v1270 = vpack.c.b16 %v1248, %v1247
      %v1271 = vpack.c.b16 %v1250, %v1249
      %v1272 = vpack.c.b16 %v1252, %v1251
      %v1273 = vpack.c.b16 %v1254, %v1253
      %v1274 = vpack.c.b16 %v1256, %v1255
      %vm1293 = vcmask 261120
      %v1295 = vsel %vm1293, %v957, 0
      %v1298 = vsel %vm1293, %v960, 0
      %v1301 = vsel %vm1293, %v963, 0
      %v1304 = vsel %vm1293, %v966, 0
      %v1307 = vsel %vm1293, %v969, 0
      %v1310 = vsel %vm1293, %v972, 0
      %v1313 = vsel %vm1293, %v975, 0
      %v1316 = vsel %vm1293, %v978, 0
      %v1319 = vsel %vm1293, %v981, 0
      %v1322 = vsel %vm1293, %v984, 0
      %v1325 = vsel %vm1293, %v987, 0
      %v1328 = vsel %vm1293, %v990, 0
      %v1331 = vsel %vm1293, %v993, 0
      %v1334 = vsel %vm1293, %v996, 0
      %v1337 = vsel %vm1293, %v999, 0
      %v1340 = vsel %vm1293, %v1002, 0
      %v1343 = vsel %vm1293, %v1005, 0
      %v1346 = vsel %vm1293, %v1008, 0
      %v1349 = vsel %vm1293, %v1011, 0
      %v1352 = vsel %vm1293, %v1014, 0
      %v1355 = vsel %vm1293, %v1017, 0
      %v1358 = vsel %vm1293, %v1020, 0
      %v1361 = vsel %vm1293, %v1023, 0
      %v1364 = vsel %vm1293, %v1026, 0
      %v1367 = vsel %vm1293, %v1029, 0
      %v1370 = vsel %vm1293, %v1032, 0
      %v1373 = vsel %vm1293, %v1035, 0
      %v1376 = vsel %vm1293, %v1038, 0
      %v1379 = vsel %vm1293, %v1041, 0
      %v1382 = vsel %vm1293, %v1044, 0
      %v1385 = vsel %vm1293, %v1047, 0
      %v1388 = vsel %vm1293, %v1050, 0
      %v1391 = vsel %vm1293, %v1053, 0
      %v1394 = vsel %vm1293, %v1056, 0
      %v1397 = vsel %vm1293, %v1059, 0
      %v1400 = vsel %vm1293, %v1062, 0
      %v1403 = vsel %vm1293, %v1065, 0
      %v1406 = vsel %vm1293, %v1068, 0
      %v1409 = vsel %vm1293, %v1071, 0
      %v1412 = vsel %vm1293, %v1074, 0
      %v1415 = vsel %vm1293, %v1077, 0
      %v1418 = vsel %vm1293, %v1080, 0
      %v1421 = vsel %vm1293, %v1083, 0
      %v1424 = vsel %vm1293, %v1086, 0
      %v1427 = vsel %vm1293, %v1089, 0
      %v1430 = vsel %vm1293, %v1092, 0
      %1432 = vmatprep.subr.bf16.mxu0 0
      %1433 = vmatpush1.bf16.msra.mxu0 %v1257
      %1434 = vmatprep.subr.bf16.mxu0 0
      %1435 = vmatpush1.bf16.msra.mxu0 %v1258
      %1436 = vmatprep.subr.bf16.mxu0 0
      %1437 = vmatpush1.bf16.msra.mxu0 %v1259
      %1438 = vmatprep.subr.bf16.mxu0 0
      %1439 = vmatpush1.bf16.msra.mxu0 %v1260
      %1440 = vmatprep.subr.bf16.mxu0 0
      %1441 = vmatpush1.bf16.msra.mxu0 %v1261
      %1442 = vmatprep.subr.bf16.mxu0 0
      %1443 = vmatpush1.bf16.msra.mxu0 %v1262
      %1444 = vmatprep.subr.bf16.mxu0 0
      %1445 = vmatpush1.bf16.msra.mxu0 %v1263
      %1446 = vmatprep.subr.bf16.mxu0 0
      %1447 = vmatpush1.bf16.msra.mxu0 %v1264
      %1448 = vmatprep.subr.bf16.mxu0 0
      %1449 = vmatpush1.bf16.msra.mxu0 %v1265
      %1450 = vmatprep.subr.bf16.mxu0 0
      %1451 = vmatpush1.bf16.msra.mxu0 %v1266
      %1452 = vmatprep.subr.bf16.mxu0 0
      %1453 = vmatpush1.bf16.msra.mxu0 %v1267
      %1454 = vmatprep.subr.bf16.mxu0 0
      %1455 = vmatpush1.bf16.msra.mxu0 %v1268
      %1456 = vmatprep.subr.bf16.mxu0 0
      %1457 = vmatpush1.bf16.msra.mxu0 %v1269
      %1458 = vmatprep.subr.bf16.mxu0 0
      %1459 = vmatpush1.bf16.msra.mxu0 %v1270
      %1460 = vmatprep.subr.bf16.mxu0 0
      %1461 = vmatpush1.bf16.msra.mxu0 %v1271
      %1462 = vmatprep.subr.bf16.mxu0 0
      %1463 = vmatpush1.bf16.msra.mxu0 %v1272
      %1464 = vmatprep.mubr.bf16.mxu0 %v956
      %1465 = vmatmul.mubr.bf16.gmra.mrb[0].mxu0 %v955
      %v1466 = vpop.f32.mrb[0].mxu0
      %v1467 = vadd.f32 %v493, %v1466
      %v1468 = vpop.f32.mrb[0].mxu0
      %v1469 = vpop.f32.mrb[0].mxu0
      %v1470 = vadd.f32 %v493, %v1469
      %v1471 = vpop.f32.mrb[0].mxu0
      %1472 = vmatprep.mubr.bf16.mxu0 %v959
      %1473 = vmatmul.mubr.bf16.gmra.mrb[0].mxu0 %v958
      %v1474 = vpop.f32.mrb[0].mxu0
      %v1475 = vadd.f32 %v493, %v1474
      %v1476 = vpop.f32.mrb[0].mxu0
      %v1477 = vpop.f32.mrb[0].mxu0
      %v1478 = vadd.f32 %v493, %v1477
      %v1479 = vpop.f32.mrb[0].mxu0
      %1480 = vmatprep.mubr.bf16.mxu0 %v962
      %1481 = vmatmul.mubr.bf16.gmra.mrb[0].mxu0 %v961
      %v1482 = vpop.f32.mrb[0].mxu0
      %v1483 = vadd.f32 %v493, %v1482
      %v1484 = vpop.f32.mrb[0].mxu0
      %v1485 = vpop.f32.mrb[0].mxu0
      %v1486 = vadd.f32 %v493, %v1485
      %v1487 = vpop.f32.mrb[0].mxu0
      %1488 = vmatprep.mubr.bf16.mxu0 %v965
      %1489 = vmatmul.mubr.bf16.gmra.mrb[0].mxu0 %v964
      %v1490 = vpop.f32.mrb[0].mxu0
      %v1491 = vadd.f32 %v493, %v1490
      %v1492 = vpop.f32.mrb[0].mxu0
      %v1493 = vpop.f32.mrb[0].mxu0
      %v1494 = vadd.f32 %v493, %v1493
      %v1495 = vpop.f32.mrb[0].mxu0
      %1496 = vmatprep.mubr.bf16.mxu0 %v968
      %1497 = vmatmul.mubr.bf16.gmra.mrb[0].mxu0 %v967
      %v1498 = vpop.f32.mrb[0].mxu0
      %v1499 = vadd.f32 %v493, %v1498
      %v1500 = vpop.f32.mrb[0].mxu0
      %v1501 = vpop.f32.mrb[0].mxu0
      %v1502 = vadd.f32 %v493, %v1501
      %v1503 = vpop.f32.mrb[0].mxu0
      %1504 = vmatprep.mubr.bf16.mxu0 %v971
      %1505 = vmatmul.mubr.bf16.gmra.mrb[0].mxu0 %v970
      %v1506 = vpop.f32.mrb[0].mxu0
      %v1507 = vadd.f32 %v493, %v1506
      %v1508 = vpop.f32.mrb[0].mxu0
      %v1509 = vpop.f32.mrb[0].mxu0
      %v1510 = vadd.f32 %v493, %v1509
      %v1511 = vpop.f32.mrb[0].mxu0
      %1512 = vmatprep.mubr.bf16.mxu0 %v974
      %1513 = vmatmul.mubr.bf16.gmra.mrb[0].mxu0 %v973
      %v1514 = vpop.f32.mrb[0].mxu0
      %v1515 = vadd.f32 %v493, %v1514
      %v1516 = vpop.f32.mrb[0].mxu0
      %v1517 = vpop.f32.mrb[0].mxu0
      %v1518 = vadd.f32 %v493, %v1517
      %v1519 = vpop.f32.mrb[0].mxu0
      %1520 = vmatprep.mubr.bf16.mxu0 %v977
      %1521 = vmatmul.mubr.bf16.gmra.mrb[0].mxu0 %v976
      %v1522 = vpop.f32.mrb[0].mxu0
      %v1523 = vadd.f32 %v493, %v1522
      %v1524 = vpop.f32.mrb[0].mxu0
      %v1525 = vpop.f32.mrb[0].mxu0
      %v1526 = vadd.f32 %v493, %v1525
      %v1527 = vpop.f32.mrb[0].mxu0
      %1528 = vmatprep.mubr.bf16.mxu0 %v980
      %1529 = vmatmul.mubr.bf16.gmra.mrb[0].mxu0 %v979
      %v1530 = vpop.f32.mrb[0].mxu0
      %v1531 = vadd.f32 %v493, %v1530
      %v1532 = vpop.f32.mrb[0].mxu0
      %v1533 = vpop.f32.mrb[0].mxu0
      %v1534 = vadd.f32 %v493, %v1533
      %v1535 = vpop.f32.mrb[0].mxu0
      %1536 = vmatprep.mubr.bf16.mxu0 %v983
      %1537 = vmatmul.mubr.bf16.gmra.mrb[0].mxu0 %v982
      %v1538 = vpop.f32.mrb[0].mxu0
      %v1539 = vadd.f32 %v493, %v1538
      %v1540 = vpop.f32.mrb[0].mxu0
      %v1541 = vpop.f32.mrb[0].mxu0
      %v1542 = vadd.f32 %v493, %v1541
      %v1543 = vpop.f32.mrb[0].mxu0
      %1544 = vmatprep.mubr.bf16.mxu0 %v986
      %1545 = vmatmul.mubr.bf16.gmra.mrb[0].mxu0 %v985
      %v1546 = vpop.f32.mrb[0].mxu0
      %v1547 = vadd.f32 %v493, %v1546
      %v1548 = vpop.f32.mrb[0].mxu0
      %v1549 = vpop.f32.mrb[0].mxu0
      %v1550 = vadd.f32 %v493, %v1549
      %v1551 = vpop.f32.mrb[0].mxu0
      %1552 = vmatprep.mubr.bf16.mxu0 %v989
      %1553 = vmatmul.mubr.bf16.gmra.mrb[0].mxu0 %v988
      %v1554 = vpop.f32.mrb[0].mxu0
      %v1555 = vadd.f32 %v493, %v1554
      %v1556 = vpop.f32.mrb[0].mxu0
      %v1557 = vpop.f32.mrb[0].mxu0
      %v1558 = vadd.f32 %v493, %v1557
      %v1559 = vpop.f32.mrb[0].mxu0
      %1560 = vmatprep.mubr.bf16.mxu0 %v992
      %1561 = vmatmul.mubr.bf16.gmra.mrb[0].mxu0 %v991
      %v1562 = vpop.f32.mrb[0].mxu0
      %v1563 = vadd.f32 %v493, %v1562
      %v1564 = vpop.f32.mrb[0].mxu0
      %v1565 = vpop.f32.mrb[0].mxu0
      %v1566 = vadd.f32 %v493, %v1565
      %v1567 = vpop.f32.mrb[0].mxu0
      %1568 = vmatprep.mubr.bf16.mxu0 %v995
      %1569 = vmatmul.mubr.bf16.gmra.mrb[0].mxu0 %v994
      %v1570 = vpop.f32.mrb[0].mxu0
      %v1571 = vadd.f32 %v493, %v1570
      %v1572 = vpop.f32.mrb[0].mxu0
      %v1573 = vpop.f32.mrb[0].mxu0
      %v1574 = vadd.f32 %v493, %v1573
      %v1575 = vpop.f32.mrb[0].mxu0
      %1576 = vmatprep.mubr.bf16.mxu0 %v998
      %1577 = vmatmul.mubr.bf16.gmra.mrb[0].mxu0 %v997
      %v1578 = vpop.f32.mrb[0].mxu0
      %v1579 = vadd.f32 %v493, %v1578
      %v1580 = vpop.f32.mrb[0].mxu0
      %v1581 = vpop.f32.mrb[0].mxu0
      %v1582 = vadd.f32 %v493, %v1581
      %v1583 = vpop.f32.mrb[0].mxu0
      %1584 = vmatprep.mubr.bf16.mxu0 %v1001
      %1585 = vmatmul.mubr.bf16.gmra.mrb[0].mxu0 %v1000
      %v1586 = vpop.f32.mrb[0].mxu0
      %v1587 = vadd.f32 %v493, %v1586
      %v1588 = vpop.f32.mrb[0].mxu0
      %v1589 = vpop.f32.mrb[0].mxu0
      %v1590 = vadd.f32 %v493, %v1589
      %v1591 = vpop.f32.mrb[0].mxu0
      %1592 = vmatprep.mubr.bf16.mxu0 %v1004
      %1593 = vmatmul.mubr.bf16.gmra.mrb[0].mxu0 %v1003
      %v1594 = vpop.f32.mrb[0].mxu0
      %v1595 = vadd.f32 %v493, %v1594
      %v1596 = vpop.f32.mrb[0].mxu0
      %v1597 = vpop.f32.mrb[0].mxu0
      %v1598 = vadd.f32 %v493, %v1597
      %v1599 = vpop.f32.mrb[0].mxu0
      %1600 = vmatprep.mubr.bf16.mxu0 %v1007
      %1601 = vmatmul.mubr.bf16.gmra.mrb[0].mxu0 %v1006
      %v1602 = vpop.f32.mrb[0].mxu0
      %v1603 = vadd.f32 %v493, %v1602
      %v1604 = vpop.f32.mrb[0].mxu0
      %v1605 = vpop.f32.mrb[0].mxu0
      %v1606 = vadd.f32 %v493, %v1605
      %v1607 = vpop.f32.mrb[0].mxu0
      %1608 = vmatprep.mubr.bf16.mxu0 %v1010
      %1609 = vmatmul.mubr.bf16.gmra.mrb[0].mxu0 %v1009
      %v1610 = vpop.f32.mrb[0].mxu0
      %v1611 = vadd.f32 %v493, %v1610
      %v1612 = vpop.f32.mrb[0].mxu0
      %v1613 = vpop.f32.mrb[0].mxu0
      %v1614 = vadd.f32 %v493, %v1613
      %v1615 = vpop.f32.mrb[0].mxu0
      %1616 = vmatprep.mubr.bf16.mxu0 %v1013
      %1617 = vmatmul.mubr.bf16.gmra.mrb[0].mxu0 %v1012
      %v1618 = vpop.f32.mrb[0].mxu0
      %v1619 = vadd.f32 %v493, %v1618
      %v1620 = vpop.f32.mrb[0].mxu0
      %v1621 = vpop.f32.mrb[0].mxu0
      %v1622 = vadd.f32 %v493, %v1621
      %v1623 = vpop.f32.mrb[0].mxu0
      %1624 = vmatprep.mubr.bf16.mxu0 %v1016
      %1625 = vmatmul.mubr.bf16.gmra.mrb[0].mxu0 %v1015
      %v1626 = vpop.f32.mrb[0].mxu0
      %v1627 = vadd.f32 %v493, %v1626
      %v1628 = vpop.f32.mrb[0].mxu0
      %v1629 = vpop.f32.mrb[0].mxu0
      %v1630 = vadd.f32 %v493, %v1629
      %v1631 = vpop.f32.mrb[0].mxu0
      %1632 = vmatprep.mubr.bf16.mxu0 %v1019
      %1633 = vmatmul.mubr.bf16.gmra.mrb[0].mxu0 %v1018
      %v1634 = vpop.f32.mrb[0].mxu0
      %v1635 = vadd.f32 %v493, %v1634
      %v1636 = vpop.f32.mrb[0].mxu0
      %v1637 = vpop.f32.mrb[0].mxu0
      %v1638 = vadd.f32 %v493, %v1637
      %v1639 = vpop.f32.mrb[0].mxu0
      %1640 = vmatprep.mubr.bf16.mxu0 %v1022
      %1641 = vmatmul.mubr.bf16.gmra.mrb[0].mxu0 %v1021
      %v1642 = vpop.f32.mrb[0].mxu0
      %v1643 = vadd.f32 %v493, %v1642
      %v1644 = vpop.f32.mrb[0].mxu0
      %v1645 = vpop.f32.mrb[0].mxu0
      %v1646 = vadd.f32 %v493, %v1645
      %v1647 = vpop.f32.mrb[0].mxu0
      %1648 = vmatprep.mubr.bf16.mxu0 %v1025
      %1649 = vmatmul.mubr.bf16.gmra.mrb[0].mxu0 %v1024
      %v1650 = vpop.f32.mrb[0].mxu0
      %v1651 = vadd.f32 %v493, %v1650
      %v1652 = vpop.f32.mrb[0].mxu0
      %v1653 = vpop.f32.mrb[0].mxu0
      %v1654 = vadd.f32 %v493, %v1653
      %v1655 = vpop.f32.mrb[0].mxu0
      %1656 = vmatprep.mubr.bf16.mxu0 %v1028
      %1657 = vmatmul.mubr.bf16.gmra.mrb[0].mxu0 %v1027
      %v1658 = vpop.f32.mrb[0].mxu0
      %v1659 = vadd.f32 %v493, %v1658
      %v1660 = vpop.f32.mrb[0].mxu0
      %v1661 = vpop.f32.mrb[0].mxu0
      %v1662 = vadd.f32 %v493, %v1661
      %v1663 = vpop.f32.mrb[0].mxu0
      %1664 = vmatprep.mubr.bf16.mxu0 %v1031
      %1665 = vmatmul.mubr.bf16.gmra.mrb[0].mxu0 %v1030
      %v1666 = vpop.f32.mrb[0].mxu0
      %v1667 = vadd.f32 %v493, %v1666
      %v1668 = vpop.f32.mrb[0].mxu0
      %v1669 = vpop.f32.mrb[0].mxu0
      %v1670 = vadd.f32 %v493, %v1669
      %v1671 = vpop.f32.mrb[0].mxu0
      %1672 = vmatprep.mubr.bf16.mxu0 %v1034
      %1673 = vmatmul.mubr.bf16.gmra.mrb[0].mxu0 %v1033
      %v1674 = vpop.f32.mrb[0].mxu0
      %v1675 = vadd.f32 %v493, %v1674
      %v1676 = vpop.f32.mrb[0].mxu0
      %v1677 = vpop.f32.mrb[0].mxu0
      %v1678 = vadd.f32 %v493, %v1677
      %v1679 = vpop.f32.mrb[0].mxu0
      %1680 = vmatprep.mubr.bf16.mxu0 %v1037
      %1681 = vmatmul.mubr.bf16.gmra.mrb[0].mxu0 %v1036
      %v1682 = vpop.f32.mrb[0].mxu0
      %v1683 = vadd.f32 %v493, %v1682
      %v1684 = vpop.f32.mrb[0].mxu0
      %v1685 = vpop.f32.mrb[0].mxu0
      %v1686 = vadd.f32 %v493, %v1685
      %v1687 = vpop.f32.mrb[0].mxu0
      %1688 = vmatprep.mubr.bf16.mxu0 %v1040
      %1689 = vmatmul.mubr.bf16.gmra.mrb[0].mxu0 %v1039
      %v1690 = vpop.f32.mrb[0].mxu0
      %v1691 = vadd.f32 %v493, %v1690
      %v1692 = vpop.f32.mrb[0].mxu0
      %v1693 = vpop.f32.mrb[0].mxu0
      %v1694 = vadd.f32 %v493, %v1693
      %v1695 = vpop.f32.mrb[0].mxu0
      %1696 = vmatprep.mubr.bf16.mxu0 %v1043
      %1697 = vmatmul.mubr.bf16.gmra.mrb[0].mxu0 %v1042
      %v1698 = vpop.f32.mrb[0].mxu0
      %v1699 = vadd.f32 %v493, %v1698
      %v1700 = vpop.f32.mrb[0].mxu0
      %v1701 = vpop.f32.mrb[0].mxu0
      %v1702 = vadd.f32 %v493, %v1701
      %v1703 = vpop.f32.mrb[0].mxu0
      %1704 = vmatprep.mubr.bf16.mxu0 %v1046
      %1705 = vmatmul.mubr.bf16.gmra.mrb[0].mxu0 %v1045
      %v1706 = vpop.f32.mrb[0].mxu0
      %v1707 = vadd.f32 %v493, %v1706
      %v1708 = vpop.f32.mrb[0].mxu0
      %v1709 = vpop.f32.mrb[0].mxu0
      %v1710 = vadd.f32 %v493, %v1709
      %v1711 = vpop.f32.mrb[0].mxu0
      %1712 = vmatprep.mubr.bf16.mxu0 %v1049
      %1713 = vmatmul.mubr.bf16.gmra.mrb[0].mxu0 %v1048
      %v1714 = vpop.f32.mrb[0].mxu0
      %v1715 = vadd.f32 %v493, %v1714
      %v1716 = vpop.f32.mrb[0].mxu0
      %v1717 = vpop.f32.mrb[0].mxu0
      %v1718 = vadd.f32 %v493, %v1717
      %v1719 = vpop.f32.mrb[0].mxu0
      %1720 = vmatprep.mubr.bf16.mxu0 %v1052
      %1721 = vmatmul.mubr.bf16.gmra.mrb[0].mxu0 %v1051
      %v1722 = vpop.f32.mrb[0].mxu0
      %v1723 = vadd.f32 %v493, %v1722
      %v1724 = vpop.f32.mrb[0].mxu0
      %v1725 = vpop.f32.mrb[0].mxu0
      %v1726 = vadd.f32 %v493, %v1725
      %v1727 = vpop.f32.mrb[0].mxu0
      %1728 = vmatprep.mubr.bf16.mxu0 %v1055
      %1729 = vmatmul.mubr.bf16.gmra.mrb[0].mxu0 %v1054
      %v1730 = vpop.f32.mrb[0].mxu0
      %v1731 = vadd.f32 %v493, %v1730
      %v1732 = vpop.f32.mrb[0].mxu0
      %v1733 = vpop.f32.mrb[0].mxu0
      %v1734 = vadd.f32 %v493, %v1733
      %v1735 = vpop.f32.mrb[0].mxu0
      %1736 = vmatprep.mubr.bf16.mxu0 %v1058
      %1737 = vmatmul.mubr.bf16.gmra.mrb[0].mxu0 %v1057
      %v1738 = vpop.f32.mrb[0].mxu0
      %v1739 = vadd.f32 %v493, %v1738
      %v1740 = vpop.f32.mrb[0].mxu0
      %v1741 = vpop.f32.mrb[0].mxu0
      %v1742 = vadd.f32 %v493, %v1741
      %v1743 = vpop.f32.mrb[0].mxu0
      %1744 = vmatprep.mubr.bf16.mxu0 %v1061
      %1745 = vmatmul.mubr.bf16.gmra.mrb[0].mxu0 %v1060
      %v1746 = vpop.f32.mrb[0].mxu0
      %v1747 = vadd.f32 %v493, %v1746
      %v1748 = vpop.f32.mrb[0].mxu0
      %v1749 = vpop.f32.mrb[0].mxu0
      %v1750 = vadd.f32 %v493, %v1749
      %v1751 = vpop.f32.mrb[0].mxu0
      %1752 = vmatprep.mubr.bf16.mxu0 %v1064
      %1753 = vmatmul.mubr.bf16.gmra.mrb[0].mxu0 %v1063
      %v1754 = vpop.f32.mrb[0].mxu0
      %v1755 = vadd.f32 %v493, %v1754
      %v1756 = vpop.f32.mrb[0].mxu0
      %v1757 = vpop.f32.mrb[0].mxu0
      %v1758 = vadd.f32 %v493, %v1757
      %v1759 = vpop.f32.mrb[0].mxu0
      %1760 = vmatprep.mubr.bf16.mxu0 %v1067
      %1761 = vmatmul.mubr.bf16.gmra.mrb[0].mxu0 %v1066
      %v1762 = vpop.f32.mrb[0].mxu0
      %v1763 = vadd.f32 %v493, %v1762
      %v1764 = vpop.f32.mrb[0].mxu0
      %v1765 = vpop.f32.mrb[0].mxu0
      %v1766 = vadd.f32 %v493, %v1765
      %v1767 = vpop.f32.mrb[0].mxu0
      %1768 = vmatprep.mubr.bf16.mxu0 %v1070
      %1769 = vmatmul.mubr.bf16.gmra.mrb[0].mxu0 %v1069
      %v1770 = vpop.f32.mrb[0].mxu0
      %v1771 = vadd.f32 %v493, %v1770
      %v1772 = vpop.f32.mrb[0].mxu0
      %v1773 = vpop.f32.mrb[0].mxu0
      %v1774 = vadd.f32 %v493, %v1773
      %v1775 = vpop.f32.mrb[0].mxu0
      %1776 = vmatprep.mubr.bf16.mxu0 %v1073
      %1777 = vmatmul.mubr.bf16.gmra.mrb[0].mxu0 %v1072
      %v1778 = vpop.f32.mrb[0].mxu0
      %v1779 = vadd.f32 %v493, %v1778
      %v1780 = vpop.f32.mrb[0].mxu0
      %v1781 = vpop.f32.mrb[0].mxu0
      %v1782 = vadd.f32 %v493, %v1781
      %v1783 = vpop.f32.mrb[0].mxu0
      %1784 = vmatprep.mubr.bf16.mxu0 %v1076
      %1785 = vmatmul.mubr.bf16.gmra.mrb[0].mxu0 %v1075
      %v1786 = vpop.f32.mrb[0].mxu0
      %v1787 = vadd.f32 %v493, %v1786
      %v1788 = vpop.f32.mrb[0].mxu0
      %v1789 = vpop.f32.mrb[0].mxu0
      %v1790 = vadd.f32 %v493, %v1789
      %v1791 = vpop.f32.mrb[0].mxu0
      %1792 = vmatprep.mubr.bf16.mxu0 %v1079
      %1793 = vmatmul.mubr.bf16.gmra.mrb[0].mxu0 %v1078
      %v1794 = vpop.f32.mrb[0].mxu0
      %v1795 = vadd.f32 %v493, %v1794
      %v1796 = vpop.f32.mrb[0].mxu0
      %v1797 = vpop.f32.mrb[0].mxu0
      %v1798 = vadd.f32 %v493, %v1797
      %v1799 = vpop.f32.mrb[0].mxu0
      %1800 = vmatprep.mubr.bf16.mxu0 %v1082
      %1801 = vmatmul.mubr.bf16.gmra.mrb[0].mxu0 %v1081
      %v1802 = vpop.f32.mrb[0].mxu0
      %v1803 = vadd.f32 %v493, %v1802
      %v1804 = vpop.f32.mrb[0].mxu0
      %v1805 = vpop.f32.mrb[0].mxu0
      %v1806 = vadd.f32 %v493, %v1805
      %v1807 = vpop.f32.mrb[0].mxu0
      %1808 = vmatprep.mubr.bf16.mxu0 %v1085
      %1809 = vmatmul.mubr.bf16.gmra.mrb[0].mxu0 %v1084
      %v1810 = vpop.f32.mrb[0].mxu0
      %v1811 = vadd.f32 %v493, %v1810
      %v1812 = vpop.f32.mrb[0].mxu0
      %v1813 = vpop.f32.mrb[0].mxu0
      %v1814 = vadd.f32 %v493, %v1813
      %v1815 = vpop.f32.mrb[0].mxu0
      %1816 = vmatprep.mubr.bf16.mxu0 %v1088
      %1817 = vmatmul.mubr.bf16.gmra.mrb[0].mxu0 %v1087
      %v1818 = vpop.f32.mrb[0].mxu0
      %v1819 = vadd.f32 %v493, %v1818
      %v1820 = vpop.f32.mrb[0].mxu0
      %v1821 = vpop.f32.mrb[0].mxu0
      %v1822 = vadd.f32 %v493, %v1821
      %v1823 = vpop.f32.mrb[0].mxu0
      %1824 = vmatprep.mubr.bf16.mxu0 %v1091
      %1825 = vmatmul.mubr.bf16.gmra.mrb[0].mxu0 %v1090
      %v1826 = vpop.f32.mrb[0].mxu0
      %v1827 = vadd.f32 %v493, %v1826
      %v1828 = vpop.f32.mrb[0].mxu0
      %v1829 = vpop.f32.mrb[0].mxu0
      %v1830 = vadd.f32 %v493, %v1829
      %v1831 = vpop.f32.mrb[0].mxu0
      %1832 = vdwg.mxu0
      %1833 = vmatprep.subr.bf16.mxu0 0
      %1834 = vmatpush1.bf16.msra.mxu0 %v1273
      %1835 = vmatprep.subr.bf16.mxu0 0
      %1836 = vmatpush1.bf16.msra.mxu0 %v1274
      %1837 = vmatprep.subr.bf16.mxu0 0
      %1838 = vmatpush1.bf16.msra.mxu0 0
      %1839 = vmatprep.subr.bf16.mxu0 0
      %1840 = vmatpush1.bf16.msra.mxu0 0
      %1841 = vmatprep.subr.bf16.mxu0 0
      %1842 = vmatpush1.bf16.msra.mxu0 0
      %1843 = vmatprep.subr.bf16.mxu0 0
      %1844 = vmatpush1.bf16.msra.mxu0 0
      %1845 = vmatprep.subr.bf16.mxu0 0
      %1846 = vmatpush1.bf16.msra.mxu0 0
      %1847 = vmatprep.subr.bf16.mxu0 0
      %1848 = vmatpush1.bf16.msra.mxu0 0
      %1849 = vmatprep.subr.bf16.mxu0 0
      %1850 = vmatpush1.bf16.msra.mxu0 0
      %1851 = vmatprep.subr.bf16.mxu0 0
      %1852 = vmatpush1.bf16.msra.mxu0 0
      %1853 = vmatprep.subr.bf16.mxu0 0
      %1854 = vmatpush1.bf16.msra.mxu0 0
      %1855 = vmatprep.subr.bf16.mxu0 0
      %1856 = vmatpush1.bf16.msra.mxu0 0
      %1857 = vmatprep.subr.bf16.mxu0 0
      %1858 = vmatpush1.bf16.msra.mxu0 0
      %1859 = vmatprep.subr.bf16.mxu0 0
      %1860 = vmatpush1.bf16.msra.mxu0 0
      %1861 = vmatprep.subr.bf16.mxu0 0
      %1862 = vmatpush1.bf16.msra.mxu0 0
      %1863 = vmatprep.subr.bf16.mxu0 0
      %1864 = vmatpush1.bf16.msra.mxu0 0
      %1865 = vmatprep.mubr.bf16.mxu0 0
      %1866 = vmatmul.mubr.bf16.gmra.mrb[0].mxu0 %v1295
      %v1867 = vpop.f32.mrb[0].mxu0
      %v1868 = vadd.f32 %v1467, %v1867
      %v1869 = vpop.f32.mrb[0].mxu0
      %v1870 = vpop.f32.mrb[0].mxu0
      %v1871 = vadd.f32 %v1470, %v1870
      %v1872 = vpop.f32.mrb[0].mxu0
      %1873 = vmatprep.mubr.bf16.mxu0 0
      %1874 = vmatmul.mubr.bf16.gmra.mrb[0].mxu0 %v1298
      %v1875 = vpop.f32.mrb[0].mxu0
      %v1876 = vadd.f32 %v1475, %v1875
      %v1877 = vpop.f32.mrb[0].mxu0
      %v1878 = vpop.f32.mrb[0].mxu0
      %v1879 = vadd.f32 %v1478, %v1878
      %v1880 = vpop.f32.mrb[0].mxu0
      %1881 = vmatprep.mubr.bf16.mxu0 0
      %1882 = vmatmul.mubr.bf16.gmra.mrb[0].mxu0 %v1301
      %v1883 = vpop.f32.mrb[0].mxu0
      %v1884 = vadd.f32 %v1483, %v1883
      %v1885 = vpop.f32.mrb[0].mxu0
      %v1886 = vpop.f32.mrb[0].mxu0
      %v1887 = vadd.f32 %v1486, %v1886
      %v1888 = vpop.f32.mrb[0].mxu0
      %1889 = vmatprep.mubr.bf16.mxu0 0
      %1890 = vmatmul.mubr.bf16.gmra.mrb[0].mxu0 %v1304
      %v1891 = vpop.f32.mrb[0].mxu0
      %v1892 = vadd.f32 %v1491, %v1891
      %v1893 = vpop.f32.mrb[0].mxu0
      %v1894 = vpop.f32.mrb[0].mxu0
      %v1895 = vadd.f32 %v1494, %v1894
      %v1896 = vpop.f32.mrb[0].mxu0
      %1897 = vmatprep.mubr.bf16.mxu0 0
      %1898 = vmatmul.mubr.bf16.gmra.mrb[0].mxu0 %v1307
      %v1899 = vpop.f32.mrb[0].mxu0
      %v1900 = vadd.f32 %v1499, %v1899
      %v1901 = vpop.f32.mrb[0].mxu0
      %v1902 = vpop.f32.mrb[0].mxu0
      %v1903 = vadd.f32 %v1502, %v1902
      %v1904 = vpop.f32.mrb[0].mxu0
      %1905 = vmatprep.mubr.bf16.mxu0 0
      %1906 = vmatmul.mubr.bf16.gmra.mrb[0].mxu0 %v1310
      %v1907 = vpop.f32.mrb[0].mxu0
      %v1908 = vadd.f32 %v1507, %v1907
      %v1909 = vpop.f32.mrb[0].mxu0
      %v1910 = vpop.f32.mrb[0].mxu0
      %v1911 = vadd.f32 %v1510, %v1910
      %v1912 = vpop.f32.mrb[0].mxu0
      %1913 = vmatprep.mubr.bf16.mxu0 0
      %1914 = vmatmul.mubr.bf16.gmra.mrb[0].mxu0 %v1313
      %v1915 = vpop.f32.mrb[0].mxu0
      %v1916 = vadd.f32 %v1515, %v1915
      %v1917 = vpop.f32.mrb[0].mxu0
      %v1918 = vpop.f32.mrb[0].mxu0
      %v1919 = vadd.f32 %v1518, %v1918
      %v1920 = vpop.f32.mrb[0].mxu0
      %1921 = vmatprep.mubr.bf16.mxu0 0
      %1922 = vmatmul.mubr.bf16.gmra.mrb[0].mxu0 %v1316
      %v1923 = vpop.f32.mrb[0].mxu0
      %v1924 = vadd.f32 %v1523, %v1923
      %v1925 = vpop.f32.mrb[0].mxu0
      %v1926 = vpop.f32.mrb[0].mxu0
      %v1927 = vadd.f32 %v1526, %v1926
      %v1928 = vpop.f32.mrb[0].mxu0
      %1929 = vmatprep.mubr.bf16.mxu0 0
      %1930 = vmatmul.mubr.bf16.gmra.mrb[0].mxu0 %v1319
      %v1931 = vpop.f32.mrb[0].mxu0
      %v1932 = vadd.f32 %v1531, %v1931
      %v1933 = vpop.f32.mrb[0].mxu0
      %v1934 = vpop.f32.mrb[0].mxu0
      %v1935 = vadd.f32 %v1534, %v1934
      %v1936 = vpop.f32.mrb[0].mxu0
      %1937 = vmatprep.mubr.bf16.mxu0 0
      %1938 = vmatmul.mubr.bf16.gmra.mrb[0].mxu0 %v1322
      %v1939 = vpop.f32.mrb[0].mxu0
      %v1940 = vadd.f32 %v1539, %v1939
      %v1941 = vpop.f32.mrb[0].mxu0
      %v1942 = vpop.f32.mrb[0].mxu0
      %v1943 = vadd.f32 %v1542, %v1942
      %v1944 = vpop.f32.mrb[0].mxu0
      %1945 = vmatprep.mubr.bf16.mxu0 0
      %1946 = vmatmul.mubr.bf16.gmra.mrb[0].mxu0 %v1325
      %v1947 = vpop.f32.mrb[0].mxu0
      %v1948 = vadd.f32 %v1547, %v1947
      %v1949 = vpop.f32.mrb[0].mxu0
      %v1950 = vpop.f32.mrb[0].mxu0
      %v1951 = vadd.f32 %v1550, %v1950
      %v1952 = vpop.f32.mrb[0].mxu0
      %1953 = vmatprep.mubr.bf16.mxu0 0
      %1954 = vmatmul.mubr.bf16.gmra.mrb[0].mxu0 %v1328
      %v1955 = vpop.f32.mrb[0].mxu0
      %v1956 = vadd.f32 %v1555, %v1955
      %v1957 = vpop.f32.mrb[0].mxu0
      %v1958 = vpop.f32.mrb[0].mxu0
      %v1959 = vadd.f32 %v1558, %v1958
      %v1960 = vpop.f32.mrb[0].mxu0
      %1961 = vmatprep.mubr.bf16.mxu0 0
      %1962 = vmatmul.mubr.bf16.gmra.mrb[0].mxu0 %v1331
      %v1963 = vpop.f32.mrb[0].mxu0
      %v1964 = vadd.f32 %v1563, %v1963
      %v1965 = vpop.f32.mrb[0].mxu0
      %v1966 = vpop.f32.mrb[0].mxu0
      %v1967 = vadd.f32 %v1566, %v1966
      %v1968 = vpop.f32.mrb[0].mxu0
      %1969 = vmatprep.mubr.bf16.mxu0 0
      %1970 = vmatmul.mubr.bf16.gmra.mrb[0].mxu0 %v1334
      %v1971 = vpop.f32.mrb[0].mxu0
      %v1972 = vadd.f32 %v1571, %v1971
      %v1973 = vpop.f32.mrb[0].mxu0
      %v1974 = vpop.f32.mrb[0].mxu0
      %v1975 = vadd.f32 %v1574, %v1974
      %v1976 = vpop.f32.mrb[0].mxu0
      %1977 = vmatprep.mubr.bf16.mxu0 0
      %1978 = vmatmul.mubr.bf16.gmra.mrb[0].mxu0 %v1337
      %v1979 = vpop.f32.mrb[0].mxu0
      %v1980 = vadd.f32 %v1579, %v1979
      %v1981 = vpop.f32.mrb[0].mxu0
      %v1982 = vpop.f32.mrb[0].mxu0
      %v1983 = vadd.f32 %v1582, %v1982
      %v1984 = vpop.f32.mrb[0].mxu0
      %1985 = vmatprep.mubr.bf16.mxu0 0
      %1986 = vmatmul.mubr.bf16.gmra.mrb[0].mxu0 %v1340
      %v1987 = vpop.f32.mrb[0].mxu0
      %v1988 = vadd.f32 %v1587, %v1987
      %v1989 = vpop.f32.mrb[0].mxu0
      %v1990 = vpop.f32.mrb[0].mxu0
      %v1991 = vadd.f32 %v1590, %v1990
      %v1992 = vpop.f32.mrb[0].mxu0
      %1993 = vmatprep.mubr.bf16.mxu0 0
      %1994 = vmatmul.mubr.bf16.gmra.mrb[0].mxu0 %v1343
      %v1995 = vpop.f32.mrb[0].mxu0
      %v1996 = vadd.f32 %v1595, %v1995
      %v1997 = vpop.f32.mrb[0].mxu0
      %v1998 = vpop.f32.mrb[0].mxu0
      %v1999 = vadd.f32 %v1598, %v1998
      %v2000 = vpop.f32.mrb[0].mxu0
      %2001 = vmatprep.mubr.bf16.mxu0 0
      %2002 = vmatmul.mubr.bf16.gmra.mrb[0].mxu0 %v1346
      %v2003 = vpop.f32.mrb[0].mxu0
      %v2004 = vadd.f32 %v1603, %v2003
      %v2005 = vpop.f32.mrb[0].mxu0
      %v2006 = vpop.f32.mrb[0].mxu0
      %v2007 = vadd.f32 %v1606, %v2006
      %v2008 = vpop.f32.mrb[0].mxu0
      %2009 = vmatprep.mubr.bf16.mxu0 0
      %2010 = vmatmul.mubr.bf16.gmra.mrb[0].mxu0 %v1349
      %v2011 = vpop.f32.mrb[0].mxu0
      %v2012 = vadd.f32 %v1611, %v2011
      %v2013 = vpop.f32.mrb[0].mxu0
      %v2014 = vpop.f32.mrb[0].mxu0
      %v2015 = vadd.f32 %v1614, %v2014
      %v2016 = vpop.f32.mrb[0].mxu0
      %2017 = vmatprep.mubr.bf16.mxu0 0
      %2018 = vmatmul.mubr.bf16.gmra.mrb[0].mxu0 %v1352
      %v2019 = vpop.f32.mrb[0].mxu0
      %v2020 = vadd.f32 %v1619, %v2019
      %v2021 = vpop.f32.mrb[0].mxu0
      %v2022 = vpop.f32.mrb[0].mxu0
      %v2023 = vadd.f32 %v1622, %v2022
      %v2024 = vpop.f32.mrb[0].mxu0
      %2025 = vmatprep.mubr.bf16.mxu0 0
      %2026 = vmatmul.mubr.bf16.gmra.mrb[0].mxu0 %v1355
      %v2027 = vpop.f32.mrb[0].mxu0
      %v2028 = vadd.f32 %v1627, %v2027
      %v2029 = vpop.f32.mrb[0].mxu0
      %v2030 = vpop.f32.mrb[0].mxu0
      %v2031 = vadd.f32 %v1630, %v2030
      %v2032 = vpop.f32.mrb[0].mxu0
      %2033 = vmatprep.mubr.bf16.mxu0 0
      %2034 = vmatmul.mubr.bf16.gmra.mrb[0].mxu0 %v1358
      %v2035 = vpop.f32.mrb[0].mxu0
      %v2036 = vadd.f32 %v1635, %v2035
      %v2037 = vpop.f32.mrb[0].mxu0
      %v2038 = vpop.f32.mrb[0].mxu0
      %v2039 = vadd.f32 %v1638, %v2038
      %v2040 = vpop.f32.mrb[0].mxu0
      %2041 = vmatprep.mubr.bf16.mxu0 0
      %2042 = vmatmul.mubr.bf16.gmra.mrb[0].mxu0 %v1361
      %v2043 = vpop.f32.mrb[0].mxu0
      %v2044 = vadd.f32 %v1643, %v2043
      %v2045 = vpop.f32.mrb[0].mxu0
      %v2046 = vpop.f32.mrb[0].mxu0
      %v2047 = vadd.f32 %v1646, %v2046
      %v2048 = vpop.f32.mrb[0].mxu0
      %2049 = vmatprep.mubr.bf16.mxu0 0
      %2050 = vmatmul.mubr.bf16.gmra.mrb[0].mxu0 %v1364
      %v2051 = vpop.f32.mrb[0].mxu0
      %v2052 = vadd.f32 %v1651, %v2051
      %v2053 = vpop.f32.mrb[0].mxu0
      %v2054 = vpop.f32.mrb[0].mxu0
      %v2055 = vadd.f32 %v1654, %v2054
      %v2056 = vpop.f32.mrb[0].mxu0
      %2057 = vmatprep.mubr.bf16.mxu0 0
      %2058 = vmatmul.mubr.bf16.gmra.mrb[0].mxu0 %v1367
      %v2059 = vpop.f32.mrb[0].mxu0
      %v2060 = vadd.f32 %v1659, %v2059
      %v2061 = vpop.f32.mrb[0].mxu0
      %v2062 = vpop.f32.mrb[0].mxu0
      %v2063 = vadd.f32 %v1662, %v2062
      %v2064 = vpop.f32.mrb[0].mxu0
      %2065 = vmatprep.mubr.bf16.mxu0 0
      %2066 = vmatmul.mubr.bf16.gmra.mrb[0].mxu0 %v1370
      %v2067 = vpop.f32.mrb[0].mxu0
      %v2068 = vadd.f32 %v1667, %v2067
      %v2069 = vpop.f32.mrb[0].mxu0
      %v2070 = vpop.f32.mrb[0].mxu0
      %v2071 = vadd.f32 %v1670, %v2070
      %v2072 = vpop.f32.mrb[0].mxu0
      %2073 = vmatprep.mubr.bf16.mxu0 0
      %2074 = vmatmul.mubr.bf16.gmra.mrb[0].mxu0 %v1373
      %v2075 = vpop.f32.mrb[0].mxu0
      %v2076 = vadd.f32 %v1675, %v2075
      %v2077 = vpop.f32.mrb[0].mxu0
      %v2078 = vpop.f32.mrb[0].mxu0
      %v2079 = vadd.f32 %v1678, %v2078
      %v2080 = vpop.f32.mrb[0].mxu0
      %2081 = vmatprep.mubr.bf16.mxu0 0
      %2082 = vmatmul.mubr.bf16.gmra.mrb[0].mxu0 %v1376
      %v2083 = vpop.f32.mrb[0].mxu0
      %v2084 = vadd.f32 %v1683, %v2083
      %v2085 = vpop.f32.mrb[0].mxu0
      %v2086 = vpop.f32.mrb[0].mxu0
      %v2087 = vadd.f32 %v1686, %v2086
      %v2088 = vpop.f32.mrb[0].mxu0
      %2089 = vmatprep.mubr.bf16.mxu0 0
      %2090 = vmatmul.mubr.bf16.gmra.mrb[0].mxu0 %v1379
      %v2091 = vpop.f32.mrb[0].mxu0
      %v2092 = vadd.f32 %v1691, %v2091
      %v2093 = vpop.f32.mrb[0].mxu0
      %v2094 = vpop.f32.mrb[0].mxu0
      %v2095 = vadd.f32 %v1694, %v2094
      %v2096 = vpop.f32.mrb[0].mxu0
      %2097 = vmatprep.mubr.bf16.mxu0 0
      %2098 = vmatmul.mubr.bf16.gmra.mrb[0].mxu0 %v1382
      %v2099 = vpop.f32.mrb[0].mxu0
      %v2100 = vadd.f32 %v1699, %v2099
      %v2101 = vpop.f32.mrb[0].mxu0
      %v2102 = vpop.f32.mrb[0].mxu0
      %v2103 = vadd.f32 %v1702, %v2102
      %v2104 = vpop.f32.mrb[0].mxu0
      %2105 = vmatprep.mubr.bf16.mxu0 0
      %2106 = vmatmul.mubr.bf16.gmra.mrb[0].mxu0 %v1385
      %v2107 = vpop.f32.mrb[0].mxu0
      %v2108 = vadd.f32 %v1707, %v2107
      %v2109 = vpop.f32.mrb[0].mxu0
      %v2110 = vpop.f32.mrb[0].mxu0
      %v2111 = vadd.f32 %v1710, %v2110
      %v2112 = vpop.f32.mrb[0].mxu0
      %2113 = vmatprep.mubr.bf16.mxu0 0
      %2114 = vmatmul.mubr.bf16.gmra.mrb[0].mxu0 %v1388
      %v2115 = vpop.f32.mrb[0].mxu0
      %v2116 = vadd.f32 %v1715, %v2115
      %v2117 = vpop.f32.mrb[0].mxu0
      %v2118 = vpop.f32.mrb[0].mxu0
      %v2119 = vadd.f32 %v1718, %v2118
      %v2120 = vpop.f32.mrb[0].mxu0
      %2121 = vmatprep.mubr.bf16.mxu0 0
      %2122 = vmatmul.mubr.bf16.gmra.mrb[0].mxu0 %v1391
      %v2123 = vpop.f32.mrb[0].mxu0
      %v2124 = vadd.f32 %v1723, %v2123
      %v2125 = vpop.f32.mrb[0].mxu0
      %v2126 = vpop.f32.mrb[0].mxu0
      %v2127 = vadd.f32 %v1726, %v2126
      %v2128 = vpop.f32.mrb[0].mxu0
      %2129 = vmatprep.mubr.bf16.mxu0 0
      %2130 = vmatmul.mubr.bf16.gmra.mrb[0].mxu0 %v1394
      %v2131 = vpop.f32.mrb[0].mxu0
      %v2132 = vadd.f32 %v1731, %v2131
      %v2133 = vpop.f32.mrb[0].mxu0
      %v2134 = vpop.f32.mrb[0].mxu0
      %v2135 = vadd.f32 %v1734, %v2134
      %v2136 = vpop.f32.mrb[0].mxu0
      %2137 = vmatprep.mubr.bf16.mxu0 0
      %2138 = vmatmul.mubr.bf16.gmra.mrb[0].mxu0 %v1397
      %v2139 = vpop.f32.mrb[0].mxu0
      %v2140 = vadd.f32 %v1739, %v2139
      %v2141 = vpop.f32.mrb[0].mxu0
      %v2142 = vpop.f32.mrb[0].mxu0
      %v2143 = vadd.f32 %v1742, %v2142
      %v2144 = vpop.f32.mrb[0].mxu0
      %2145 = vmatprep.mubr.bf16.mxu0 0
      %2146 = vmatmul.mubr.bf16.gmra.mrb[0].mxu0 %v1400
      %v2147 = vpop.f32.mrb[0].mxu0
      %v2148 = vadd.f32 %v1747, %v2147
      %v2149 = vpop.f32.mrb[0].mxu0
      %v2150 = vpop.f32.mrb[0].mxu0
      %v2151 = vadd.f32 %v1750, %v2150
      %v2152 = vpop.f32.mrb[0].mxu0
      %2153 = vmatprep.mubr.bf16.mxu0 0
      %2154 = vmatmul.mubr.bf16.gmra.mrb[0].mxu0 %v1403
      %v2155 = vpop.f32.mrb[0].mxu0
      %v2156 = vadd.f32 %v1755, %v2155
      %v2157 = vpop.f32.mrb[0].mxu0
      %v2158 = vpop.f32.mrb[0].mxu0
      %v2159 = vadd.f32 %v1758, %v2158
      %v2160 = vpop.f32.mrb[0].mxu0
      %2161 = vmatprep.mubr.bf16.mxu0 0
      %2162 = vmatmul.mubr.bf16.gmra.mrb[0].mxu0 %v1406
      %v2163 = vpop.f32.mrb[0].mxu0
      %v2164 = vadd.f32 %v1763, %v2163
      %v2165 = vpop.f32.mrb[0].mxu0
      %v2166 = vpop.f32.mrb[0].mxu0
      %v2167 = vadd.f32 %v1766, %v2166
      %v2168 = vpop.f32.mrb[0].mxu0
      %2169 = vmatprep.mubr.bf16.mxu0 0
      %2170 = vmatmul.mubr.bf16.gmra.mrb[0].mxu0 %v1409
      %v2171 = vpop.f32.mrb[0].mxu0
      %v2172 = vadd.f32 %v1771, %v2171
      %v2173 = vpop.f32.mrb[0].mxu0
      %v2174 = vpop.f32.mrb[0].mxu0
      %v2175 = vadd.f32 %v1774, %v2174
      %v2176 = vpop.f32.mrb[0].mxu0
      %2177 = vmatprep.mubr.bf16.mxu0 0
      %2178 = vmatmul.mubr.bf16.gmra.mrb[0].mxu0 %v1412
      %v2179 = vpop.f32.mrb[0].mxu0
      %v2180 = vadd.f32 %v1779, %v2179
      %v2181 = vpop.f32.mrb[0].mxu0
      %v2182 = vpop.f32.mrb[0].mxu0
      %v2183 = vadd.f32 %v1782, %v2182
      %v2184 = vpop.f32.mrb[0].mxu0
      %2185 = vmatprep.mubr.bf16.mxu0 0
      %2186 = vmatmul.mubr.bf16.gmra.mrb[0].mxu0 %v1415
      %v2187 = vpop.f32.mrb[0].mxu0
      %v2188 = vadd.f32 %v1787, %v2187
      %v2189 = vpop.f32.mrb[0].mxu0
      %v2190 = vpop.f32.mrb[0].mxu0
      %v2191 = vadd.f32 %v1790, %v2190
      %v2192 = vpop.f32.mrb[0].mxu0
      %2193 = vmatprep.mubr.bf16.mxu0 0
      %2194 = vmatmul.mubr.bf16.gmra.mrb[0].mxu0 %v1418
      %v2195 = vpop.f32.mrb[0].mxu0
      %v2196 = vadd.f32 %v1795, %v2195
      %v2197 = vpop.f32.mrb[0].mxu0
      %v2198 = vpop.f32.mrb[0].mxu0
      %v2199 = vadd.f32 %v1798, %v2198
      %v2200 = vpop.f32.mrb[0].mxu0
      %2201 = vmatprep.mubr.bf16.mxu0 0
      %2202 = vmatmul.mubr.bf16.gmra.mrb[0].mxu0 %v1421
      %v2203 = vpop.f32.mrb[0].mxu0
      %v2204 = vadd.f32 %v1803, %v2203
      %v2205 = vpop.f32.mrb[0].mxu0
      %v2206 = vpop.f32.mrb[0].mxu0
      %v2207 = vadd.f32 %v1806, %v2206
      %v2208 = vpop.f32.mrb[0].mxu0
      %2209 = vmatprep.mubr.bf16.mxu0 0
      %2210 = vmatmul.mubr.bf16.gmra.mrb[0].mxu0 %v1424
      %v2211 = vpop.f32.mrb[0].mxu0
      %v2212 = vadd.f32 %v1811, %v2211
      %v2213 = vpop.f32.mrb[0].mxu0
      %v2214 = vpop.f32.mrb[0].mxu0
      %v2215 = vadd.f32 %v1814, %v2214
      %v2216 = vpop.f32.mrb[0].mxu0
      %2217 = vmatprep.mubr.bf16.mxu0 0
      %2218 = vmatmul.mubr.bf16.gmra.mrb[0].mxu0 %v1427
      %v2219 = vpop.f32.mrb[0].mxu0
      %v2220 = vadd.f32 %v1819, %v2219
      %v2221 = vpop.f32.mrb[0].mxu0
      %v2222 = vpop.f32.mrb[0].mxu0
      %v2223 = vadd.f32 %v1822, %v2222
      %v2224 = vpop.f32.mrb[0].mxu0
      %2225 = vmatprep.mubr.bf16.mxu0 0
      %2226 = vmatmul.mubr.bf16.gmra.mrb[0].mxu0 %v1430
      %v2227 = vpop.f32.mrb[0].mxu0
      %v2228 = vadd.f32 %v1827, %v2227
      %v2229 = vpop.f32.mrb[0].mxu0
      %v2230 = vpop.f32.mrb[0].mxu0
      %v2231 = vadd.f32 %v1830, %v2230
      %v2232 = vpop.f32.mrb[0].mxu0
      %2233 = vdwg.mxu0
      %v2234 = vmax.f32 %v1868, 0.0
      %v2235 = vmax.f32 %v1871, 0.0
      %v2236 = vmax.f32 %v1876, 0.0
      %v2237 = vmax.f32 %v1879, 0.0
      %v2238 = vmax.f32 %v1884, 0.0
      %v2239 = vmax.f32 %v1887, 0.0
      %v2240 = vmax.f32 %v1892, 0.0
      %v2241 = vmax.f32 %v1895, 0.0
      %v2242 = vmax.f32 %v1900, 0.0
      %v2243 = vmax.f32 %v1903, 0.0
      %v2244 = vmax.f32 %v1908, 0.0
      %v2245 = vmax.f32 %v1911, 0.0
      %v2246 = vmax.f32 %v1916, 0.0
      %v2247 = vmax.f32 %v1919, 0.0
      %v2248 = vmax.f32 %v1924, 0.0
      %v2249 = vmax.f32 %v1927, 0.0
      %v2250 = vmax.f32 %v1932, 0.0
      %v2251 = vmax.f32 %v1935, 0.0
      %v2252 = vmax.f32 %v1940, 0.0
      %v2253 = vmax.f32 %v1943, 0.0
      %v2254 = vmax.f32 %v1948, 0.0
      %v2255 = vmax.f32 %v1951, 0.0
      %v2256 = vmax.f32 %v1956, 0.0
      %v2257 = vmax.f32 %v1959, 0.0
      %v2258 = vmax.f32 %v1964, 0.0
      %v2259 = vmax.f32 %v1967, 0.0
      %v2260 = vmax.f32 %v1972, 0.0
      %v2261 = vmax.f32 %v1975, 0.0
      %v2262 = vmax.f32 %v1980, 0.0
      %v2263 = vmax.f32 %v1983, 0.0
      %v2264 = vmax.f32 %v1988, 0.0
      %v2265 = vmax.f32 %v1991, 0.0
      %v2266 = vmax.f32 %v1996, 0.0
      %v2267 = vmax.f32 %v1999, 0.0
      %v2268 = vmax.f32 %v2004, 0.0
      %v2269 = vmax.f32 %v2007, 0.0
      %v2270 = vmax.f32 %v2012, 0.0
      %v2271 = vmax.f32 %v2015, 0.0
      %v2272 = vmax.f32 %v2020, 0.0
      %v2273 = vmax.f32 %v2023, 0.0
      %v2274 = vmax.f32 %v2028, 0.0
      %v2275 = vmax.f32 %v2031, 0.0
      %v2276 = vmax.f32 %v2036, 0.0
      %v2277 = vmax.f32 %v2039, 0.0
      %v2278 = vmax.f32 %v2044, 0.0
      %v2279 = vmax.f32 %v2047, 0.0
      %v2280 = vmax.f32 %v2052, 0.0
      %v2281 = vmax.f32 %v2055, 0.0
      %v2282 = vmax.f32 %v2060, 0.0
      %v2283 = vmax.f32 %v2063, 0.0
      %v2284 = vmax.f32 %v2068, 0.0
      %v2285 = vmax.f32 %v2071, 0.0
      %v2286 = vmax.f32 %v2076, 0.0
      %v2287 = vmax.f32 %v2079, 0.0
      %v2288 = vmax.f32 %v2084, 0.0
      %v2289 = vmax.f32 %v2087, 0.0
      %v2290 = vmax.f32 %v2092, 0.0
      %v2291 = vmax.f32 %v2095, 0.0
      %v2292 = vmax.f32 %v2100, 0.0
      %v2293 = vmax.f32 %v2103, 0.0
      %v2294 = vmax.f32 %v2108, 0.0
      %v2295 = vmax.f32 %v2111, 0.0
      %v2296 = vmax.f32 %v2116, 0.0
      %v2297 = vmax.f32 %v2119, 0.0
      %v2298 = vmax.f32 %v2124, 0.0
      %v2299 = vmax.f32 %v2127, 0.0
      %v2300 = vmax.f32 %v2132, 0.0
      %v2301 = vmax.f32 %v2135, 0.0
      %v2302 = vmax.f32 %v2140, 0.0
      %v2303 = vmax.f32 %v2143, 0.0
      %v2304 = vmax.f32 %v2148, 0.0
      %v2305 = vmax.f32 %v2151, 0.0
      %v2306 = vmax.f32 %v2156, 0.0
      %v2307 = vmax.f32 %v2159, 0.0
      %v2308 = vmax.f32 %v2164, 0.0
      %v2309 = vmax.f32 %v2167, 0.0
      %v2310 = vmax.f32 %v2172, 0.0
      %v2311 = vmax.f32 %v2175, 0.0
      %v2312 = vmax.f32 %v2180, 0.0
      %v2313 = vmax.f32 %v2183, 0.0
      %v2314 = vmax.f32 %v2188, 0.0
      %v2315 = vmax.f32 %v2191, 0.0
      %v2316 = vmax.f32 %v2196, 0.0
      %v2317 = vmax.f32 %v2199, 0.0
      %v2318 = vmax.f32 %v2204, 0.0
      %v2319 = vmax.f32 %v2207, 0.0
      %v2320 = vmax.f32 %v2212, 0.0
      %v2321 = vmax.f32 %v2215, 0.0
      %v2322 = vmax.f32 %v2220, 0.0
      %v2323 = vmax.f32 %v2223, 0.0
      %v2324 = vmax.f32 %v2228, 0.0
      %v2325 = vmax.f32 %v2231, 0.0
      %2326 = vst.msk [vmem:[%s265] sm:$0xff] %vm1293, %v2234
      %2327 = vst.msk [vmem:[%s265 + $0x8] sm:$0xff] %vm1293, %v2235
      %2328 = vst.msk [vmem:[%s265 + $0x10] sm:$0xff] %vm1293, %v2236
      %2329 = vst.msk [vmem:[%s265 + $0x18] sm:$0xff] %vm1293, %v2237
      %2330 = vst.msk [vmem:[%s265 + $0x20] sm:$0xff] %vm1293, %v2238
      %2331 = vst.msk [vmem:[%s265 + $0x28] sm:$0xff] %vm1293, %v2239
      %2332 = vst.msk [vmem:[%s265 + $0x30] sm:$0xff] %vm1293, %v2240
      %2333 = vst.msk [vmem:[%s265 + $0x38] sm:$0xff] %vm1293, %v2241
      %2334 = vst.msk [vmem:[%s265 + $0x40] sm:$0xff] %vm1293, %v2242
      %2335 = vst.msk [vmem:[%s265 + $0x48] sm:$0xff] %vm1293, %v2243
      %2336 = vst.msk [vmem:[%s265 + $0x50] sm:$0xff] %vm1293, %v2244
      %2337 = vst.msk [vmem:[%s265 + $0x58] sm:$0xff] %vm1293, %v2245
      %2338 = vst.msk [vmem:[%s265 + $0x60] sm:$0xff] %vm1293, %v2246
      %2339 = vst.msk [vmem:[%s265 + $0x68] sm:$0xff] %vm1293, %v2247
      %2340 = vst.msk [vmem:[%s265 + $0x70] sm:$0xff] %vm1293, %v2248
      %2341 = vst.msk [vmem:[%s265 + $0x78] sm:$0xff] %vm1293, %v2249
      %2342 = vst.msk [vmem:[%s265 + $0x80] sm:$0xff] %vm1293, %v2250
      %2343 = vst.msk [vmem:[%s265 + $0x88] sm:$0xff] %vm1293, %v2251
      %2344 = vst.msk [vmem:[%s265 + $0x90] sm:$0xff] %vm1293, %v2252
      %2345 = vst.msk [vmem:[%s265 + $0x98] sm:$0xff] %vm1293, %v2253
      %2346 = vst.msk [vmem:[%s265 + $0xa0] sm:$0xff] %vm1293, %v2254
      %2347 = vst.msk [vmem:[%s265 + $0xa8] sm:$0xff] %vm1293, %v2255
      %2348 = vst.msk [vmem:[%s265 + $0xb0] sm:$0xff] %vm1293, %v2256
      %2349 = vst.msk [vmem:[%s265 + $0xb8] sm:$0xff] %vm1293, %v2257
      %2350 = vst.msk [vmem:[%s265 + $0xc0] sm:$0xff] %vm1293, %v2258
      %2351 = vst.msk [vmem:[%s265 + $0xc8] sm:$0xff] %vm1293, %v2259
      %2352 = vst.msk [vmem:[%s265 + $0xd0] sm:$0xff] %vm1293, %v2260
      %2353 = vst.msk [vmem:[%s265 + $0xd8] sm:$0xff] %vm1293, %v2261
      %2354 = vst.msk [vmem:[%s265 + $0xe0] sm:$0xff] %vm1293, %v2262
      %2355 = vst.msk [vmem:[%s265 + $0xe8] sm:$0xff] %vm1293, %v2263
      %2356 = vst.msk [vmem:[%s265 + $0xf0] sm:$0xff] %vm1293, %v2264
      %2357 = vst.msk [vmem:[%s265 + $0xf8] sm:$0xff] %vm1293, %v2265
      %2358 = vst.msk [vmem:[%s265 + $0x100] sm:$0xff] %vm1293, %v2266
      %2359 = vst.msk [vmem:[%s265 + $0x108] sm:$0xff] %vm1293, %v2267
      %2360 = vst.msk [vmem:[%s265 + $0x110] sm:$0xff] %vm1293, %v2268
      %2361 = vst.msk [vmem:[%s265 + $0x118] sm:$0xff] %vm1293, %v2269
      %2362 = vst.msk [vmem:[%s265 + $0x120] sm:$0xff] %vm1293, %v2270
      %2363 = vst.msk [vmem:[%s265 + $0x128] sm:$0xff] %vm1293, %v2271
      %2364 = vst.msk [vmem:[%s265 + $0x130] sm:$0xff] %vm1293, %v2272
      %2365 = vst.msk [vmem:[%s265 + $0x138] sm:$0xff] %vm1293, %v2273
      %2366 = vst.msk [vmem:[%s265 + $0x140] sm:$0xff] %vm1293, %v2274
      %2367 = vst.msk [vmem:[%s265 + $0x148] sm:$0xff] %vm1293, %v2275
      %2368 = vst.msk [vmem:[%s265 + $0x150] sm:$0xff] %vm1293, %v2276
      %2369 = vst.msk [vmem:[%s265 + $0x158] sm:$0xff] %vm1293, %v2277
      %2370 = vst.msk [vmem:[%s265 + $0x160] sm:$0xff] %vm1293, %v2278
      %2371 = vst.msk [vmem:[%s265 + $0x168] sm:$0xff] %vm1293, %v2279
      %2372 = vst.msk [vmem:[%s265 + $0x170] sm:$0xff] %vm1293, %v2280
      %2373 = vst.msk [vmem:[%s265 + $0x178] sm:$0xff] %vm1293, %v2281
      %2374 = vst.msk [vmem:[%s265 + $0x180] sm:$0xff] %vm1293, %v2282
      %2375 = vst.msk [vmem:[%s265 + $0x188] sm:$0xff] %vm1293, %v2283
      %2376 = vst.msk [vmem:[%s265 + $0x190] sm:$0xff] %vm1293, %v2284
      %2377 = vst.msk [vmem:[%s265 + $0x198] sm:$0xff] %vm1293, %v2285
      %2378 = vst.msk [vmem:[%s265 + $0x1a0] sm:$0xff] %vm1293, %v2286
      %2379 = vst.msk [vmem:[%s265 + $0x1a8] sm:$0xff] %vm1293, %v2287
      %2380 = vst.msk [vmem:[%s265 + $0x1b0] sm:$0xff] %vm1293, %v2288
      %2381 = vst.msk [vmem:[%s265 + $0x1b8] sm:$0xff] %vm1293, %v2289
      %2382 = vst.msk [vmem:[%s265 + $0x1c0] sm:$0xff] %vm1293, %v2290
      %2383 = vst.msk [vmem:[%s265 + $0x1c8] sm:$0xff] %vm1293, %v2291
      %2384 = vst.msk [vmem:[%s265 + $0x1d0] sm:$0xff] %vm1293, %v2292
      %2385 = vst.msk [vmem:[%s265 + $0x1d8] sm:$0xff] %vm1293, %v2293
      %2386 = vst.msk [vmem:[%s265 + $0x1e0] sm:$0xff] %vm1293, %v2294
      %2387 = vst.msk [vmem:[%s265 + $0x1e8] sm:$0xff] %vm1293, %v2295
      %2388 = vst.msk [vmem:[%s265 + $0x1f0] sm:$0xff] %vm1293, %v2296
      %2389 = vst.msk [vmem:[%s265 + $0x1f8] sm:$0xff] %vm1293, %v2297
      %2390 = vst.msk [vmem:[%s265 + $0x200] sm:$0xff] %vm1293, %v2298
      %2391 = vst.msk [vmem:[%s265 + $0x208] sm:$0xff] %vm1293, %v2299
      %2392 = vst.msk [vmem:[%s265 + $0x210] sm:$0xff] %vm1293, %v2300
      %2393 = vst.msk [vmem:[%s265 + $0x218] sm:$0xff] %vm1293, %v2301
      %2394 = vst.msk [vmem:[%s265 + $0x220] sm:$0xff] %vm1293, %v2302
      %2395 = vst.msk [vmem:[%s265 + $0x228] sm:$0xff] %vm1293, %v2303
      %2396 = vst.msk [vmem:[%s265 + $0x230] sm:$0xff] %vm1293, %v2304
      %2397 = vst.msk [vmem:[%s265 + $0x238] sm:$0xff] %vm1293, %v2305
      %2398 = vst.msk [vmem:[%s265 + $0x240] sm:$0xff] %vm1293, %v2306
      %2399 = vst.msk [vmem:[%s265 + $0x248] sm:$0xff] %vm1293, %v2307
      %2400 = vst.msk [vmem:[%s265 + $0x250] sm:$0xff] %vm1293, %v2308
      %2401 = vst.msk [vmem:[%s265 + $0x258] sm:$0xff] %vm1293, %v2309
      %2402 = vst.msk [vmem:[%s265 + $0x260] sm:$0xff] %vm1293, %v2310
      %2403 = vst.msk [vmem:[%s265 + $0x268] sm:$0xff] %vm1293, %v2311
      %2404 = vst.msk [vmem:[%s265 + $0x270] sm:$0xff] %vm1293, %v2312
      %2405 = vst.msk [vmem:[%s265 + $0x278] sm:$0xff] %vm1293, %v2313
      %2406 = vst.msk [vmem:[%s265 + $0x280] sm:$0xff] %vm1293, %v2314
      %2407 = vst.msk [vmem:[%s265 + $0x288] sm:$0xff] %vm1293, %v2315
      %2408 = vst.msk [vmem:[%s265 + $0x290] sm:$0xff] %vm1293, %v2316
      %2409 = vst.msk [vmem:[%s265 + $0x298] sm:$0xff] %vm1293, %v2317
      %2410 = vst.msk [vmem:[%s265 + $0x2a0] sm:$0xff] %vm1293, %v2318
      %2411 = vst.msk [vmem:[%s265 + $0x2a8] sm:$0xff] %vm1293, %v2319
      %2412 = vst.msk [vmem:[%s265 + $0x2b0] sm:$0xff] %vm1293, %v2320
      %2413 = vst.msk [vmem:[%s265 + $0x2b8] sm:$0xff] %vm1293, %v2321
      %2414 = vst.msk [vmem:[%s265 + $0x2c0] sm:$0xff] %vm1293, %v2322
      %2415 = vst.msk [vmem:[%s265 + $0x2c8] sm:$0xff] %vm1293, %v2323
      %2416 = vst.msk [vmem:[%s265 + $0x2d0] sm:$0xff] %vm1293, %v2324
      %2417 = vst.msk [vmem:[%s265 + $0x2d8] sm:$0xff] %vm1293, %v2325
      %s2418 = smul.u32 92, %s19
      %p2419 = scmp.lt.s32.totalorder %s2418, 183
      %s2420 = scalar_select %p2419, %s2418, 183
      %p2421 = scmp.lt.s32.totalorder %s20, 0
      %s2422 = scalar_select %p2421, %s20, 0
      %s2423 = sadd.s32 %s2422, %s2420
      %s2424 = smul.addr %s2423, 8
      %s2425 = scalar_lea.vmem %s3, %s2424
      // Predicated region
      $region33: #{forward.12} parent=31 // pred_check
        %p2426 = pneg %p135
      $region34: #{forward.12} parent=31 // pred_check_branch
        %2428 = sbr.rel (%p2426) target = $region36
      $region35: #{forward.12} parent=31 // pred_region
        %s2429 = smul.u32 92, %s19
      $region36: #{forward.12} parent=31 // pred_fallthru
        _
    $region32: #{forward.12} parent=5 // pred_fallthru
      _
    %p2430 = scmp.le.s32.totalorder 2, %s9
    // Predicated region
    $region37: #{forward.12} parent=5 // pred_check
      %p2431 = pneg %p2430
    $region38: #{forward.12} parent=5 // pred_check_branch
      %2433 = sbr.rel (%p2431) target = $region40
    $region39: #{forward.12} parent=5 // pred_region
      %s2434 = ssub.s32 %s9, 2
      // Predicated region
      $region41: #{forward.12} parent=39 // pred_check
        %p2435 = pneg %p141
      $region42: #{forward.12} parent=39 // pred_check_branch
        %2437 = sbr.rel (%p2435) target = $region44
      $region43: #{forward.12} parent=39 // pred_region
        %s2438 = smul.u32 92, %s22
        %p2439 = scmp.lt.s32.totalorder %s2438, 183
        %s2440 = scalar_select %p2439, %s2438, 183
        %p2441 = scmp.lt.s32.totalorder %s23, 0
        %s2442 = scalar_select %p2441, %s23, 0
        %s2443 = sadd.s32 %s2442, %s2440
        %s2444 = smul.addr %s2443, 8
        %s2445 = scalar_lea.vmem %s3, %s2444
      $region44: #{forward.12} parent=39 // pred_fallthru
        _
    $region40: #{forward.12} parent=5 // pred_fallthru
      _
  $region6: #{forward.12} parent=0 // loop_footer
    %s13 = sadd.s32 1, %s9
  $region7: #{forward.12} parent=0 // loop_footer_branch
    %8 = sbr.rel target = $region3
  $region8: #{forward.12} parent=0 // loop_exit
    _

// kernel: tile.33
$region0: #{tile.33}
  #allocation0 [shape = 's32[1]{0}', space=sflag, size = 0x4, scoped, tag = 'scoped memory for tile.33']
  %s0 = inlined_call_operand.vmem [shape: f32[32], index: 0, kind: input, shape index: {}]
  %s1 = inlined_call_operand.vmem [shape: f32[26,32], index: 1, kind: output, shape index: {}]
  // Predicated region
  $region2: #{tile.33} parent=0 // pred_check
    _
  $region3: #{tile.33} parent=0 // pred_check_branch
    %3 = sbr.rel (0) target = $region5
  $region4: #{tile.33} parent=0 // pred_region
    _
  $region5: #{tile.33} parent=0 // pred_fallthru
    _
  %v4 = vld [vmem:[%s0] ss:$0 sm:$0xff]
  %5 = vst [vmem:[%s1] sm:$0xff] %v4
  %s6 = scalar_lea.vmem %s1, 8
  %7 = vst [vmem:[%s6] sm:$0xff] %v4
  %s8 = scalar_lea.vmem %s1, 16
  %9 = vst [vmem:[%s8] sm:$0xff] %v4
  %s10 = scalar_lea.vmem %s1, 24
  %11 = vst [vmem:[%s10] sm:$0xff] %v4

// kernel: tile.34
$region0: #{tile.34}
  %s0 = inlined_call_operand.vmem [shape: f32[26,32], index: 0, kind: input, shape index: {}]
  %s1 = inlined_call_operand.vmem [shape: f32[1,832], index: 1, kind: output, shape index: {}]
  $region1: #{tile.34} parent=0
    #allocation0 [shape = 'u8[28672]{0}', space=vmem, size = 0x7000, scoped, tag = 'scoped mem for output reshape']
    %v2 = vld [vmem:[%s0] ss:$4 sm:$0x7f]
    %vm3 = vcmask 261120
    %4 = vst.msk [vmem:[#allocation0] ss:$8 sm:$0xf] %vm3, %v2
    %5 = vst.msk [vmem:[#allocation0] ss:$8 sm:$0x70] %vm3, %v2
    %s6 = scalar_lea.vmem %s0, 3
    %v7 = vld [vmem:[%s6] ss:$4 sm:$0x3f]
    %8 = vrot.lane.b32.xlu0 %v7, 96
    %v9 = vpop.permute.xlu0 %8
    %vm10 = vcmask 1048320
    %11 = vst.msk [vmem:[#allocation0] ss:$8 sm:$0xf] %vm10, %v9
    %12 = vst.msk [vmem:[#allocation0] ss:$8 sm:$0x30] %vm10, %v9
    %s13 = scalar_lea.vmem %s0, 2
    %v14 = vld [vmem:[%s13] ss:$4 sm:$0x3f]
    %15 = vrot.lane.b32.xlu0 %v14, 64
    %v16 = vpop.permute.xlu0 %15
    %vm17 = vcmask 785920
    %18 = vst.msk [vmem:[#allocation0] ss:$8 sm:$0xf] %vm17, %v16
    %19 = vst.msk [vmem:[#allocation0] ss:$8 sm:$0x30] %vm17, %v16
    %s20 = scalar_lea.vmem %s0, 1
    %v21 = vld [vmem:[%s20] ss:$4 sm:$0x7f]
    %22 = vrot.lane.b32.xlu0 %v21, 32
    %v23 = vpop.permute.xlu0 %22
    %vm24 = vcmask 523520
    %25 = vst.msk [vmem:[#allocation0] ss:$8 sm:$0xf] %vm24, %v23
    %26 = vst.msk [vmem:[#allocation0] ss:$8 sm:$0x70] %vm24, %v23
    %s28 = sshllo.u32 0, 1
    %v30 = vld [vmem:[#allocation0] sm:%s28]
    %s31 = sshllo.u32 0, 1
    %32 = vst [vmem:[%s1] sm:%s31] %v30
    %s33 = scalar_lea.vmem [#allocation0], 8
    %v34 = vld [vmem:[%s33] sm:%s28]
    %s35 = sshllo.u32 0, 1
    %s36 = scalar_lea.vmem %s1, 1
    %37 = vst [vmem:[%s36] sm:%s35] %v34
    %s38 = scalar_lea.vmem [#allocation0], 16
    %v39 = vld [vmem:[%s38] sm:%s28]
    %s40 = sshllo.u32 0, 1
    %s41 = smul.addr 1, 2
    %s42 = scalar_lea.vmem %s1, %s41
    %43 = vst [vmem:[%s42] sm:%s40] %v39
    %s44 = scalar_lea.vmem [#allocation0], 24
    %v45 = vld [vmem:[%s44] sm:%s28]
    %s46 = sshllo.u32 0, 1
    %s47 = smul.addr 1, 3
    %s48 = scalar_lea.vmem %s1, %s47
    %49 = vst [vmem:[%s48] sm:%s46] %v45
    %s50 = scalar_lea.vmem [#allocation0], 32
    %v51 = vld [vmem:[%s50] sm:%s28]
    %s52 = sshllo.u32 0, 1
    %s53 = smul.addr 1, 4
    %s54 = scalar_lea.vmem %s1, %s53
    %55 = vst [vmem:[%s54] sm:%s52] %v51
    %s56 = scalar_lea.vmem [#allocation0], 40
    %v57 = vld [vmem:[%s56] sm:%s28]
    %s58 = sshllo.u32 0, 1
    %s59 = smul.addr 1, 5
    %s60 = scalar_lea.vmem %s1, %s59
    %61 = vst [vmem:[%s60] sm:%s58] %v57
    %s62 = scalar_lea.vmem [#allocation0], 48
    %v63 = vld [vmem:[%s62] sm:%s28]
    %s64 = sshllo.u32 0, 1
    %s65 = smul.addr 1, 6
    %s66 = scalar_lea.vmem %s1, %s65
    %67 = vst [vmem:[%s66] sm:%s64] %v63

// kernel: forward.13
$region0: #{forward.13}
  #allocation0 [shape = 'u32[]', space=smem, size = 0x4, offset = 0x4, fixed_abs, tag = 'smem constant byte address 0x4 - core index']
  #allocation1 [shape = 'u32[144,128]{1,0:T(1,128)}', space=vmem, size = 0x12000, scoped, tag = 'internal scratch']
  %s0 = inlined_call_operand.vmem [shape: f32[2,27,864], index: 0, kind: input, shape index: {}]
  %s1 = inlined_call_operand.vmem [shape: f32[1,832], index: 1, kind: input, shape index: {}]
  %s2 = inlined_call_operand.vmem [shape: f32[1,832], index: 2, kind: input, shape index: {}]
  %s3 = inlined_call_operand.vmem [shape: f32[2,26,832], index: 3, kind: output, shape index: {}]
  %s4 = sld [smem:[#allocation0]]
  $region45: #{forward.13} parent=0
    _
  %s6 = ssub.s32 1, %s4
  %s7 = scalar_select 0, %s6, %s4
  loop: start=0, step=1, limit=4
  $region2: #{forward.13} parent=0 // loop_pre_header
    _
  $region3: #{forward.13} parent=0 // loop_header
    %s9 = sphi 0, %s13
    %p10 = scmp.ge.s32.totalorder %s9, 4
    %s19 = sphi 0, %s21
    %s22 = sphi 0, %s19
    %s23 = sphi 0, %s22
    %s39 = sphi 0, %s23
    %s43 = sphi 0, %s43
    %s45 = sphi 0, %s43
    %s46 = sphi 0, %s45
    %s60 = sphi 0, %s46
    %s64 = sphi 0, %s64
    %s66 = sphi 0, %s64
    %s67 = sphi 0, %s66
    %s81 = sphi 0, %s67
    %s87 = sphi 0, %s89
    %s90 = sphi 0, %s87
    %s91 = sphi 0, %s90
    %s107 = sphi 0, %s91
  $region4: #{forward.13} parent=0 // loop_header_branch
    %12 = sbr.rel (%p10) target = $region8
  $region5: #{forward.13} parent=0 // loop_body
    %s14 = ssub.s32 %s9, 1
    %s15 = ssub.s32 %s9, 2
    %s16 = sadd.s32 %s9, 1
    %s17 = ssub.s32 %s9, %s16
    %p18 = scmp.eq.s32.totalorder %s17, 0
    %s20 = sadd.s32 %s19, 1
    %s21 = scalar_select %p18, %s19, %s20
    %p24 = pneg %p18
    %p25 = scmp.eq.s32.totalorder %s9, 1
    %p26 = por %p24, %p25
    %p27 = scmp.ne.s32.totalorder %s19, %s22
    %p28 = scmp.eq.s32.totalorder %s9, 0
    %p29 = por %p27, %p28
    %p30 = scmp.ne.s32.totalorder %s19, %s22
    %p31 = scmp.eq.s32.totalorder %s14, 1
    %p32 = por %p30, %p31
    %p33 = scmp.ne.s32.totalorder %s22, %s23
    %p34 = scmp.eq.s32.totalorder %s14, 0
    %p35 = por %p33, %p34
    %p36 = scmp.ne.s32.totalorder %s22, %s23
    %p37 = scmp.eq.s32.totalorder %s15, 1
    %p38 = por %p36, %p37
    %p40 = scmp.ne.s32.totalorder %s23, %s39
    %p41 = scmp.eq.s32.totalorder %s15, 0
    %p42 = por %p40, %p41
    %s44 = sadd.s32 %s43, 1
    %p47 = scmp.eq.s32.totalorder %s9, 1
    %p48 = scmp.ne.s32.totalorder %s43, %s45
    %p49 = scmp.eq.s32.totalorder %s9, 0
    %p50 = por %p48, %p49
    %p51 = scmp.ne.s32.totalorder %s43, %s45
    %p52 = scmp.eq.s32.totalorder %s14, 1
    %p53 = por %p51, %p52
    %p54 = scmp.ne.s32.totalorder %s45, %s46
    %p55 = scmp.eq.s32.totalorder %s14, 0
    %p56 = por %p54, %p55
    %p57 = scmp.ne.s32.totalorder %s45, %s46
    %p58 = scmp.eq.s32.totalorder %s15, 1
    %p59 = por %p57, %p58
    %p61 = scmp.ne.s32.totalorder %s46, %s60
    %p62 = scmp.eq.s32.totalorder %s15, 0
    %p63 = por %p61, %p62
    %s65 = sadd.s32 %s64, 1
    %p68 = scmp.eq.s32.totalorder %s9, 1
    %p69 = scmp.ne.s32.totalorder %s64, %s66
    %p70 = scmp.eq.s32.totalorder %s9, 0
    %p71 = por %p69, %p70
    %p72 = scmp.ne.s32.totalorder %s64, %s66
    %p73 = scmp.eq.s32.totalorder %s14, 1
    %p74 = por %p72, %p73
    %p75 = scmp.ne.s32.totalorder %s66, %s67
    %p76 = scmp.eq.s32.totalorder %s14, 0
    %p77 = por %p75, %p76
    %p78 = scmp.ne.s32.totalorder %s66, %s67
    %p79 = scmp.eq.s32.totalorder %s15, 1
    %p80 = por %p78, %p79
    %p82 = scmp.ne.s32.totalorder %s67, %s81
    %p83 = scmp.eq.s32.totalorder %s15, 0
    %p84 = por %p82, %p83
    %s85 = ssub.s32 %s9, %s16
    %p86 = scmp.eq.s32.totalorder %s85, 0
    %s88 = sadd.s32 %s87, 1
    %s89 = scalar_select %p86, %s87, %s88
    %p92 = pneg %p86
    %p93 = scmp.eq.s32.totalorder %s9, 1
    %p94 = por %p92, %p93
    %p95 = scmp.ne.s32.totalorder %s87, %s90
    %p96 = scmp.eq.s32.totalorder %s9, 0
    %p97 = por %p95, %p96
    %p98 = scmp.ne.s32.totalorder %s87, %s90
    %p99 = scmp.eq.s32.totalorder %s14, 1
    %p100 = por %p98, %p99
    %p101 = scmp.ne.s32.totalorder %s90, %s91
    %p102 = scmp.eq.s32.totalorder %s14, 0
    %p103 = por %p101, %p102
    %p104 = scmp.ne.s32.totalorder %s90, %s91
    %p105 = scmp.eq.s32.totalorder %s15, 1
    %p106 = por %p104, %p105
    %p108 = scmp.ne.s32.totalorder %s91, %s107
    %p109 = scmp.eq.s32.totalorder %s15, 0
    %p110 = por %p108, %p109
    %p111 = scmp.le.s32.totalorder 1, %s9
    %p112 = scmp.lt.s32.totalorder %s9, 3
    %p113 = pnand %p111, %p112
    %p114 = pneg %p113
    // Predicated region
    $region9: #{forward.13} parent=5 // pred_check
      _
    $region10: #{forward.13} parent=5 // pred_check_branch
      %116 = sbr.rel (%p113) target = $region12
    $region11: #{forward.13} parent=5 // pred_region
      %s117 = ssub.s32 %s9, 1
      // Predicated region
      $region13: #{forward.13} parent=11 // pred_check
        %p118 = pneg %p56
      $region14: #{forward.13} parent=11 // pred_check_branch
        %120 = sbr.rel (%p118) target = $region16
      $region15: #{forward.13} parent=11 // pred_region
        _
      $region16: #{forward.13} parent=11 // pred_fallthru
        _
      // Predicated region
      $region17: #{forward.13} parent=11 // pred_check
        %p121 = pneg %p77
      $region18: #{forward.13} parent=11 // pred_check_branch
        %123 = sbr.rel (%p121) target = $region20
      $region19: #{forward.13} parent=11 // pred_region
        _
      $region20: #{forward.13} parent=11 // pred_fallthru
        _
    $region12: #{forward.13} parent=5 // pred_fallthru
      _
    %p124 = scmp.lt.s32.totalorder %s9, 2
    // Predicated region
    $region21: #{forward.13} parent=5 // pred_check
      %p125 = pneg %p124
    $region22: #{forward.13} parent=5 // pred_check_branch
      %127 = sbr.rel (%p125) target = $region24
    $region23: #{forward.13} parent=5 // pred_region
      // Predicated region
      $region25: #{forward.13} parent=23 // pred_check
        %p128 = pneg %p29
      $region26: #{forward.13} parent=23 // pred_check_branch
        %130 = sbr.rel (%p128) target = $region28
      $region27: #{forward.13} parent=23 // pred_region
        %p131 = scmp.lt.s32.totalorder %s9, 1
        %s132 = scalar_select %p131, %s9, 1
        %s133 = smul.addr %s132, 28
        %s134 = smul.addr %s133, 8
        %s135 = scalar_lea.vmem %s0, %s134
      $region28: #{forward.13} parent=23 // pred_fallthru
        _
    $region24: #{forward.13} parent=5 // pred_fallthru
      _
    %p136 = scmp.le.s32.totalorder 1, %s9
    %p137 = scmp.lt.s32.totalorder %s9, 3
    %p138 = pnand %p136, %p137
    %p139 = pneg %p138
    // Predicated region
    $region29: #{forward.13} parent=5 // pred_check
      _
    $region30: #{forward.13} parent=5 // pred_check_branch
      %141 = sbr.rel (%p138) target = $region32
    $region31: #{forward.13} parent=5 // pred_region
      %s142 = ssub.s32 %s9, 1
      %p143 = scmp.lt.s32.totalorder %s14, 1
      %s144 = scalar_select %p143, %s14, 1
      %s145 = smul.addr %s144, 28
      %s146 = smul.addr %s145, 8
      %s147 = scalar_lea.vmem %s0, %s146
      %p148 = pneg %p35
      %p149 = pneg %p32
      %p150 = pneg %p56
      %p151 = pneg %p53
      %p152 = pneg %p77
      %p153 = pneg %p74
      %p154 = pneg %p103
      %p155 = pneg %p100
      %p156 = scmp.lt.s32.totalorder %s14, 1
      %s157 = scalar_select %p156, %s14, 1
      %s158 = smul.addr %s157, 28
      %s159 = smul.addr %s158, 8
      %s160 = scalar_lea.vmem %s3, %s159
      %p161 = scmp.lt.s32.totalorder %s14, 1
      %s162 = scalar_select %p161, %s14, 1
      %s163 = smul.addr %s162, 28
      %s164 = smul.addr %s163, 8
      %s165 = scalar_lea.vmem %s0, %s164
      %p166 = scmp.lt.s32.totalorder %s14, 1
      %s167 = scalar_select %p166, %s14, 1
      %s168 = smul.addr %s167, 28
      %s169 = smul.addr %s168, 8
      %s170 = scalar_lea.vmem %s3, %s169
      %v171 = vld [vmem:[%s165] sm:$0xff]
      %v172 = vld [vmem:[%s165 + $0x8] sm:$0xff]
      %v173 = vld [vmem:[%s165 + $0x10] sm:$0xff]
      %v174 = vld [vmem:[%s165 + $0x18] sm:$0xff]
      %v175 = vld [vmem:[%s165 + $0x20] sm:$0xff]
      %v176 = vld [vmem:[%s165 + $0x28] sm:$0xff]
      %v177 = vld [vmem:[%s165 + $0x30] sm:$0xff]
      %v178 = vld [vmem:[%s165 + $0x38] sm:$0xff]
      %v179 = vld [vmem:[%s165 + $0x40] sm:$0xff]
      %v180 = vld [vmem:[%s165 + $0x48] sm:$0xff]
      %v181 = vld [vmem:[%s165 + $0x50] sm:$0xff]
      %v182 = vld [vmem:[%s165 + $0x58] sm:$0xff]
      %v183 = vld [vmem:[%s165 + $0x60] sm:$0xff]
      %v184 = vld [vmem:[%s165 + $0x68] sm:$0xff]
      %v185 = vld [vmem:[%s165 + $0x70] sm:$0xff]
      %v186 = vld [vmem:[%s165 + $0x78] sm:$0xff]
      %v187 = vld [vmem:[%s165 + $0x80] sm:$0xff]
      %v188 = vld [vmem:[%s165 + $0x88] sm:$0xff]
      %v189 = vld [vmem:[%s165 + $0x90] sm:$0xff]
      %v190 = vld [vmem:[%s165 + $0x98] sm:$0xff]
      %v191 = vld [vmem:[%s165 + $0xa0] sm:$0xff]
      %v192 = vld [vmem:[%s165 + $0xa8] sm:$0x7]
      %v193 = vld [vmem:[%s165 + $0xb0] sm:$0x7]
      %v194 = vld [vmem:[%s165 + $0xb8] sm:$0x7]
      %v195 = vld [vmem:[%s165 + $0xc0] sm:$0x7]
      %v196 = vld [vmem:[%s165 + $0xc8] sm:$0x7]
      %v197 = vld [vmem:[%s165 + $0xd0] sm:$0x7]
      %v198 = vld [vmem:[%s165 + $0xd8] sm:$0x7]
      %vm227 = vcmask 1046528
      %v228 = vrot.slane %v171, 1
      %v229 = vrot.slane %v178, 1
      %v230 = vsel %vm227, %v228, %v229
      %v231 = vrot.slane %v172, 1
      %v232 = vrot.slane %v179, 1
      %v233 = vsel %vm227, %v231, %v232
      %v234 = vrot.slane %v173, 1
      %v235 = vrot.slane %v180, 1
      %v236 = vsel %vm227, %v234, %v235
      %v237 = vrot.slane %v174, 1
      %v238 = vrot.slane %v181, 1
      %v239 = vsel %vm227, %v237, %v238
      %v240 = vrot.slane %v175, 1
      %v241 = vrot.slane %v182, 1
      %v242 = vsel %vm227, %v240, %v241
      %v243 = vrot.slane %v176, 1
      %v244 = vrot.slane %v183, 1
      %v245 = vsel %vm227, %v243, %v244
      %v246 = vrot.slane %v177, 1
      %v247 = vrot.slane %v184, 1
      %v248 = vsel %vm227, %v246, %v247
      %v249 = vrot.slane %v185, 1
      %v250 = vsel %vm227, %v229, %v249
      %v251 = vrot.slane %v186, 1
      %v252 = vsel %vm227, %v232, %v251
      %v253 = vrot.slane %v187, 1
      %v254 = vsel %vm227, %v235, %v253
      %v255 = vrot.slane %v188, 1
      %v256 = vsel %vm227, %v238, %v255
      %v257 = vrot.slane %v189, 1
      %v258 = vsel %vm227, %v241, %v257
      %v259 = vrot.slane %v190, 1
      %v260 = vsel %vm227, %v244, %v259
      %v261 = vrot.slane %v191, 1
      %v262 = vsel %vm227, %v247, %v261
      %v263 = vrot.slane %v192, 1
      %v264 = vsel %vm227, %v249, %v263
      %v265 = vrot.slane %v193, 1
      %v266 = vsel %vm227, %v251, %v265
      %v267 = vrot.slane %v194, 1
      %v268 = vsel %vm227, %v253, %v267
      %v269 = vrot.slane %v195, 1
      %v270 = vsel %vm227, %v255, %v269
      %v271 = vrot.slane %v196, 1
      %v272 = vsel %vm227, %v257, %v271
      %v273 = vrot.slane %v197, 1
      %v274 = vsel %vm227, %v259, %v273
      %v275 = vrot.slane %v198, 1
      %v276 = vsel %vm227, %v261, %v275
      %v305 = vmax.f32 %v171, %v230
      %v306 = vmax.f32 %v172, %v233
      %v307 = vmax.f32 %v173, %v236
      %v308 = vmax.f32 %v174, %v239
      %v309 = vmax.f32 %v175, %v242
      %v310 = vmax.f32 %v176, %v245
      %v311 = vmax.f32 %v177, %v248
      %v312 = vmax.f32 %v178, %v250
      %v313 = vmax.f32 %v179, %v252
      %v314 = vmax.f32 %v180, %v254
      %v315 = vmax.f32 %v181, %v256
      %v316 = vmax.f32 %v182, %v258
      %v317 = vmax.f32 %v183, %v260
      %v318 = vmax.f32 %v184, %v262
      %v319 = vmax.f32 %v185, %v264
      %v320 = vmax.f32 %v186, %v266
      %v321 = vmax.f32 %v187, %v268
      %v322 = vmax.f32 %v188, %v270
      %v323 = vmax.f32 %v189, %v272
      %v324 = vmax.f32 %v190, %v274
      %v325 = vmax.f32 %v191, %v276
      %v326 = vmax.f32 %v192, %v263
      %v327 = vmax.f32 %v193, %v265
      %v328 = vmax.f32 %v194, %v267
      %v329 = vmax.f32 %v195, %v269
      %v330 = vmax.f32 %v196, %v271
      %v331 = vmax.f32 %v197, %v273
      %v332 = vmax.f32 %v198, %v275
      %361 = vrot.lane.b32.xlu0 %v305, 96
      %v362 = vpop.permute.xlu0 %361
      %363 = vrot.lane.b32.xlu0 %v306, 96
      %v364 = vpop.permute.xlu0 %363
      %365 = vrot.lane.b32.xlu0 %v307, 96
      %v366 = vpop.permute.xlu0 %365
      %367 = vrot.lane.b32.xlu0 %v308, 96
      %v368 = vpop.permute.xlu0 %367
      %369 = vrot.lane.b32.xlu0 %v309, 96
      %v370 = vpop.permute.xlu0 %369
      %371 = vrot.lane.b32.xlu0 %v310, 96
      %v372 = vpop.permute.xlu0 %371
      %373 = vrot.lane.b32.xlu0 %v311, 96
      %v374 = vpop.permute.xlu0 %373
      %375 = vrot.lane.b32.xlu0 %v312, 96
      %v376 = vpop.permute.xlu0 %375
      %377 = vrot.lane.b32.xlu0 %v313, 96
      %v378 = vpop.permute.xlu0 %377
      %379 = vrot.lane.b32.xlu0 %v314, 96
      %v380 = vpop.permute.xlu0 %379
      %381 = vrot.lane.b32.xlu0 %v315, 96
      %v382 = vpop.permute.xlu0 %381
      %383 = vrot.lane.b32.xlu0 %v316, 96
      %v384 = vpop.permute.xlu0 %383
      %385 = vrot.lane.b32.xlu0 %v317, 96
      %v386 = vpop.permute.xlu0 %385
      %387 = vrot.lane.b32.xlu0 %v318, 96
      %v388 = vpop.permute.xlu0 %387
      %389 = vrot.lane.b32.xlu0 %v319, 96
      %v390 = vpop.permute.xlu0 %389
      %391 = vrot.lane.b32.xlu0 %v320, 96
      %v392 = vpop.permute.xlu0 %391
      %393 = vrot.lane.b32.xlu0 %v321, 96
      %v394 = vpop.permute.xlu0 %393
      %395 = vrot.lane.b32.xlu0 %v322, 96
      %v396 = vpop.permute.xlu0 %395
      %397 = vrot.lane.b32.xlu0 %v323, 96
      %v398 = vpop.permute.xlu0 %397
      %399 = vrot.lane.b32.xlu0 %v324, 96
      %v400 = vpop.permute.xlu0 %399
      %401 = vrot.lane.b32.xlu0 %v325, 96
      %v402 = vpop.permute.xlu0 %401
      %403 = vrot.lane.b32.xlu0 %v326, 96
      %v404 = vpop.permute.xlu0 %403
      %405 = vrot.lane.b32.xlu0 %v327, 96
      %v406 = vpop.permute.xlu0 %405
      %407 = vrot.lane.b32.xlu0 %v328, 96
      %v408 = vpop.permute.xlu0 %407
      %409 = vrot.lane.b32.xlu0 %v329, 96
      %v410 = vpop.permute.xlu0 %409
      %411 = vrot.lane.b32.xlu0 %v330, 96
      %v412 = vpop.permute.xlu0 %411
      %413 = vrot.lane.b32.xlu0 %v331, 96
      %v414 = vpop.permute.xlu0 %413
      %415 = vrot.lane.b32.xlu0 %v332, 96
      %v416 = vpop.permute.xlu0 %415
      %vm417 = vcmask 785408
      %v418 = vsel %vm417, %v362, %v364
      %v419 = vsel %vm417, %v364, %v366
      %v420 = vsel %vm417, %v366, %v368
      %v421 = vsel %vm417, %v368, %v370
      %v422 = vsel %vm417, %v370, %v372
      %v423 = vsel %vm417, %v372, %v374
      %v424 = vsel %vm417, %v376, %v378
      %v425 = vsel %vm417, %v378, %v380
      %v426 = vsel %vm417, %v380, %v382
      %v427 = vsel %vm417, %v382, %v384
      %v428 = vsel %vm417, %v384, %v386
      %v429 = vsel %vm417, %v386, %v388
      %v430 = vsel %vm417, %v390, %v392
      %v431 = vsel %vm417, %v392, %v394
      %v432 = vsel %vm417, %v394, %v396
      %v433 = vsel %vm417, %v396, %v398
      %v434 = vsel %vm417, %v398, %v400
      %v435 = vsel %vm417, %v400, %v402
      %v436 = vsel %vm417, %v404, %v406
      %v437 = vsel %vm417, %v406, %v408
      %v438 = vsel %vm417, %v408, %v410
      %v439 = vsel %vm417, %v410, %v412
      %v440 = vsel %vm417, %v412, %v414
      %v441 = vsel %vm417, %v414, %v416
      %v470 = vmax.f32 %v305, %v418
      %v471 = vmax.f32 %v306, %v419
      %v472 = vmax.f32 %v307, %v420
      %v473 = vmax.f32 %v308, %v421
      %v474 = vmax.f32 %v309, %v422
      %v475 = vmax.f32 %v310, %v423
      %v476 = vmax.f32 %v311, %v374
      %v477 = vmax.f32 %v312, %v424
      %v478 = vmax.f32 %v313, %v425
      %v479 = vmax.f32 %v314, %v426
      %v480 = vmax.f32 %v315, %v427
      %v481 = vmax.f32 %v316, %v428
      %v482 = vmax.f32 %v317, %v429
      %v483 = vmax.f32 %v318, %v388
      %v484 = vmax.f32 %v319, %v430
      %v485 = vmax.f32 %v320, %v431
      %v486 = vmax.f32 %v321, %v432
      %v487 = vmax.f32 %v322, %v433
      %v488 = vmax.f32 %v323, %v434
      %v489 = vmax.f32 %v324, %v435
      %v490 = vmax.f32 %v325, %v402
      %v491 = vmax.f32 %v326, %v436
      %v492 = vmax.f32 %v327, %v437
      %v493 = vmax.f32 %v328, %v438
      %v494 = vmax.f32 %v329, %v439
      %v495 = vmax.f32 %v330, %v440
      %v496 = vmax.f32 %v331, %v441
      %v497 = vmax.f32 %v332, %v416
      %v498 = vld [vmem:[%s1] sm:$0x7f]
      %v500 = vlaneseq
      %v501 = vshrl.u32 %v500, 7
      %v502 = vsub.s32 0, %v501
      %v503 = vrot.slane %v498, %v502
      %v504 = vlaneseq
      %v505 = vshrl.u32 %v504, 7
      %v506 = vsub.s32 1, %v505
      %v507 = vrot.slane %v498, %v506
      %v508 = vlaneseq
      %v509 = vshrl.u32 %v508, 7
      %v510 = vsub.s32 2, %v509
      %v511 = vrot.slane %v498, %v510
      %v512 = vlaneseq
      %v513 = vshrl.u32 %v512, 7
      %v514 = vsub.s32 3, %v513
      %v515 = vrot.slane %v498, %v514
      %v516 = vlaneseq
      %v517 = vshrl.u32 %v516, 7
      %v518 = vsub.s32 4, %v517
      %v519 = vrot.slane %v498, %v518
      %v520 = vlaneseq
      %v521 = vshrl.u32 %v520, 7
      %v522 = vsub.s32 5, %v521
      %v523 = vrot.slane %v498, %v522
      %v524 = vlaneseq
      %v525 = vshrl.u32 %v524, 7
      %v526 = vsub.s32 6, %v525
      %v527 = vrot.slane %v498, %v526
      %v535 = vmul.f32 %v470, %v503
      %v536 = vmul.f32 %v471, %v507
      %v537 = vmul.f32 %v472, %v511
      %v538 = vmul.f32 %v473, %v515
      %v539 = vmul.f32 %v474, %v519
      %v540 = vmul.f32 %v475, %v523
      %v541 = vmul.f32 %v476, %v527
      %v542 = vmul.f32 %v477, %v503
      %v543 = vmul.f32 %v478, %v507
      %v544 = vmul.f32 %v479, %v511
      %v545 = vmul.f32 %v480, %v515
      %v546 = vmul.f32 %v481, %v519
      %v547 = vmul.f32 %v482, %v523
      %v548 = vmul.f32 %v483, %v527
      %v549 = vmul.f32 %v484, %v503
      %v550 = vmul.f32 %v485, %v507
      %v551 = vmul.f32 %v486, %v511
      %v552 = vmul.f32 %v487, %v515
      %v553 = vmul.f32 %v488, %v519
      %v554 = vmul.f32 %v489, %v523
      %v555 = vmul.f32 %v490, %v527
      %v556 = vmul.f32 %v491, %v503
      %v557 = vmul.f32 %v492, %v507
      %v558 = vmul.f32 %v493, %v511
      %v559 = vmul.f32 %v494, %v515
      %v560 = vmul.f32 %v495, %v519
      %v561 = vmul.f32 %v496, %v523
      %v562 = vmul.f32 %v497, %v527
      %v563 = vld [vmem:[%s2] sm:$0x7f]
      %v565 = vlaneseq
      %v566 = vshrl.u32 %v565, 7
      %v567 = vsub.s32 0, %v566
      %v568 = vrot.slane %v563, %v567
      %v569 = vlaneseq
      %v570 = vshrl.u32 %v569, 7
      %v571 = vsub.s32 1, %v570
      %v572 = vrot.slane %v563, %v571
      %v573 = vlaneseq
      %v574 = vshrl.u32 %v573, 7
      %v575 = vsub.s32 2, %v574
      %v576 = vrot.slane %v563, %v575
      %v577 = vlaneseq
      %v578 = vshrl.u32 %v577, 7
      %v579 = vsub.s32 3, %v578
      %v580 = vrot.slane %v563, %v579
      %v581 = vlaneseq
      %v582 = vshrl.u32 %v581, 7
      %v583 = vsub.s32 4, %v582
      %v584 = vrot.slane %v563, %v583
      %v585 = vlaneseq
      %v586 = vshrl.u32 %v585, 7
      %v587 = vsub.s32 5, %v586
      %v588 = vrot.slane %v563, %v587
      %v589 = vlaneseq
      %v590 = vshrl.u32 %v589, 7
      %v591 = vsub.s32 6, %v590
      %v592 = vrot.slane %v563, %v591
      %v600 = vadd.f32 %v535, %v568
      %v601 = vadd.f32 %v536, %v572
      %v602 = vadd.f32 %v537, %v576
      %v603 = vadd.f32 %v538, %v580
      %v604 = vadd.f32 %v539, %v584
      %v605 = vadd.f32 %v540, %v588
      %v606 = vadd.f32 %v541, %v592
      %v607 = vadd.f32 %v542, %v568
      %v608 = vadd.f32 %v543, %v572
      %v609 = vadd.f32 %v544, %v576
      %v610 = vadd.f32 %v545, %v580
      %v611 = vadd.f32 %v546, %v584
      %v612 = vadd.f32 %v547, %v588
      %v613 = vadd.f32 %v548, %v592
      %v614 = vadd.f32 %v549, %v568
      %v615 = vadd.f32 %v550, %v572
      %v616 = vadd.f32 %v551, %v576
      %v617 = vadd.f32 %v552, %v580
      %v618 = vadd.f32 %v553, %v584
      %v619 = vadd.f32 %v554, %v588
      %v620 = vadd.f32 %v555, %v592
      %v621 = vadd.f32 %v556, %v568
      %v622 = vadd.f32 %v557, %v572
      %v623 = vadd.f32 %v558, %v576
      %v624 = vadd.f32 %v559, %v580
      %v625 = vadd.f32 %v560, %v584
      %v626 = vadd.f32 %v561, %v588
      %v627 = vadd.f32 %v562, %v592
      %628 = vst [vmem:[%s170] sm:$0xff] %v600
      %629 = vst [vmem:[%s170 + $0x8] sm:$0xff] %v601
      %630 = vst [vmem:[%s170 + $0x10] sm:$0xff] %v602
      %631 = vst [vmem:[%s170 + $0x18] sm:$0xff] %v603
      %632 = vst [vmem:[%s170 + $0x20] sm:$0xff] %v604
      %633 = vst [vmem:[%s170 + $0x28] sm:$0xff] %v605
      %vm634 = vcmask 523264
      %635 = vst.msk [vmem:[%s170 + $0x30] sm:$0xff] %vm634, %v606
      %636 = vst [vmem:[%s170 + $0x38] sm:$0xff] %v607
      %637 = vst [vmem:[%s170 + $0x40] sm:$0xff] %v608
      %638 = vst [vmem:[%s170 + $0x48] sm:$0xff] %v609
      %639 = vst [vmem:[%s170 + $0x50] sm:$0xff] %v610
      %640 = vst [vmem:[%s170 + $0x58] sm:$0xff] %v611
      %641 = vst [vmem:[%s170 + $0x60] sm:$0xff] %v612
      %642 = vst.msk [vmem:[%s170 + $0x68] sm:$0xff] %vm634, %v613
      %643 = vst [vmem:[%s170 + $0x70] sm:$0xff] %v614
      %644 = vst [vmem:[%s170 + $0x78] sm:$0xff] %v615
      %645 = vst [vmem:[%s170 + $0x80] sm:$0xff] %v616
      %646 = vst [vmem:[%s170 + $0x88] sm:$0xff] %v617
      %647 = vst [vmem:[%s170 + $0x90] sm:$0xff] %v618
      %648 = vst [vmem:[%s170 + $0x98] sm:$0xff] %v619
      %649 = vst.msk [vmem:[%s170 + $0xa0] sm:$0xff] %vm634, %v620
      %650 = vst [vmem:[%s170 + $0xa8] sm:$0x3] %v621
      %651 = vst [vmem:[%s170 + $0xb0] sm:$0x3] %v622
      %652 = vst [vmem:[%s170 + $0xb8] sm:$0x3] %v623
      %653 = vst [vmem:[%s170 + $0xc0] sm:$0x3] %v624
      %654 = vst [vmem:[%s170 + $0xc8] sm:$0x3] %v625
      %655 = vst [vmem:[%s170 + $0xd0] sm:$0x3] %v626
      %vm656 = vcmask 517120
      %657 = vst.msk [vmem:[%s170 + $0xd8] sm:$0x3] %vm656, %v627
      %p658 = scmp.lt.s32.totalorder %s14, 1
      %s659 = scalar_select %p658, %s14, 1
      %s660 = smul.addr %s659, 28
      %s661 = smul.addr %s660, 8
      %s662 = scalar_lea.vmem %s3, %s661
      // Predicated region
      $region33: #{forward.13} parent=31 // pred_check
        %p663 = pneg %p100
      $region34: #{forward.13} parent=31 // pred_check_branch
        %665 = sbr.rel (%p663) target = $region36
      $region35: #{forward.13} parent=31 // pred_region
        _
      $region36: #{forward.13} parent=31 // pred_fallthru
        _
    $region32: #{forward.13} parent=5 // pred_fallthru
      _
    %p666 = scmp.le.s32.totalorder 2, %s9
    // Predicated region
    $region37: #{forward.13} parent=5 // pred_check
      %p667 = pneg %p666
    $region38: #{forward.13} parent=5 // pred_check_branch
      %669 = sbr.rel (%p667) target = $region40
    $region39: #{forward.13} parent=5 // pred_region
      %s670 = ssub.s32 %s9, 2
      // Predicated region
      $region41: #{forward.13} parent=39 // pred_check
        %p671 = pneg %p106
      $region42: #{forward.13} parent=39 // pred_check_branch
        %673 = sbr.rel (%p671) target = $region44
      $region43: #{forward.13} parent=39 // pred_region
        %p674 = scmp.lt.s32.totalorder %s15, 1
        %s675 = scalar_select %p674, %s15, 1
        %s676 = smul.addr %s675, 28
        %s677 = smul.addr %s676, 8
        %s678 = scalar_lea.vmem %s3, %s677
      $region44: #{forward.13} parent=39 // pred_fallthru
        _
    $region40: #{forward.13} parent=5 // pred_fallthru
      _
  $region6: #{forward.13} parent=0 // loop_footer
    %s13 = sadd.s32 1, %s9
  $region7: #{forward.13} parent=0 // loop_footer_branch
    %8 = sbr.rel target = $region3
  $region8: #{forward.13} parent=0 // loop_exit
    _

// kernel: forward.14
$region0: #{forward.14}
  #allocation0 [shape = 'u32[]', space=smem, size = 0x4, offset = 0x4, fixed_abs, tag = 'smem constant byte address 0x4 - core index']
  #allocation1 [shape = 'u32[144,128]{1,0:T(1,128)}', space=vmem, size = 0x12000, scoped, tag = 'internal scratch']
  #allocation2 [shape = 'f32[8,256]{1,0:T(8,128)}', space=vmem, size = 0x2000, scoped, tag = 'scratch operand']
  %s0 = inlined_call_operand.vmem [shape: bf16[8,21632], index: 0, kind: input, shape index: {}]
  %s1 = inlined_call_operand.vmem [shape: bf16[21632,512], index: 1, kind: input, shape index: {}]
  %s2 = inlined_call_operand.vmem [shape: f32[1,512], index: 2, kind: input, shape index: {}]
  %s3 = inlined_call_operand.vmem [shape: f32[8,512], index: 3, kind: output, shape index: {}]
  %s4 = sld [smem:[#allocation0]]
  $region91: #{forward.14} parent=0
    _
  %s6 = ssub.s32 1, %s4
  %s7 = scalar_select 0, %s6, %s4
  $region1: #{forward.14} parent=0
    #allocation3 [shape = 'u8[1703936]{0}', space=vmem, size = 0x1a0000, scoped, tag = 'input window, operand 1']
    loop: start=0, step=1, limit=28
    $region2: #{forward.14} parent=1 // loop_pre_header
      _
    $region3: #{forward.14} parent=1 // loop_header
      %s9 = sphi 0, %s13
      %p10 = scmp.ge.s32.totalorder %s9, 28
      %s16 = sphi 0, %s35
      %s17 = sphi 0, %s31
      %s18 = sphi 0, %s27
      %s19 = sphi 0, %s16
      %s20 = sphi 0, %s17
      %s21 = sphi 0, %s18
      %s22 = sphi 0, %s19
      %s23 = sphi 0, %s20
      %s24 = sphi 0, %s21
      %s40 = sphi 0, %s42
      %s43 = sphi 0, %s40
      %s44 = sphi 0, %s43
      %s60 = sphi 0, %s44
      %s68 = sphi 0, %s70
      %s71 = sphi 0, %s68
      %s72 = sphi 0, %s71
      %s88 = sphi 0, %s72
      %s94 = sphi 0, %s96
      %s97 = sphi 0, %s94
      %s98 = sphi 0, %s97
      %s114 = sphi 0, %s98
      %s122 = sphi 0, %s124
      %s125 = sphi 0, %s122
      %s126 = sphi 0, %s125
      %s142 = sphi 0, %s126
    $region4: #{forward.14} parent=1 // loop_header_branch
      %12 = sbr.rel (%p10) target = $region8
    $region5: #{forward.14} parent=1 // loop_body
      %s14 = ssub.s32 %s9, 1
      %s15 = ssub.s32 %s9, 2
      %s25 = sadd.s32 1, %s18
      %p26 = scmp.ge.s32.totalorder %s25, 13
      %s27 = scalar_select %p26, 0, %s25
      %s28 = sadd.s32 1, %s17
      %s29 = scalar_select %p26, %s28, %s17
      %p30 = scmp.ge.s32.totalorder %s29, 2
      %s31 = scalar_select %p30, 0, %s29
      %s32 = sadd.s32 1, %s16
      %s33 = scalar_select %p30, %s32, %s16
      %p34 = scmp.ge.s32.totalorder %s33, 1
      %s35 = scalar_select %p34, 0, %s33
      %s36 = ssub.s32 %s16, %s35
      %s37 = ssub.s32 %s18, %s27
      %s38 = sor.u32 %s36, %s37
      %p39 = scmp.eq.s32.totalorder %s38, 0
      %s41 = sadd.s32 %s40, 1
      %s42 = scalar_select %p39, %s40, %s41
      %p45 = pneg %p39
      %p46 = scmp.eq.s32.totalorder %s9, 25
      %p47 = por %p45, %p46
      %p48 = scmp.ne.s32.totalorder %s40, %s43
      %p49 = scmp.eq.s32.totalorder %s9, 0
      %p50 = por %p48, %p49
      %p51 = scmp.ne.s32.totalorder %s40, %s43
      %p52 = scmp.eq.s32.totalorder %s14, 25
      %p53 = por %p51, %p52
      %p54 = scmp.ne.s32.totalorder %s43, %s44
      %p55 = scmp.eq.s32.totalorder %s14, 0
      %p56 = por %p54, %p55
      %p57 = scmp.ne.s32.totalorder %s43, %s44
      %p58 = scmp.eq.s32.totalorder %s15, 25
      %p59 = por %p57, %p58
      %p61 = scmp.ne.s32.totalorder %s44, %s60
      %p62 = scmp.eq.s32.totalorder %s15, 0
      %p63 = por %p61, %p62
      %s64 = ssub.s32 %s18, %s27
      %s65 = ssub.s32 %s17, %s31
      %s66 = sor.u32 %s64, %s65
      %p67 = scmp.eq.s32.totalorder %s66, 0
      %s69 = sadd.s32 %s68, 1
      %s70 = scalar_select %p67, %s68, %s69
      %p73 = pneg %p67
      %p74 = scmp.eq.s32.totalorder %s9, 25
      %p75 = por %p73, %p74
      %p76 = scmp.ne.s32.totalorder %s68, %s71
      %p77 = scmp.eq.s32.totalorder %s9, 0
      %p78 = por %p76, %p77
      %p79 = scmp.ne.s32.totalorder %s68, %s71
      %p80 = scmp.eq.s32.totalorder %s14, 25
      %p81 = por %p79, %p80
      %p82 = scmp.ne.s32.totalorder %s71, %s72
      %p83 = scmp.eq.s32.totalorder %s14, 0
      %p84 = por %p82, %p83
      %p85 = scmp.ne.s32.totalorder %s71, %s72
      %p86 = scmp.eq.s32.totalorder %s15, 25
      %p87 = por %p85, %p86
      %p89 = scmp.ne.s32.totalorder %s72, %s88
      %p90 = scmp.eq.s32.totalorder %s15, 0
      %p91 = por %p89, %p90
      %s92 = ssub.s32 %s17, %s31
      %p93 = scmp.eq.s32.totalorder %s92, 0
      %s95 = sadd.s32 %s94, 1
      %s96 = scalar_select %p93, %s94, %s95
      %p99 = pneg %p93
      %p100 = scmp.eq.s32.totalorder %s9, 25
      %p101 = por %p99, %p100
      %p102 = scmp.ne.s32.totalorder %s94, %s97
      %p103 = scmp.eq.s32.totalorder %s9, 0
      %p104 = por %p102, %p103
      %p105 = scmp.ne.s32.totalorder %s94, %s97
      %p106 = scmp.eq.s32.totalorder %s14, 25
      %p107 = por %p105, %p106
      %p108 = scmp.ne.s32.totalorder %s97, %s98
      %p109 = scmp.eq.s32.totalorder %s14, 0
      %p110 = por %p108, %p109
      %p111 = scmp.ne.s32.totalorder %s97, %s98
      %p112 = scmp.eq.s32.totalorder %s15, 25
      %p113 = por %p111, %p112
      %p115 = scmp.ne.s32.totalorder %s98, %s114
      %p116 = scmp.eq.s32.totalorder %s15, 0
      %p117 = por %p115, %p116
      %s118 = ssub.s32 %s16, %s35
      %s119 = ssub.s32 %s17, %s31
      %s120 = sor.u32 %s118, %s119
      %p121 = scmp.eq.s32.totalorder %s120, 0
      %s123 = sadd.s32 %s122, 1
      %s124 = scalar_select %p121, %s122, %s123
      %p127 = pneg %p121
      %p128 = scmp.eq.s32.totalorder %s9, 25
      %p129 = por %p127, %p128
      %p130 = scmp.ne.s32.totalorder %s122, %s125
      %p131 = scmp.eq.s32.totalorder %s9, 0
      %p132 = por %p130, %p131
      %p133 = scmp.ne.s32.totalorder %s122, %s125
      %p134 = scmp.eq.s32.totalorder %s14, 25
      %p135 = por %p133, %p134
      %p136 = scmp.ne.s32.totalorder %s125, %s126
      %p137 = scmp.eq.s32.totalorder %s14, 0
      %p138 = por %p136, %p137
      %p139 = scmp.ne.s32.totalorder %s125, %s126
      %p140 = scmp.eq.s32.totalorder %s15, 25
      %p141 = por %p139, %p140
      %p143 = scmp.ne.s32.totalorder %s126, %s142
      %p144 = scmp.eq.s32.totalorder %s15, 0
      %p145 = por %p143, %p144
      %p146 = scmp.le.s32.totalorder 1, %s9
      %p147 = scmp.lt.s32.totalorder %s9, 27
      %p148 = pnand %p146, %p147
      %p149 = pneg %p148
      // Predicated region
      $region9: #{forward.14} parent=5 // pred_check
        _
      $region10: #{forward.14} parent=5 // pred_check_branch
        %151 = sbr.rel (%p148) target = $region12
      $region11: #{forward.14} parent=5 // pred_region
        %s152 = ssub.s32 %s9, 1
      $region12: #{forward.14} parent=5 // pred_fallthru
        _
      %p153 = scmp.lt.s32.totalorder %s9, 26
      // Predicated region
      $region13: #{forward.14} parent=5 // pred_check
        %p154 = pneg %p153
      $region14: #{forward.14} parent=5 // pred_check_branch
        %156 = sbr.rel (%p154) target = $region16
      $region15: #{forward.14} parent=5 // pred_region
        // Predicated region
        $region17: #{forward.14} parent=15 // pred_check
          %p157 = pneg %p50
        $region18: #{forward.14} parent=15 // pred_check_branch
          %159 = sbr.rel (%p157) target = $region20
        $region19: #{forward.14} parent=15 // pred_region
          %s160 = smul.u32 13, %s18
          %p161 = scmp.lt.s32.totalorder %s16, 0
          %s162 = scalar_select %p161, %s16, 0
          %p163 = scmp.lt.s32.totalorder %s160, 168
          %s164 = scalar_select %p163, %s160, 168
          %s165 = smul.addr %s162, 169
          %s166 = sadd.s32 %s164, %s165
          %s167 = smul.addr %s166, 4
          %s168 = scalar_lea.vmem %s0, %s167
          %s169 = smul.u32 13, %s18
        $region20: #{forward.14} parent=15 // pred_fallthru
          _
        // Predicated region
        $region21: #{forward.14} parent=15 // pred_check
          %p170 = pneg %p78
        $region22: #{forward.14} parent=15 // pred_check_branch
          %172 = sbr.rel (%p170) target = $region24
        $region23: #{forward.14} parent=15 // pred_region
          %s173 = sand.u32 %s68, 1
          %s174 = sand.u32 %s68, 1
          %s175 = smul.addr %s174, 1664
          %s176 = scalar_lea.vmem [#allocation3], %s175
          %s177 = smul.u32 208, %s18
          %s178 = smul.u32 2, %s17
          %s179 = smul.addr %s177, 4
          %s180 = sadd.s32 %s178, %s179
          %s181 = smul.addr %s180, 4
          %s182 = scalar_lea.vmem %s1, %s181
          // Predicated region
          $region25: #{forward.14} parent=23 // pred_check
            _
          $region26: #{forward.14} parent=23 // pred_check_branch
            %184 = sbr.rel (0) target = $region28
          $region27: #{forward.14} parent=23 // pred_region
            // Predicated region
            $region29: #{forward.14} parent=27 // pred_check
              _
            $region30: #{forward.14} parent=27 // pred_check_branch
              %186 = sbr.rel (0) target = $region32
            $region31: #{forward.14} parent=27 // pred_region
              // Predicated region
              $region44: #{forward.14} parent=31 // pred_check
                _
              $region45: #{forward.14} parent=31 // pred_check_branch
                %615 = sbr.rel (0) target = $region47
              $region46: #{forward.14} parent=31 // pred_region
                loop: start=0, step=1, limit=1
                $region48: #{forward.14} parent=46 // loop_pre_header
                  _
                $region49: #{forward.14} parent=46 // loop_header
                  %s617 = sphi 0, %s621
                  %p618 = scmp.ge.s32.totalorder %s617, 1
                  %s622 = sphi %s182, %s182
                  %s623 = sphi %s176, %s176
                $region50: #{forward.14} parent=46 // loop_header_branch
                  %620 = sbr.rel (%p618) target = $region54
                $region51: #{forward.14} parent=46 // loop_body
                  %v624 = vld [vmem:[%s622] sm:$0xff]
                  %625 = vst [vmem:[%s623] sm:$0xff] %v624
                  %v626 = vld [vmem:[%s622 + $0x10] sm:$0xff]
                  %627 = vst [vmem:[%s623 + $0x8] sm:$0xff] %v626
                  %v628 = vld [vmem:[%s622 + $0x20] sm:$0xff]
                  %629 = vst [vmem:[%s623 + $0x10] sm:$0xff] %v628
                  %v630 = vld [vmem:[%s622 + $0x30] sm:$0xff]
                  %631 = vst [vmem:[%s623 + $0x18] sm:$0xff] %v630
                  %v632 = vld [vmem:[%s622 + $0x40] sm:$0xff]
                  %633 = vst [vmem:[%s623 + $0x20] sm:$0xff] %v632
                  %v634 = vld [vmem:[%s622 + $0x50] sm:$0xff]
                  %635 = vst [vmem:[%s623 + $0x28] sm:$0xff] %v634
                  %v636 = vld [vmem:[%s622 + $0x60] sm:$0xff]
                  %637 = vst [vmem:[%s623 + $0x30] sm:$0xff] %v636
                  %v638 = vld [vmem:[%s622 + $0x70] sm:$0xff]
                  %639 = vst [vmem:[%s623 + $0x38] sm:$0xff] %v638
                  %v640 = vld [vmem:[%s622 + $0x80] sm:$0xff]
                  %641 = vst [vmem:[%s623 + $0x40] sm:$0xff] %v640
                  %v642 = vld [vmem:[%s622 + $0x90] sm:$0xff]
                  %643 = vst [vmem:[%s623 + $0x48] sm:$0xff] %v642
                  %v644 = vld [vmem:[%s622 + $0xa0] sm:$0xff]
                  %645 = vst [vmem:[%s623 + $0x50] sm:$0xff] %v644
                  %v646 = vld [vmem:[%s622 + $0xb0] sm:$0xff]
                  %647 = vst [vmem:[%s623 + $0x58] sm:$0xff] %v646
                  %v648 = vld [vmem:[%s622 + $0xc0] sm:$0xff]
                  %649 = vst [vmem:[%s623 + $0x60] sm:$0xff] %v648
                  %v650 = vld [vmem:[%s622 + $0xd0] sm:$0xff]
                  %651 = vst [vmem:[%s623 + $0x68] sm:$0xff] %v650
                  %v652 = vld [vmem:[%s622 + $0xe0] sm:$0xff]
                  %653 = vst [vmem:[%s623 + $0x70] sm:$0xff] %v652
                  %v654 = vld [vmem:[%s622 + $0xf0] sm:$0xff]
                  %655 = vst [vmem:[%s623 + $0x78] sm:$0xff] %v654
                  %v656 = vld [vmem:[%s622 + $0x100] sm:$0xff]
                  %657 = vst [vmem:[%s623 + $0x80] sm:$0xff] %v656
                  %v658 = vld [vmem:[%s622 + $0x110] sm:$0xff]
                  %659 = vst [vmem:[%s623 + $0x88] sm:$0xff] %v658
                  %v660 = vld [vmem:[%s622 + $0x120] sm:$0xff]
                  %661 = vst [vmem:[%s623 + $0x90] sm:$0xff] %v660
                  %v662 = vld [vmem:[%s622 + $0x130] sm:$0xff]
                  %663 = vst [vmem:[%s623 + $0x98] sm:$0xff] %v662
                  %v664 = vld [vmem:[%s622 + $0x140] sm:$0xff]
                  %665 = vst [vmem:[%s623 + $0xa0] sm:$0xff] %v664
                  %v666 = vld [vmem:[%s622 + $0x150] sm:$0xff]
                  %667 = vst [vmem:[%s623 + $0xa8] sm:$0xff] %v666
                  %v668 = vld [vmem:[%s622 + $0x160] sm:$0xff]
                  %669 = vst [vmem:[%s623 + $0xb0] sm:$0xff] %v668
                  %v670 = vld [vmem:[%s622 + $0x170] sm:$0xff]
                  %671 = vst [vmem:[%s623 + $0xb8] sm:$0xff] %v670
                  %v672 = vld [vmem:[%s622 + $0x180] sm:$0xff]
                  %673 = vst [vmem:[%s623 + $0xc0] sm:$0xff] %v672
                  %v674 = vld [vmem:[%s622 + $0x190] sm:$0xff]
                  %675 = vst [vmem:[%s623 + $0xc8] sm:$0xff] %v674
                  %v676 = vld [vmem:[%s622 + $0x1a0] sm:$0xff]
                  %677 = vst [vmem:[%s623 + $0xd0] sm:$0xff] %v676
                  %v678 = vld [vmem:[%s622 + $0x1b0] sm:$0xff]
                  %679 = vst [vmem:[%s623 + $0xd8] sm:$0xff] %v678
                  %v680 = vld [vmem:[%s622 + $0x1c0] sm:$0xff]
                  %681 = vst [vmem:[%s623 + $0xe0] sm:$0xff] %v680
                  %v682 = vld [vmem:[%s622 + $0x1d0] sm:$0xff]
                  %683 = vst [vmem:[%s623 + $0xe8] sm:$0xff] %v682
                  %v684 = vld [vmem:[%s622 + $0x1e0] sm:$0xff]
                  %685 = vst [vmem:[%s623 + $0xf0] sm:$0xff] %v684
                  %v686 = vld [vmem:[%s622 + $0x1f0] sm:$0xff]
                  %687 = vst [vmem:[%s623 + $0xf8] sm:$0xff] %v686
                  %v688 = vld [vmem:[%s622 + $0x200] sm:$0xff]
                  %689 = vst [vmem:[%s623 + $0x100] sm:$0xff] %v688
                  %v690 = vld [vmem:[%s622 + $0x210] sm:$0xff]
                  %691 = vst [vmem:[%s623 + $0x108] sm:$0xff] %v690
                  %v692 = vld [vmem:[%s622 + $0x220] sm:$0xff]
                  %693 = vst [vmem:[%s623 + $0x110] sm:$0xff] %v692
                  %v694 = vld [vmem:[%s622 + $0x230] sm:$0xff]
                  %695 = vst [vmem:[%s623 + $0x118] sm:$0xff] %v694
                  %v696 = vld [vmem:[%s622 + $0x240] sm:$0xff]
                  %697 = vst [vmem:[%s623 + $0x120] sm:$0xff] %v696
                  %v698 = vld [vmem:[%s622 + $0x250] sm:$0xff]
                  %699 = vst [vmem:[%s623 + $0x128] sm:$0xff] %v698
                  %v700 = vld [vmem:[%s622 + $0x260] sm:$0xff]
                  %701 = vst [vmem:[%s623 + $0x130] sm:$0xff] %v700
                  %v702 = vld [vmem:[%s622 + $0x270] sm:$0xff]
                  %703 = vst [vmem:[%s623 + $0x138] sm:$0xff] %v702
                  %v704 = vld [vmem:[%s622 + $0x280] sm:$0xff]
                  %705 = vst [vmem:[%s623 + $0x140] sm:$0xff] %v704
                  %v706 = vld [vmem:[%s622 + $0x290] sm:$0xff]
                  %707 = vst [vmem:[%s623 + $0x148] sm:$0xff] %v706
                  %v708 = vld [vmem:[%s622 + $0x2a0] sm:$0xff]
                  %709 = vst [vmem:[%s623 + $0x150] sm:$0xff] %v708
                  %v710 = vld [vmem:[%s622 + $0x2b0] sm:$0xff]
                  %711 = vst [vmem:[%s623 + $0x158] sm:$0xff] %v710
                  %v712 = vld [vmem:[%s622 + $0x2c0] sm:$0xff]
                  %713 = vst [vmem:[%s623 + $0x160] sm:$0xff] %v712
                  %v714 = vld [vmem:[%s622 + $0x2d0] sm:$0xff]
                  %715 = vst [vmem:[%s623 + $0x168] sm:$0xff] %v714
                  %v716 = vld [vmem:[%s622 + $0x2e0] sm:$0xff]
                  %717 = vst [vmem:[%s623 + $0x170] sm:$0xff] %v716
                  %v718 = vld [vmem:[%s622 + $0x2f0] sm:$0xff]
                  %719 = vst [vmem:[%s623 + $0x178] sm:$0xff] %v718
                  %v720 = vld [vmem:[%s622 + $0x300] sm:$0xff]
                  %721 = vst [vmem:[%s623 + $0x180] sm:$0xff] %v720
                  %v722 = vld [vmem:[%s622 + $0x310] sm:$0xff]
                  %723 = vst [vmem:[%s623 + $0x188] sm:$0xff] %v722
                  %v724 = vld [vmem:[%s622 + $0x320] sm:$0xff]
                  %725 = vst [vmem:[%s623 + $0x190] sm:$0xff] %v724
                  %v726 = vld [vmem:[%s622 + $0x330] sm:$0xff]
                  %727 = vst [vmem:[%s623 + $0x198] sm:$0xff] %v726
                  %v728 = vld [vmem:[%s622 + $0x340] sm:$0xff]
                  %729 = vst [vmem:[%s623 + $0x1a0] sm:$0xff] %v728
                  %v730 = vld [vmem:[%s622 + $0x350] sm:$0xff]
                  %731 = vst [vmem:[%s623 + $0x1a8] sm:$0xff] %v730
                  %v732 = vld [vmem:[%s622 + $0x360] sm:$0xff]
                  %733 = vst [vmem:[%s623 + $0x1b0] sm:$0xff] %v732
                  %v734 = vld [vmem:[%s622 + $0x370] sm:$0xff]
                  %735 = vst [vmem:[%s623 + $0x1b8] sm:$0xff] %v734
                  %v736 = vld [vmem:[%s622 + $0x380] sm:$0xff]
                  %737 = vst [vmem:[%s623 + $0x1c0] sm:$0xff] %v736
                  %v738 = vld [vmem:[%s622 + $0x390] sm:$0xff]
                  %739 = vst [vmem:[%s623 + $0x1c8] sm:$0xff] %v738
                  %v740 = vld [vmem:[%s622 + $0x3a0] sm:$0xff]
                  %741 = vst [vmem:[%s623 + $0x1d0] sm:$0xff] %v740
                  %v742 = vld [vmem:[%s622 + $0x3b0] sm:$0xff]
                  %743 = vst [vmem:[%s623 + $0x1d8] sm:$0xff] %v742
                  %v744 = vld [vmem:[%s622 + $0x3c0] sm:$0xff]
                  %745 = vst [vmem:[%s623 + $0x1e0] sm:$0xff] %v744
                  %v746 = vld [vmem:[%s622 + $0x3d0] sm:$0xff]
                  %747 = vst [vmem:[%s623 + $0x1e8] sm:$0xff] %v746
                  %v748 = vld [vmem:[%s622 + $0x3e0] sm:$0xff]
                  %749 = vst [vmem:[%s623 + $0x1f0] sm:$0xff] %v748
                  %v750 = vld [vmem:[%s622 + $0x3f0] sm:$0xff]
                  %751 = vst [vmem:[%s623 + $0x1f8] sm:$0xff] %v750
                  %v752 = vld [vmem:[%s622 + $0x400] sm:$0xff]
                  %753 = vst [vmem:[%s623 + $0x200] sm:$0xff] %v752
                  %v754 = vld [vmem:[%s622 + $0x410] sm:$0xff]
                  %755 = vst [vmem:[%s623 + $0x208] sm:$0xff] %v754
                  %v756 = vld [vmem:[%s622 + $0x420] sm:$0xff]
                  %757 = vst [vmem:[%s623 + $0x210] sm:$0xff] %v756
                  %v758 = vld [vmem:[%s622 + $0x430] sm:$0xff]
                  %759 = vst [vmem:[%s623 + $0x218] sm:$0xff] %v758
                  %v760 = vld [vmem:[%s622 + $0x440] sm:$0xff]
                  %761 = vst [vmem:[%s623 + $0x220] sm:$0xff] %v760
                  %v762 = vld [vmem:[%s622 + $0x450] sm:$0xff]
                  %763 = vst [vmem:[%s623 + $0x228] sm:$0xff] %v762
                  %v764 = vld [vmem:[%s622 + $0x460] sm:$0xff]
                  %765 = vst [vmem:[%s623 + $0x230] sm:$0xff] %v764
                  %v766 = vld [vmem:[%s622 + $0x470] sm:$0xff]
                  %767 = vst [vmem:[%s623 + $0x238] sm:$0xff] %v766
                  %v768 = vld [vmem:[%s622 + $0x480] sm:$0xff]
                  %769 = vst [vmem:[%s623 + $0x240] sm:$0xff] %v768
                  %v770 = vld [vmem:[%s622 + $0x490] sm:$0xff]
                  %771 = vst [vmem:[%s623 + $0x248] sm:$0xff] %v770
                  %v772 = vld [vmem:[%s622 + $0x4a0] sm:$0xff]
                  %773 = vst [vmem:[%s623 + $0x250] sm:$0xff] %v772
                  %v774 = vld [vmem:[%s622 + $0x4b0] sm:$0xff]
                  %775 = vst [vmem:[%s623 + $0x258] sm:$0xff] %v774
                  %v776 = vld [vmem:[%s622 + $0x4c0] sm:$0xff]
                  %777 = vst [vmem:[%s623 + $0x260] sm:$0xff] %v776
                  %v778 = vld [vmem:[%s622 + $0x4d0] sm:$0xff]
                  %779 = vst [vmem:[%s623 + $0x268] sm:$0xff] %v778
                  %v780 = vld [vmem:[%s622 + $0x4e0] sm:$0xff]
                  %781 = vst [vmem:[%s623 + $0x270] sm:$0xff] %v780
                  %v782 = vld [vmem:[%s622 + $0x4f0] sm:$0xff]
                  %783 = vst [vmem:[%s623 + $0x278] sm:$0xff] %v782
                  %v784 = vld [vmem:[%s622 + $0x500] sm:$0xff]
                  %785 = vst [vmem:[%s623 + $0x280] sm:$0xff] %v784
                  %v786 = vld [vmem:[%s622 + $0x510] sm:$0xff]
                  %787 = vst [vmem:[%s623 + $0x288] sm:$0xff] %v786
                  %v788 = vld [vmem:[%s622 + $0x520] sm:$0xff]
                  %789 = vst [vmem:[%s623 + $0x290] sm:$0xff] %v788
                  %v790 = vld [vmem:[%s622 + $0x530] sm:$0xff]
                  %791 = vst [vmem:[%s623 + $0x298] sm:$0xff] %v790
                  %v792 = vld [vmem:[%s622 + $0x540] sm:$0xff]
                  %793 = vst [vmem:[%s623 + $0x2a0] sm:$0xff] %v792
                  %v794 = vld [vmem:[%s622 + $0x550] sm:$0xff]
                  %795 = vst [vmem:[%s623 + $0x2a8] sm:$0xff] %v794
                  %v796 = vld [vmem:[%s622 + $0x560] sm:$0xff]
                  %797 = vst [vmem:[%s623 + $0x2b0] sm:$0xff] %v796
                  %v798 = vld [vmem:[%s622 + $0x570] sm:$0xff]
                  %799 = vst [vmem:[%s623 + $0x2b8] sm:$0xff] %v798
                  %v800 = vld [vmem:[%s622 + $0x580] sm:$0xff]
                  %801 = vst [vmem:[%s623 + $0x2c0] sm:$0xff] %v800
                  %v802 = vld [vmem:[%s622 + $0x590] sm:$0xff]
                  %803 = vst [vmem:[%s623 + $0x2c8] sm:$0xff] %v802
                  %v804 = vld [vmem:[%s622 + $0x5a0] sm:$0xff]
                  %805 = vst [vmem:[%s623 + $0x2d0] sm:$0xff] %v804
                  %v806 = vld [vmem:[%s622 + $0x5b0] sm:$0xff]
                  %807 = vst [vmem:[%s623 + $0x2d8] sm:$0xff] %v806
                  %v808 = vld [vmem:[%s622 + $0x5c0] sm:$0xff]
                  %809 = vst [vmem:[%s623 + $0x2e0] sm:$0xff] %v808
                  %v810 = vld [vmem:[%s622 + $0x5d0] sm:$0xff]
                  %811 = vst [vmem:[%s623 + $0x2e8] sm:$0xff] %v810
                  %v812 = vld [vmem:[%s622 + $0x5e0] sm:$0xff]
                  %813 = vst [vmem:[%s623 + $0x2f0] sm:$0xff] %v812
                  %v814 = vld [vmem:[%s622 + $0x5f0] sm:$0xff]
                  %815 = vst [vmem:[%s623 + $0x2f8] sm:$0xff] %v814
                  %v816 = vld [vmem:[%s622 + $0x600] sm:$0xff]
                  %817 = vst [vmem:[%s623 + $0x300] sm:$0xff] %v816
                  %v818 = vld [vmem:[%s622 + $0x610] sm:$0xff]
                  %819 = vst [vmem:[%s623 + $0x308] sm:$0xff] %v818
                  %v820 = vld [vmem:[%s622 + $0x620] sm:$0xff]
                  %821 = vst [vmem:[%s623 + $0x310] sm:$0xff] %v820
                  %v822 = vld [vmem:[%s622 + $0x630] sm:$0xff]
                  %823 = vst [vmem:[%s623 + $0x318] sm:$0xff] %v822
                  %v824 = vld [vmem:[%s622 + $0x640] sm:$0xff]
                  %825 = vst [vmem:[%s623 + $0x320] sm:$0xff] %v824
                  %v826 = vld [vmem:[%s622 + $0x650] sm:$0xff]
                  %827 = vst [vmem:[%s623 + $0x328] sm:$0xff] %v826
                  %v828 = vld [vmem:[%s622 + $0x660] sm:$0xff]
                  %829 = vst [vmem:[%s623 + $0x330] sm:$0xff] %v828
                  %v830 = vld [vmem:[%s622 + $0x670] sm:$0xff]
                  %831 = vst [vmem:[%s623 + $0x338] sm:$0xff] %v830
                  %v832 = vld [vmem:[%s622 + $0x680] sm:$0xff]
                  %833 = vst [vmem:[%s623 + $0x340] sm:$0xff] %v832
                  %v834 = vld [vmem:[%s622 + $0x690] sm:$0xff]
                  %835 = vst [vmem:[%s623 + $0x348] sm:$0xff] %v834
                  %v836 = vld [vmem:[%s622 + $0x6a0] sm:$0xff]
                  %837 = vst [vmem:[%s623 + $0x350] sm:$0xff] %v836
                  %v838 = vld [vmem:[%s622 + $0x6b0] sm:$0xff]
                  %839 = vst [vmem:[%s623 + $0x358] sm:$0xff] %v838
                  %v840 = vld [vmem:[%s622 + $0x6c0] sm:$0xff]
                  %841 = vst [vmem:[%s623 + $0x360] sm:$0xff] %v840
                  %v842 = vld [vmem:[%s622 + $0x6d0] sm:$0xff]
                  %843 = vst [vmem:[%s623 + $0x368] sm:$0xff] %v842
                  %v844 = vld [vmem:[%s622 + $0x6e0] sm:$0xff]
                  %845 = vst [vmem:[%s623 + $0x370] sm:$0xff] %v844
                  %v846 = vld [vmem:[%s622 + $0x6f0] sm:$0xff]
                  %847 = vst [vmem:[%s623 + $0x378] sm:$0xff] %v846
                  %v848 = vld [vmem:[%s622 + $0x700] sm:$0xff]
                  %849 = vst [vmem:[%s623 + $0x380] sm:$0xff] %v848
                  %v850 = vld [vmem:[%s622 + $0x710] sm:$0xff]
                  %851 = vst [vmem:[%s623 + $0x388] sm:$0xff] %v850
                  %v852 = vld [vmem:[%s622 + $0x720] sm:$0xff]
                  %853 = vst [vmem:[%s623 + $0x390] sm:$0xff] %v852
                  %v854 = vld [vmem:[%s622 + $0x730] sm:$0xff]
                  %855 = vst [vmem:[%s623 + $0x398] sm:$0xff] %v854
                  %v856 = vld [vmem:[%s622 + $0x740] sm:$0xff]
                  %857 = vst [vmem:[%s623 + $0x3a0] sm:$0xff] %v856
                  %v858 = vld [vmem:[%s622 + $0x750] sm:$0xff]
                  %859 = vst [vmem:[%s623 + $0x3a8] sm:$0xff] %v858
                  %v860 = vld [vmem:[%s622 + $0x760] sm:$0xff]
                  %861 = vst [vmem:[%s623 + $0x3b0] sm:$0xff] %v860
                  %v862 = vld [vmem:[%s622 + $0x770] sm:$0xff]
                  %863 = vst [vmem:[%s623 + $0x3b8] sm:$0xff] %v862
                  %v864 = vld [vmem:[%s622 + $0x780] sm:$0xff]
                  %865 = vst [vmem:[%s623 + $0x3c0] sm:$0xff] %v864
                  %v866 = vld [vmem:[%s622 + $0x790] sm:$0xff]
                  %867 = vst [vmem:[%s623 + $0x3c8] sm:$0xff] %v866
                  %v868 = vld [vmem:[%s622 + $0x7a0] sm:$0xff]
                  %869 = vst [vmem:[%s623 + $0x3d0] sm:$0xff] %v868
                  %v870 = vld [vmem:[%s622 + $0x7b0] sm:$0xff]
                  %871 = vst [vmem:[%s623 + $0x3d8] sm:$0xff] %v870
                  %v872 = vld [vmem:[%s622 + $0x7c0] sm:$0xff]
                  %873 = vst [vmem:[%s623 + $0x3e0] sm:$0xff] %v872
                  %v874 = vld [vmem:[%s622 + $0x7d0] sm:$0xff]
                  %875 = vst [vmem:[%s623 + $0x3e8] sm:$0xff] %v874
                  %v876 = vld [vmem:[%s622 + $0x7e0] sm:$0xff]
                  %877 = vst [vmem:[%s623 + $0x3f0] sm:$0xff] %v876
                  %v878 = vld [vmem:[%s622 + $0x7f0] sm:$0xff]
                  %879 = vst [vmem:[%s623 + $0x3f8] sm:$0xff] %v878
                  %v880 = vld [vmem:[%s622 + $0x800] sm:$0xff]
                  %881 = vst [vmem:[%s623 + $0x400] sm:$0xff] %v880
                  %v882 = vld [vmem:[%s622 + $0x810] sm:$0xff]
                  %883 = vst [vmem:[%s623 + $0x408] sm:$0xff] %v882
                  %v884 = vld [vmem:[%s622 + $0x820] sm:$0xff]
                  %885 = vst [vmem:[%s623 + $0x410] sm:$0xff] %v884
                  %v886 = vld [vmem:[%s622 + $0x830] sm:$0xff]
                  %887 = vst [vmem:[%s623 + $0x418] sm:$0xff] %v886
                  %v888 = vld [vmem:[%s622 + $0x840] sm:$0xff]
                  %889 = vst [vmem:[%s623 + $0x420] sm:$0xff] %v888
                  %v890 = vld [vmem:[%s622 + $0x850] sm:$0xff]
                  %891 = vst [vmem:[%s623 + $0x428] sm:$0xff] %v890
                  %v892 = vld [vmem:[%s622 + $0x860] sm:$0xff]
                  %893 = vst [vmem:[%s623 + $0x430] sm:$0xff] %v892
                  %v894 = vld [vmem:[%s622 + $0x870] sm:$0xff]
                  %895 = vst [vmem:[%s623 + $0x438] sm:$0xff] %v894
                  %v896 = vld [vmem:[%s622 + $0x880] sm:$0xff]
                  %897 = vst [vmem:[%s623 + $0x440] sm:$0xff] %v896
                  %v898 = vld [vmem:[%s622 + $0x890] sm:$0xff]
                  %899 = vst [vmem:[%s623 + $0x448] sm:$0xff] %v898
                  %v900 = vld [vmem:[%s622 + $0x8a0] sm:$0xff]
                  %901 = vst [vmem:[%s623 + $0x450] sm:$0xff] %v900
                  %v902 = vld [vmem:[%s622 + $0x8b0] sm:$0xff]
                  %903 = vst [vmem:[%s623 + $0x458] sm:$0xff] %v902
                  %v904 = vld [vmem:[%s622 + $0x8c0] sm:$0xff]
                  %905 = vst [vmem:[%s623 + $0x460] sm:$0xff] %v904
                  %v906 = vld [vmem:[%s622 + $0x8d0] sm:$0xff]
                  %907 = vst [vmem:[%s623 + $0x468] sm:$0xff] %v906
                  %v908 = vld [vmem:[%s622 + $0x8e0] sm:$0xff]
                  %909 = vst [vmem:[%s623 + $0x470] sm:$0xff] %v908
                  %v910 = vld [vmem:[%s622 + $0x8f0] sm:$0xff]
                  %911 = vst [vmem:[%s623 + $0x478] sm:$0xff] %v910
                  %v912 = vld [vmem:[%s622 + $0x900] sm:$0xff]
                  %913 = vst [vmem:[%s623 + $0x480] sm:$0xff] %v912
                  %v914 = vld [vmem:[%s622 + $0x910] sm:$0xff]
                  %915 = vst [vmem:[%s623 + $0x488] sm:$0xff] %v914
                  %v916 = vld [vmem:[%s622 + $0x920] sm:$0xff]
                  %917 = vst [vmem:[%s623 + $0x490] sm:$0xff] %v916
                  %v918 = vld [vmem:[%s622 + $0x930] sm:$0xff]
                  %919 = vst [vmem:[%s623 + $0x498] sm:$0xff] %v918
                  %v920 = vld [vmem:[%s622 + $0x940] sm:$0xff]
                  %921 = vst [vmem:[%s623 + $0x4a0] sm:$0xff] %v920
                  %v922 = vld [vmem:[%s622 + $0x950] sm:$0xff]
                  %923 = vst [vmem:[%s623 + $0x4a8] sm:$0xff] %v922
                  %v924 = vld [vmem:[%s622 + $0x960] sm:$0xff]
                  %925 = vst [vmem:[%s623 + $0x4b0] sm:$0xff] %v924
                  %v926 = vld [vmem:[%s622 + $0x970] sm:$0xff]
                  %927 = vst [vmem:[%s623 + $0x4b8] sm:$0xff] %v926
                  %v928 = vld [vmem:[%s622 + $0x980] sm:$0xff]
                  %929 = vst [vmem:[%s623 + $0x4c0] sm:$0xff] %v928
                  %v930 = vld [vmem:[%s622 + $0x990] sm:$0xff]
                  %931 = vst [vmem:[%s623 + $0x4c8] sm:$0xff] %v930
                  %v932 = vld [vmem:[%s622 + $0x9a0] sm:$0xff]
                  %933 = vst [vmem:[%s623 + $0x4d0] sm:$0xff] %v932
                  %v934 = vld [vmem:[%s622 + $0x9b0] sm:$0xff]
                  %935 = vst [vmem:[%s623 + $0x4d8] sm:$0xff] %v934
                  %v936 = vld [vmem:[%s622 + $0x9c0] sm:$0xff]
                  %937 = vst [vmem:[%s623 + $0x4e0] sm:$0xff] %v936
                  %v938 = vld [vmem:[%s622 + $0x9d0] sm:$0xff]
                  %939 = vst [vmem:[%s623 + $0x4e8] sm:$0xff] %v938
                  %v940 = vld [vmem:[%s622 + $0x9e0] sm:$0xff]
                  %941 = vst [vmem:[%s623 + $0x4f0] sm:$0xff] %v940
                  %v942 = vld [vmem:[%s622 + $0x9f0] sm:$0xff]
                  %943 = vst [vmem:[%s623 + $0x4f8] sm:$0xff] %v942
                  %v944 = vld [vmem:[%s622 + $0xa00] sm:$0xff]
                  %945 = vst [vmem:[%s623 + $0x500] sm:$0xff] %v944
                  %v946 = vld [vmem:[%s622 + $0xa10] sm:$0xff]
                  %947 = vst [vmem:[%s623 + $0x508] sm:$0xff] %v946
                  %v948 = vld [vmem:[%s622 + $0xa20] sm:$0xff]
                  %949 = vst [vmem:[%s623 + $0x510] sm:$0xff] %v948
                  %v950 = vld [vmem:[%s622 + $0xa30] sm:$0xff]
                  %951 = vst [vmem:[%s623 + $0x518] sm:$0xff] %v950
                  %v952 = vld [vmem:[%s622 + $0xa40] sm:$0xff]
                  %953 = vst [vmem:[%s623 + $0x520] sm:$0xff] %v952
                  %v954 = vld [vmem:[%s622 + $0xa50] sm:$0xff]
                  %955 = vst [vmem:[%s623 + $0x528] sm:$0xff] %v954
                  %v956 = vld [vmem:[%s622 + $0xa60] sm:$0xff]
                  %957 = vst [vmem:[%s623 + $0x530] sm:$0xff] %v956
                  %v958 = vld [vmem:[%s622 + $0xa70] sm:$0xff]
                  %959 = vst [vmem:[%s623 + $0x538] sm:$0xff] %v958
                  %v960 = vld [vmem:[%s622 + $0xa80] sm:$0xff]
                  %961 = vst [vmem:[%s623 + $0x540] sm:$0xff] %v960
                  %v962 = vld [vmem:[%s622 + $0xa90] sm:$0xff]
                  %963 = vst [vmem:[%s623 + $0x548] sm:$0xff] %v962
                  %v964 = vld [vmem:[%s622 + $0xaa0] sm:$0xff]
                  %965 = vst [vmem:[%s623 + $0x550] sm:$0xff] %v964
                  %v966 = vld [vmem:[%s622 + $0xab0] sm:$0xff]
                  %967 = vst [vmem:[%s623 + $0x558] sm:$0xff] %v966
                  %v968 = vld [vmem:[%s622 + $0xac0] sm:$0xff]
                  %969 = vst [vmem:[%s623 + $0x560] sm:$0xff] %v968
                  %v970 = vld [vmem:[%s622 + $0xad0] sm:$0xff]
                  %971 = vst [vmem:[%s623 + $0x568] sm:$0xff] %v970
                  %v972 = vld [vmem:[%s622 + $0xae0] sm:$0xff]
                  %973 = vst [vmem:[%s623 + $0x570] sm:$0xff] %v972
                  %v974 = vld [vmem:[%s622 + $0xaf0] sm:$0xff]
                  %975 = vst [vmem:[%s623 + $0x578] sm:$0xff] %v974
                  %v976 = vld [vmem:[%s622 + $0xb00] sm:$0xff]
                  %977 = vst [vmem:[%s623 + $0x580] sm:$0xff] %v976
                  %v978 = vld [vmem:[%s622 + $0xb10] sm:$0xff]
                  %979 = vst [vmem:[%s623 + $0x588] sm:$0xff] %v978
                  %v980 = vld [vmem:[%s622 + $0xb20] sm:$0xff]
                  %981 = vst [vmem:[%s623 + $0x590] sm:$0xff] %v980
                  %v982 = vld [vmem:[%s622 + $0xb30] sm:$0xff]
                  %983 = vst [vmem:[%s623 + $0x598] sm:$0xff] %v982
                  %v984 = vld [vmem:[%s622 + $0xb40] sm:$0xff]
                  %985 = vst [vmem:[%s623 + $0x5a0] sm:$0xff] %v984
                  %v986 = vld [vmem:[%s622 + $0xb50] sm:$0xff]
                  %987 = vst [vmem:[%s623 + $0x5a8] sm:$0xff] %v986
                  %v988 = vld [vmem:[%s622 + $0xb60] sm:$0xff]
                  %989 = vst [vmem:[%s623 + $0x5b0] sm:$0xff] %v988
                  %v990 = vld [vmem:[%s622 + $0xb70] sm:$0xff]
                  %991 = vst [vmem:[%s623 + $0x5b8] sm:$0xff] %v990
                  %v992 = vld [vmem:[%s622 + $0xb80] sm:$0xff]
                  %993 = vst [vmem:[%s623 + $0x5c0] sm:$0xff] %v992
                  %v994 = vld [vmem:[%s622 + $0xb90] sm:$0xff]
                  %995 = vst [vmem:[%s623 + $0x5c8] sm:$0xff] %v994
                  %v996 = vld [vmem:[%s622 + $0xba0] sm:$0xff]
                  %997 = vst [vmem:[%s623 + $0x5d0] sm:$0xff] %v996
                  %v998 = vld [vmem:[%s622 + $0xbb0] sm:$0xff]
                  %999 = vst [vmem:[%s623 + $0x5d8] sm:$0xff] %v998
                  %v1000 = vld [vmem:[%s622 + $0xbc0] sm:$0xff]
                  %1001 = vst [vmem:[%s623 + $0x5e0] sm:$0xff] %v1000
                  %v1002 = vld [vmem:[%s622 + $0xbd0] sm:$0xff]
                  %1003 = vst [vmem:[%s623 + $0x5e8] sm:$0xff] %v1002
                  %v1004 = vld [vmem:[%s622 + $0xbe0] sm:$0xff]
                  %1005 = vst [vmem:[%s623 + $0x5f0] sm:$0xff] %v1004
                  %v1006 = vld [vmem:[%s622 + $0xbf0] sm:$0xff]
                  %1007 = vst [vmem:[%s623 + $0x5f8] sm:$0xff] %v1006
                  %v1008 = vld [vmem:[%s622 + $0xc00] sm:$0xff]
                  %1009 = vst [vmem:[%s623 + $0x600] sm:$0xff] %v1008
                  %v1010 = vld [vmem:[%s622 + $0xc10] sm:$0xff]
                  %1011 = vst [vmem:[%s623 + $0x608] sm:$0xff] %v1010
                  %v1012 = vld [vmem:[%s622 + $0xc20] sm:$0xff]
                  %1013 = vst [vmem:[%s623 + $0x610] sm:$0xff] %v1012
                  %v1014 = vld [vmem:[%s622 + $0xc30] sm:$0xff]
                  %1015 = vst [vmem:[%s623 + $0x618] sm:$0xff] %v1014
                  %v1016 = vld [vmem:[%s622 + $0xc40] sm:$0xff]
                  %1017 = vst [vmem:[%s623 + $0x620] sm:$0xff] %v1016
                  %v1018 = vld [vmem:[%s622 + $0xc50] sm:$0xff]
                  %1019 = vst [vmem:[%s623 + $0x628] sm:$0xff] %v1018
                  %v1020 = vld [vmem:[%s622 + $0xc60] sm:$0xff]
                  %1021 = vst [vmem:[%s623 + $0x630] sm:$0xff] %v1020
                  %v1022 = vld [vmem:[%s622 + $0xc70] sm:$0xff]
                  %1023 = vst [vmem:[%s623 + $0x638] sm:$0xff] %v1022
                  %v1024 = vld [vmem:[%s622 + $0xc80] sm:$0xff]
                  %1025 = vst [vmem:[%s623 + $0x640] sm:$0xff] %v1024
                  %v1026 = vld [vmem:[%s622 + $0xc90] sm:$0xff]
                  %1027 = vst [vmem:[%s623 + $0x648] sm:$0xff] %v1026
                  %v1028 = vld [vmem:[%s622 + $0xca0] sm:$0xff]
                  %1029 = vst [vmem:[%s623 + $0x650] sm:$0xff] %v1028
                  %v1030 = vld [vmem:[%s622 + $0xcb0] sm:$0xff]
                  %1031 = vst [vmem:[%s623 + $0x658] sm:$0xff] %v1030
                  %v1032 = vld [vmem:[%s622 + $0xcc0] sm:$0xff]
                  %1033 = vst [vmem:[%s623 + $0x660] sm:$0xff] %v1032
                  %v1034 = vld [vmem:[%s622 + $0xcd0] sm:$0xff]
                  %1035 = vst [vmem:[%s623 + $0x668] sm:$0xff] %v1034
                  %v1036 = vld [vmem:[%s622 + $0xce0] sm:$0xff]
                  %1037 = vst [vmem:[%s623 + $0x670] sm:$0xff] %v1036
                  %v1038 = vld [vmem:[%s622 + $0xcf0] sm:$0xff]
                  %1039 = vst [vmem:[%s623 + $0x678] sm:$0xff] %v1038
                $region52: #{forward.14} parent=46 // loop_footer
                  %s621 = sadd.s32 1, %s617
                $region53: #{forward.14} parent=46 // loop_footer_branch
                  %616 = sbr.rel target = $region49
                $region54: #{forward.14} parent=46 // loop_exit
                  _
              $region47: #{forward.14} parent=31 // pred_fallthru
                _
              // Predicated region
              $region55: #{forward.14} parent=31 // pred_check
                _
              $region56: #{forward.14} parent=31 // pred_check_branch
                %1041 = sbr.rel target = $region58
              $region57: #{forward.14} parent=31 // pred_region
                _
              $region58: #{forward.14} parent=31 // pred_fallthru
                _
            $region32: #{forward.14} parent=27 // pred_fallthru
              _
            // Predicated region
            $region33: #{forward.14} parent=27 // pred_check
              _
            $region34: #{forward.14} parent=27 // pred_check_branch
              %188 = sbr.rel target = $region36
            $region35: #{forward.14} parent=27 // pred_region
              loop: start=0, step=1, limit=1
              $region37: #{forward.14} parent=35 // loop_pre_header
                _
              $region38: #{forward.14} parent=35 // loop_header
                %s191 = sphi 0, %s195
                %p192 = scmp.ge.s32.totalorder %s191, 1
                %s196 = sphi %s182, %s182
                %s197 = sphi %s176, %s176
              $region39: #{forward.14} parent=35 // loop_header_branch
                %194 = sbr.rel (%p192) target = $region43
              $region40: #{forward.14} parent=35 // loop_body
                %v198 = vld [vmem:[%s196] sm:$0xff]
                %199 = vst [vmem:[%s197] sm:$0xff] %v198
                %v200 = vld [vmem:[%s196 + $0x10] sm:$0xff]
                %201 = vst [vmem:[%s197 + $0x8] sm:$0xff] %v200
                %v202 = vld [vmem:[%s196 + $0x20] sm:$0xff]
                %203 = vst [vmem:[%s197 + $0x10] sm:$0xff] %v202
                %v204 = vld [vmem:[%s196 + $0x30] sm:$0xff]
                %205 = vst [vmem:[%s197 + $0x18] sm:$0xff] %v204
                %v206 = vld [vmem:[%s196 + $0x40] sm:$0xff]
                %207 = vst [vmem:[%s197 + $0x20] sm:$0xff] %v206
                %v208 = vld [vmem:[%s196 + $0x50] sm:$0xff]
                %209 = vst [vmem:[%s197 + $0x28] sm:$0xff] %v208
                %v210 = vld [vmem:[%s196 + $0x60] sm:$0xff]
                %211 = vst [vmem:[%s197 + $0x30] sm:$0xff] %v210
                %v212 = vld [vmem:[%s196 + $0x70] sm:$0xff]
                %213 = vst [vmem:[%s197 + $0x38] sm:$0xff] %v212
                %v214 = vld [vmem:[%s196 + $0x80] sm:$0xff]
                %215 = vst [vmem:[%s197 + $0x40] sm:$0xff] %v214
                %v216 = vld [vmem:[%s196 + $0x90] sm:$0xff]
                %217 = vst [vmem:[%s197 + $0x48] sm:$0xff] %v216
                %v218 = vld [vmem:[%s196 + $0xa0] sm:$0xff]
                %219 = vst [vmem:[%s197 + $0x50] sm:$0xff] %v218
                %v220 = vld [vmem:[%s196 + $0xb0] sm:$0xff]
                %221 = vst [vmem:[%s197 + $0x58] sm:$0xff] %v220
                %v222 = vld [vmem:[%s196 + $0xc0] sm:$0xff]
                %223 = vst [vmem:[%s197 + $0x60] sm:$0xff] %v222
                %v224 = vld [vmem:[%s196 + $0xd0] sm:$0xff]
                %225 = vst [vmem:[%s197 + $0x68] sm:$0xff] %v224
                %v226 = vld [vmem:[%s196 + $0xe0] sm:$0xff]
                %227 = vst [vmem:[%s197 + $0x70] sm:$0xff] %v226
                %v228 = vld [vmem:[%s196 + $0xf0] sm:$0xff]
                %229 = vst [vmem:[%s197 + $0x78] sm:$0xff] %v228
                %v230 = vld [vmem:[%s196 + $0x100] sm:$0xff]
                %231 = vst [vmem:[%s197 + $0x80] sm:$0xff] %v230
                %v232 = vld [vmem:[%s196 + $0x110] sm:$0xff]
                %233 = vst [vmem:[%s197 + $0x88] sm:$0xff] %v232
                %v234 = vld [vmem:[%s196 + $0x120] sm:$0xff]
                %235 = vst [vmem:[%s197 + $0x90] sm:$0xff] %v234
                %v236 = vld [vmem:[%s196 + $0x130] sm:$0xff]
                %237 = vst [vmem:[%s197 + $0x98] sm:$0xff] %v236
                %v238 = vld [vmem:[%s196 + $0x140] sm:$0xff]
                %239 = vst [vmem:[%s197 + $0xa0] sm:$0xff] %v238
                %v240 = vld [vmem:[%s196 + $0x150] sm:$0xff]
                %241 = vst [vmem:[%s197 + $0xa8] sm:$0xff] %v240
                %v242 = vld [vmem:[%s196 + $0x160] sm:$0xff]
                %243 = vst [vmem:[%s197 + $0xb0] sm:$0xff] %v242
                %v244 = vld [vmem:[%s196 + $0x170] sm:$0xff]
                %245 = vst [vmem:[%s197 + $0xb8] sm:$0xff] %v244
                %v246 = vld [vmem:[%s196 + $0x180] sm:$0xff]
                %247 = vst [vmem:[%s197 + $0xc0] sm:$0xff] %v246
                %v248 = vld [vmem:[%s196 + $0x190] sm:$0xff]
                %249 = vst [vmem:[%s197 + $0xc8] sm:$0xff] %v248
                %v250 = vld [vmem:[%s196 + $0x1a0] sm:$0xff]
                %251 = vst [vmem:[%s197 + $0xd0] sm:$0xff] %v250
                %v252 = vld [vmem:[%s196 + $0x1b0] sm:$0xff]
                %253 = vst [vmem:[%s197 + $0xd8] sm:$0xff] %v252
                %v254 = vld [vmem:[%s196 + $0x1c0] sm:$0xff]
                %255 = vst [vmem:[%s197 + $0xe0] sm:$0xff] %v254
                %v256 = vld [vmem:[%s196 + $0x1d0] sm:$0xff]
                %257 = vst [vmem:[%s197 + $0xe8] sm:$0xff] %v256
                %v258 = vld [vmem:[%s196 + $0x1e0] sm:$0xff]
                %259 = vst [vmem:[%s197 + $0xf0] sm:$0xff] %v258
                %v260 = vld [vmem:[%s196 + $0x1f0] sm:$0xff]
                %261 = vst [vmem:[%s197 + $0xf8] sm:$0xff] %v260
                %v262 = vld [vmem:[%s196 + $0x200] sm:$0xff]
                %263 = vst [vmem:[%s197 + $0x100] sm:$0xff] %v262
                %v264 = vld [vmem:[%s196 + $0x210] sm:$0xff]
                %265 = vst [vmem:[%s197 + $0x108] sm:$0xff] %v264
                %v266 = vld [vmem:[%s196 + $0x220] sm:$0xff]
                %267 = vst [vmem:[%s197 + $0x110] sm:$0xff] %v266
                %v268 = vld [vmem:[%s196 + $0x230] sm:$0xff]
                %269 = vst [vmem:[%s197 + $0x118] sm:$0xff] %v268
                %v270 = vld [vmem:[%s196 + $0x240] sm:$0xff]
                %271 = vst [vmem:[%s197 + $0x120] sm:$0xff] %v270
                %v272 = vld [vmem:[%s196 + $0x250] sm:$0xff]
                %273 = vst [vmem:[%s197 + $0x128] sm:$0xff] %v272
                %v274 = vld [vmem:[%s196 + $0x260] sm:$0xff]
                %275 = vst [vmem:[%s197 + $0x130] sm:$0xff] %v274
                %v276 = vld [vmem:[%s196 + $0x270] sm:$0xff]
                %277 = vst [vmem:[%s197 + $0x138] sm:$0xff] %v276
                %v278 = vld [vmem:[%s196 + $0x280] sm:$0xff]
                %279 = vst [vmem:[%s197 + $0x140] sm:$0xff] %v278
                %v280 = vld [vmem:[%s196 + $0x290] sm:$0xff]
                %281 = vst [vmem:[%s197 + $0x148] sm:$0xff] %v280
                %v282 = vld [vmem:[%s196 + $0x2a0] sm:$0xff]
                %283 = vst [vmem:[%s197 + $0x150] sm:$0xff] %v282
                %v284 = vld [vmem:[%s196 + $0x2b0] sm:$0xff]
                %285 = vst [vmem:[%s197 + $0x158] sm:$0xff] %v284
                %v286 = vld [vmem:[%s196 + $0x2c0] sm:$0xff]
                %287 = vst [vmem:[%s197 + $0x160] sm:$0xff] %v286
                %v288 = vld [vmem:[%s196 + $0x2d0] sm:$0xff]
                %289 = vst [vmem:[%s197 + $0x168] sm:$0xff] %v288
                %v290 = vld [vmem:[%s196 + $0x2e0] sm:$0xff]
                %291 = vst [vmem:[%s197 + $0x170] sm:$0xff] %v290
                %v292 = vld [vmem:[%s196 + $0x2f0] sm:$0xff]
                %293 = vst [vmem:[%s197 + $0x178] sm:$0xff] %v292
                %v294 = vld [vmem:[%s196 + $0x300] sm:$0xff]
                %295 = vst [vmem:[%s197 + $0x180] sm:$0xff] %v294
                %v296 = vld [vmem:[%s196 + $0x310] sm:$0xff]
                %297 = vst [vmem:[%s197 + $0x188] sm:$0xff] %v296
                %v298 = vld [vmem:[%s196 + $0x320] sm:$0xff]
                %299 = vst [vmem:[%s197 + $0x190] sm:$0xff] %v298
                %v300 = vld [vmem:[%s196 + $0x330] sm:$0xff]
                %301 = vst [vmem:[%s197 + $0x198] sm:$0xff] %v300
                %v302 = vld [vmem:[%s196 + $0x340] sm:$0xff]
                %303 = vst [vmem:[%s197 + $0x1a0] sm:$0xff] %v302
                %v304 = vld [vmem:[%s196 + $0x350] sm:$0xff]
                %305 = vst [vmem:[%s197 + $0x1a8] sm:$0xff] %v304
                %v306 = vld [vmem:[%s196 + $0x360] sm:$0xff]
                %307 = vst [vmem:[%s197 + $0x1b0] sm:$0xff] %v306
                %v308 = vld [vmem:[%s196 + $0x370] sm:$0xff]
                %309 = vst [vmem:[%s197 + $0x1b8] sm:$0xff] %v308
                %v310 = vld [vmem:[%s196 + $0x380] sm:$0xff]
                %311 = vst [vmem:[%s197 + $0x1c0] sm:$0xff] %v310
                %v312 = vld [vmem:[%s196 + $0x390] sm:$0xff]
                %313 = vst [vmem:[%s197 + $0x1c8] sm:$0xff] %v312
                %v314 = vld [vmem:[%s196 + $0x3a0] sm:$0xff]
                %315 = vst [vmem:[%s197 + $0x1d0] sm:$0xff] %v314
                %v316 = vld [vmem:[%s196 + $0x3b0] sm:$0xff]
                %317 = vst [vmem:[%s197 + $0x1d8] sm:$0xff] %v316
                %v318 = vld [vmem:[%s196 + $0x3c0] sm:$0xff]
                %319 = vst [vmem:[%s197 + $0x1e0] sm:$0xff] %v318
                %v320 = vld [vmem:[%s196 + $0x3d0] sm:$0xff]
                %321 = vst [vmem:[%s197 + $0x1e8] sm:$0xff] %v320
                %v322 = vld [vmem:[%s196 + $0x3e0] sm:$0xff]
                %323 = vst [vmem:[%s197 + $0x1f0] sm:$0xff] %v322
                %v324 = vld [vmem:[%s196 + $0x3f0] sm:$0xff]
                %325 = vst [vmem:[%s197 + $0x1f8] sm:$0xff] %v324
                %v326 = vld [vmem:[%s196 + $0x400] sm:$0xff]
                %327 = vst [vmem:[%s197 + $0x200] sm:$0xff] %v326
                %v328 = vld [vmem:[%s196 + $0x410] sm:$0xff]
                %329 = vst [vmem:[%s197 + $0x208] sm:$0xff] %v328
                %v330 = vld [vmem:[%s196 + $0x420] sm:$0xff]
                %331 = vst [vmem:[%s197 + $0x210] sm:$0xff] %v330
                %v332 = vld [vmem:[%s196 + $0x430] sm:$0xff]
                %333 = vst [vmem:[%s197 + $0x218] sm:$0xff] %v332
                %v334 = vld [vmem:[%s196 + $0x440] sm:$0xff]
                %335 = vst [vmem:[%s197 + $0x220] sm:$0xff] %v334
                %v336 = vld [vmem:[%s196 + $0x450] sm:$0xff]
                %337 = vst [vmem:[%s197 + $0x228] sm:$0xff] %v336
                %v338 = vld [vmem:[%s196 + $0x460] sm:$0xff]
                %339 = vst [vmem:[%s197 + $0x230] sm:$0xff] %v338
                %v340 = vld [vmem:[%s196 + $0x470] sm:$0xff]
                %341 = vst [vmem:[%s197 + $0x238] sm:$0xff] %v340
                %v342 = vld [vmem:[%s196 + $0x480] sm:$0xff]
                %343 = vst [vmem:[%s197 + $0x240] sm:$0xff] %v342
                %v344 = vld [vmem:[%s196 + $0x490] sm:$0xff]
                %345 = vst [vmem:[%s197 + $0x248] sm:$0xff] %v344
                %v346 = vld [vmem:[%s196 + $0x4a0] sm:$0xff]
                %347 = vst [vmem:[%s197 + $0x250] sm:$0xff] %v346
                %v348 = vld [vmem:[%s196 + $0x4b0] sm:$0xff]
                %349 = vst [vmem:[%s197 + $0x258] sm:$0xff] %v348
                %v350 = vld [vmem:[%s196 + $0x4c0] sm:$0xff]
                %351 = vst [vmem:[%s197 + $0x260] sm:$0xff] %v350
                %v352 = vld [vmem:[%s196 + $0x4d0] sm:$0xff]
                %353 = vst [vmem:[%s197 + $0x268] sm:$0xff] %v352
                %v354 = vld [vmem:[%s196 + $0x4e0] sm:$0xff]
                %355 = vst [vmem:[%s197 + $0x270] sm:$0xff] %v354
                %v356 = vld [vmem:[%s196 + $0x4f0] sm:$0xff]
                %357 = vst [vmem:[%s197 + $0x278] sm:$0xff] %v356
                %v358 = vld [vmem:[%s196 + $0x500] sm:$0xff]
                %359 = vst [vmem:[%s197 + $0x280] sm:$0xff] %v358
                %v360 = vld [vmem:[%s196 + $0x510] sm:$0xff]
                %361 = vst [vmem:[%s197 + $0x288] sm:$0xff] %v360
                %v362 = vld [vmem:[%s196 + $0x520] sm:$0xff]
                %363 = vst [vmem:[%s197 + $0x290] sm:$0xff] %v362
                %v364 = vld [vmem:[%s196 + $0x530] sm:$0xff]
                %365 = vst [vmem:[%s197 + $0x298] sm:$0xff] %v364
                %v366 = vld [vmem:[%s196 + $0x540] sm:$0xff]
                %367 = vst [vmem:[%s197 + $0x2a0] sm:$0xff] %v366
                %v368 = vld [vmem:[%s196 + $0x550] sm:$0xff]
                %369 = vst [vmem:[%s197 + $0x2a8] sm:$0xff] %v368
                %v370 = vld [vmem:[%s196 + $0x560] sm:$0xff]
                %371 = vst [vmem:[%s197 + $0x2b0] sm:$0xff] %v370
                %v372 = vld [vmem:[%s196 + $0x570] sm:$0xff]
                %373 = vst [vmem:[%s197 + $0x2b8] sm:$0xff] %v372
                %v374 = vld [vmem:[%s196 + $0x580] sm:$0xff]
                %375 = vst [vmem:[%s197 + $0x2c0] sm:$0xff] %v374
                %v376 = vld [vmem:[%s196 + $0x590] sm:$0xff]
                %377 = vst [vmem:[%s197 + $0x2c8] sm:$0xff] %v376
                %v378 = vld [vmem:[%s196 + $0x5a0] sm:$0xff]
                %379 = vst [vmem:[%s197 + $0x2d0] sm:$0xff] %v378
                %v380 = vld [vmem:[%s196 + $0x5b0] sm:$0xff]
                %381 = vst [vmem:[%s197 + $0x2d8] sm:$0xff] %v380
                %v382 = vld [vmem:[%s196 + $0x5c0] sm:$0xff]
                %383 = vst [vmem:[%s197 + $0x2e0] sm:$0xff] %v382
                %v384 = vld [vmem:[%s196 + $0x5d0] sm:$0xff]
                %385 = vst [vmem:[%s197 + $0x2e8] sm:$0xff] %v384
                %v386 = vld [vmem:[%s196 + $0x5e0] sm:$0xff]
                %387 = vst [vmem:[%s197 + $0x2f0] sm:$0xff] %v386
                %v388 = vld [vmem:[%s196 + $0x5f0] sm:$0xff]
                %389 = vst [vmem:[%s197 + $0x2f8] sm:$0xff] %v388
                %v390 = vld [vmem:[%s196 + $0x600] sm:$0xff]
                %391 = vst [vmem:[%s197 + $0x300] sm:$0xff] %v390
                %v392 = vld [vmem:[%s196 + $0x610] sm:$0xff]
                %393 = vst [vmem:[%s197 + $0x308] sm:$0xff] %v392
                %v394 = vld [vmem:[%s196 + $0x620] sm:$0xff]
                %395 = vst [vmem:[%s197 + $0x310] sm:$0xff] %v394
                %v396 = vld [vmem:[%s196 + $0x630] sm:$0xff]
                %397 = vst [vmem:[%s197 + $0x318] sm:$0xff] %v396
                %v398 = vld [vmem:[%s196 + $0x640] sm:$0xff]
                %399 = vst [vmem:[%s197 + $0x320] sm:$0xff] %v398
                %v400 = vld [vmem:[%s196 + $0x650] sm:$0xff]
                %401 = vst [vmem:[%s197 + $0x328] sm:$0xff] %v400
                %v402 = vld [vmem:[%s196 + $0x660] sm:$0xff]
                %403 = vst [vmem:[%s197 + $0x330] sm:$0xff] %v402
                %v404 = vld [vmem:[%s196 + $0x670] sm:$0xff]
                %405 = vst [vmem:[%s197 + $0x338] sm:$0xff] %v404
                %v406 = vld [vmem:[%s196 + $0x680] sm:$0xff]
                %407 = vst [vmem:[%s197 + $0x340] sm:$0xff] %v406
                %v408 = vld [vmem:[%s196 + $0x690] sm:$0xff]
                %409 = vst [vmem:[%s197 + $0x348] sm:$0xff] %v408
                %v410 = vld [vmem:[%s196 + $0x6a0] sm:$0xff]
                %411 = vst [vmem:[%s197 + $0x350] sm:$0xff] %v410
                %v412 = vld [vmem:[%s196 + $0x6b0] sm:$0xff]
                %413 = vst [vmem:[%s197 + $0x358] sm:$0xff] %v412
                %v414 = vld [vmem:[%s196 + $0x6c0] sm:$0xff]
                %415 = vst [vmem:[%s197 + $0x360] sm:$0xff] %v414
                %v416 = vld [vmem:[%s196 + $0x6d0] sm:$0xff]
                %417 = vst [vmem:[%s197 + $0x368] sm:$0xff] %v416
                %v418 = vld [vmem:[%s196 + $0x6e0] sm:$0xff]
                %419 = vst [vmem:[%s197 + $0x370] sm:$0xff] %v418
                %v420 = vld [vmem:[%s196 + $0x6f0] sm:$0xff]
                %421 = vst [vmem:[%s197 + $0x378] sm:$0xff] %v420
                %v422 = vld [vmem:[%s196 + $0x700] sm:$0xff]
                %423 = vst [vmem:[%s197 + $0x380] sm:$0xff] %v422
                %v424 = vld [vmem:[%s196 + $0x710] sm:$0xff]
                %425 = vst [vmem:[%s197 + $0x388] sm:$0xff] %v424
                %v426 = vld [vmem:[%s196 + $0x720] sm:$0xff]
                %427 = vst [vmem:[%s197 + $0x390] sm:$0xff] %v426
                %v428 = vld [vmem:[%s196 + $0x730] sm:$0xff]
                %429 = vst [vmem:[%s197 + $0x398] sm:$0xff] %v428
                %v430 = vld [vmem:[%s196 + $0x740] sm:$0xff]
                %431 = vst [vmem:[%s197 + $0x3a0] sm:$0xff] %v430
                %v432 = vld [vmem:[%s196 + $0x750] sm:$0xff]
                %433 = vst [vmem:[%s197 + $0x3a8] sm:$0xff] %v432
                %v434 = vld [vmem:[%s196 + $0x760] sm:$0xff]
                %435 = vst [vmem:[%s197 + $0x3b0] sm:$0xff] %v434
                %v436 = vld [vmem:[%s196 + $0x770] sm:$0xff]
                %437 = vst [vmem:[%s197 + $0x3b8] sm:$0xff] %v436
                %v438 = vld [vmem:[%s196 + $0x780] sm:$0xff]
                %439 = vst [vmem:[%s197 + $0x3c0] sm:$0xff] %v438
                %v440 = vld [vmem:[%s196 + $0x790] sm:$0xff]
                %441 = vst [vmem:[%s197 + $0x3c8] sm:$0xff] %v440
                %v442 = vld [vmem:[%s196 + $0x7a0] sm:$0xff]
                %443 = vst [vmem:[%s197 + $0x3d0] sm:$0xff] %v442
                %v444 = vld [vmem:[%s196 + $0x7b0] sm:$0xff]
                %445 = vst [vmem:[%s197 + $0x3d8] sm:$0xff] %v444
                %v446 = vld [vmem:[%s196 + $0x7c0] sm:$0xff]
                %447 = vst [vmem:[%s197 + $0x3e0] sm:$0xff] %v446
                %v448 = vld [vmem:[%s196 + $0x7d0] sm:$0xff]
                %449 = vst [vmem:[%s197 + $0x3e8] sm:$0xff] %v448
                %v450 = vld [vmem:[%s196 + $0x7e0] sm:$0xff]
                %451 = vst [vmem:[%s197 + $0x3f0] sm:$0xff] %v450
                %v452 = vld [vmem:[%s196 + $0x7f0] sm:$0xff]
                %453 = vst [vmem:[%s197 + $0x3f8] sm:$0xff] %v452
                %v454 = vld [vmem:[%s196 + $0x800] sm:$0xff]
                %455 = vst [vmem:[%s197 + $0x400] sm:$0xff] %v454
                %v456 = vld [vmem:[%s196 + $0x810] sm:$0xff]
                %457 = vst [vmem:[%s197 + $0x408] sm:$0xff] %v456
                %v458 = vld [vmem:[%s196 + $0x820] sm:$0xff]
                %459 = vst [vmem:[%s197 + $0x410] sm:$0xff] %v458
                %v460 = vld [vmem:[%s196 + $0x830] sm:$0xff]
                %461 = vst [vmem:[%s197 + $0x418] sm:$0xff] %v460
                %v462 = vld [vmem:[%s196 + $0x840] sm:$0xff]
                %463 = vst [vmem:[%s197 + $0x420] sm:$0xff] %v462
                %v464 = vld [vmem:[%s196 + $0x850] sm:$0xff]
                %465 = vst [vmem:[%s197 + $0x428] sm:$0xff] %v464
                %v466 = vld [vmem:[%s196 + $0x860] sm:$0xff]
                %467 = vst [vmem:[%s197 + $0x430] sm:$0xff] %v466
                %v468 = vld [vmem:[%s196 + $0x870] sm:$0xff]
                %469 = vst [vmem:[%s197 + $0x438] sm:$0xff] %v468
                %v470 = vld [vmem:[%s196 + $0x880] sm:$0xff]
                %471 = vst [vmem:[%s197 + $0x440] sm:$0xff] %v470
                %v472 = vld [vmem:[%s196 + $0x890] sm:$0xff]
                %473 = vst [vmem:[%s197 + $0x448] sm:$0xff] %v472
                %v474 = vld [vmem:[%s196 + $0x8a0] sm:$0xff]
                %475 = vst [vmem:[%s197 + $0x450] sm:$0xff] %v474
                %v476 = vld [vmem:[%s196 + $0x8b0] sm:$0xff]
                %477 = vst [vmem:[%s197 + $0x458] sm:$0xff] %v476
                %v478 = vld [vmem:[%s196 + $0x8c0] sm:$0xff]
                %479 = vst [vmem:[%s197 + $0x460] sm:$0xff] %v478
                %v480 = vld [vmem:[%s196 + $0x8d0] sm:$0xff]
                %481 = vst [vmem:[%s197 + $0x468] sm:$0xff] %v480
                %v482 = vld [vmem:[%s196 + $0x8e0] sm:$0xff]
                %483 = vst [vmem:[%s197 + $0x470] sm:$0xff] %v482
                %v484 = vld [vmem:[%s196 + $0x8f0] sm:$0xff]
                %485 = vst [vmem:[%s197 + $0x478] sm:$0xff] %v484
                %v486 = vld [vmem:[%s196 + $0x900] sm:$0xff]
                %487 = vst [vmem:[%s197 + $0x480] sm:$0xff] %v486
                %v488 = vld [vmem:[%s196 + $0x910] sm:$0xff]
                %489 = vst [vmem:[%s197 + $0x488] sm:$0xff] %v488
                %v490 = vld [vmem:[%s196 + $0x920] sm:$0xff]
                %491 = vst [vmem:[%s197 + $0x490] sm:$0xff] %v490
                %v492 = vld [vmem:[%s196 + $0x930] sm:$0xff]
                %493 = vst [vmem:[%s197 + $0x498] sm:$0xff] %v492
                %v494 = vld [vmem:[%s196 + $0x940] sm:$0xff]
                %495 = vst [vmem:[%s197 + $0x4a0] sm:$0xff] %v494
                %v496 = vld [vmem:[%s196 + $0x950] sm:$0xff]
                %497 = vst [vmem:[%s197 + $0x4a8] sm:$0xff] %v496
                %v498 = vld [vmem:[%s196 + $0x960] sm:$0xff]
                %499 = vst [vmem:[%s197 + $0x4b0] sm:$0xff] %v498
                %v500 = vld [vmem:[%s196 + $0x970] sm:$0xff]
                %501 = vst [vmem:[%s197 + $0x4b8] sm:$0xff] %v500
                %v502 = vld [vmem:[%s196 + $0x980] sm:$0xff]
                %503 = vst [vmem:[%s197 + $0x4c0] sm:$0xff] %v502
                %v504 = vld [vmem:[%s196 + $0x990] sm:$0xff]
                %505 = vst [vmem:[%s197 + $0x4c8] sm:$0xff] %v504
                %v506 = vld [vmem:[%s196 + $0x9a0] sm:$0xff]
                %507 = vst [vmem:[%s197 + $0x4d0] sm:$0xff] %v506
                %v508 = vld [vmem:[%s196 + $0x9b0] sm:$0xff]
                %509 = vst [vmem:[%s197 + $0x4d8] sm:$0xff] %v508
                %v510 = vld [vmem:[%s196 + $0x9c0] sm:$0xff]
                %511 = vst [vmem:[%s197 + $0x4e0] sm:$0xff] %v510
                %v512 = vld [vmem:[%s196 + $0x9d0] sm:$0xff]
                %513 = vst [vmem:[%s197 + $0x4e8] sm:$0xff] %v512
                %v514 = vld [vmem:[%s196 + $0x9e0] sm:$0xff]
                %515 = vst [vmem:[%s197 + $0x4f0] sm:$0xff] %v514
                %v516 = vld [vmem:[%s196 + $0x9f0] sm:$0xff]
                %517 = vst [vmem:[%s197 + $0x4f8] sm:$0xff] %v516
                %v518 = vld [vmem:[%s196 + $0xa00] sm:$0xff]
                %519 = vst [vmem:[%s197 + $0x500] sm:$0xff] %v518
                %v520 = vld [vmem:[%s196 + $0xa10] sm:$0xff]
                %521 = vst [vmem:[%s197 + $0x508] sm:$0xff] %v520
                %v522 = vld [vmem:[%s196 + $0xa20] sm:$0xff]
                %523 = vst [vmem:[%s197 + $0x510] sm:$0xff] %v522
                %v524 = vld [vmem:[%s196 + $0xa30] sm:$0xff]
                %525 = vst [vmem:[%s197 + $0x518] sm:$0xff] %v524
                %v526 = vld [vmem:[%s196 + $0xa40] sm:$0xff]
                %527 = vst [vmem:[%s197 + $0x520] sm:$0xff] %v526
                %v528 = vld [vmem:[%s196 + $0xa50] sm:$0xff]
                %529 = vst [vmem:[%s197 + $0x528] sm:$0xff] %v528
                %v530 = vld [vmem:[%s196 + $0xa60] sm:$0xff]
                %531 = vst [vmem:[%s197 + $0x530] sm:$0xff] %v530
                %v532 = vld [vmem:[%s196 + $0xa70] sm:$0xff]
                %533 = vst [vmem:[%s197 + $0x538] sm:$0xff] %v532
                %v534 = vld [vmem:[%s196 + $0xa80] sm:$0xff]
                %535 = vst [vmem:[%s197 + $0x540] sm:$0xff] %v534
                %v536 = vld [vmem:[%s196 + $0xa90] sm:$0xff]
                %537 = vst [vmem:[%s197 + $0x548] sm:$0xff] %v536
                %v538 = vld [vmem:[%s196 + $0xaa0] sm:$0xff]
                %539 = vst [vmem:[%s197 + $0x550] sm:$0xff] %v538
                %v540 = vld [vmem:[%s196 + $0xab0] sm:$0xff]
                %541 = vst [vmem:[%s197 + $0x558] sm:$0xff] %v540
                %v542 = vld [vmem:[%s196 + $0xac0] sm:$0xff]
                %543 = vst [vmem:[%s197 + $0x560] sm:$0xff] %v542
                %v544 = vld [vmem:[%s196 + $0xad0] sm:$0xff]
                %545 = vst [vmem:[%s197 + $0x568] sm:$0xff] %v544
                %v546 = vld [vmem:[%s196 + $0xae0] sm:$0xff]
                %547 = vst [vmem:[%s197 + $0x570] sm:$0xff] %v546
                %v548 = vld [vmem:[%s196 + $0xaf0] sm:$0xff]
                %549 = vst [vmem:[%s197 + $0x578] sm:$0xff] %v548
                %v550 = vld [vmem:[%s196 + $0xb00] sm:$0xff]
                %551 = vst [vmem:[%s197 + $0x580] sm:$0xff] %v550
                %v552 = vld [vmem:[%s196 + $0xb10] sm:$0xff]
                %553 = vst [vmem:[%s197 + $0x588] sm:$0xff] %v552
                %v554 = vld [vmem:[%s196 + $0xb20] sm:$0xff]
                %555 = vst [vmem:[%s197 + $0x590] sm:$0xff] %v554
                %v556 = vld [vmem:[%s196 + $0xb30] sm:$0xff]
                %557 = vst [vmem:[%s197 + $0x598] sm:$0xff] %v556
                %v558 = vld [vmem:[%s196 + $0xb40] sm:$0xff]
                %559 = vst [vmem:[%s197 + $0x5a0] sm:$0xff] %v558
                %v560 = vld [vmem:[%s196 + $0xb50] sm:$0xff]
                %561 = vst [vmem:[%s197 + $0x5a8] sm:$0xff] %v560
                %v562 = vld [vmem:[%s196 + $0xb60] sm:$0xff]
                %563 = vst [vmem:[%s197 + $0x5b0] sm:$0xff] %v562
                %v564 = vld [vmem:[%s196 + $0xb70] sm:$0xff]
                %565 = vst [vmem:[%s197 + $0x5b8] sm:$0xff] %v564
                %v566 = vld [vmem:[%s196 + $0xb80] sm:$0xff]
                %567 = vst [vmem:[%s197 + $0x5c0] sm:$0xff] %v566
                %v568 = vld [vmem:[%s196 + $0xb90] sm:$0xff]
                %569 = vst [vmem:[%s197 + $0x5c8] sm:$0xff] %v568
                %v570 = vld [vmem:[%s196 + $0xba0] sm:$0xff]
                %571 = vst [vmem:[%s197 + $0x5d0] sm:$0xff] %v570
                %v572 = vld [vmem:[%s196 + $0xbb0] sm:$0xff]
                %573 = vst [vmem:[%s197 + $0x5d8] sm:$0xff] %v572
                %v574 = vld [vmem:[%s196 + $0xbc0] sm:$0xff]
                %575 = vst [vmem:[%s197 + $0x5e0] sm:$0xff] %v574
                %v576 = vld [vmem:[%s196 + $0xbd0] sm:$0xff]
                %577 = vst [vmem:[%s197 + $0x5e8] sm:$0xff] %v576
                %v578 = vld [vmem:[%s196 + $0xbe0] sm:$0xff]
                %579 = vst [vmem:[%s197 + $0x5f0] sm:$0xff] %v578
                %v580 = vld [vmem:[%s196 + $0xbf0] sm:$0xff]
                %581 = vst [vmem:[%s197 + $0x5f8] sm:$0xff] %v580
                %v582 = vld [vmem:[%s196 + $0xc00] sm:$0xff]
                %583 = vst [vmem:[%s197 + $0x600] sm:$0xff] %v582
                %v584 = vld [vmem:[%s196 + $0xc10] sm:$0xff]
                %585 = vst [vmem:[%s197 + $0x608] sm:$0xff] %v584
                %v586 = vld [vmem:[%s196 + $0xc20] sm:$0xff]
                %587 = vst [vmem:[%s197 + $0x610] sm:$0xff] %v586
                %v588 = vld [vmem:[%s196 + $0xc30] sm:$0xff]
                %589 = vst [vmem:[%s197 + $0x618] sm:$0xff] %v588
                %v590 = vld [vmem:[%s196 + $0xc40] sm:$0xff]
                %591 = vst [vmem:[%s197 + $0x620] sm:$0xff] %v590
                %v592 = vld [vmem:[%s196 + $0xc50] sm:$0xff]
                %593 = vst [vmem:[%s197 + $0x628] sm:$0xff] %v592
                %v594 = vld [vmem:[%s196 + $0xc60] sm:$0xff]
                %595 = vst [vmem:[%s197 + $0x630] sm:$0xff] %v594
                %v596 = vld [vmem:[%s196 + $0xc70] sm:$0xff]
                %597 = vst [vmem:[%s197 + $0x638] sm:$0xff] %v596
                %v598 = vld [vmem:[%s196 + $0xc80] sm:$0xff]
                %599 = vst [vmem:[%s197 + $0x640] sm:$0xff] %v598
                %v600 = vld [vmem:[%s196 + $0xc90] sm:$0xff]
                %601 = vst [vmem:[%s197 + $0x648] sm:$0xff] %v600
                %v602 = vld [vmem:[%s196 + $0xca0] sm:$0xff]
                %603 = vst [vmem:[%s197 + $0x650] sm:$0xff] %v602
                %v604 = vld [vmem:[%s196 + $0xcb0] sm:$0xff]
                %605 = vst [vmem:[%s197 + $0x658] sm:$0xff] %v604
                %v606 = vld [vmem:[%s196 + $0xcc0] sm:$0xff]
                %607 = vst [vmem:[%s197 + $0x660] sm:$0xff] %v606
                %v608 = vld [vmem:[%s196 + $0xcd0] sm:$0xff]
                %609 = vst [vmem:[%s197 + $0x668] sm:$0xff] %v608
                %v610 = vld [vmem:[%s196 + $0xce0] sm:$0xff]
                %611 = vst [vmem:[%s197 + $0x670] sm:$0xff] %v610
                %v612 = vld [vmem:[%s196 + $0xcf0] sm:$0xff]
                %613 = vst [vmem:[%s197 + $0x678] sm:$0xff] %v612
              $region41: #{forward.14} parent=35 // loop_footer
                %s195 = sadd.s32 1, %s191
              $region42: #{forward.14} parent=35 // loop_footer_branch
                %190 = sbr.rel target = $region38
              $region43: #{forward.14} parent=35 // loop_exit
                _
            $region36: #{forward.14} parent=27 // pred_fallthru
              _
          $region28: #{forward.14} parent=23 // pred_fallthru
            _
          %1042 = vnop
        $region24: #{forward.14} parent=15 // pred_fallthru
          _
        // Predicated region
        $region59: #{forward.14} parent=15 // pred_check
          %p1043 = pneg %p104
        $region60: #{forward.14} parent=15 // pred_check_branch
          %1045 = sbr.rel (%p1043) target = $region62
        $region61: #{forward.14} parent=15 // pred_region
          %s1046 = smul.u32 2, %s17
          %p1047 = scmp.lt.s32.totalorder %s1046, 3
          %s1048 = scalar_select %p1047, %s1046, 3
          %s1049 = scalar_lea.vmem %s2, %s1048
          %s1050 = smul.u32 2, %s17
        $region62: #{forward.14} parent=15 // pred_fallthru
          _
      $region16: #{forward.14} parent=5 // pred_fallthru
        _
      %p1051 = scmp.le.s32.totalorder 1, %s9
      %p1052 = scmp.lt.s32.totalorder %s9, 27
      %p1053 = pnand %p1051, %p1052
      %p1054 = pneg %p1053
      // Predicated region
      $region63: #{forward.14} parent=5 // pred_check
        _
      $region64: #{forward.14} parent=5 // pred_check_branch
        %1056 = sbr.rel (%p1053) target = $region66
      $region65: #{forward.14} parent=5 // pred_region
        %s1057 = ssub.s32 %s9, 1
        %s1058 = sand.u32 %s71, 1
        %s1059 = sand.u32 %s71, 1
        %s1060 = smul.addr %s1059, 1664
        %s1061 = scalar_lea.vmem [#allocation3], %s1060
        // Predicated region
        $region67: #{forward.14} parent=65 // pred_check
          %p1062 = pneg %p84
        $region68: #{forward.14} parent=65 // pred_check_branch
          %1064 = sbr.rel (%p1062) target = $region70
        $region69: #{forward.14} parent=65 // pred_region
          _
        $region70: #{forward.14} parent=65 // pred_fallthru
          _
        %s1065 = smul.u32 13, %s21
        %p1066 = scmp.lt.s32.totalorder %s19, 0
        %s1067 = scalar_select %p1066, %s19, 0
        %p1068 = scmp.lt.s32.totalorder %s1065, 168
        %s1069 = scalar_select %p1068, %s1065, 168
        %s1070 = smul.addr %s1067, 169
        %s1071 = sadd.s32 %s1069, %s1070
        %s1072 = smul.addr %s1071, 4
        %s1073 = scalar_lea.vmem %s0, %s1072
        %p1074 = pneg %p56
        %p1075 = pneg %p53
        %s1076 = sand.u32 %s71, 1
        %s1077 = sand.u32 %s71, 1
        %s1078 = smul.addr %s1077, 1664
        %s1079 = scalar_lea.vmem [#allocation3], %s1078
        %p1080 = pneg %p84
        %p1081 = pneg %p81
        %s1082 = smul.u32 2, %s20
        %p1083 = scmp.lt.s32.totalorder %s1082, 3
        %s1084 = scalar_select %p1083, %s1082, 3
        %s1085 = scalar_lea.vmem %s2, %s1084
        %p1086 = pneg %p110
        %p1087 = pneg %p107
        %p1088 = pneg %p138
        %p1089 = pneg %p135
        %s1090 = smul.u32 2, %s20
        %p1091 = scmp.lt.s32.totalorder %s19, 0
        %s1092 = scalar_select %p1091, %s19, 0
        %p1093 = scmp.lt.s32.totalorder %s1090, 3
        %s1094 = scalar_select %p1093, %s1090, 3
        %s1095 = smul.addr %s1092, 4
        %s1096 = sadd.s32 %s1094, %s1095
        %s1097 = smul.addr %s1096, 8
        %s1098 = scalar_lea.vmem %s3, %s1097
        %s1099 = smul.u32 13, %s21
        %p1100 = scmp.lt.s32.totalorder %s19, 0
        %s1101 = scalar_select %p1100, %s19, 0
        %p1102 = scmp.lt.s32.totalorder %s1099, 168
        %s1103 = scalar_select %p1102, %s1099, 168
        %s1104 = smul.addr %s1101, 169
        %s1105 = sadd.s32 %s1103, %s1104
        %s1106 = smul.addr %s1105, 4
        %s1107 = scalar_lea.vmem %s0, %s1106
        %s1108 = smul.u32 13, %s21
        %s1109 = smul.u32 208, %s21
        %s1110 = smul.u32 2, %s20
        %s1111 = smul.u32 2, %s20
        %p1112 = scmp.lt.s32.totalorder %s1111, 3
        %s1113 = scalar_select %p1112, %s1111, 3
        %s1114 = scalar_lea.vmem %s2, %s1113
        %s1115 = smul.u32 2, %s20
        %s1116 = smul.u32 2, %s20
        %p1117 = scmp.lt.s32.totalorder %s19, 0
        %s1118 = scalar_select %p1117, %s19, 0
        %p1119 = scmp.lt.s32.totalorder %s1116, 3
        %s1120 = scalar_select %p1119, %s1116, 3
        %s1121 = smul.addr %s1118, 4
        %s1122 = sadd.s32 %s1120, %s1121
        %s1123 = smul.addr %s1122, 8
        %s1124 = scalar_lea.vmem %s3, %s1123
        %s1125 = smul.u32 2, %s20
        %p1127 = scmp.eq.s32.totalorder %s21, 0
        // Predicated region
        $region71: #{forward.14} parent=65 // pred_check
          %p1128 = pneg %p1127
        $region72: #{forward.14} parent=65 // pred_check_branch
          %1130 = sbr.rel (%p1128) target = $region74
        $region73: #{forward.14} parent=65 // pred_region
          %1131 = vst [vmem:[#allocation2] sm:$0xff] 0.0
          %1132 = vst [vmem:[#allocation2 + $0x8] sm:$0xff] 0.0
        $region74: #{forward.14} parent=65 // pred_fallthru
          _
        %v1133 = vld [vmem:[#allocation2] sm:$0xff]
        %v1134 = vld [vmem:[#allocation2 + $0x8] sm:$0xff]
        %v1135 = vld [vmem:[%s1107] sm:$0xff]
        %v1136 = vld [vmem:[%s1107 + $0x8] sm:$0xff]
        %v1137 = vld [vmem:[%s1107 + $0x10] sm:$0xff]
        %v1138 = vld [vmem:[%s1107 + $0x18] sm:$0xff]
        %v1139 = vld [vmem:[%s1107 + $0x20] sm:$0xff]
        %v1140 = vld [vmem:[%s1107 + $0x28] sm:$0xff]
        %v1141 = vld [vmem:[%s1107 + $0x30] sm:$0xf]
        %v1142 = vld [vmem:[%s1061] sm:$0xff]
        %v1143 = vld [vmem:[%s1061 + $0x8] sm:$0xff]
        %v1144 = vld [vmem:[%s1061 + $0x10] sm:$0xff]
        %v1145 = vld [vmem:[%s1061 + $0x18] sm:$0xff]
        %v1146 = vld [vmem:[%s1061 + $0x20] sm:$0xff]
        %v1147 = vld [vmem:[%s1061 + $0x28] sm:$0xff]
        %v1148 = vld [vmem:[%s1061 + $0x30] sm:$0xff]
        %v1149 = vld [vmem:[%s1061 + $0x38] sm:$0xff]
        %v1150 = vld [vmem:[%s1061 + $0x40] sm:$0xff]
        %v1151 = vld [vmem:[%s1061 + $0x48] sm:$0xff]
        %v1152 = vld [vmem:[%s1061 + $0x50] sm:$0xff]
        %v1153 = vld [vmem:[%s1061 + $0x58] sm:$0xff]
        %v1154 = vld [vmem:[%s1061 + $0x60] sm:$0xff]
        %v1155 = vld [vmem:[%s1061 + $0x68] sm:$0xff]
        %v1156 = vld [vmem:[%s1061 + $0x70] sm:$0xff]
        %v1157 = vld [vmem:[%s1061 + $0x78] sm:$0xff]
        %v1158 = vld [vmem:[%s1061 + $0x80] sm:$0xff]
        %v1159 = vld [vmem:[%s1061 + $0x88] sm:$0xff]
        %v1160 = vld [vmem:[%s1061 + $0x90] sm:$0xff]
        %v1161 = vld [vmem:[%s1061 + $0x98] sm:$0xff]
        %v1162 = vld [vmem:[%s1061 + $0xa0] sm:$0xff]
        %v1163 = vld [vmem:[%s1061 + $0xa8] sm:$0xff]
        %v1164 = vld [vmem:[%s1061 + $0xb0] sm:$0xff]
        %v1165 = vld [vmem:[%s1061 + $0xb8] sm:$0xff]
        %v1166 = vld [vmem:[%s1061 + $0xc0] sm:$0xff]
        %v1167 = vld [vmem:[%s1061 + $0xc8] sm:$0xff]
        %v1168 = vld [vmem:[%s1061 + $0xd0] sm:$0xff]
        %v1169 = vld [vmem:[%s1061 + $0xd8] sm:$0xff]
        %v1170 = vld [vmem:[%s1061 + $0xe0] sm:$0xff]
        %v1171 = vld [vmem:[%s1061 + $0xe8] sm:$0xff]
        %v1172 = vld [vmem:[%s1061 + $0xf0] sm:$0xff]
        %v1173 = vld [vmem:[%s1061 + $0xf8] sm:$0xff]
        %v1174 = vld [vmem:[%s1061 + $0x100] sm:$0xff]
        %v1175 = vld [vmem:[%s1061 + $0x108] sm:$0xff]
        %v1176 = vld [vmem:[%s1061 + $0x110] sm:$0xff]
        %v1177 = vld [vmem:[%s1061 + $0x118] sm:$0xff]
        %v1178 = vld [vmem:[%s1061 + $0x120] sm:$0xff]
        %v1179 = vld [vmem:[%s1061 + $0x128] sm:$0xff]
        %v1180 = vld [vmem:[%s1061 + $0x130] sm:$0xff]
        %v1181 = vld [vmem:[%s1061 + $0x138] sm:$0xff]
        %v1182 = vld [vmem:[%s1061 + $0x140] sm:$0xff]
        %v1183 = vld [vmem:[%s1061 + $0x148] sm:$0xff]
        %v1184 = vld [vmem:[%s1061 + $0x150] sm:$0xff]
        %v1185 = vld [vmem:[%s1061 + $0x158] sm:$0xff]
        %v1186 = vld [vmem:[%s1061 + $0x160] sm:$0xff]
        %v1187 = vld [vmem:[%s1061 + $0x168] sm:$0xff]
        %v1188 = vld [vmem:[%s1061 + $0x170] sm:$0xff]
        %v1189 = vld [vmem:[%s1061 + $0x178] sm:$0xff]
        %v1190 = vld [vmem:[%s1061 + $0x180] sm:$0xff]
        %v1191 = vld [vmem:[%s1061 + $0x188] sm:$0xff]
        %v1192 = vld [vmem:[%s1061 + $0x190] sm:$0xff]
        %v1193 = vld [vmem:[%s1061 + $0x198] sm:$0xff]
        %v1194 = vld [vmem:[%s1061 + $0x1a0] sm:$0xff]
        %v1195 = vld [vmem:[%s1061 + $0x1a8] sm:$0xff]
        %v1196 = vld [vmem:[%s1061 + $0x1b0] sm:$0xff]
        %v1197 = vld [vmem:[%s1061 + $0x1b8] sm:$0xff]
        %v1198 = vld [vmem:[%s1061 + $0x1c0] sm:$0xff]
        %v1199 = vld [vmem:[%s1061 + $0x1c8] sm:$0xff]
        %v1200 = vld [vmem:[%s1061 + $0x1d0] sm:$0xff]
        %v1201 = vld [vmem:[%s1061 + $0x1d8] sm:$0xff]
        %v1202 = vld [vmem:[%s1061 + $0x1e0] sm:$0xff]
        %v1203 = vld [vmem:[%s1061 + $0x1e8] sm:$0xff]
        %v1204 = vld [vmem:[%s1061 + $0x1f0] sm:$0xff]
        %v1205 = vld [vmem:[%s1061 + $0x1f8] sm:$0xff]
        %v1206 = vld [vmem:[%s1061 + $0x200] sm:$0xff]
        %v1207 = vld [vmem:[%s1061 + $0x208] sm:$0xff]
        %v1208 = vld [vmem:[%s1061 + $0x210] sm:$0xff]
        %v1209 = vld [vmem:[%s1061 + $0x218] sm:$0xff]
        %v1210 = vld [vmem:[%s1061 + $0x220] sm:$0xff]
        %v1211 = vld [vmem:[%s1061 + $0x228] sm:$0xff]
        %v1212 = vld [vmem:[%s1061 + $0x230] sm:$0xff]
        %v1213 = vld [vmem:[%s1061 + $0x238] sm:$0xff]
        %v1214 = vld [vmem:[%s1061 + $0x240] sm:$0xff]
        %v1215 = vld [vmem:[%s1061 + $0x248] sm:$0xff]
        %v1216 = vld [vmem:[%s1061 + $0x250] sm:$0xff]
        %v1217 = vld [vmem:[%s1061 + $0x258] sm:$0xff]
        %v1218 = vld [vmem:[%s1061 + $0x260] sm:$0xff]
        %v1219 = vld [vmem:[%s1061 + $0x268] sm:$0xff]
        %v1220 = vld [vmem:[%s1061 + $0x270] sm:$0xff]
        %v1221 = vld [vmem:[%s1061 + $0x278] sm:$0xff]
        %v1222 = vld [vmem:[%s1061 + $0x280] sm:$0xff]
        %v1223 = vld [vmem:[%s1061 + $0x288] sm:$0xff]
        %v1224 = vld [vmem:[%s1061 + $0x290] sm:$0xff]
        %v1225 = vld [vmem:[%s1061 + $0x298] sm:$0xff]
        %v1226 = vld [vmem:[%s1061 + $0x2a0] sm:$0xff]
        %v1227 = vld [vmem:[%s1061 + $0x2a8] sm:$0xff]
        %v1228 = vld [vmem:[%s1061 + $0x2b0] sm:$0xff]
        %v1229 = vld [vmem:[%s1061 + $0x2b8] sm:$0xff]
        %v1230 = vld [vmem:[%s1061 + $0x2c0] sm:$0xff]
        %v1231 = vld [vmem:[%s1061 + $0x2c8] sm:$0xff]
        %v1232 = vld [vmem:[%s1061 + $0x2d0] sm:$0xff]
        %v1233 = vld [vmem:[%s1061 + $0x2d8] sm:$0xff]
        %v1234 = vld [vmem:[%s1061 + $0x2e0] sm:$0xff]
        %v1235 = vld [vmem:[%s1061 + $0x2e8] sm:$0xff]
        %v1236 = vld [vmem:[%s1061 + $0x2f0] sm:$0xff]
        %v1237 = vld [vmem:[%s1061 + $0x2f8] sm:$0xff]
        %v1238 = vld [vmem:[%s1061 + $0x300] sm:$0xff]
        %v1239 = vld [vmem:[%s1061 + $0x308] sm:$0xff]
        %v1240 = vld [vmem:[%s1061 + $0x310] sm:$0xff]
        %v1241 = vld [vmem:[%s1061 + $0x318] sm:$0xff]
        %v1242 = vld [vmem:[%s1061 + $0x320] sm:$0xff]
        %v1243 = vld [vmem:[%s1061 + $0x328] sm:$0xff]
        %v1244 = vld [vmem:[%s1061 + $0x330] sm:$0xff]
        %v1245 = vld [vmem:[%s1061 + $0x338] sm:$0xff]
        %v1246 = vld [vmem:[%s1061 + $0x340] sm:$0xff]
        %v1247 = vld [vmem:[%s1061 + $0x348] sm:$0xff]
        %v1248 = vld [vmem:[%s1061 + $0x350] sm:$0xff]
        %v1249 = vld [vmem:[%s1061 + $0x358] sm:$0xff]
        %v1250 = vld [vmem:[%s1061 + $0x360] sm:$0xff]
        %v1251 = vld [vmem:[%s1061 + $0x368] sm:$0xff]
        %v1252 = vld [vmem:[%s1061 + $0x370] sm:$0xff]
        %v1253 = vld [vmem:[%s1061 + $0x378] sm:$0xff]
        %v1254 = vld [vmem:[%s1061 + $0x380] sm:$0xff]
        %v1255 = vld [vmem:[%s1061 + $0x388] sm:$0xff]
        %v1256 = vld [vmem:[%s1061 + $0x390] sm:$0xff]
        %v1257 = vld [vmem:[%s1061 + $0x398] sm:$0xff]
        %v1258 = vld [vmem:[%s1061 + $0x3a0] sm:$0xff]
        %v1259 = vld [vmem:[%s1061 + $0x3a8] sm:$0xff]
        %v1260 = vld [vmem:[%s1061 + $0x3b0] sm:$0xff]
        %v1261 = vld [vmem:[%s1061 + $0x3b8] sm:$0xff]
        %v1262 = vld [vmem:[%s1061 + $0x3c0] sm:$0xff]
        %v1263 = vld [vmem:[%s1061 + $0x3c8] sm:$0xff]
        %v1264 = vld [vmem:[%s1061 + $0x3d0] sm:$0xff]
        %v1265 = vld [vmem:[%s1061 + $0x3d8] sm:$0xff]
        %v1266 = vld [vmem:[%s1061 + $0x3e0] sm:$0xff]
        %v1267 = vld [vmem:[%s1061 + $0x3e8] sm:$0xff]
        %v1268 = vld [vmem:[%s1061 + $0x3f0] sm:$0xff]
        %v1269 = vld [vmem:[%s1061 + $0x3f8] sm:$0xff]
        %v1270 = vld [vmem:[%s1061 + $0x400] sm:$0xff]
        %v1271 = vld [vmem:[%s1061 + $0x408] sm:$0xff]
        %v1272 = vld [vmem:[%s1061 + $0x410] sm:$0xff]
        %v1273 = vld [vmem:[%s1061 + $0x418] sm:$0xff]
        %v1274 = vld [vmem:[%s1061 + $0x420] sm:$0xff]
        %v1275 = vld [vmem:[%s1061 + $0x428] sm:$0xff]
        %v1276 = vld [vmem:[%s1061 + $0x430] sm:$0xff]
        %v1277 = vld [vmem:[%s1061 + $0x438] sm:$0xff]
        %v1278 = vld [vmem:[%s1061 + $0x440] sm:$0xff]
        %v1279 = vld [vmem:[%s1061 + $0x448] sm:$0xff]
        %v1280 = vld [vmem:[%s1061 + $0x450] sm:$0xff]
        %v1281 = vld [vmem:[%s1061 + $0x458] sm:$0xff]
        %v1282 = vld [vmem:[%s1061 + $0x460] sm:$0xff]
        %v1283 = vld [vmem:[%s1061 + $0x468] sm:$0xff]
        %v1284 = vld [vmem:[%s1061 + $0x470] sm:$0xff]
        %v1285 = vld [vmem:[%s1061 + $0x478] sm:$0xff]
        %v1286 = vld [vmem:[%s1061 + $0x480] sm:$0xff]
        %v1287 = vld [vmem:[%s1061 + $0x488] sm:$0xff]
        %v1288 = vld [vmem:[%s1061 + $0x490] sm:$0xff]
        %v1289 = vld [vmem:[%s1061 + $0x498] sm:$0xff]
        %v1290 = vld [vmem:[%s1061 + $0x4a0] sm:$0xff]
        %v1291 = vld [vmem:[%s1061 + $0x4a8] sm:$0xff]
        %v1292 = vld [vmem:[%s1061 + $0x4b0] sm:$0xff]
        %v1293 = vld [vmem:[%s1061 + $0x4b8] sm:$0xff]
        %v1294 = vld [vmem:[%s1061 + $0x4c0] sm:$0xff]
        %v1295 = vld [vmem:[%s1061 + $0x4c8] sm:$0xff]
        %v1296 = vld [vmem:[%s1061 + $0x4d0] sm:$0xff]
        %v1297 = vld [vmem:[%s1061 + $0x4d8] sm:$0xff]
        %v1298 = vld [vmem:[%s1061 + $0x4e0] sm:$0xff]
        %v1299 = vld [vmem:[%s1061 + $0x4e8] sm:$0xff]
        %v1300 = vld [vmem:[%s1061 + $0x4f0] sm:$0xff]
        %v1301 = vld [vmem:[%s1061 + $0x4f8] sm:$0xff]
        %v1302 = vld [vmem:[%s1061 + $0x500] sm:$0xff]
        %v1303 = vld [vmem:[%s1061 + $0x508] sm:$0xff]
        %v1304 = vld [vmem:[%s1061 + $0x510] sm:$0xff]
        %v1305 = vld [vmem:[%s1061 + $0x518] sm:$0xff]
        %v1306 = vld [vmem:[%s1061 + $0x520] sm:$0xff]
        %v1307 = vld [vmem:[%s1061 + $0x528] sm:$0xff]
        %v1308 = vld [vmem:[%s1061 + $0x530] sm:$0xff]
        %v1309 = vld [vmem:[%s1061 + $0x538] sm:$0xff]
        %v1310 = vld [vmem:[%s1061 + $0x540] sm:$0xff]
        %v1311 = vld [vmem:[%s1061 + $0x548] sm:$0xff]
        %v1312 = vld [vmem:[%s1061 + $0x550] sm:$0xff]
        %v1313 = vld [vmem:[%s1061 + $0x558] sm:$0xff]
        %v1314 = vld [vmem:[%s1061 + $0x560] sm:$0xff]
        %v1315 = vld [vmem:[%s1061 + $0x568] sm:$0xff]
        %v1316 = vld [vmem:[%s1061 + $0x570] sm:$0xff]
        %v1317 = vld [vmem:[%s1061 + $0x578] sm:$0xff]
        %v1318 = vld [vmem:[%s1061 + $0x580] sm:$0xff]
        %v1319 = vld [vmem:[%s1061 + $0x588] sm:$0xff]
        %v1320 = vld [vmem:[%s1061 + $0x590] sm:$0xff]
        %v1321 = vld [vmem:[%s1061 + $0x598] sm:$0xff]
        %v1322 = vld [vmem:[%s1061 + $0x5a0] sm:$0xff]
        %v1323 = vld [vmem:[%s1061 + $0x5a8] sm:$0xff]
        %v1324 = vld [vmem:[%s1061 + $0x5b0] sm:$0xff]
        %v1325 = vld [vmem:[%s1061 + $0x5b8] sm:$0xff]
        %v1326 = vld [vmem:[%s1061 + $0x5c0] sm:$0xff]
        %v1327 = vld [vmem:[%s1061 + $0x5c8] sm:$0xff]
        %v1328 = vld [vmem:[%s1061 + $0x5d0] sm:$0xff]
        %v1329 = vld [vmem:[%s1061 + $0x5d8] sm:$0xff]
        %v1330 = vld [vmem:[%s1061 + $0x5e0] sm:$0xff]
        %v1331 = vld [vmem:[%s1061 + $0x5e8] sm:$0xff]
        %v1332 = vld [vmem:[%s1061 + $0x5f0] sm:$0xff]
        %v1333 = vld [vmem:[%s1061 + $0x5f8] sm:$0xff]
        %v1334 = vld [vmem:[%s1061 + $0x600] sm:$0xff]
        %v1335 = vld [vmem:[%s1061 + $0x608] sm:$0xff]
        %v1336 = vld [vmem:[%s1061 + $0x610] sm:$0xff]
        %v1337 = vld [vmem:[%s1061 + $0x618] sm:$0xff]
        %v1338 = vld [vmem:[%s1061 + $0x620] sm:$0xff]
        %v1339 = vld [vmem:[%s1061 + $0x628] sm:$0xff]
        %v1340 = vld [vmem:[%s1061 + $0x630] sm:$0xff]
        %v1341 = vld [vmem:[%s1061 + $0x638] sm:$0xff]
        %v1342 = vld [vmem:[%s1061 + $0x640] sm:$0xff]
        %v1343 = vld [vmem:[%s1061 + $0x648] sm:$0xff]
        %v1344 = vld [vmem:[%s1061 + $0x650] sm:$0xff]
        %v1345 = vld [vmem:[%s1061 + $0x658] sm:$0xff]
        %v1346 = vld [vmem:[%s1061 + $0x660] sm:$0xff]
        %v1347 = vld [vmem:[%s1061 + $0x668] sm:$0xff]
        %v1348 = vld [vmem:[%s1061 + $0x670] sm:$0xff]
        %v1349 = vld [vmem:[%s1061 + $0x678] sm:$0xff]
        %v1357 = vunpack.c.l.b16 %v1135
        %v1358 = vunpack.c.h.b16 %v1135
        %v1359 = vunpack.c.l.b16 %v1136
        %v1360 = vunpack.c.h.b16 %v1136
        %v1361 = vunpack.c.l.b16 %v1137
        %v1362 = vunpack.c.h.b16 %v1137
        %v1363 = vunpack.c.l.b16 %v1138
        %v1364 = vunpack.c.h.b16 %v1138
        %v1365 = vunpack.c.l.b16 %v1139
        %v1366 = vunpack.c.h.b16 %v1139
        %v1367 = vunpack.c.l.b16 %v1140
        %v1368 = vunpack.c.h.b16 %v1140
        %v1369 = vunpack.c.l.b16 %v1141
        %v1370 = vpack.c.b16 %v1357, %v1357
        %v1371 = vpack.c.b16 %v1358, %v1358
        %v1372 = vpack.c.b16 %v1359, %v1359
        %v1373 = vpack.c.b16 %v1360, %v1360
        %v1374 = vpack.c.b16 %v1361, %v1361
        %v1375 = vpack.c.b16 %v1362, %v1362
        %v1376 = vpack.c.b16 %v1363, %v1363
        %v1377 = vpack.c.b16 %v1364, %v1364
        %v1378 = vpack.c.b16 %v1365, %v1365
        %v1379 = vpack.c.b16 %v1366, %v1366
        %v1380 = vpack.c.b16 %v1367, %v1367
        %v1381 = vpack.c.b16 %v1368, %v1368
        %v1382 = vpack.c.b16 %v1369, %v1369
        %v1604 = vunpack.c.l.b16 %v1142
        %v1605 = vunpack.c.h.b16 %v1142
        %v1606 = vunpack.c.l.b16 %v1143
        %v1607 = vunpack.c.h.b16 %v1143
        %v1608 = vunpack.c.l.b16 %v1144
        %v1609 = vunpack.c.h.b16 %v1144
        %v1610 = vunpack.c.l.b16 %v1145
        %v1611 = vunpack.c.h.b16 %v1145
        %v1612 = vunpack.c.l.b16 %v1146
        %v1613 = vunpack.c.h.b16 %v1146
        %v1614 = vunpack.c.l.b16 %v1147
        %v1615 = vunpack.c.h.b16 %v1147
        %v1616 = vunpack.c.l.b16 %v1148
        %v1617 = vunpack.c.h.b16 %v1148
        %v1618 = vunpack.c.l.b16 %v1149
        %v1619 = vunpack.c.h.b16 %v1149
        %v1620 = vunpack.c.l.b16 %v1150
        %v1621 = vunpack.c.h.b16 %v1150
        %v1622 = vunpack.c.l.b16 %v1151
        %v1623 = vunpack.c.h.b16 %v1151
        %v1624 = vunpack.c.l.b16 %v1152
        %v1625 = vunpack.c.h.b16 %v1152
        %v1626 = vunpack.c.l.b16 %v1153
        %v1627 = vunpack.c.h.b16 %v1153
        %v1628 = vunpack.c.l.b16 %v1154
        %v1629 = vunpack.c.h.b16 %v1154
        %v1630 = vunpack.c.l.b16 %v1155
        %v1631 = vunpack.c.h.b16 %v1155
        %v1632 = vunpack.c.l.b16 %v1156
        %v1633 = vunpack.c.h.b16 %v1156
        %v1634 = vunpack.c.l.b16 %v1157
        %v1635 = vunpack.c.h.b16 %v1157
        %v1636 = vunpack.c.l.b16 %v1158
        %v1637 = vunpack.c.h.b16 %v1158
        %v1638 = vunpack.c.l.b16 %v1159
        %v1639 = vunpack.c.h.b16 %v1159
        %v1640 = vunpack.c.l.b16 %v1160
        %v1641 = vunpack.c.h.b16 %v1160
        %v1642 = vunpack.c.l.b16 %v1161
        %v1643 = vunpack.c.h.b16 %v1161
        %v1644 = vunpack.c.l.b16 %v1162
        %v1645 = vunpack.c.h.b16 %v1162
        %v1646 = vunpack.c.l.b16 %v1163
        %v1647 = vunpack.c.h.b16 %v1163
        %v1648 = vunpack.c.l.b16 %v1164
        %v1649 = vunpack.c.h.b16 %v1164
        %v1650 = vunpack.c.l.b16 %v1165
        %v1651 = vunpack.c.h.b16 %v1165
        %v1652 = vunpack.c.l.b16 %v1166
        %v1653 = vunpack.c.h.b16 %v1166
        %v1654 = vunpack.c.l.b16 %v1167
        %v1655 = vunpack.c.h.b16 %v1167
        %v1656 = vunpack.c.l.b16 %v1168
        %v1657 = vunpack.c.h.b16 %v1168
        %v1658 = vunpack.c.l.b16 %v1169
        %v1659 = vunpack.c.h.b16 %v1169
        %v1660 = vunpack.c.l.b16 %v1170
        %v1661 = vunpack.c.h.b16 %v1170
        %v1662 = vunpack.c.l.b16 %v1171
        %v1663 = vunpack.c.h.b16 %v1171
        %v1664 = vunpack.c.l.b16 %v1172
        %v1665 = vunpack.c.h.b16 %v1172
        %v1666 = vunpack.c.l.b16 %v1173
        %v1667 = vunpack.c.h.b16 %v1173
        %v1668 = vunpack.c.l.b16 %v1174
        %v1669 = vunpack.c.h.b16 %v1174
        %v1670 = vunpack.c.l.b16 %v1175
        %v1671 = vunpack.c.h.b16 %v1175
        %v1672 = vunpack.c.l.b16 %v1176
        %v1673 = vunpack.c.h.b16 %v1176
        %v1674 = vunpack.c.l.b16 %v1177
        %v1675 = vunpack.c.h.b16 %v1177
        %v1676 = vunpack.c.l.b16 %v1178
        %v1677 = vunpack.c.h.b16 %v1178
        %v1678 = vunpack.c.l.b16 %v1179
        %v1679 = vunpack.c.h.b16 %v1179
        %v1680 = vunpack.c.l.b16 %v1180
        %v1681 = vunpack.c.h.b16 %v1180
        %v1682 = vunpack.c.l.b16 %v1181
        %v1683 = vunpack.c.h.b16 %v1181
        %v1684 = vunpack.c.l.b16 %v1182
        %v1685 = vunpack.c.h.b16 %v1182
        %v1686 = vunpack.c.l.b16 %v1183
        %v1687 = vunpack.c.h.b16 %v1183
        %v1688 = vunpack.c.l.b16 %v1184
        %v1689 = vunpack.c.h.b16 %v1184
        %v1690 = vunpack.c.l.b16 %v1185
        %v1691 = vunpack.c.h.b16 %v1185
        %v1692 = vunpack.c.l.b16 %v1186
        %v1693 = vunpack.c.h.b16 %v1186
        %v1694 = vunpack.c.l.b16 %v1187
        %v1695 = vunpack.c.h.b16 %v1187
        %v1696 = vunpack.c.l.b16 %v1188
        %v1697 = vunpack.c.h.b16 %v1188
        %v1698 = vunpack.c.l.b16 %v1189
        %v1699 = vunpack.c.h.b16 %v1189
        %v1700 = vunpack.c.l.b16 %v1190
        %v1701 = vunpack.c.h.b16 %v1190
        %v1702 = vunpack.c.l.b16 %v1191
        %v1703 = vunpack.c.h.b16 %v1191
        %v1704 = vunpack.c.l.b16 %v1192
        %v1705 = vunpack.c.h.b16 %v1192
        %v1706 = vunpack.c.l.b16 %v1193
        %v1707 = vunpack.c.h.b16 %v1193
        %v1708 = vunpack.c.l.b16 %v1194
        %v1709 = vunpack.c.h.b16 %v1194
        %v1710 = vunpack.c.l.b16 %v1195
        %v1711 = vunpack.c.h.b16 %v1195
        %v1712 = vunpack.c.l.b16 %v1196
        %v1713 = vunpack.c.h.b16 %v1196
        %v1714 = vunpack.c.l.b16 %v1197
        %v1715 = vunpack.c.h.b16 %v1197
        %v1716 = vunpack.c.l.b16 %v1198
        %v1717 = vunpack.c.h.b16 %v1198
        %v1718 = vunpack.c.l.b16 %v1199
        %v1719 = vunpack.c.h.b16 %v1199
        %v1720 = vunpack.c.l.b16 %v1200
        %v1721 = vunpack.c.h.b16 %v1200
        %v1722 = vunpack.c.l.b16 %v1201
        %v1723 = vunpack.c.h.b16 %v1201
        %v1724 = vunpack.c.l.b16 %v1202
        %v1725 = vunpack.c.h.b16 %v1202
        %v1726 = vunpack.c.l.b16 %v1203
        %v1727 = vunpack.c.h.b16 %v1203
        %v1728 = vunpack.c.l.b16 %v1204
        %v1729 = vunpack.c.h.b16 %v1204
        %v1730 = vunpack.c.l.b16 %v1205
        %v1731 = vunpack.c.h.b16 %v1205
        %v1732 = vunpack.c.l.b16 %v1206
        %v1733 = vunpack.c.h.b16 %v1206
        %v1734 = vunpack.c.l.b16 %v1207
        %v1735 = vunpack.c.h.b16 %v1207
        %v1736 = vunpack.c.l.b16 %v1208
        %v1737 = vunpack.c.h.b16 %v1208
        %v1738 = vunpack.c.l.b16 %v1209
        %v1739 = vunpack.c.h.b16 %v1209
        %v1740 = vunpack.c.l.b16 %v1210
        %v1741 = vunpack.c.h.b16 %v1210
        %v1742 = vunpack.c.l.b16 %v1211
        %v1743 = vunpack.c.h.b16 %v1211
        %v1744 = vunpack.c.l.b16 %v1212
        %v1745 = vunpack.c.h.b16 %v1212
        %v1746 = vunpack.c.l.b16 %v1213
        %v1747 = vunpack.c.h.b16 %v1213
        %v1748 = vunpack.c.l.b16 %v1214
        %v1749 = vunpack.c.h.b16 %v1214
        %v1750 = vunpack.c.l.b16 %v1215
        %v1751 = vunpack.c.h.b16 %v1215
        %v1752 = vunpack.c.l.b16 %v1216
        %v1753 = vunpack.c.h.b16 %v1216
        %v1754 = vunpack.c.l.b16 %v1217
        %v1755 = vunpack.c.h.b16 %v1217
        %v1756 = vunpack.c.l.b16 %v1218
        %v1757 = vunpack.c.h.b16 %v1218
        %v1758 = vunpack.c.l.b16 %v1219
        %v1759 = vunpack.c.h.b16 %v1219
        %v1760 = vunpack.c.l.b16 %v1220
        %v1761 = vunpack.c.h.b16 %v1220
        %v1762 = vunpack.c.l.b16 %v1221
        %v1763 = vunpack.c.h.b16 %v1221
        %v1764 = vunpack.c.l.b16 %v1222
        %v1765 = vunpack.c.h.b16 %v1222
        %v1766 = vunpack.c.l.b16 %v1223
        %v1767 = vunpack.c.h.b16 %v1223
        %v1768 = vunpack.c.l.b16 %v1224
        %v1769 = vunpack.c.h.b16 %v1224
        %v1770 = vunpack.c.l.b16 %v1225
        %v1771 = vunpack.c.h.b16 %v1225
        %v1772 = vunpack.c.l.b16 %v1226
        %v1773 = vunpack.c.h.b16 %v1226
        %v1774 = vunpack.c.l.b16 %v1227
        %v1775 = vunpack.c.h.b16 %v1227
        %v1776 = vunpack.c.l.b16 %v1228
        %v1777 = vunpack.c.h.b16 %v1228
        %v1778 = vunpack.c.l.b16 %v1229
        %v1779 = vunpack.c.h.b16 %v1229
        %v1780 = vunpack.c.l.b16 %v1230
        %v1781 = vunpack.c.h.b16 %v1230
        %v1782 = vunpack.c.l.b16 %v1231
        %v1783 = vunpack.c.h.b16 %v1231
        %v1784 = vunpack.c.l.b16 %v1232
        %v1785 = vunpack.c.h.b16 %v1232
        %v1786 = vunpack.c.l.b16 %v1233
        %v1787 = vunpack.c.h.b16 %v1233
        %v1788 = vunpack.c.l.b16 %v1234
        %v1789 = vunpack.c.h.b16 %v1234
        %v1790 = vunpack.c.l.b16 %v1235
        %v1791 = vunpack.c.h.b16 %v1235
        %v1792 = vunpack.c.l.b16 %v1236
        %v1793 = vunpack.c.h.b16 %v1236
        %v1794 = vunpack.c.l.b16 %v1237
        %v1795 = vunpack.c.h.b16 %v1237
        %v1796 = vunpack.c.l.b16 %v1238
        %v1797 = vunpack.c.h.b16 %v1238
        %v1798 = vunpack.c.l.b16 %v1239
        %v1799 = vunpack.c.h.b16 %v1239
        %v1800 = vunpack.c.l.b16 %v1240
        %v1801 = vunpack.c.h.b16 %v1240
        %v1802 = vunpack.c.l.b16 %v1241
        %v1803 = vunpack.c.h.b16 %v1241
        %v1804 = vunpack.c.l.b16 %v1242
        %v1805 = vunpack.c.h.b16 %v1242
        %v1806 = vunpack.c.l.b16 %v1243
        %v1807 = vunpack.c.h.b16 %v1243
        %v1808 = vunpack.c.l.b16 %v1244
        %v1809 = vunpack.c.h.b16 %v1244
        %v1810 = vunpack.c.l.b16 %v1245
        %v1811 = vunpack.c.h.b16 %v1245
        %v1812 = vunpack.c.l.b16 %v1246
        %v1813 = vunpack.c.h.b16 %v1246
        %v1814 = vunpack.c.l.b16 %v1247
        %v1815 = vunpack.c.h.b16 %v1247
        %v1816 = vunpack.c.l.b16 %v1248
        %v1817 = vunpack.c.h.b16 %v1248
        %v1818 = vunpack.c.l.b16 %v1249
        %v1819 = vunpack.c.h.b16 %v1249
        %v1820 = vunpack.c.l.b16 %v1250
        %v1821 = vunpack.c.h.b16 %v1250
        %v1822 = vunpack.c.l.b16 %v1251
        %v1823 = vunpack.c.h.b16 %v1251
        %v1824 = vunpack.c.l.b16 %v1252
        %v1825 = vunpack.c.h.b16 %v1252
        %v1826 = vunpack.c.l.b16 %v1253
        %v1827 = vunpack.c.h.b16 %v1253
        %v1828 = vunpack.c.l.b16 %v1254
        %v1829 = vunpack.c.h.b16 %v1254
        %v1830 = vunpack.c.l.b16 %v1255
        %v1831 = vunpack.c.h.b16 %v1255
        %v1832 = vunpack.c.l.b16 %v1256
        %v1833 = vunpack.c.h.b16 %v1256
        %v1834 = vunpack.c.l.b16 %v1257
        %v1835 = vunpack.c.h.b16 %v1257
        %v1836 = vunpack.c.l.b16 %v1258
        %v1837 = vunpack.c.h.b16 %v1258
        %v1838 = vunpack.c.l.b16 %v1259
        %v1839 = vunpack.c.h.b16 %v1259
        %v1840 = vunpack.c.l.b16 %v1260
        %v1841 = vunpack.c.h.b16 %v1260
        %v1842 = vunpack.c.l.b16 %v1261
        %v1843 = vunpack.c.h.b16 %v1261
        %v1844 = vunpack.c.l.b16 %v1262
        %v1845 = vunpack.c.h.b16 %v1262
        %v1846 = vunpack.c.l.b16 %v1263
        %v1847 = vunpack.c.h.b16 %v1263
        %v1848 = vunpack.c.l.b16 %v1264
        %v1849 = vunpack.c.h.b16 %v1264
        %v1850 = vunpack.c.l.b16 %v1265
        %v1851 = vunpack.c.h.b16 %v1265
        %v1852 = vunpack.c.l.b16 %v1266
        %v1853 = vunpack.c.h.b16 %v1266
        %v1854 = vunpack.c.l.b16 %v1267
        %v1855 = vunpack.c.h.b16 %v1267
        %v1856 = vunpack.c.l.b16 %v1268
        %v1857 = vunpack.c.h.b16 %v1268
        %v1858 = vunpack.c.l.b16 %v1269
        %v1859 = vunpack.c.h.b16 %v1269
        %v1860 = vunpack.c.l.b16 %v1270
        %v1861 = vunpack.c.h.b16 %v1270
        %v1862 = vunpack.c.l.b16 %v1271
        %v1863 = vunpack.c.h.b16 %v1271
        %v1864 = vunpack.c.l.b16 %v1272
        %v1865 = vunpack.c.h.b16 %v1272
        %v1866 = vunpack.c.l.b16 %v1273
        %v1867 = vunpack.c.h.b16 %v1273
        %v1868 = vunpack.c.l.b16 %v1274
        %v1869 = vunpack.c.h.b16 %v1274
        %v1870 = vunpack.c.l.b16 %v1275
        %v1871 = vunpack.c.h.b16 %v1275
        %v1872 = vunpack.c.l.b16 %v1276
        %v1873 = vunpack.c.h.b16 %v1276
        %v1874 = vunpack.c.l.b16 %v1277
        %v1875 = vunpack.c.h.b16 %v1277
        %v1876 = vunpack.c.l.b16 %v1278
        %v1877 = vunpack.c.h.b16 %v1278
        %v1878 = vunpack.c.l.b16 %v1279
        %v1879 = vunpack.c.h.b16 %v1279
        %v1880 = vunpack.c.l.b16 %v1280
        %v1881 = vunpack.c.h.b16 %v1280
        %v1882 = vunpack.c.l.b16 %v1281
        %v1883 = vunpack.c.h.b16 %v1281
        %v1884 = vunpack.c.l.b16 %v1282
        %v1885 = vunpack.c.h.b16 %v1282
        %v1886 = vunpack.c.l.b16 %v1283
        %v1887 = vunpack.c.h.b16 %v1283
        %v1888 = vunpack.c.l.b16 %v1284
        %v1889 = vunpack.c.h.b16 %v1284
        %v1890 = vunpack.c.l.b16 %v1285
        %v1891 = vunpack.c.h.b16 %v1285
        %v1892 = vunpack.c.l.b16 %v1286
        %v1893 = vunpack.c.h.b16 %v1286
        %v1894 = vunpack.c.l.b16 %v1287
        %v1895 = vunpack.c.h.b16 %v1287
        %v1896 = vunpack.c.l.b16 %v1288
        %v1897 = vunpack.c.h.b16 %v1288
        %v1898 = vunpack.c.l.b16 %v1289
        %v1899 = vunpack.c.h.b16 %v1289
        %v1900 = vunpack.c.l.b16 %v1290
        %v1901 = vunpack.c.h.b16 %v1290
        %v1902 = vunpack.c.l.b16 %v1291
        %v1903 = vunpack.c.h.b16 %v1291
        %v1904 = vunpack.c.l.b16 %v1292
        %v1905 = vunpack.c.h.b16 %v1292
        %v1906 = vunpack.c.l.b16 %v1293
        %v1907 = vunpack.c.h.b16 %v1293
        %v1908 = vunpack.c.l.b16 %v1294
        %v1909 = vunpack.c.h.b16 %v1294
        %v1910 = vunpack.c.l.b16 %v1295
        %v1911 = vunpack.c.h.b16 %v1295
        %v1912 = vunpack.c.l.b16 %v1296
        %v1913 = vunpack.c.h.b16 %v1296
        %v1914 = vunpack.c.l.b16 %v1297
        %v1915 = vunpack.c.h.b16 %v1297
        %v1916 = vunpack.c.l.b16 %v1298
        %v1917 = vunpack.c.h.b16 %v1298
        %v1918 = vunpack.c.l.b16 %v1299
        %v1919 = vunpack.c.h.b16 %v1299
        %v1920 = vunpack.c.l.b16 %v1300
        %v1921 = vunpack.c.h.b16 %v1300
        %v1922 = vunpack.c.l.b16 %v1301
        %v1923 = vunpack.c.h.b16 %v1301
        %v1924 = vunpack.c.l.b16 %v1302
        %v1925 = vunpack.c.h.b16 %v1302
        %v1926 = vunpack.c.l.b16 %v1303
        %v1927 = vunpack.c.h.b16 %v1303
        %v1928 = vunpack.c.l.b16 %v1304
        %v1929 = vunpack.c.h.b16 %v1304
        %v1930 = vunpack.c.l.b16 %v1305
        %v1931 = vunpack.c.h.b16 %v1305
        %v1932 = vunpack.c.l.b16 %v1306
        %v1933 = vunpack.c.h.b16 %v1306
        %v1934 = vunpack.c.l.b16 %v1307
        %v1935 = vunpack.c.h.b16 %v1307
        %v1936 = vunpack.c.l.b16 %v1308
        %v1937 = vunpack.c.h.b16 %v1308
        %v1938 = vunpack.c.l.b16 %v1309
        %v1939 = vunpack.c.h.b16 %v1309
        %v1940 = vunpack.c.l.b16 %v1310
        %v1941 = vunpack.c.h.b16 %v1310
        %v1942 = vunpack.c.l.b16 %v1311
        %v1943 = vunpack.c.h.b16 %v1311
        %v1944 = vunpack.c.l.b16 %v1312
        %v1945 = vunpack.c.h.b16 %v1312
        %v1946 = vunpack.c.l.b16 %v1313
        %v1947 = vunpack.c.h.b16 %v1313
        %v1948 = vunpack.c.l.b16 %v1314
        %v1949 = vunpack.c.h.b16 %v1314
        %v1950 = vunpack.c.l.b16 %v1315
        %v1951 = vunpack.c.h.b16 %v1315
        %v1952 = vunpack.c.l.b16 %v1316
        %v1953 = vunpack.c.h.b16 %v1316
        %v1954 = vunpack.c.l.b16 %v1317
        %v1955 = vunpack.c.h.b16 %v1317
        %v1956 = vunpack.c.l.b16 %v1318
        %v1957 = vunpack.c.h.b16 %v1318
        %v1958 = vunpack.c.l.b16 %v1319
        %v1959 = vunpack.c.h.b16 %v1319
        %v1960 = vunpack.c.l.b16 %v1320
        %v1961 = vunpack.c.h.b16 %v1320
        %v1962 = vunpack.c.l.b16 %v1321
        %v1963 = vunpack.c.h.b16 %v1321
        %v1964 = vunpack.c.l.b16 %v1322
        %v1965 = vunpack.c.h.b16 %v1322
        %v1966 = vunpack.c.l.b16 %v1323
        %v1967 = vunpack.c.h.b16 %v1323
        %v1968 = vunpack.c.l.b16 %v1324
        %v1969 = vunpack.c.h.b16 %v1324
        %v1970 = vunpack.c.l.b16 %v1325
        %v1971 = vunpack.c.h.b16 %v1325
        %v1972 = vunpack.c.l.b16 %v1326
        %v1973 = vunpack.c.h.b16 %v1326
        %v1974 = vunpack.c.l.b16 %v1327
        %v1975 = vunpack.c.h.b16 %v1327
        %v1976 = vunpack.c.l.b16 %v1328
        %v1977 = vunpack.c.h.b16 %v1328
        %v1978 = vunpack.c.l.b16 %v1329
        %v1979 = vunpack.c.h.b16 %v1329
        %v1980 = vunpack.c.l.b16 %v1330
        %v1981 = vunpack.c.h.b16 %v1330
        %v1982 = vunpack.c.l.b16 %v1331
        %v1983 = vunpack.c.h.b16 %v1331
        %v1984 = vunpack.c.l.b16 %v1332
        %v1985 = vunpack.c.h.b16 %v1332
        %v1986 = vunpack.c.l.b16 %v1333
        %v1987 = vunpack.c.h.b16 %v1333
        %v1988 = vunpack.c.l.b16 %v1334
        %v1989 = vunpack.c.h.b16 %v1334
        %v1990 = vunpack.c.l.b16 %v1335
        %v1991 = vunpack.c.h.b16 %v1335
        %v1992 = vunpack.c.l.b16 %v1336
        %v1993 = vunpack.c.h.b16 %v1336
        %v1994 = vunpack.c.l.b16 %v1337
        %v1995 = vunpack.c.h.b16 %v1337
        %v1996 = vunpack.c.l.b16 %v1338
        %v1997 = vunpack.c.h.b16 %v1338
        %v1998 = vunpack.c.l.b16 %v1339
        %v1999 = vunpack.c.h.b16 %v1339
        %v2000 = vunpack.c.l.b16 %v1340
        %v2001 = vunpack.c.h.b16 %v1340
        %v2002 = vunpack.c.l.b16 %v1341
        %v2003 = vunpack.c.h.b16 %v1341
        %v2004 = vunpack.c.l.b16 %v1342
        %v2005 = vunpack.c.h.b16 %v1342
        %v2006 = vunpack.c.l.b16 %v1343
        %v2007 = vunpack.c.h.b16 %v1343
        %v2008 = vunpack.c.l.b16 %v1344
        %v2009 = vunpack.c.h.b16 %v1344
        %v2010 = vunpack.c.l.b16 %v1345
        %v2011 = vunpack.c.h.b16 %v1345
        %v2012 = vunpack.c.l.b16 %v1346
        %v2013 = vunpack.c.h.b16 %v1346
        %v2014 = vunpack.c.l.b16 %v1347
        %v2015 = vunpack.c.h.b16 %v1347
        %v2016 = vunpack.c.l.b16 %v1348
        %v2017 = vunpack.c.h.b16 %v1348
        %v2018 = vunpack.c.l.b16 %v1349
        %v2019 = vunpack.c.h.b16 %v1349
        %v2020 = vpack.c.b16 %v1606, %v1604
        %v2021 = vpack.c.b16 %v1607, %v1605
        %v2022 = vpack.c.b16 %v1610, %v1608
        %v2023 = vpack.c.b16 %v1611, %v1609
        %v2024 = vpack.c.b16 %v1614, %v1612
        %v2025 = vpack.c.b16 %v1615, %v1613
        %v2026 = vpack.c.b16 %v1618, %v1616
        %v2027 = vpack.c.b16 %v1619, %v1617
        %v2028 = vpack.c.b16 %v1622, %v1620
        %v2029 = vpack.c.b16 %v1623, %v1621
        %v2030 = vpack.c.b16 %v1626, %v1624
        %v2031 = vpack.c.b16 %v1627, %v1625
        %v2032 = vpack.c.b16 %v1630, %v1628
        %v2033 = vpack.c.b16 %v1631, %v1629
        %v2034 = vpack.c.b16 %v1634, %v1632
        %v2035 = vpack.c.b16 %v1635, %v1633
        %v2036 = vpack.c.b16 %v1638, %v1636
        %v2037 = vpack.c.b16 %v1639, %v1637
        %v2038 = vpack.c.b16 %v1642, %v1640
        %v2039 = vpack.c.b16 %v1643, %v1641
        %v2040 = vpack.c.b16 %v1646, %v1644
        %v2041 = vpack.c.b16 %v1647, %v1645
        %v2042 = vpack.c.b16 %v1650, %v1648
        %v2043 = vpack.c.b16 %v1651, %v1649
        %v2044 = vpack.c.b16 %v1654, %v1652
        %v2045 = vpack.c.b16 %v1655, %v1653
        %v2046 = vpack.c.b16 %v1658, %v1656
        %v2047 = vpack.c.b16 %v1659, %v1657
        %v2048 = vpack.c.b16 %v1662, %v1660
        %v2049 = vpack.c.b16 %v1663, %v1661
        %v2050 = vpack.c.b16 %v1666, %v1664
        %v2051 = vpack.c.b16 %v1667, %v1665
        %v2052 = vpack.c.b16 %v1670, %v1668
        %v2053 = vpack.c.b16 %v1671, %v1669
        %v2054 = vpack.c.b16 %v1674, %v1672
        %v2055 = vpack.c.b16 %v1675, %v1673
        %v2056 = vpack.c.b16 %v1678, %v1676
        %v2057 = vpack.c.b16 %v1679, %v1677
        %v2058 = vpack.c.b16 %v1682, %v1680
        %v2059 = vpack.c.b16 %v1683, %v1681
        %v2060 = vpack.c.b16 %v1686, %v1684
        %v2061 = vpack.c.b16 %v1687, %v1685
        %v2062 = vpack.c.b16 %v1690, %v1688
        %v2063 = vpack.c.b16 %v1691, %v1689
        %v2064 = vpack.c.b16 %v1694, %v1692
        %v2065 = vpack.c.b16 %v1695, %v1693
        %v2066 = vpack.c.b16 %v1698, %v1696
        %v2067 = vpack.c.b16 %v1699, %v1697
        %v2068 = vpack.c.b16 %v1702, %v1700
        %v2069 = vpack.c.b16 %v1703, %v1701
        %v2070 = vpack.c.b16 %v1706, %v1704
        %v2071 = vpack.c.b16 %v1707, %v1705
        %v2072 = vpack.c.b16 %v1710, %v1708
        %v2073 = vpack.c.b16 %v1711, %v1709
        %v2074 = vpack.c.b16 %v1714, %v1712
        %v2075 = vpack.c.b16 %v1715, %v1713
        %v2076 = vpack.c.b16 %v1718, %v1716
        %v2077 = vpack.c.b16 %v1719, %v1717
        %v2078 = vpack.c.b16 %v1722, %v1720
        %v2079 = vpack.c.b16 %v1723, %v1721
        %v2080 = vpack.c.b16 %v1726, %v1724
        %v2081 = vpack.c.b16 %v1727, %v1725
        %v2082 = vpack.c.b16 %v1730, %v1728
        %v2083 = vpack.c.b16 %v1731, %v1729
        %v2084 = vpack.c.b16 %v1734, %v1732
        %v2085 = vpack.c.b16 %v1735, %v1733
        %v2086 = vpack.c.b16 %v1738, %v1736
        %v2087 = vpack.c.b16 %v1739, %v1737
        %v2088 = vpack.c.b16 %v1742, %v1740
        %v2089 = vpack.c.b16 %v1743, %v1741
        %v2090 = vpack.c.b16 %v1746, %v1744
        %v2091 = vpack.c.b16 %v1747, %v1745
        %v2092 = vpack.c.b16 %v1750, %v1748
        %v2093 = vpack.c.b16 %v1751, %v1749
        %v2094 = vpack.c.b16 %v1754, %v1752
        %v2095 = vpack.c.b16 %v1755, %v1753
        %v2096 = vpack.c.b16 %v1758, %v1756
        %v2097 = vpack.c.b16 %v1759, %v1757
        %v2098 = vpack.c.b16 %v1762, %v1760
        %v2099 = vpack.c.b16 %v1763, %v1761
        %v2100 = vpack.c.b16 %v1766, %v1764
        %v2101 = vpack.c.b16 %v1767, %v1765
        %v2102 = vpack.c.b16 %v1770, %v1768
        %v2103 = vpack.c.b16 %v1771, %v1769
        %v2104 = vpack.c.b16 %v1774, %v1772
        %v2105 = vpack.c.b16 %v1775, %v1773
        %v2106 = vpack.c.b16 %v1778, %v1776
        %v2107 = vpack.c.b16 %v1779, %v1777
        %v2108 = vpack.c.b16 %v1782, %v1780
        %v2109 = vpack.c.b16 %v1783, %v1781
        %v2110 = vpack.c.b16 %v1786, %v1784
        %v2111 = vpack.c.b16 %v1787, %v1785
        %v2112 = vpack.c.b16 %v1790, %v1788
        %v2113 = vpack.c.b16 %v1791, %v1789
        %v2114 = vpack.c.b16 %v1794, %v1792
        %v2115 = vpack.c.b16 %v1795, %v1793
        %v2116 = vpack.c.b16 %v1798, %v1796
        %v2117 = vpack.c.b16 %v1799, %v1797
        %v2118 = vpack.c.b16 %v1802, %v1800
        %v2119 = vpack.c.b16 %v1803, %v1801
        %v2120 = vpack.c.b16 %v1806, %v1804
        %v2121 = vpack.c.b16 %v1807, %v1805
        %v2122 = vpack.c.b16 %v1810, %v1808
        %v2123 = vpack.c.b16 %v1811, %v1809
        %v2124 = vpack.c.b16 %v1814, %v1812
        %v2125 = vpack.c.b16 %v1815, %v1813
        %v2126 = vpack.c.b16 %v1818, %v1816
        %v2127 = vpack.c.b16 %v1819, %v1817
        %v2128 = vpack.c.b16 %v1822, %v1820
        %v2129 = vpack.c.b16 %v1823, %v1821
        %v2130 = vpack.c.b16 %v1826, %v1824
        %v2131 = vpack.c.b16 %v1827, %v1825
        %v2132 = vpack.c.b16 %v1830, %v1828
        %v2133 = vpack.c.b16 %v1831, %v1829
        %v2134 = vpack.c.b16 %v1834, %v1832
        %v2135 = vpack.c.b16 %v1835, %v1833
        %v2136 = vpack.c.b16 %v1838, %v1836
        %v2137 = vpack.c.b16 %v1839, %v1837
        %v2138 = vpack.c.b16 %v1842, %v1840
        %v2139 = vpack.c.b16 %v1843, %v1841
        %v2140 = vpack.c.b16 %v1846, %v1844
        %v2141 = vpack.c.b16 %v1847, %v1845
        %v2142 = vpack.c.b16 %v1850, %v1848
        %v2143 = vpack.c.b16 %v1851, %v1849
        %v2144 = vpack.c.b16 %v1854, %v1852
        %v2145 = vpack.c.b16 %v1855, %v1853
        %v2146 = vpack.c.b16 %v1858, %v1856
        %v2147 = vpack.c.b16 %v1859, %v1857
        %v2148 = vpack.c.b16 %v1862, %v1860
        %v2149 = vpack.c.b16 %v1863, %v1861
        %v2150 = vpack.c.b16 %v1866, %v1864
        %v2151 = vpack.c.b16 %v1867, %v1865
        %v2152 = vpack.c.b16 %v1870, %v1868
        %v2153 = vpack.c.b16 %v1871, %v1869
        %v2154 = vpack.c.b16 %v1874, %v1872
        %v2155 = vpack.c.b16 %v1875, %v1873
        %v2156 = vpack.c.b16 %v1878, %v1876
        %v2157 = vpack.c.b16 %v1879, %v1877
        %v2158 = vpack.c.b16 %v1882, %v1880
        %v2159 = vpack.c.b16 %v1883, %v1881
        %v2160 = vpack.c.b16 %v1886, %v1884
        %v2161 = vpack.c.b16 %v1887, %v1885
        %v2162 = vpack.c.b16 %v1890, %v1888
        %v2163 = vpack.c.b16 %v1891, %v1889
        %v2164 = vpack.c.b16 %v1894, %v1892
        %v2165 = vpack.c.b16 %v1895, %v1893
        %v2166 = vpack.c.b16 %v1898, %v1896
        %v2167 = vpack.c.b16 %v1899, %v1897
        %v2168 = vpack.c.b16 %v1902, %v1900
        %v2169 = vpack.c.b16 %v1903, %v1901
        %v2170 = vpack.c.b16 %v1906, %v1904
        %v2171 = vpack.c.b16 %v1907, %v1905
        %v2172 = vpack.c.b16 %v1910, %v1908
        %v2173 = vpack.c.b16 %v1911, %v1909
        %v2174 = vpack.c.b16 %v1914, %v1912
        %v2175 = vpack.c.b16 %v1915, %v1913
        %v2176 = vpack.c.b16 %v1918, %v1916
        %v2177 = vpack.c.b16 %v1919, %v1917
        %v2178 = vpack.c.b16 %v1922, %v1920
        %v2179 = vpack.c.b16 %v1923, %v1921
        %v2180 = vpack.c.b16 %v1926, %v1924
        %v2181 = vpack.c.b16 %v1927, %v1925
        %v2182 = vpack.c.b16 %v1930, %v1928
        %v2183 = vpack.c.b16 %v1931, %v1929
        %v2184 = vpack.c.b16 %v1934, %v1932
        %v2185 = vpack.c.b16 %v1935, %v1933
        %v2186 = vpack.c.b16 %v1938, %v1936
        %v2187 = vpack.c.b16 %v1939, %v1937
        %v2188 = vpack.c.b16 %v1942, %v1940
        %v2189 = vpack.c.b16 %v1943, %v1941
        %v2190 = vpack.c.b16 %v1946, %v1944
        %v2191 = vpack.c.b16 %v1947, %v1945
        %v2192 = vpack.c.b16 %v1950, %v1948
        %v2193 = vpack.c.b16 %v1951, %v1949
        %v2194 = vpack.c.b16 %v1954, %v1952
        %v2195 = vpack.c.b16 %v1955, %v1953
        %v2196 = vpack.c.b16 %v1958, %v1956
        %v2197 = vpack.c.b16 %v1959, %v1957
        %v2198 = vpack.c.b16 %v1962, %v1960
        %v2199 = vpack.c.b16 %v1963, %v1961
        %v2200 = vpack.c.b16 %v1966, %v1964
        %v2201 = vpack.c.b16 %v1967, %v1965
        %v2202 = vpack.c.b16 %v1970, %v1968
        %v2203 = vpack.c.b16 %v1971, %v1969
        %v2204 = vpack.c.b16 %v1974, %v1972
        %v2205 = vpack.c.b16 %v1975, %v1973
        %v2206 = vpack.c.b16 %v1978, %v1976
        %v2207 = vpack.c.b16 %v1979, %v1977
        %v2208 = vpack.c.b16 %v1982, %v1980
        %v2209 = vpack.c.b16 %v1983, %v1981
        %v2210 = vpack.c.b16 %v1986, %v1984
        %v2211 = vpack.c.b16 %v1987, %v1985
        %v2212 = vpack.c.b16 %v1990, %v1988
        %v2213 = vpack.c.b16 %v1991, %v1989
        %v2214 = vpack.c.b16 %v1994, %v1992
        %v2215 = vpack.c.b16 %v1995, %v1993
        %v2216 = vpack.c.b16 %v1998, %v1996
        %v2217 = vpack.c.b16 %v1999, %v1997
        %v2218 = vpack.c.b16 %v2002, %v2000
        %v2219 = vpack.c.b16 %v2003, %v2001
        %v2220 = vpack.c.b16 %v2006, %v2004
        %v2221 = vpack.c.b16 %v2007, %v2005
        %v2222 = vpack.c.b16 %v2010, %v2008
        %v2223 = vpack.c.b16 %v2011, %v2009
        %v2224 = vpack.c.b16 %v2014, %v2012
        %v2225 = vpack.c.b16 %v2015, %v2013
        %v2226 = vpack.c.b16 %v2018, %v2016
        %v2227 = vpack.c.b16 %v2019, %v2017
        %2436 = vmatprep.subr.bf16.mxu0 %v2021
        %2437 = vmatpush1.bf16.msra.mxu0 %v2020
        %2438 = vmatprep.subr.bf16.mxu0 %v2023
        %2439 = vmatpush1.bf16.msra.mxu0 %v2022
        %2440 = vmatprep.subr.bf16.mxu0 %v2025
        %2441 = vmatpush1.bf16.msra.mxu0 %v2024
        %2442 = vmatprep.subr.bf16.mxu0 %v2027
        %2443 = vmatpush1.bf16.msra.mxu0 %v2026
        %2444 = vmatprep.subr.bf16.mxu0 %v2029
        %2445 = vmatpush1.bf16.msra.mxu0 %v2028
        %2446 = vmatprep.subr.bf16.mxu0 %v2031
        %2447 = vmatpush1.bf16.msra.mxu0 %v2030
        %2448 = vmatprep.subr.bf16.mxu0 %v2033
        %2449 = vmatpush1.bf16.msra.mxu0 %v2032
        %2450 = vmatprep.subr.bf16.mxu0 %v2035
        %2451 = vmatpush1.bf16.msra.mxu0 %v2034
        %2452 = vmatprep.subr.bf16.mxu0 %v2037
        %2453 = vmatpush1.bf16.msra.mxu0 %v2036
        %2454 = vmatprep.subr.bf16.mxu0 %v2039
        %2455 = vmatpush1.bf16.msra.mxu0 %v2038
        %2456 = vmatprep.subr.bf16.mxu0 %v2041
        %2457 = vmatpush1.bf16.msra.mxu0 %v2040
        %2458 = vmatprep.subr.bf16.mxu0 %v2043
        %2459 = vmatpush1.bf16.msra.mxu0 %v2042
        %2460 = vmatprep.subr.bf16.mxu0 %v2045
        %2461 = vmatpush1.bf16.msra.mxu0 %v2044
        %2462 = vmatprep.subr.bf16.mxu0 %v2047
        %2463 = vmatpush1.bf16.msra.mxu0 %v2046
        %2464 = vmatprep.subr.bf16.mxu0 %v2049
        %2465 = vmatpush1.bf16.msra.mxu0 %v2048
        %2466 = vmatprep.subr.bf16.mxu0 %v2051
        %2467 = vmatpush1.bf16.msra.mxu0 %v2050
        %2468 = vmatprep.mubr.bf16.mxu0 %v1371
        %2469 = vmatmul.mubr.bf16.gmra.mrb[0].mxu0 %v1370
        %v2470 = vpop.f32.mrb[0].mxu0
        %v2471 = vadd.f32 0.0, %v2470
        %v2472 = vpop.f32.mrb[0].mxu0
        %v2473 = vadd.f32 0.0, %v2472
        %v2474 = vpop.f32.mrb[0].mxu0
        %v2475 = vpop.f32.mrb[0].mxu0
        %2476 = vdwg.mxu0
        %2477 = vmatprep.subr.bf16.mxu0 %v2053
        %2478 = vmatpush1.bf16.msra.mxu0 %v2052
        %2479 = vmatprep.subr.bf16.mxu0 %v2055
        %2480 = vmatpush1.bf16.msra.mxu0 %v2054
        %2481 = vmatprep.subr.bf16.mxu0 %v2057
        %2482 = vmatpush1.bf16.msra.mxu0 %v2056
        %2483 = vmatprep.subr.bf16.mxu0 %v2059
        %2484 = vmatpush1.bf16.msra.mxu0 %v2058
        %2485 = vmatprep.subr.bf16.mxu0 %v2061
        %2486 = vmatpush1.bf16.msra.mxu0 %v2060
        %2487 = vmatprep.subr.bf16.mxu0 %v2063
        %2488 = vmatpush1.bf16.msra.mxu0 %v2062
        %2489 = vmatprep.subr.bf16.mxu0 %v2065
        %2490 = vmatpush1.bf16.msra.mxu0 %v2064
        %2491 = vmatprep.subr.bf16.mxu0 %v2067
        %2492 = vmatpush1.bf16.msra.mxu0 %v2066
        %2493 = vmatprep.subr.bf16.mxu0 %v2069
        %2494 = vmatpush1.bf16.msra.mxu0 %v2068
        %2495 = vmatprep.subr.bf16.mxu0 %v2071
        %2496 = vmatpush1.bf16.msra.mxu0 %v2070
        %2497 = vmatprep.subr.bf16.mxu0 %v2073
        %2498 = vmatpush1.bf16.msra.mxu0 %v2072
        %2499 = vmatprep.subr.bf16.mxu0 %v2075
        %2500 = vmatpush1.bf16.msra.mxu0 %v2074
        %2501 = vmatprep.subr.bf16.mxu0 %v2077
        %2502 = vmatpush1.bf16.msra.mxu0 %v2076
        %2503 = vmatprep.subr.bf16.mxu0 %v2079
        %2504 = vmatpush1.bf16.msra.mxu0 %v2078
        %2505 = vmatprep.subr.bf16.mxu0 %v2081
        %2506 = vmatpush1.bf16.msra.mxu0 %v2080
        %2507 = vmatprep.subr.bf16.mxu0 %v2083
        %2508 = vmatpush1.bf16.msra.mxu0 %v2082
        %2509 = vmatprep.mubr.bf16.mxu0 %v1373
        %2510 = vmatmul.mubr.bf16.gmra.mrb[0].mxu0 %v1372
        %v2511 = vpop.f32.mrb[0].mxu0
        %v2512 = vadd.f32 %v2471, %v2511
        %v2513 = vpop.f32.mrb[0].mxu0
        %v2514 = vadd.f32 %v2473, %v2513
        %v2515 = vpop.f32.mrb[0].mxu0
        %v2516 = vpop.f32.mrb[0].mxu0
        %2517 = vdwg.mxu0
        %2518 = vmatprep.subr.bf16.mxu0 %v2085
        %2519 = vmatpush1.bf16.msra.mxu0 %v2084
        %2520 = vmatprep.subr.bf16.mxu0 %v2087
        %2521 = vmatpush1.bf16.msra.mxu0 %v2086
        %2522 = vmatprep.subr.bf16.mxu0 %v2089
        %2523 = vmatpush1.bf16.msra.mxu0 %v2088
        %2524 = vmatprep.subr.bf16.mxu0 %v2091
        %2525 = vmatpush1.bf16.msra.mxu0 %v2090
        %2526 = vmatprep.subr.bf16.mxu0 %v2093
        %2527 = vmatpush1.bf16.msra.mxu0 %v2092
        %2528 = vmatprep.subr.bf16.mxu0 %v2095
        %2529 = vmatpush1.bf16.msra.mxu0 %v2094
        %2530 = vmatprep.subr.bf16.mxu0 %v2097
        %2531 = vmatpush1.bf16.msra.mxu0 %v2096
        %2532 = vmatprep.subr.bf16.mxu0 %v2099
        %2533 = vmatpush1.bf16.msra.mxu0 %v2098
        %2534 = vmatprep.subr.bf16.mxu0 %v2101
        %2535 = vmatpush1.bf16.msra.mxu0 %v2100
        %2536 = vmatprep.subr.bf16.mxu0 %v2103
        %2537 = vmatpush1.bf16.msra.mxu0 %v2102
        %2538 = vmatprep.subr.bf16.mxu0 %v2105
        %2539 = vmatpush1.bf16.msra.mxu0 %v2104
        %2540 = vmatprep.subr.bf16.mxu0 %v2107
        %2541 = vmatpush1.bf16.msra.mxu0 %v2106
        %2542 = vmatprep.subr.bf16.mxu0 %v2109
        %2543 = vmatpush1.bf16.msra.mxu0 %v2108
        %2544 = vmatprep.subr.bf16.mxu0 %v2111
        %2545 = vmatpush1.bf16.msra.mxu0 %v2110
        %2546 = vmatprep.subr.bf16.mxu0 %v2113
        %2547 = vmatpush1.bf16.msra.mxu0 %v2112
        %2548 = vmatprep.subr.bf16.mxu0 %v2115
        %2549 = vmatpush1.bf16.msra.mxu0 %v2114
        %2550 = vmatprep.mubr.bf16.mxu0 %v1375
        %2551 = vmatmul.mubr.bf16.gmra.mrb[0].mxu0 %v1374
        %v2552 = vpop.f32.mrb[0].mxu0
        %v2553 = vadd.f32 %v2512, %v2552
        %v2554 = vpop.f32.mrb[0].mxu0
        %v2555 = vadd.f32 %v2514, %v2554
        %v2556 = vpop.f32.mrb[0].mxu0
        %v2557 = vpop.f32.mrb[0].mxu0
        %2558 = vdwg.mxu0
        %2559 = vmatprep.subr.bf16.mxu0 %v2117
        %2560 = vmatpush1.bf16.msra.mxu0 %v2116
        %2561 = vmatprep.subr.bf16.mxu0 %v2119
        %2562 = vmatpush1.bf16.msra.mxu0 %v2118
        %2563 = vmatprep.subr.bf16.mxu0 %v2121
        %2564 = vmatpush1.bf16.msra.mxu0 %v2120
        %2565 = vmatprep.subr.bf16.mxu0 %v2123
        %2566 = vmatpush1.bf16.msra.mxu0 %v2122
        %2567 = vmatprep.subr.bf16.mxu0 %v2125
        %2568 = vmatpush1.bf16.msra.mxu0 %v2124
        %2569 = vmatprep.subr.bf16.mxu0 %v2127
        %2570 = vmatpush1.bf16.msra.mxu0 %v2126
        %2571 = vmatprep.subr.bf16.mxu0 %v2129
        %2572 = vmatpush1.bf16.msra.mxu0 %v2128
        %2573 = vmatprep.subr.bf16.mxu0 %v2131
        %2574 = vmatpush1.bf16.msra.mxu0 %v2130
        %2575 = vmatprep.subr.bf16.mxu0 %v2133
        %2576 = vmatpush1.bf16.msra.mxu0 %v2132
        %2577 = vmatprep.subr.bf16.mxu0 %v2135
        %2578 = vmatpush1.bf16.msra.mxu0 %v2134
        %2579 = vmatprep.subr.bf16.mxu0 %v2137
        %2580 = vmatpush1.bf16.msra.mxu0 %v2136
        %2581 = vmatprep.subr.bf16.mxu0 %v2139
        %2582 = vmatpush1.bf16.msra.mxu0 %v2138
        %2583 = vmatprep.subr.bf16.mxu0 %v2141
        %2584 = vmatpush1.bf16.msra.mxu0 %v2140
        %2585 = vmatprep.subr.bf16.mxu0 %v2143
        %2586 = vmatpush1.bf16.msra.mxu0 %v2142
        %2587 = vmatprep.subr.bf16.mxu0 %v2145
        %2588 = vmatpush1.bf16.msra.mxu0 %v2144
        %2589 = vmatprep.subr.bf16.mxu0 %v2147
        %2590 = vmatpush1.bf16.msra.mxu0 %v2146
        %2591 = vmatprep.mubr.bf16.mxu0 %v1377
        %2592 = vmatmul.mubr.bf16.gmra.mrb[0].mxu0 %v1376
        %v2593 = vpop.f32.mrb[0].mxu0
        %v2594 = vadd.f32 %v2553, %v2593
        %v2595 = vpop.f32.mrb[0].mxu0
        %v2596 = vadd.f32 %v2555, %v2595
        %v2597 = vpop.f32.mrb[0].mxu0
        %v2598 = vpop.f32.mrb[0].mxu0
        %2599 = vdwg.mxu0
        %2600 = vmatprep.subr.bf16.mxu0 %v2149
        %2601 = vmatpush1.bf16.msra.mxu0 %v2148
        %2602 = vmatprep.subr.bf16.mxu0 %v2151
        %2603 = vmatpush1.bf16.msra.mxu0 %v2150
        %2604 = vmatprep.subr.bf16.mxu0 %v2153
        %2605 = vmatpush1.bf16.msra.mxu0 %v2152
        %2606 = vmatprep.subr.bf16.mxu0 %v2155
        %2607 = vmatpush1.bf16.msra.mxu0 %v2154
        %2608 = vmatprep.subr.bf16.mxu0 %v2157
        %2609 = vmatpush1.bf16.msra.mxu0 %v2156
        %2610 = vmatprep.subr.bf16.mxu0 %v2159
        %2611 = vmatpush1.bf16.msra.mxu0 %v2158
        %2612 = vmatprep.subr.bf16.mxu0 %v2161
        %2613 = vmatpush1.bf16.msra.mxu0 %v2160
        %2614 = vmatprep.subr.bf16.mxu0 %v2163
        %2615 = vmatpush1.bf16.msra.mxu0 %v2162
        %2616 = vmatprep.subr.bf16.mxu0 %v2165
        %2617 = vmatpush1.bf16.msra.mxu0 %v2164
        %2618 = vmatprep.subr.bf16.mxu0 %v2167
        %2619 = vmatpush1.bf16.msra.mxu0 %v2166
        %2620 = vmatprep.subr.bf16.mxu0 %v2169
        %2621 = vmatpush1.bf16.msra.mxu0 %v2168
        %2622 = vmatprep.subr.bf16.mxu0 %v2171
        %2623 = vmatpush1.bf16.msra.mxu0 %v2170
        %2624 = vmatprep.subr.bf16.mxu0 %v2173
        %2625 = vmatpush1.bf16.msra.mxu0 %v2172
        %2626 = vmatprep.subr.bf16.mxu0 %v2175
        %2627 = vmatpush1.bf16.msra.mxu0 %v2174
        %2628 = vmatprep.subr.bf16.mxu0 %v2177
        %2629 = vmatpush1.bf16.msra.mxu0 %v2176
        %2630 = vmatprep.subr.bf16.mxu0 %v2179
        %2631 = vmatpush1.bf16.msra.mxu0 %v2178
        %2632 = vmatprep.mubr.bf16.mxu0 %v1379
        %2633 = vmatmul.mubr.bf16.gmra.mrb[0].mxu0 %v1378
        %v2634 = vpop.f32.mrb[0].mxu0
        %v2635 = vadd.f32 %v2594, %v2634
        %v2636 = vpop.f32.mrb[0].mxu0
        %v2637 = vadd.f32 %v2596, %v2636
        %v2638 = vpop.f32.mrb[0].mxu0
        %v2639 = vpop.f32.mrb[0].mxu0
        %2640 = vdwg.mxu0
        %2641 = vmatprep.subr.bf16.mxu0 %v2181
        %2642 = vmatpush1.bf16.msra.mxu0 %v2180
        %2643 = vmatprep.subr.bf16.mxu0 %v2183
        %2644 = vmatpush1.bf16.msra.mxu0 %v2182
        %2645 = vmatprep.subr.bf16.mxu0 %v2185
        %2646 = vmatpush1.bf16.msra.mxu0 %v2184
        %2647 = vmatprep.subr.bf16.mxu0 %v2187
        %2648 = vmatpush1.bf16.msra.mxu0 %v2186
        %2649 = vmatprep.subr.bf16.mxu0 %v2189
        %2650 = vmatpush1.bf16.msra.mxu0 %v2188
        %2651 = vmatprep.subr.bf16.mxu0 %v2191
        %2652 = vmatpush1.bf16.msra.mxu0 %v2190
        %2653 = vmatprep.subr.bf16.mxu0 %v2193
        %2654 = vmatpush1.bf16.msra.mxu0 %v2192
        %2655 = vmatprep.subr.bf16.mxu0 %v2195
        %2656 = vmatpush1.bf16.msra.mxu0 %v2194
        %2657 = vmatprep.subr.bf16.mxu0 %v2197
        %2658 = vmatpush1.bf16.msra.mxu0 %v2196
        %2659 = vmatprep.subr.bf16.mxu0 %v2199
        %2660 = vmatpush1.bf16.msra.mxu0 %v2198
        %2661 = vmatprep.subr.bf16.mxu0 %v2201
        %2662 = vmatpush1.bf16.msra.mxu0 %v2200
        %2663 = vmatprep.subr.bf16.mxu0 %v2203
        %2664 = vmatpush1.bf16.msra.mxu0 %v2202
        %2665 = vmatprep.subr.bf16.mxu0 %v2205
        %2666 = vmatpush1.bf16.msra.mxu0 %v2204
        %2667 = vmatprep.subr.bf16.mxu0 %v2207
        %2668 = vmatpush1.bf16.msra.mxu0 %v2206
        %2669 = vmatprep.subr.bf16.mxu0 %v2209
        %2670 = vmatpush1.bf16.msra.mxu0 %v2208
        %2671 = vmatprep.subr.bf16.mxu0 %v2211
        %2672 = vmatpush1.bf16.msra.mxu0 %v2210
        %2673 = vmatprep.mubr.bf16.mxu0 %v1381
        %2674 = vmatmul.mubr.bf16.gmra.mrb[0].mxu0 %v1380
        %v2675 = vpop.f32.mrb[0].mxu0
        %v2676 = vadd.f32 %v2635, %v2675
        %v2677 = vpop.f32.mrb[0].mxu0
        %v2678 = vadd.f32 %v2637, %v2677
        %v2679 = vpop.f32.mrb[0].mxu0
        %v2680 = vpop.f32.mrb[0].mxu0
        %2681 = vdwg.mxu0
        %2682 = vmatprep.subr.bf16.mxu0 %v2213
        %2683 = vmatpush1.bf16.msra.mxu0 %v2212
        %2684 = vmatprep.subr.bf16.mxu0 %v2215
        %2685 = vmatpush1.bf16.msra.mxu0 %v2214
        %2686 = vmatprep.subr.bf16.mxu0 %v2217
        %2687 = vmatpush1.bf16.msra.mxu0 %v2216
        %2688 = vmatprep.subr.bf16.mxu0 %v2219
        %2689 = vmatpush1.bf16.msra.mxu0 %v2218
        %2690 = vmatprep.subr.bf16.mxu0 %v2221
        %2691 = vmatpush1.bf16.msra.mxu0 %v2220
        %2692 = vmatprep.subr.bf16.mxu0 %v2223
        %2693 = vmatpush1.bf16.msra.mxu0 %v2222
        %2694 = vmatprep.subr.bf16.mxu0 %v2225
        %2695 = vmatpush1.bf16.msra.mxu0 %v2224
        %2696 = vmatprep.subr.bf16.mxu0 %v2227
        %2697 = vmatpush1.bf16.msra.mxu0 %v2226
        %2698 = vmatprep.subr.bf16.mxu0 0
        %2699 = vmatpush1.bf16.msra.mxu0 0
        %2700 = vmatprep.subr.bf16.mxu0 0
        %2701 = vmatpush1.bf16.msra.mxu0 0
        %2702 = vmatprep.subr.bf16.mxu0 0
        %2703 = vmatpush1.bf16.msra.mxu0 0
        %2704 = vmatprep.subr.bf16.mxu0 0
        %2705 = vmatpush1.bf16.msra.mxu0 0
        %2706 = vmatprep.subr.bf16.mxu0 0
        %2707 = vmatpush1.bf16.msra.mxu0 0
        %2708 = vmatprep.subr.bf16.mxu0 0
        %2709 = vmatpush1.bf16.msra.mxu0 0
        %2710 = vmatprep.subr.bf16.mxu0 0
        %2711 = vmatpush1.bf16.msra.mxu0 0
        %2712 = vmatprep.subr.bf16.mxu0 0
        %2713 = vmatpush1.bf16.msra.mxu0 0
        %2714 = vmatprep.mubr.bf16.mxu0 0
        %2715 = vmatmul.mubr.bf16.gmra.mrb[0].mxu0 %v1382
        %v2716 = vpop.f32.mrb[0].mxu0
        %v2717 = vadd.f32 %v2676, %v2716
        %v2718 = vpop.f32.mrb[0].mxu0
        %v2719 = vadd.f32 %v2678, %v2718
        %v2720 = vpop.f32.mrb[0].mxu0
        %v2721 = vpop.f32.mrb[0].mxu0
        %2722 = vdwg.mxu0
        %v2723 = vadd.f32 %v1133, %v2717
        %v2724 = vadd.f32 %v1134, %v2719
        %2725 = vst [vmem:[#allocation2] sm:$0xff] %v2723
        %2726 = vst [vmem:[#allocation2 + $0x8] sm:$0xff] %v2724
        %p2727 = scmp.eq.s32.totalorder %s21, 12
        // Predicated region
        $region75: #{forward.14} parent=65 // pred_check
          %p2728 = pneg %p2727
        $region76: #{forward.14} parent=65 // pred_check_branch
          %2730 = sbr.rel (%p2728) target = $region78
        $region77: #{forward.14} parent=65 // pred_region
          %v2731 = vld [vmem:[#allocation2] sm:$0xff]
          %v2732 = vld [vmem:[#allocation2 + $0x8] sm:$0xff]
          %v2733 = vld [vmem:[%s1114] sm:$0x3]
          %v2735 = vlaneseq
          %v2736 = vshrl.u32 %v2735, 7
          %v2737 = vsub.s32 0, %v2736
          %v2738 = vrot.slane %v2733, %v2737
          %v2739 = vlaneseq
          %v2740 = vshrl.u32 %v2739, 7
          %v2741 = vsub.s32 1, %v2740
          %v2742 = vrot.slane %v2733, %v2741
          %v2745 = vadd.f32 %v2731, %v2738
          %v2746 = vadd.f32 %v2732, %v2742
          %v2747 = vmax.f32 %v2745, 0.0
          %v2748 = vmax.f32 %v2746, 0.0
          %2749 = vst [vmem:[%s1124] sm:$0xff] %v2747
          %2750 = vst [vmem:[%s1124 + $0x8] sm:$0xff] %v2748
        $region78: #{forward.14} parent=65 // pred_fallthru
          _
        %s2751 = smul.u32 2, %s20
        %p2752 = scmp.lt.s32.totalorder %s19, 0
        %s2753 = scalar_select %p2752, %s19, 0
        %p2754 = scmp.lt.s32.totalorder %s2751, 3
        %s2755 = scalar_select %p2754, %s2751, 3
        %s2756 = smul.addr %s2753, 4
        %s2757 = sadd.s32 %s2755, %s2756
        %s2758 = smul.addr %s2757, 8
        %s2759 = scalar_lea.vmem %s3, %s2758
        // Predicated region
        $region79: #{forward.14} parent=65 // pred_check
          %p2760 = pneg %p135
        $region80: #{forward.14} parent=65 // pred_check_branch
          %2762 = sbr.rel (%p2760) target = $region82
        $region81: #{forward.14} parent=65 // pred_region
          %s2763 = smul.u32 2, %s20
        $region82: #{forward.14} parent=65 // pred_fallthru
          _
      $region66: #{forward.14} parent=5 // pred_fallthru
        _
      %p2764 = scmp.le.s32.totalorder 2, %s9
      // Predicated region
      $region83: #{forward.14} parent=5 // pred_check
        %p2765 = pneg %p2764
      $region84: #{forward.14} parent=5 // pred_check_branch
        %2767 = sbr.rel (%p2765) target = $region86
      $region85: #{forward.14} parent=5 // pred_region
        %s2768 = ssub.s32 %s9, 2
        // Predicated region
        $region87: #{forward.14} parent=85 // pred_check
          %p2769 = pneg %p141
        $region88: #{forward.14} parent=85 // pred_check_branch
          %2771 = sbr.rel (%p2769) target = $region90
        $region89: #{forward.14} parent=85 // pred_region
          %s2772 = smul.u32 2, %s23
          %p2773 = scmp.lt.s32.totalorder %s22, 0
          %s2774 = scalar_select %p2773, %s22, 0
          %p2775 = scmp.lt.s32.totalorder %s2772, 3
          %s2776 = scalar_select %p2775, %s2772, 3
          %s2777 = smul.addr %s2774, 4
          %s2778 = sadd.s32 %s2776, %s2777
          %s2779 = smul.addr %s2778, 8
          %s2780 = scalar_lea.vmem %s3, %s2779
        $region90: #{forward.14} parent=85 // pred_fallthru
          _
      $region86: #{forward.14} parent=5 // pred_fallthru
        _
    $region6: #{forward.14} parent=1 // loop_footer
      %s13 = sadd.s32 1, %s9
    $region7: #{forward.14} parent=1 // loop_footer_branch
      %8 = sbr.rel target = $region3
    $region8: #{forward.14} parent=1 // loop_exit
      _

// kernel: forward.15
$region0: #{forward.15}
  #allocation0 [shape = 'u32[]', space=smem, size = 0x4, offset = 0x4, fixed_abs, tag = 'smem constant byte address 0x4 - core index']
  #allocation1 [shape = 'u32[144,128]{1,0:T(1,128)}', space=vmem, size = 0x12000, scoped, tag = 'internal scratch']
  %s0 = inlined_call_operand.vmem [shape: bf16[8,512], index: 0, kind: input, shape index: {}]
  %s1 = inlined_call_operand.vmem [shape: bf16[512,10], index: 1, kind: input, shape index: {}]
  %s2 = inlined_call_operand.vmem [shape: f32[1,10], index: 2, kind: input, shape index: {}]
  %s3 = inlined_call_operand.vmem [shape: f32[8,10], index: 3, kind: output, shape index: {}]
  %s4 = sld [smem:[#allocation0]]
  $region22: #{forward.15} parent=0
    _
  %s6 = ssub.s32 1, %s4
  %s7 = scalar_select 0, %s6, %s4
  // Predicated region
  $region2: #{forward.15} parent=0 // pred_check
    _
  $region3: #{forward.15} parent=0 // pred_check_branch
    %9 = sbr.rel (0) target = $region5
  $region4: #{forward.15} parent=0 // pred_region
    _
  $region5: #{forward.15} parent=0 // pred_fallthru
    _
  // Predicated region
  $region6: #{forward.15} parent=0 // pred_check
    _
  $region7: #{forward.15} parent=0 // pred_check_branch
    %11 = sbr.rel (0) target = $region9
  $region8: #{forward.15} parent=0 // pred_region
    _
  $region9: #{forward.15} parent=0 // pred_fallthru
    _
  // Predicated region
  $region10: #{forward.15} parent=0 // pred_check
    _
  $region11: #{forward.15} parent=0 // pred_check_branch
    %13 = sbr.rel (0) target = $region13
  $region12: #{forward.15} parent=0 // pred_region
    _
  $region13: #{forward.15} parent=0 // pred_fallthru
    _
  %v15 = vld [vmem:[%s0] sm:$0xff]
  %v16 = vld [vmem:[%s0 + $0x8] sm:$0xff]
  %v17 = vld [vmem:[%s1] sm:$0xf]
  %v18 = vld [vmem:[%s1 + $0x4] sm:$0xf]
  %v19 = vld [vmem:[%s1 + $0x8] sm:$0xf]
  %v20 = vld [vmem:[%s1 + $0xc] sm:$0xf]
  %v21 = vld [vmem:[%s1 + $0x10] sm:$0xf]
  %v22 = vld [vmem:[%s1 + $0x14] sm:$0xf]
  %v23 = vld [vmem:[%s1 + $0x18] sm:$0xf]
  %v24 = vld [vmem:[%s1 + $0x1c] sm:$0xf]
  %v25 = vld [vmem:[%s1 + $0x20] sm:$0xf]
  %v26 = vld [vmem:[%s1 + $0x24] sm:$0xf]
  %v27 = vld [vmem:[%s1 + $0x28] sm:$0xf]
  %v28 = vld [vmem:[%s1 + $0x2c] sm:$0xf]
  %v29 = vld [vmem:[%s1 + $0x30] sm:$0xf]
  %v30 = vld [vmem:[%s1 + $0x34] sm:$0xf]
  %v31 = vld [vmem:[%s1 + $0x38] sm:$0xf]
  %v32 = vld [vmem:[%s1 + $0x3c] sm:$0xf]
  %v33 = vld [vmem:[%s1 + $0x40] sm:$0xf]
  %v34 = vld [vmem:[%s1 + $0x44] sm:$0xf]
  %v35 = vld [vmem:[%s1 + $0x48] sm:$0xf]
  %v36 = vld [vmem:[%s1 + $0x4c] sm:$0xf]
  %v37 = vld [vmem:[%s1 + $0x50] sm:$0xf]
  %v38 = vld [vmem:[%s1 + $0x54] sm:$0xf]
  %v39 = vld [vmem:[%s1 + $0x58] sm:$0xf]
  %v40 = vld [vmem:[%s1 + $0x5c] sm:$0xf]
  %v41 = vld [vmem:[%s1 + $0x60] sm:$0xf]
  %v42 = vld [vmem:[%s1 + $0x64] sm:$0xf]
  %v43 = vld [vmem:[%s1 + $0x68] sm:$0xf]
  %v44 = vld [vmem:[%s1 + $0x6c] sm:$0xf]
  %v45 = vld [vmem:[%s1 + $0x70] sm:$0xf]
  %v46 = vld [vmem:[%s1 + $0x74] sm:$0xf]
  %v47 = vld [vmem:[%s1 + $0x78] sm:$0xf]
  %v48 = vld [vmem:[%s1 + $0x7c] sm:$0xf]
  %v49 = vld [vmem:[%s1 + $0x80] sm:$0xf]
  %v50 = vld [vmem:[%s1 + $0x84] sm:$0xf]
  %v51 = vld [vmem:[%s1 + $0x88] sm:$0xf]
  %v52 = vld [vmem:[%s1 + $0x8c] sm:$0xf]
  %v53 = vld [vmem:[%s1 + $0x90] sm:$0xf]
  %v54 = vld [vmem:[%s1 + $0x94] sm:$0xf]
  %v55 = vld [vmem:[%s1 + $0x98] sm:$0xf]
  %v56 = vld [vmem:[%s1 + $0x9c] sm:$0xf]
  %v57 = vld [vmem:[%s1 + $0xa0] sm:$0xf]
  %v58 = vld [vmem:[%s1 + $0xa4] sm:$0xf]
  %v59 = vld [vmem:[%s1 + $0xa8] sm:$0xf]
  %v60 = vld [vmem:[%s1 + $0xac] sm:$0xf]
  %v61 = vld [vmem:[%s1 + $0xb0] sm:$0xf]
  %v62 = vld [vmem:[%s1 + $0xb4] sm:$0xf]
  %v63 = vld [vmem:[%s1 + $0xb8] sm:$0xf]
  %v64 = vld [vmem:[%s1 + $0xbc] sm:$0xf]
  %v65 = vld [vmem:[%s1 + $0xc0] sm:$0xf]
  %v66 = vld [vmem:[%s1 + $0xc4] sm:$0xf]
  %v67 = vld [vmem:[%s1 + $0xc8] sm:$0xf]
  %v68 = vld [vmem:[%s1 + $0xcc] sm:$0xf]
  %v69 = vld [vmem:[%s1 + $0xd0] sm:$0xf]
  %v70 = vld [vmem:[%s1 + $0xd4] sm:$0xf]
  %v71 = vld [vmem:[%s1 + $0xd8] sm:$0xf]
  %v72 = vld [vmem:[%s1 + $0xdc] sm:$0xf]
  %v73 = vld [vmem:[%s1 + $0xe0] sm:$0xf]
  %v74 = vld [vmem:[%s1 + $0xe4] sm:$0xf]
  %v75 = vld [vmem:[%s1 + $0xe8] sm:$0xf]
  %v76 = vld [vmem:[%s1 + $0xec] sm:$0xf]
  %v77 = vld [vmem:[%s1 + $0xf0] sm:$0xf]
  %v78 = vld [vmem:[%s1 + $0xf4] sm:$0xf]
  %v79 = vld [vmem:[%s1 + $0xf8] sm:$0xf]
  %v80 = vld [vmem:[%s1 + $0xfc] sm:$0xf]
  %v81 = vld [vmem:[%s2] sm:$0x1]
  %v83 = vlaneseq
  %v84 = vshrl.u32 %v83, 7
  %v85 = vsub.s32 0, %v84
  %v86 = vrot.slane %v81, %v85
  %v90 = vunpack.c.l.b16 %v15
  %v91 = vunpack.c.h.b16 %v15
  %v92 = vunpack.c.l.b16 %v16
  %v93 = vunpack.c.h.b16 %v16
  %v94 = vpack.c.b16 %v90, %v90
  %v95 = vpack.c.b16 %v91, %v91
  %v96 = vpack.c.b16 %v92, %v92
  %v97 = vpack.c.b16 %v93, %v93
  %v166 = vunpack.c.l.b16 %v17
  %v167 = vunpack.c.l.b16 %v18
  %v168 = vunpack.c.l.b16 %v19
  %v169 = vunpack.c.l.b16 %v20
  %v170 = vunpack.c.l.b16 %v21
  %v171 = vunpack.c.l.b16 %v22
  %v172 = vunpack.c.l.b16 %v23
  %v173 = vunpack.c.l.b16 %v24
  %v174 = vunpack.c.l.b16 %v25
  %v175 = vunpack.c.l.b16 %v26
  %v176 = vunpack.c.l.b16 %v27
  %v177 = vunpack.c.l.b16 %v28
  %v178 = vunpack.c.l.b16 %v29
  %v179 = vunpack.c.l.b16 %v30
  %v180 = vunpack.c.l.b16 %v31
  %v181 = vunpack.c.l.b16 %v32
  %v182 = vunpack.c.l.b16 %v33
  %v183 = vunpack.c.l.b16 %v34
  %v184 = vunpack.c.l.b16 %v35
  %v185 = vunpack.c.l.b16 %v36
  %v186 = vunpack.c.l.b16 %v37
  %v187 = vunpack.c.l.b16 %v38
  %v188 = vunpack.c.l.b16 %v39
  %v189 = vunpack.c.l.b16 %v40
  %v190 = vunpack.c.l.b16 %v41
  %v191 = vunpack.c.l.b16 %v42
  %v192 = vunpack.c.l.b16 %v43
  %v193 = vunpack.c.l.b16 %v44
  %v194 = vunpack.c.l.b16 %v45
  %v195 = vunpack.c.l.b16 %v46
  %v196 = vunpack.c.l.b16 %v47
  %v197 = vunpack.c.l.b16 %v48
  %v198 = vunpack.c.l.b16 %v49
  %v199 = vunpack.c.l.b16 %v50
  %v200 = vunpack.c.l.b16 %v51
  %v201 = vunpack.c.l.b16 %v52
  %v202 = vunpack.c.l.b16 %v53
  %v203 = vunpack.c.l.b16 %v54
  %v204 = vunpack.c.l.b16 %v55
  %v205 = vunpack.c.l.b16 %v56
  %v206 = vunpack.c.l.b16 %v57
  %v207 = vunpack.c.l.b16 %v58
  %v208 = vunpack.c.l.b16 %v59
  %v209 = vunpack.c.l.b16 %v60
  %v210 = vunpack.c.l.b16 %v61
  %v211 = vunpack.c.l.b16 %v62
  %v212 = vunpack.c.l.b16 %v63
  %v213 = vunpack.c.l.b16 %v64
  %v214 = vunpack.c.l.b16 %v65
  %v215 = vunpack.c.l.b16 %v66
  %v216 = vunpack.c.l.b16 %v67
  %v217 = vunpack.c.l.b16 %v68
  %v218 = vunpack.c.l.b16 %v69
  %v219 = vunpack.c.l.b16 %v70
  %v220 = vunpack.c.l.b16 %v71
  %v221 = vunpack.c.l.b16 %v72
  %v222 = vunpack.c.l.b16 %v73
  %v223 = vunpack.c.l.b16 %v74
  %v224 = vunpack.c.l.b16 %v75
  %v225 = vunpack.c.l.b16 %v76
  %v226 = vunpack.c.l.b16 %v77
  %v227 = vunpack.c.l.b16 %v78
  %v228 = vunpack.c.l.b16 %v79
  %v229 = vunpack.c.l.b16 %v80
  %v230 = vpack.c.b16 %v167, %v166
  %v231 = vpack.c.b16 %v169, %v168
  %v232 = vpack.c.b16 %v171, %v170
  %v233 = vpack.c.b16 %v173, %v172
  %v234 = vpack.c.b16 %v175, %v174
  %v235 = vpack.c.b16 %v177, %v176
  %v236 = vpack.c.b16 %v179, %v178
  %v237 = vpack.c.b16 %v181, %v180
  %v238 = vpack.c.b16 %v183, %v182
  %v239 = vpack.c.b16 %v185, %v184
  %v240 = vpack.c.b16 %v187, %v186
  %v241 = vpack.c.b16 %v189, %v188
  %v242 = vpack.c.b16 %v191, %v190
  %v243 = vpack.c.b16 %v193, %v192
  %v244 = vpack.c.b16 %v195, %v194
  %v245 = vpack.c.b16 %v197, %v196
  %v246 = vpack.c.b16 %v199, %v198
  %v247 = vpack.c.b16 %v201, %v200
  %v248 = vpack.c.b16 %v203, %v202
  %v249 = vpack.c.b16 %v205, %v204
  %v250 = vpack.c.b16 %v207, %v206
  %v251 = vpack.c.b16 %v209, %v208
  %v252 = vpack.c.b16 %v211, %v210
  %v253 = vpack.c.b16 %v213, %v212
  %v254 = vpack.c.b16 %v215, %v214
  %v255 = vpack.c.b16 %v217, %v216
  %v256 = vpack.c.b16 %v219, %v218
  %v257 = vpack.c.b16 %v221, %v220
  %v258 = vpack.c.b16 %v223, %v222
  %v259 = vpack.c.b16 %v225, %v224
  %v260 = vpack.c.b16 %v227, %v226
  %v261 = vpack.c.b16 %v229, %v228
  %294 = vmatprep.subr.bf16.mxu0 0
  %295 = vmatpush1.bf16.msra.mxu0 %v230
  %296 = vmatprep.subr.bf16.mxu0 0
  %297 = vmatpush1.bf16.msra.mxu0 %v231
  %298 = vmatprep.subr.bf16.mxu0 0
  %299 = vmatpush1.bf16.msra.mxu0 %v232
  %300 = vmatprep.subr.bf16.mxu0 0
  %301 = vmatpush1.bf16.msra.mxu0 %v233
  %302 = vmatprep.subr.bf16.mxu0 0
  %303 = vmatpush1.bf16.msra.mxu0 %v234
  %304 = vmatprep.subr.bf16.mxu0 0
  %305 = vmatpush1.bf16.msra.mxu0 %v235
  %306 = vmatprep.subr.bf16.mxu0 0
  %307 = vmatpush1.bf16.msra.mxu0 %v236
  %308 = vmatprep.subr.bf16.mxu0 0
  %309 = vmatpush1.bf16.msra.mxu0 %v237
  %310 = vmatprep.subr.bf16.mxu0 0
  %311 = vmatpush1.bf16.msra.mxu0 %v238
  %312 = vmatprep.subr.bf16.mxu0 0
  %313 = vmatpush1.bf16.msra.mxu0 %v239
  %314 = vmatprep.subr.bf16.mxu0 0
  %315 = vmatpush1.bf16.msra.mxu0 %v240
  %316 = vmatprep.subr.bf16.mxu0 0
  %317 = vmatpush1.bf16.msra.mxu0 %v241
  %318 = vmatprep.subr.bf16.mxu0 0
  %319 = vmatpush1.bf16.msra.mxu0 %v242
  %320 = vmatprep.subr.bf16.mxu0 0
  %321 = vmatpush1.bf16.msra.mxu0 %v243
  %322 = vmatprep.subr.bf16.mxu0 0
  %323 = vmatpush1.bf16.msra.mxu0 %v244
  %324 = vmatprep.subr.bf16.mxu0 0
  %325 = vmatpush1.bf16.msra.mxu0 %v245
  %326 = vmatprep.mubr.bf16.mxu0 %v95
  %327 = vmatmul.mubr.bf16.gmra.mrb[0].mxu0 %v94
  %v328 = vpop.f32.mrb[0].mxu0
  %v329 = vadd.f32 %v86, %v328
  %v330 = vpop.f32.mrb[0].mxu0
  %v331 = vpop.f32.mrb[0].mxu0
  %v332 = vpop.f32.mrb[0].mxu0
  %333 = vdwg.mxu0
  %334 = vmatprep.subr.bf16.mxu0 0
  %335 = vmatpush1.bf16.msra.mxu0 %v246
  %336 = vmatprep.subr.bf16.mxu0 0
  %337 = vmatpush1.bf16.msra.mxu0 %v247
  %338 = vmatprep.subr.bf16.mxu0 0
  %339 = vmatpush1.bf16.msra.mxu0 %v248
  %340 = vmatprep.subr.bf16.mxu0 0
  %341 = vmatpush1.bf16.msra.mxu0 %v249
  %342 = vmatprep.subr.bf16.mxu0 0
  %343 = vmatpush1.bf16.msra.mxu0 %v250
  %344 = vmatprep.subr.bf16.mxu0 0
  %345 = vmatpush1.bf16.msra.mxu0 %v251
  %346 = vmatprep.subr.bf16.mxu0 0
  %347 = vmatpush1.bf16.msra.mxu0 %v252
  %348 = vmatprep.subr.bf16.mxu0 0
  %349 = vmatpush1.bf16.msra.mxu0 %v253
  %350 = vmatprep.subr.bf16.mxu0 0
  %351 = vmatpush1.bf16.msra.mxu0 %v254
  %352 = vmatprep.subr.bf16.mxu0 0
  %353 = vmatpush1.bf16.msra.mxu0 %v255
  %354 = vmatprep.subr.bf16.mxu0 0
  %355 = vmatpush1.bf16.msra.mxu0 %v256
  %356 = vmatprep.subr.bf16.mxu0 0
  %357 = vmatpush1.bf16.msra.mxu0 %v257
  %358 = vmatprep.subr.bf16.mxu0 0
  %359 = vmatpush1.bf16.msra.mxu0 %v258
  %360 = vmatprep.subr.bf16.mxu0 0
  %361 = vmatpush1.bf16.msra.mxu0 %v259
  %362 = vmatprep.subr.bf16.mxu0 0
  %363 = vmatpush1.bf16.msra.mxu0 %v260
  %364 = vmatprep.subr.bf16.mxu0 0
  %365 = vmatpush1.bf16.msra.mxu0 %v261
  %366 = vmatprep.mubr.bf16.mxu0 %v97
  %367 = vmatmul.mubr.bf16.gmra.mrb[0].mxu0 %v96
  %v368 = vpop.f32.mrb[0].mxu0
  %v369 = vadd.f32 %v329, %v368
  %v370 = vpop.f32.mrb[0].mxu0
  %v371 = vpop.f32.mrb[0].mxu0
  %v372 = vpop.f32.mrb[0].mxu0
  %373 = vdwg.mxu0
  %vm374 = vcmask 80896
  %375 = vst.msk [vmem:[%s3] sm:$0xff] %vm374, %v369
  // Predicated region
  $region14: #{forward.15} parent=0 // pred_check
    _
  $region15: #{forward.15} parent=0 // pred_check_branch
    %377 = sbr.rel (0) target = $region17
  $region16: #{forward.15} parent=0 // pred_region
    _
  $region17: #{forward.15} parent=0 // pred_fallthru
    _
  // Predicated region
  $region18: #{forward.15} parent=0 // pred_check
    _
  $region19: #{forward.15} parent=0 // pred_check_branch
    %379 = sbr.rel (0) target = $region21
  $region20: #{forward.15} parent=0 // pred_region
    _
  $region21: #{forward.15} parent=0 // pred_fallthru
    _

</llo_original>
